<compile_context>
chip_gen: v7x
topology: tpu7x:2x2x1
jax: 0.10.0
libtpu: 0.0.40
codegen_flags: <defaults>
</compile_context>

<pallas_src>
import jax
import jax.numpy as jnp
from jax.experimental import pallas as pl
from jax.experimental.pallas import tpu as pltpu

# Sizes fixed by the module: size_dict['small'] = [1024, 512, 256]
L_IN, D_HID, D_ATT = 1024, 512, 256
N_CLASSES = 2
NEG_INF = -1e30  # finite "minus infinity" -> no inf-inf NaN risk in online softmax


# ---------------------------------------------------------------------------
# Fused kernel. Grid = (num_splits [parallel], tiles_per_split [arbitrary]).
# Per instance tile:
#   h1    = ReLU(h @ W_fc + b_fc)                          (tile_n, 512)
#   ab    = h1 @ [W_a | W_b] + [b_a | b_b]                 (tile_n, 512)
#   A_i   = sum(tanh(ab[:,:256]) * sigmoid(ab[:,256:]) * w_c, lanes) + b_c
# Online softmax over this split's part of the bag, accumulated directly in
# the per-split resident output blocks (m, l, acc).  The merge across splits
# and the tiny 512->2 classifier are done in the wrapper (exact).
# ---------------------------------------------------------------------------
def clam_sb_fused_kernel(n_valid_ref,                         # scalar prefetch (SMEM)
                         h_ref, wfc_ref, bfc_ref, wab_ref, bab_ref,
                         wc_ref, bc_ref,
                         a_raw_ref, m_out_ref, l_out_ref, acc_out_ref):
    j = pl.program_id(1)
    tile_n = h_ref.shape[0]

    # per-split accumulator init (output blocks are resident across the j axis)
    @pl.when(j == 0)
    def _init():
        m_out_ref[...] = jnp.full_like(m_out_ref, NEG_INF)
        l_out_ref[...] = jnp.zeros_like(l_out_ref)
        acc_out_ref[...] = jnp.zeros_like(acc_out_ref)

    # ---- per-instance hot path: bf16 MXU matmuls, f32 accumulation ----
    h_b = h_ref[...].astype(jnp.bfloat16)                     # cast in-kernel
    h1 = jnp.dot(h_b, wfc_ref[...],
                 preferred_element_type=jnp.float32) + bfc_ref[...]
    h1 = jnp.maximum(h1, 0.0)                                 # (tile_n, 512) f32
    h1_b = h1.astype(jnp.bfloat16)

    # fused gated-attention projection: one (512, 512) matmul, lane-aligned split
    ab = jnp.dot(h1_b, wab_ref[...],
                 preferred_element_type=jnp.float32) + bab_ref[...]
    a = jnp.tanh(ab[:, :D_ATT])
    b = jax.nn.sigmoid(ab[:, D_ATT:])
    gated = a * b                                             # (tile_n, 256) f32

    # attention score: lane (channel) reduce against the w_c row (XLU slot)
    att = jnp.sum(gated * wc_ref[...], axis=-1, keepdims=True) + bc_ref[...]

    # mask padded instances so they get zero softmax mass
    g_tile = pl.program_id(0) * pl.num_programs(1) + j
    row = g_tile * tile_n + jax.lax.broadcasted_iota(jnp.int32, (tile_n, 1), 0)
    att = jnp.where(row < n_valid_ref[0], att, NEG_INF)       # (tile_n, 1)

    a_raw_ref[...] = att                                      # raw (pre-softmax) scores

    # ---- online softmax-weighted pooling (per-split partials) ----
    m_prev = m_out_ref[...]                                   # (1, 1)
    m_new = jnp.maximum(m_prev, jnp.max(att, axis=0, keepdims=True))
    alpha = jnp.exp(m_prev - m_new)
    p = jnp.exp(att - m_new)                                  # (tile_n, 1); padded -> 0
    l_out_ref[...] = alpha * l_out_ref[...] + jnp.sum(p, axis=0, keepdims=True)
    # pooled = p^T @ h1 as an MXU matmul (contract dim 0 of both) -> (1, 512)
    pooled = jax.lax.dot_general(
        p.astype(jnp.bfloat16), h1_b,
        dimension_numbers=(((0,), (0,)), ((), ())),
        preferred_element_type=jnp.float32)
    acc_out_ref[...] = alpha * acc_out_ref[...] + pooled
    m_out_ref[...] = m_new


def clam_sb_forward(h, params, *, tile_n=1024, num_splits=2):
    """Default-path forward of CLAM_SB. Returns
    (logits, Y_prob, Y_hat, A_raw, results_dict, None, None)."""
    N = h.shape[0]
    assert h.shape[1] == L_IN
    assert N >= 1, "empty bag not supported (softmax over zero instances)"
    assert tile_n % 8 == 0

    # split / tile bookkeeping: every split must own at least one valid tile
    n_tiles = int(pl.cdiv(N, tile_n))
    num_splits = max(1, min(int(num_splits), n_tiles))
    while num_splits > 1 and (num_splits - 1) * int(pl.cdiv(n_tiles, num_splits)) >= n_tiles:
        num_splits -= 1
    tps = int(pl.cdiv(n_tiles, num_splits))                   # tiles per split
    n_pad = num_splits * tps * tile_n

    # pad the bag to the grid extent (padded rows are masked in-kernel).
    # NOTE: h is NOT dtype-cast in the wrapper — the kernel consumes it as-is
    # (f32 or bf16) and casts to bf16 on the VPU before the W_fc matmul.
    if n_pad != N:
        h = jnp.pad(h, ((0, n_pad - N), (0, 0)))

    # bf16 operands for the big matmuls; biases / small weights stay f32
    wfc = params["W_fc"].astype(jnp.bfloat16)
    bfc = params["b_fc"].astype(jnp.float32)
    wab = jnp.concatenate([params["W_a"], params["W_b"]], axis=1).astype(jnp.bfloat16)
    bab = jnp.concatenate([params["b_a"], params["b_b"]], axis=1).astype(jnp.float32)
    wc_row = params["w_c"].reshape(1, D_ATT).astype(jnp.float32)
    bc = params["b_c"].astype(jnp.float32)

    n_valid = jnp.array([N], dtype=jnp.int32)

    rep = lambda s, j, n: (0, 0)                   # replicated (weight) blocks
    tile_idx = lambda s, j, n: (s * tps + j, 0)    # instance tiles / A_raw rows
    split_idx = lambda s, j, n: (s, 0, 0)          # per-split partial outputs

    # derived VMEM budget: ~18.5 KiB/row live + ~4 MiB of resident weights
    vmem_limit = min(100 * 1024 * 1024, 8 * 1024 * 1024 + tile_n * 32 * 1024)

    a_raw_col, pm, plse, pacc = pl.pallas_call(
        clam_sb_fused_kernel,
        out_shape=(
            jax.ShapeDtypeStruct((n_pad, 1), jnp.float32),            # A_raw column (padded)
            jax.ShapeDtypeStruct((num_splits, 1, 1), jnp.float32),    # partial running max m
            jax.ShapeDtypeStruct((num_splits, 1, 1), jnp.float32),    # partial running sum l
            jax.ShapeDtypeStruct((num_splits, 1, D_HID), jnp.float32),# partial acc = sum e^(A-m) h1
        ),
        grid_spec=pltpu.PrefetchScalarGridSpec(
            num_scalar_prefetch=1,
            grid=(num_splits, tps),
            in_specs=[
                pl.BlockSpec((tile_n, L_IN), tile_idx),      # h (native dtype)
                pl.BlockSpec((L_IN, D_HID), rep),            # W_fc
                pl.BlockSpec((1, D_HID), rep),               # b_fc
                pl.BlockSpec((D_HID, 2 * D_ATT), rep),       # [W_a | W_b]
                pl.BlockSpec((1, 2 * D_ATT), rep),           # [b_a | b_b]
                pl.BlockSpec((1, D_ATT), rep),               # w_c (row)
                pl.BlockSpec((1, 1), rep),                   # b_c
            ],
            out_specs=[
                pl.BlockSpec((tile_n, 1), tile_idx),         # A_raw column
                pl.BlockSpec((None, 1, 1), split_idx),       # partial m
                pl.BlockSpec((None, 1, 1), split_idx),       # partial l
                pl.BlockSpec((None, 1, D_HID), split_idx),   # partial acc
            ],
        ),
        compiler_params=pltpu.CompilerParams(
            # split axis is parallel (dual-TC on v7x), reduction axis sequential
            dimension_semantics=("parallel", "arbitrary"),
            vmem_limit_bytes=vmem_limit,
        ),
    )(n_valid, h, wfc, bfc, wab, bab, wc_row, bc)

    # ---- exact merge of per-split online-softmax partials (tiny, wrapper) ----
    pm = pm.reshape(num_splits, 1)
    plse = plse.reshape(num_splits, 1)
    pacc = pacc.reshape(num_splits, D_HID)
    m_glob = jnp.max(pm, axis=0, keepdims=True)                    # (1, 1)
    scale = jnp.exp(pm - m_glob)                                   # (S, 1)
    l_glob = jnp.sum(scale * plse, axis=0, keepdims=True)          # (1, 1)
    acc_glob = jnp.sum(scale * pacc, axis=0, keepdims=True)        # (1, 512)
    m_pool = acc_glob / l_glob                                     # == softmax(A) @ h1

    logits = m_pool @ params["W_cls"].astype(jnp.float32) + params["b_cls"].astype(jnp.float32)
    y_prob = jax.nn.softmax(logits, axis=1)
    y_hat = jnp.argmax(logits, axis=1, keepdims=True).astype(jnp.int32)

    # A = torch.transpose(A, 1, 0): drop padded rows, view as (1, N)
    A_raw = a_raw_col[:N, 0].reshape(1, N)

    # label is None in the default forward path -> center_loss == 0.0
    # TODO(synk): CenterLoss (label given), instance_eval top-k/CE branch and
    # is_final_epochs top-k patch gathering are host/data-dependent branches in
    # the reference module and are not implemented here.
    results_dict = {"center_loss": 0.0}

    return logits, y_prob, y_hat, A_raw, results_dict, None, None


def make_params(key):
    """Deterministic synthetic parameters with the shapes implied by __init__."""
    ks = jax.random.split(key, 10)
    s = 0.02
    return {
        "W_fc": jax.random.normal(ks[0], (L_IN, D_HID), jnp.float32) * s,
        "b_fc": jax.random.normal(ks[1], (1, D_HID), jnp.float32) * s,
        "W_a": jax.random.normal(ks[2], (D_HID, D_ATT), jnp.float32) * s,
        "b_a": jax.random.normal(ks[3], (1, D_ATT), jnp.float32) * s,
        "W_b": jax.random.normal(ks[4], (D_HID, D_ATT), jnp.float32) * s,
        "b_b": jax.random.normal(ks[5], (1, D_ATT), jnp.float32) * s,
        "w_c": jax.random.normal(ks[6], (D_ATT, 1), jnp.float32) * s,
        "b_c": jax.random.normal(ks[7], (1, 1), jnp.float32) * s,
        "W_cls": jax.random.normal(ks[8], (D_HID, N_CLASSES), jnp.float32) * s,
        "b_cls": jax.random.normal(ks[9], (1, N_CLASSES), jnp.float32) * s,
    }


def reference_forward(h, p):
    """Pure-JAX f32 reference mirroring the PyTorch forward (default path)."""
    h1 = jnp.maximum(h @ p["W_fc"] + p["b_fc"], 0.0)
    a = jnp.tanh(h1 @ p["W_a"] + p["b_a"])
    b = jax.nn.sigmoid(h1 @ p["W_b"] + p["b_b"])
    A = (a * b) @ p["w_c"] + p["b_c"]                 # (N, 1)
    A_raw = A.T                                       # (1, N)
    A_soft = jax.nn.softmax(A_raw, axis=1)
    M = A_soft @ h1                                   # (1, 512)
    logits = M @ p["W_cls"] + p["b_cls"]
    y_prob = jax.nn.softmax(logits, axis=1)
    y_hat = jnp.argmax(logits, axis=1, keepdims=True).astype(jnp.int32)
    return logits, y_prob, y_hat, A_raw


if __name__ == "__main__":
    key = jax.random.PRNGKey(0)
    pkey, hkey = jax.random.split(key)
    params = make_params(pkey)

    # bag size deliberately NOT a tile multiple: exercises pad + mask, two
    # splits, multiple tiles per split, and one fully-padded trailing tile.
    N = 700
    h = jax.random.normal(hkey, (N, L_IN), jnp.float32)

    r_logits, r_prob, r_hat, r_Araw = reference_forward(h, params)

    # small-tile / two-split config (multi-step online softmax + split merge)
    logits, y_prob, y_hat, A_raw, results, pfe, sfe = clam_sb_forward(
        h, params, tile_n=256, num_splits=2)
    jax.block_until_ready((logits, y_prob, y_hat, A_raw))

    assert A_raw.shape == (1, N)
    assert jnp.allclose(A_raw, r_Araw, atol=2e-2, rtol=2e-2)
    assert jnp.allclose(logits, r_logits, atol=2e-2, rtol=2e-2)
    assert jnp.allclose(y_prob, r_prob, atol=2e-2, rtol=2e-2)
    # argmax may legitimately differ only if the f32 logit gap is ~0
    gap = float(jnp.abs(r_logits[0, 0] - r_logits[0, 1]))
    assert jnp.array_equal(y_hat, r_hat) or gap < 5e-3

    # default (large-tile) config: single tile / single split path
    logits_d, y_prob_d, y_hat_d, A_raw_d, _, _, _ = clam_sb_forward(h, params)
    jax.block_until_ready((logits_d, y_prob_d, A_raw_d))
    assert jnp.allclose(A_raw_d, r_Araw, atol=2e-2, rtol=2e-2)
    assert jnp.allclose(logits_d, r_logits, atol=2e-2, rtol=2e-2)
    assert jnp.allclose(y_prob_d, r_prob, atol=2e-2, rtol=2e-2)

    print("KERNEL_OK")
</pallas_src>

<mosaic_0001>
module attributes {stable_mosaic.version = 11 : i64} {
  func.func @clam_sb_fused_kernel(%arg0: i32, %arg1: i32, %arg2: memref<1xi32, #tpu.memory_space<smem>>, %arg3: memref<256x1024xf32, #tpu.memory_space<vmem>>, %arg4: memref<1024x512xbf16, #tpu.memory_space<vmem>>, %arg5: memref<1x512xf32, #tpu.memory_space<vmem>>, %arg6: memref<512x512xbf16, #tpu.memory_space<vmem>>, %arg7: memref<1x512xf32, #tpu.memory_space<vmem>>, %arg8: memref<1x256xf32, #tpu.memory_space<vmem>>, %arg9: memref<1x1xf32, #tpu.memory_space<vmem>>, %arg10: memref<256x1xf32, #tpu.memory_space<vmem>>, %arg11: memref<1x1x1xf32, #tpu.memory_space<vmem>>, %arg12: memref<1x1x1xf32, #tpu.memory_space<vmem>>, %arg13: memref<1x1x512xf32, #tpu.memory_space<vmem>>) attributes {dimension_semantics = [#tpu.dimension_semantics<parallel>, #tpu.dimension_semantics<arbitrary>], iteration_bounds = array<i64: 2, 2>, scalar_prefetch = 1 : i64, scratch_operands = 0 : i64, tpu.core_type = #tpu.core_type<tc>, window_params = [{transform_indices = @transform_0, window_bounds = array<i64: 256, 1024>}, {pipeline_mode = #tpu.pipeline_mode<synchronous>, transform_indices = @transform_1, window_bounds = array<i64: 1024, 512>}, {pipeline_mode = #tpu.pipeline_mode<synchronous>, transform_indices = @transform_2, window_bounds = array<i64: 1, 512>}, {pipeline_mode = #tpu.pipeline_mode<synchronous>, transform_indices = @transform_3, window_bounds = array<i64: 512, 512>}, {pipeline_mode = #tpu.pipeline_mode<synchronous>, transform_indices = @transform_4, window_bounds = array<i64: 1, 512>}, {pipeline_mode = #tpu.pipeline_mode<synchronous>, transform_indices = @transform_5, window_bounds = array<i64: 1, 256>}, {pipeline_mode = #tpu.pipeline_mode<synchronous>, transform_indices = @transform_6, window_bounds = array<i64: 1, 1>}, {transform_indices = @transform_7, window_bounds = array<i64: 256, 1>}, {transform_indices = @transform_8, window_bounds = array<i64: 1, 1, 1>}, {transform_indices = @transform_9, window_bounds = array<i64: 1, 1, 1>}, {transform_indices = @transform_10, window_bounds = array<i64: 1, 1, 512>}]} {
    %c0_i32 = arith.constant 0 : i32
    %0 = arith.cmpi eq, %arg1, %c0_i32 : i32
    %1 = arith.extui %0 : i1 to i32
    %c0_i32_0 = arith.constant 0 : i32
    %2 = arith.cmpi ne, %1, %c0_i32_0 : i32
    scf.if %2 {
      %cst_43 = arith.constant -1.000000e+30 : f32
      %79 = vector.broadcast %cst_43 : f32 to vector<1x1xf32>
      %c0_44 = arith.constant 0 : index
      %c0_45 = arith.constant 0 : index
      %c0_46 = arith.constant 0 : index
      %80 = vector.load %arg11[%c0_44, %c0_45, %c0_46] : memref<1x1x1xf32, #tpu.memory_space<vmem>>, vector<1x1x1xf32>
      %81 = vector.shape_cast %80 : vector<1x1x1xf32> to vector<1x1xf32>
      %82 = vector.shape_cast %79 : vector<1x1xf32> to vector<1x1x1xf32>
      tpu.vector_store %arg11[%c0_44, %c0_45, %c0_46], %82 {strides = array<i32>} : memref<1x1x1xf32, #tpu.memory_space<vmem>>, vector<1x1x1xf32>,
      %cst_47 = arith.constant 0.000000e+00 : f32
      %83 = vector.broadcast %cst_47 : f32 to vector<1x1xf32>
      %c0_48 = arith.constant 0 : index
      %c0_49 = arith.constant 0 : index
      %c0_50 = arith.constant 0 : index
      %84 = vector.load %arg12[%c0_48, %c0_49, %c0_50] : memref<1x1x1xf32, #tpu.memory_space<vmem>>, vector<1x1x1xf32>
      %85 = vector.shape_cast %84 : vector<1x1x1xf32> to vector<1x1xf32>
      %86 = vector.shape_cast %83 : vector<1x1xf32> to vector<1x1x1xf32>
      tpu.vector_store %arg12[%c0_48, %c0_49, %c0_50], %86 {strides = array<i32>} : memref<1x1x1xf32, #tpu.memory_space<vmem>>, vector<1x1x1xf32>,
      %cst_51 = arith.constant 0.000000e+00 : f32
      %87 = vector.broadcast %cst_51 : f32 to vector<1x512xf32>
      %c0_52 = arith.constant 0 : index
      %c0_53 = arith.constant 0 : index
      %c0_54 = arith.constant 0 : index
      %88 = vector.load %arg13[%c0_52, %c0_53, %c0_54] : memref<1x1x512xf32, #tpu.memory_space<vmem>>, vector<1x1x512xf32>
      %89 = vector.shape_cast %88 : vector<1x1x512xf32> to vector<1x512xf32>
      %90 = vector.shape_cast %87 : vector<1x512xf32> to vector<1x1x512xf32>
      tpu.vector_store %arg13[%c0_52, %c0_53, %c0_54], %90 {strides = array<i32>} : memref<1x1x512xf32, #tpu.memory_space<vmem>>, vector<1x1x512xf32>,
    } else {
    }
    %c0 = arith.constant 0 : index
    %c0_1 = arith.constant 0 : index
    %3 = vector.load %arg3[%c0, %c0_1] : memref<256x1024xf32, #tpu.memory_space<vmem>>, vector<256x1024xf32>
    %4 = arith.truncf %3 : vector<256x1024xf32> to vector<256x1024xbf16>
    %c0_2 = arith.constant 0 : index
    %c0_3 = arith.constant 0 : index
    %5 = vector.load %arg4[%c0_2, %c0_3] : memref<1024x512xbf16, #tpu.memory_space<vmem>>, vector<1024x512xbf16>
    %cst = arith.constant dense<0.000000e+00> : vector<256x512xf32>
    %6 = tpu.matmul %4, %5, %cst {dimension_numbers = #tpu.dot_dimension_numbers<[1], [0], [0], [1], [0, 0, 1, 1], [], []>} : vector<256x1024xbf16>, vector<1024x512xbf16>, vector<256x512xf32> -> vector<256x512xf32>
    %c0_4 = arith.constant 0 : index
    %c0_5 = arith.constant 0 : index
    %7 = vector.load %arg5[%c0_4, %c0_5] : memref<1x512xf32, #tpu.memory_space<vmem>>, vector<1x512xf32>
    %8 = vector.broadcast %7 : vector<1x512xf32> to vector<256x512xf32>
    %9 = arith.addf %6, %8 : vector<256x512xf32>
    %cst_6 = arith.constant 0.000000e+00 : f32
    %10 = vector.broadcast %cst_6 : f32 to vector<256x512xf32>
    %11 = arith.maximumf %9, %10 : vector<256x512xf32>
    %12 = arith.truncf %11 : vector<256x512xf32> to vector<256x512xbf16>
    %c0_7 = arith.constant 0 : index
    %c0_8 = arith.constant 0 : index
    %13 = vector.load %arg6[%c0_7, %c0_8] : memref<512x512xbf16, #tpu.memory_space<vmem>>, vector<512x512xbf16>
    %cst_9 = arith.constant dense<0.000000e+00> : vector<256x512xf32>
    %14 = tpu.matmul %12, %13, %cst_9 {dimension_numbers = #tpu.dot_dimension_numbers<[1], [0], [0], [1], [0, 0, 1, 1], [], []>} : vector<256x512xbf16>, vector<512x512xbf16>, vector<256x512xf32> -> vector<256x512xf32>
    %c0_10 = arith.constant 0 : index
    %c0_11 = arith.constant 0 : index
    %15 = vector.load %arg7[%c0_10, %c0_11] : memref<1x512xf32, #tpu.memory_space<vmem>>, vector<1x512xf32>
    %16 = vector.broadcast %15 : vector<1x512xf32> to vector<256x512xf32>
    %17 = arith.addf %14, %16 : vector<256x512xf32>
    %18 = vector.extract_strided_slice %17 {offsets = [0, 0], sizes = [256, 256], strides = [1, 1]} : vector<256x512xf32> to vector<256x256xf32>
    %19 = math.tanh %18 : vector<256x256xf32>
    %20 = vector.extract_strided_slice %17 {offsets = [0, 256], sizes = [256, 256], strides = [1, 1]} : vector<256x512xf32> to vector<256x256xf32>
    %21 = arith.negf %20 : vector<256x256xf32>
    %22 = math.exp %21 : vector<256x256xf32>
    %cst_12 = arith.constant 1.000000e+00 : f32
    %23 = vector.broadcast %cst_12 : f32 to vector<256x256xf32>
    %24 = arith.addf %23, %22 : vector<256x256xf32>
    %25 = arith.divf %23, %24 : vector<256x256xf32>
    %26 = arith.mulf %19, %25 : vector<256x256xf32>
    %c0_13 = arith.constant 0 : index
    %c0_14 = arith.constant 0 : index
    %27 = vector.load %arg8[%c0_13, %c0_14] : memref<1x256xf32, #tpu.memory_space<vmem>>, vector<1x256xf32>
    %28 = vector.broadcast %27 : vector<1x256xf32> to vector<256x256xf32>
    %29 = arith.mulf %26, %28 : vector<256x256xf32>
    %cst_15 = arith.constant dense<0.000000e+00> : vector<256xf32>
    %30 = vector.multi_reduction <add>, %29, %cst_15 [1] : vector<256x256xf32> to vector<256xf32>
    %31 = vector.shape_cast %30 : vector<256xf32> to vector<256x1xf32>
    %c0_16 = arith.constant 0 : index
    %c0_17 = arith.constant 0 : index
    %32 = vector.load %arg9[%c0_16, %c0_17] : memref<1x1xf32, #tpu.memory_space<vmem>>, vector<1x1xf32>
    %33 = vector.broadcast %32 : vector<1x1xf32> to vector<256x1xf32>
    %34 = arith.addf %31, %33 : vector<256x1xf32>
    %c2_i32 = arith.constant 2 : i32
    %35 = arith.muli %arg0, %c2_i32 : i32
    %36 = arith.addi %35, %arg1 : i32
    %c256_i32 = arith.constant 256 : i32
    %37 = arith.muli %36, %c256_i32 : i32
    %38 = tpu.iota {dimensions = array<i32: 0>} : vector<256x1xi32>
    %39 = vector.broadcast %37 : i32 to vector<256x1xi32>
    %40 = arith.addi %39, %38 : vector<256x1xi32>
    %c0_18 = arith.constant 0 : index
    %41 = memref.load %arg2[%c0_18] : memref<1xi32, #tpu.memory_space<smem>>
    %42 = vector.broadcast %41 : i32 to vector<256x1xi32>
    %43 = arith.cmpi slt, %40, %42 : vector<256x1xi32>
    %cst_19 = arith.constant -1.000000e+30 : f32
    %44 = vector.broadcast %cst_19 : f32 to vector<256x1xf32>
    %45 = arith.select %43, %34, %44 : vector<256x1xi1>, vector<256x1xf32>
    %c0_20 = arith.constant 0 : index
    %c0_21 = arith.constant 0 : index
    %46 = vector.load %arg10[%c0_20, %c0_21] : memref<256x1xf32, #tpu.memory_space<vmem>>, vector<256x1xf32>
    tpu.vector_store %arg10[%c0_20, %c0_21], %45 {strides = array<i32>} : memref<256x1xf32, #tpu.memory_space<vmem>>, vector<256x1xf32>,
    %c0_22 = arith.constant 0 : index
    %c0_23 = arith.constant 0 : index
    %c0_24 = arith.constant 0 : index
    %47 = vector.load %arg11[%c0_22, %c0_23, %c0_24] : memref<1x1x1xf32, #tpu.memory_space<vmem>>, vector<1x1x1xf32>
    %48 = vector.shape_cast %47 : vector<1x1x1xf32> to vector<1x1xf32>
    %cst_25 = arith.constant dense<0xFF800000> : vector<1xf32>
    %49 = vector.multi_reduction <maximumf>, %45, %cst_25 [0] : vector<256x1xf32> to vector<1xf32>
    %50 = vector.shape_cast %49 : vector<1xf32> to vector<1x1xf32>
    %51 = arith.maximumf %48, %50 : vector<1x1xf32>
    %52 = arith.subf %48, %51 : vector<1x1xf32>
    %53 = math.exp %52 : vector<1x1xf32>
    %54 = vector.broadcast %51 : vector<1x1xf32> to vector<256x1xf32>
    %55 = arith.subf %45, %54 : vector<256x1xf32>
    %56 = math.exp %55 : vector<256x1xf32>
    %c0_26 = arith.constant 0 : index
    %c0_27 = arith.constant 0 : index
    %c0_28 = arith.constant 0 : index
    %57 = vector.load %arg12[%c0_26, %c0_27, %c0_28] : memref<1x1x1xf32, #tpu.memory_space<vmem>>, vector<1x1x1xf32>
    %58 = vector.shape_cast %57 : vector<1x1x1xf32> to vector<1x1xf32>
    %59 = arith.mulf %53, %58 : vector<1x1xf32>
    %cst_29 = arith.constant dense<0.000000e+00> : vector<1xf32>
    %60 = vector.multi_reduction <add>, %56, %cst_29 [0] : vector<256x1xf32> to vector<1xf32>
    %61 = vector.shape_cast %60 : vector<1xf32> to vector<1x1xf32>
    %62 = arith.addf %59, %61 : vector<1x1xf32>
    %c0_30 = arith.constant 0 : index
    %c0_31 = arith.constant 0 : index
    %c0_32 = arith.constant 0 : index
    %63 = vector.load %arg12[%c0_30, %c0_31, %c0_32] : memref<1x1x1xf32, #tpu.memory_space<vmem>>, vector<1x1x1xf32>
    %64 = vector.shape_cast %63 : vector<1x1x1xf32> to vector<1x1xf32>
    %65 = vector.shape_cast %62 : vector<1x1xf32> to vector<1x1x1xf32>
    tpu.vector_store %arg12[%c0_30, %c0_31, %c0_32], %65 {strides = array<i32>} : memref<1x1x1xf32, #tpu.memory_space<vmem>>, vector<1x1x1xf32>,
    %66 = arith.truncf %56 : vector<256x1xf32> to vector<256x1xbf16>
    %cst_33 = arith.constant dense<0.000000e+00> : vector<1x512xf32>
    %67 = tpu.matmul %66, %12, %cst_33 {dimension_numbers = #tpu.dot_dimension_numbers<[0], [0], [1], [1], [0, 1, 1, 1], [], []>} : vector<256x1xbf16>, vector<256x512xbf16>, vector<1x512xf32> -> vector<1x512xf32>
    %c0_34 = arith.constant 0 : index
    %c0_35 = arith.constant 0 : index
    %c0_36 = arith.constant 0 : index
    %68 = vector.load %arg13[%c0_34, %c0_35, %c0_36] : memref<1x1x512xf32, #tpu.memory_space<vmem>>, vector<1x1x512xf32>
    %69 = vector.shape_cast %68 : vector<1x1x512xf32> to vector<1x512xf32>
    %70 = vector.broadcast %53 : vector<1x1xf32> to vector<1x512xf32>
    %71 = arith.mulf %70, %69 : vector<1x512xf32>
    %72 = arith.addf %71, %67 : vector<1x512xf32>
    %c0_37 = arith.constant 0 : index
    %c0_38 = arith.constant 0 : index
    %c0_39 = arith.constant 0 : index
    %73 = vector.load %arg13[%c0_37, %c0_38, %c0_39] : memref<1x1x512xf32, #tpu.memory_space<vmem>>, vector<1x1x512xf32>
    %74 = vector.shape_cast %73 : vector<1x1x512xf32> to vector<1x512xf32>
    %75 = vector.shape_cast %72 : vector<1x512xf32> to vector<1x1x512xf32>
    tpu.vector_store %arg13[%c0_37, %c0_38, %c0_39], %75 {strides = array<i32>} : memref<1x1x512xf32, #tpu.memory_space<vmem>>, vector<1x1x512xf32>,
    %c0_40 = arith.constant 0 : index
    %c0_41 = arith.constant 0 : index
    %c0_42 = arith.constant 0 : index
    %76 = vector.load %arg11[%c0_40, %c0_41, %c0_42] : memref<1x1x1xf32, #tpu.memory_space<vmem>>, vector<1x1x1xf32>
    %77 = vector.shape_cast %76 : vector<1x1x1xf32> to vector<1x1xf32>
    %78 = vector.shape_cast %51 : vector<1x1xf32> to vector<1x1x1xf32>
    tpu.vector_store %arg11[%c0_40, %c0_41, %c0_42], %78 {strides = array<i32>} : memref<1x1x1xf32, #tpu.memory_space<vmem>>, vector<1x1x1xf32>,
    return
  }
  func.func @transform_0(%arg0: i32, %arg1: i32, %arg2: memref<1xi32, #tpu.memory_space<smem>>) -> (i32, i32) {
    %c2_i32 = arith.constant 2 : i32
    %0 = arith.muli %arg0, %c2_i32 : i32
    %1 = arith.addi %0, %arg1 : i32
    %c0_i32 = arith.constant 0 : i32
    %c0_i32_0 = arith.constant 0 : i32
    return %1, %c0_i32 : i32, i32
  }
  func.func @transform_1(%arg0: i32, %arg1: i32, %arg2: memref<1xi32, #tpu.memory_space<smem>>) -> (i32, i32) {
    %c0_i32 = arith.constant 0 : i32
    %c0_i32_0 = arith.constant 0 : i32
    %c0_i32_1 = arith.constant 0 : i32
    return %c0_i32, %c0_i32_0 : i32, i32
  }
  func.func @transform_2(%arg0: i32, %arg1: i32, %arg2: memref<1xi32, #tpu.memory_space<smem>>) -> (i32, i32) {
    %c0_i32 = arith.constant 0 : i32
    %c0_i32_0 = arith.constant 0 : i32
    %c0_i32_1 = arith.constant 0 : i32
    return %c0_i32, %c0_i32_0 : i32, i32
  }
  func.func @transform_3(%arg0: i32, %arg1: i32, %arg2: memref<1xi32, #tpu.memory_space<smem>>) -> (i32, i32) {
    %c0_i32 = arith.constant 0 : i32
    %c0_i32_0 = arith.constant 0 : i32
    %c0_i32_1 = arith.constant 0 : i32
    return %c0_i32, %c0_i32_0 : i32, i32
  }
  func.func @transform_4(%arg0: i32, %arg1: i32, %arg2: memref<1xi32, #tpu.memory_space<smem>>) -> (i32, i32) {
    %c0_i32 = arith.constant 0 : i32
    %c0_i32_0 = arith.constant 0 : i32
    %c0_i32_1 = arith.constant 0 : i32
    return %c0_i32, %c0_i32_0 : i32, i32
  }
  func.func @transform_5(%arg0: i32, %arg1: i32, %arg2: memref<1xi32, #tpu.memory_space<smem>>) -> (i32, i32) {
    %c0_i32 = arith.constant 0 : i32
    %c0_i32_0 = arith.constant 0 : i32
    %c0_i32_1 = arith.constant 0 : i32
    return %c0_i32, %c0_i32_0 : i32, i32
  }
  func.func @transform_6(%arg0: i32, %arg1: i32, %arg2: memref<1xi32, #tpu.memory_space<smem>>) -> (i32, i32) {
    %c0_i32 = arith.constant 0 : i32
    %c0_i32_0 = arith.constant 0 : i32
    %c0_i32_1 = arith.constant 0 : i32
    return %c0_i32, %c0_i32_0 : i32, i32
  }
  func.func @transform_7(%arg0: i32, %arg1: i32, %arg2: memref<1xi32, #tpu.memory_space<smem>>) -> (i32, i32) {
    %c2_i32 = arith.constant 2 : i32
    %0 = arith.muli %arg0, %c2_i32 : i32
    %1 = arith.addi %0, %arg1 : i32
    %c0_i32 = arith.constant 0 : i32
    %c0_i32_0 = arith.constant 0 : i32
    return %1, %c0_i32 : i32, i32
  }
  func.func @transform_8(%arg0: i32, %arg1: i32, %arg2: memref<1xi32, #tpu.memory_space<smem>>) -> (i32, i32, i32) {
    %c0_i32 = arith.constant 0 : i32
    %c0_i32_0 = arith.constant 0 : i32
    %c0_i32_1 = arith.constant 0 : i32
    return %arg0, %c0_i32, %c0_i32_0 : i32, i32, i32
  }
  func.func @transform_9(%arg0: i32, %arg1: i32, %arg2: memref<1xi32, #tpu.memory_space<smem>>) -> (i32, i32, i32) {
    %c0_i32 = arith.constant 0 : i32
    %c0_i32_0 = arith.constant 0 : i32
    %c0_i32_1 = arith.constant 0 : i32
    return %arg0, %c0_i32, %c0_i32_0 : i32, i32, i32
  }
  func.func @transform_10(%arg0: i32, %arg1: i32, %arg2: memref<1xi32, #tpu.memory_space<smem>>) -> (i32, i32, i32) {
    %c0_i32 = arith.constant 0 : i32
    %c0_i32_0 = arith.constant 0 : i32
    %c0_i32_1 = arith.constant 0 : i32
    return %arg0, %c0_i32, %c0_i32_0 : i32, i32, i32
  }
}

</mosaic_0001>

<llo_original>
// kernel: tpu_custom_call.1
$region0: #{tpu_custom_call.1}
  #allocation0 [shape = 'u32[]', space=smem, size = 0x4, offset = 0x4, fixed_abs, tag = 'smem constant byte address 0x4 - core index']
  #allocation1 [shape = 'u32[144,128]{1,0:T(1,128)}', space=vmem, size = 0x12000, scoped, tag = 'internal scratch']
  #allocation2 [shape = 's32[1]{0}', space=sflag, size = 0x4, scoped, tag = 'scoped memory for tpu_custom_call.1']
  #allocation3 [shape = 's32[1]{0:T(128)S(6)}', space=smem, size = 0x200, scoped, tag = 'prefetched SMEM operand 0']
  #allocation4 [shape = 'f32[1,1]{1,0:T(1,128)S(1)}', space=vmem, size = 0x200, scoped, tag = 'scoped memory for tpu_custom_call.1']
  %s0 = inlined_call_operand.<no memory space> [shape: s32[1], index: 0, kind: input, shape index: {}]
  %s1 = inlined_call_operand.hbm [shape: f32[1024,1024], index: 1, kind: input, shape index: {}]
  %s2 = inlined_call_operand.hbm [shape: bf16[1024,512], index: 2, kind: input, shape index: {}]
  %s3 = inlined_call_operand.hbm [shape: f32[1,512], index: 3, kind: input, shape index: {}]
  %s4 = inlined_call_operand.hbm [shape: bf16[512,512], index: 4, kind: input, shape index: {}]
  %s5 = inlined_call_operand.hbm [shape: f32[1,512], index: 5, kind: input, shape index: {}]
  %s6 = inlined_call_operand.hbm [shape: f32[1,256], index: 6, kind: input, shape index: {}]
  %s7 = inlined_call_operand.<no memory space> [shape: f32[1,1], index: 7, kind: input, shape index: {}]
  %s8 = inlined_call_operand.vmem [shape: f32[1024,1], index: 8, kind: output, shape index: {0}]
  %s9 = inlined_call_operand.vmem [shape: f32[2,1,1], index: 9, kind: output, shape index: {1}]
  %s10 = inlined_call_operand.vmem [shape: f32[2,1,1], index: 10, kind: output, shape index: {2}]
  %s11 = inlined_call_operand.hbm [shape: f32[2,1,512], index: 11, kind: output, shape index: {3}]
  %12 = xla_tuple %s8, %s9, %s10, %s11
  %s13 = sld [smem:[#allocation0]]
  $region113: #{tpu_custom_call.1} parent=0
    _
  %s15 = ssub.s32 1, %s13
  %s16 = scalar_select 0, %s15, %s13
  %17 = sst [smem:[#allocation3]] %s0
  %v18 = vstv %s7
  %19 = vst [vmem:[#allocation4] sm:$0x1] %v18
  $region1: #{tpu_custom_call.1} parent=0
    #allocation5 [shape = 'u8[2097152]{0}', space=vmem, size = 0x200000, scoped, tag = 'input window, operand 1']
    #allocation6 [shape = 's32[2]{0}', space=sflag, size = 0x8, scoped, tag = 'scoped memory for tpu_custom_call.1']
    #allocation7 [shape = 's32[2]{0}', space=sflag, size = 0x8, scoped, tag = 'scoped memory for tpu_custom_call.1']
    #allocation8 [shape = 'u8[1048576]{0}', space=vmem, size = 0x100000, scoped, tag = 'input window, operand 2, single buffered']
    #allocation9 [shape = 's32[1]{0}', space=sflag, size = 0x4, scoped, tag = 'scoped memory for tpu_custom_call.1']
    #allocation10 [shape = 'u8[2048]{0}', space=vmem, size = 0x800, scoped, tag = 'input window, operand 3, single buffered']
    #allocation11 [shape = 'u8[524288]{0}', space=vmem, size = 0x80000, scoped, tag = 'input window, operand 4, single buffered']
    #allocation12 [shape = 's32[1]{0}', space=sflag, size = 0x4, scoped, tag = 'scoped memory for tpu_custom_call.1']
    #allocation13 [shape = 'u8[2048]{0}', space=vmem, size = 0x800, scoped, tag = 'input window, operand 5, single buffered']
    #allocation14 [shape = 'u8[1024]{0}', space=vmem, size = 0x400, scoped, tag = 'input window, operand 6, single buffered']
    #allocation15 [shape = 's32[1]{0}', space=sflag, size = 0x4, scoped, tag = 'scoped memory for tpu_custom_call.1']
    #allocation16 [shape = 'u8[4096]{0}', space=vmem, size = 0x1000, scoped, tag = 'output window, operand 3']
    %20 = vsyncpa [#allocation6], 0
    %s21 = scalar_lea.sflag [#allocation6], 1
    %22 = vsyncpa %s21, 0
    %23 = vsyncpa [#allocation9], 0
    %24 = vsyncpa [#allocation12], 0
    %25 = vsyncpa [#allocation15], 0
    %26 = vsyncpa [#allocation7], 0
    %s27 = scalar_lea.sflag [#allocation7], 1
    %28 = vsyncpa %s27, 0
    loop: start=0, step=1, limit=6
    $region2: #{tpu_custom_call.1} parent=1 // loop_pre_header
      _
    $region3: #{tpu_custom_call.1} parent=1 // loop_header
      %s30 = sphi 0, %s34
      %p31 = scmp.ge.s32.totalorder %s30, 6
      %s37 = sphi 0, %s49
      %s38 = sphi 0, %s45
      %s39 = sphi 0, %s37
      %s40 = sphi 0, %s38
      %s41 = sphi 0, %s39
      %s42 = sphi 0, %s40
      %s56 = sphi 0, %s58
      %s59 = sphi 0, %s56
      %s60 = sphi 0, %s59
      %s76 = sphi 0, %s60
      %s80 = sphi 0, %s80
      %s82 = sphi 0, %s80
      %s83 = sphi 0, %s82
      %s97 = sphi 0, %s83
      %s101 = sphi 0, %s101
      %s103 = sphi 0, %s101
      %s104 = sphi 0, %s103
      %s118 = sphi 0, %s104
      %s122 = sphi 0, %s122
      %s124 = sphi 0, %s122
      %s125 = sphi 0, %s124
      %s139 = sphi 0, %s125
      %s143 = sphi 0, %s143
      %s145 = sphi 0, %s143
      %s146 = sphi 0, %s145
      %s160 = sphi 0, %s146
      %s164 = sphi 0, %s164
      %s166 = sphi 0, %s164
      %s167 = sphi 0, %s166
      %s181 = sphi 0, %s167
      %s185 = sphi 0, %s185
      %s187 = sphi 0, %s185
      %s188 = sphi 0, %s187
      %s202 = sphi 0, %s188
      %s212 = sphi 0, %s214
      %s215 = sphi 0, %s212
      %s216 = sphi 0, %s215
      %s232 = sphi 0, %s216
      %s238 = sphi 0, %s240
      %s241 = sphi 0, %s238
      %s242 = sphi 0, %s241
      %s258 = sphi 0, %s242
      %s264 = sphi 0, %s266
      %s267 = sphi 0, %s264
      %s268 = sphi 0, %s267
      %s284 = sphi 0, %s268
      %s290 = sphi 0, %s292
      %s293 = sphi 0, %s290
      %s294 = sphi 0, %s293
      %s310 = sphi 0, %s294
    $region4: #{tpu_custom_call.1} parent=1 // loop_header_branch
      %33 = sbr.rel (%p31) target = $region8
    $region5: #{tpu_custom_call.1} parent=1 // loop_body
      %s35 = ssub.s32 %s30, 1
      %s36 = ssub.s32 %s30, 2
      %s43 = sadd.s32 1, %s38
      %p44 = scmp.ge.s32.totalorder %s43, 2
      %s45 = scalar_select %p44, 0, %s43
      %s46 = sadd.s32 1, %s37
      %s47 = scalar_select %p44, %s46, %s37
      %p48 = scmp.ge.s32.totalorder %s47, 2
      %s49 = scalar_select %p48, 0, %s47
      %s50 = smul.u32 %s37, 2
      %s51 = sadd.s32 %s50, %s38
      %s52 = smul.u32 %s49, 2
      %s53 = sadd.s32 %s52, %s45
      %s54 = ssub.s32 %s51, %s53
      %p55 = scmp.eq.s32.totalorder %s54, 0
      %s57 = sadd.s32 %s56, 1
      %s58 = scalar_select %p55, %s56, %s57
      %p61 = pneg %p55
      %p62 = scmp.eq.s32.totalorder %s30, 3
      %p63 = por %p61, %p62
      %p64 = scmp.ne.s32.totalorder %s56, %s59
      %p65 = scmp.eq.s32.totalorder %s30, 0
      %p66 = por %p64, %p65
      %p67 = scmp.ne.s32.totalorder %s56, %s59
      %p68 = scmp.eq.s32.totalorder %s35, 3
      %p69 = por %p67, %p68
      %p70 = scmp.ne.s32.totalorder %s59, %s60
      %p71 = scmp.eq.s32.totalorder %s35, 0
      %p72 = por %p70, %p71
      %p73 = scmp.ne.s32.totalorder %s59, %s60
      %p74 = scmp.eq.s32.totalorder %s36, 3
      %p75 = por %p73, %p74
      %p77 = scmp.ne.s32.totalorder %s60, %s76
      %p78 = scmp.eq.s32.totalorder %s36, 0
      %p79 = por %p77, %p78
      %s81 = sadd.s32 %s80, 1
      %p84 = scmp.eq.s32.totalorder %s30, 3
      %p85 = scmp.ne.s32.totalorder %s80, %s82
      %p86 = scmp.eq.s32.totalorder %s30, 0
      %p87 = por %p85, %p86
      %p88 = scmp.ne.s32.totalorder %s80, %s82
      %p89 = scmp.eq.s32.totalorder %s35, 3
      %p90 = por %p88, %p89
      %p91 = scmp.ne.s32.totalorder %s82, %s83
      %p92 = scmp.eq.s32.totalorder %s35, 0
      %p93 = por %p91, %p92
      %p94 = scmp.ne.s32.totalorder %s82, %s83
      %p95 = scmp.eq.s32.totalorder %s36, 3
      %p96 = por %p94, %p95
      %p98 = scmp.ne.s32.totalorder %s83, %s97
      %p99 = scmp.eq.s32.totalorder %s36, 0
      %p100 = por %p98, %p99
      %s102 = sadd.s32 %s101, 1
      %p105 = scmp.eq.s32.totalorder %s30, 3
      %p106 = scmp.ne.s32.totalorder %s101, %s103
      %p107 = scmp.eq.s32.totalorder %s30, 0
      %p108 = por %p106, %p107
      %p109 = scmp.ne.s32.totalorder %s101, %s103
      %p110 = scmp.eq.s32.totalorder %s35, 3
      %p111 = por %p109, %p110
      %p112 = scmp.ne.s32.totalorder %s103, %s104
      %p113 = scmp.eq.s32.totalorder %s35, 0
      %p114 = por %p112, %p113
      %p115 = scmp.ne.s32.totalorder %s103, %s104
      %p116 = scmp.eq.s32.totalorder %s36, 3
      %p117 = por %p115, %p116
      %p119 = scmp.ne.s32.totalorder %s104, %s118
      %p120 = scmp.eq.s32.totalorder %s36, 0
      %p121 = por %p119, %p120
      %s123 = sadd.s32 %s122, 1
      %p126 = scmp.eq.s32.totalorder %s30, 3
      %p127 = scmp.ne.s32.totalorder %s122, %s124
      %p128 = scmp.eq.s32.totalorder %s30, 0
      %p129 = por %p127, %p128
      %p130 = scmp.ne.s32.totalorder %s122, %s124
      %p131 = scmp.eq.s32.totalorder %s35, 3
      %p132 = por %p130, %p131
      %p133 = scmp.ne.s32.totalorder %s124, %s125
      %p134 = scmp.eq.s32.totalorder %s35, 0
      %p135 = por %p133, %p134
      %p136 = scmp.ne.s32.totalorder %s124, %s125
      %p137 = scmp.eq.s32.totalorder %s36, 3
      %p138 = por %p136, %p137
      %p140 = scmp.ne.s32.totalorder %s125, %s139
      %p141 = scmp.eq.s32.totalorder %s36, 0
      %p142 = por %p140, %p141
      %s144 = sadd.s32 %s143, 1
      %p147 = scmp.eq.s32.totalorder %s30, 3
      %p148 = scmp.ne.s32.totalorder %s143, %s145
      %p149 = scmp.eq.s32.totalorder %s30, 0
      %p150 = por %p148, %p149
      %p151 = scmp.ne.s32.totalorder %s143, %s145
      %p152 = scmp.eq.s32.totalorder %s35, 3
      %p153 = por %p151, %p152
      %p154 = scmp.ne.s32.totalorder %s145, %s146
      %p155 = scmp.eq.s32.totalorder %s35, 0
      %p156 = por %p154, %p155
      %p157 = scmp.ne.s32.totalorder %s145, %s146
      %p158 = scmp.eq.s32.totalorder %s36, 3
      %p159 = por %p157, %p158
      %p161 = scmp.ne.s32.totalorder %s146, %s160
      %p162 = scmp.eq.s32.totalorder %s36, 0
      %p163 = por %p161, %p162
      %s165 = sadd.s32 %s164, 1
      %p168 = scmp.eq.s32.totalorder %s30, 3
      %p169 = scmp.ne.s32.totalorder %s164, %s166
      %p170 = scmp.eq.s32.totalorder %s30, 0
      %p171 = por %p169, %p170
      %p172 = scmp.ne.s32.totalorder %s164, %s166
      %p173 = scmp.eq.s32.totalorder %s35, 3
      %p174 = por %p172, %p173
      %p175 = scmp.ne.s32.totalorder %s166, %s167
      %p176 = scmp.eq.s32.totalorder %s35, 0
      %p177 = por %p175, %p176
      %p178 = scmp.ne.s32.totalorder %s166, %s167
      %p179 = scmp.eq.s32.totalorder %s36, 3
      %p180 = por %p178, %p179
      %p182 = scmp.ne.s32.totalorder %s167, %s181
      %p183 = scmp.eq.s32.totalorder %s36, 0
      %p184 = por %p182, %p183
      %s186 = sadd.s32 %s185, 1
      %p189 = scmp.eq.s32.totalorder %s30, 3
      %p190 = scmp.ne.s32.totalorder %s185, %s187
      %p191 = scmp.eq.s32.totalorder %s30, 0
      %p192 = por %p190, %p191
      %p193 = scmp.ne.s32.totalorder %s185, %s187
      %p194 = scmp.eq.s32.totalorder %s35, 3
      %p195 = por %p193, %p194
      %p196 = scmp.ne.s32.totalorder %s187, %s188
      %p197 = scmp.eq.s32.totalorder %s35, 0
      %p198 = por %p196, %p197
      %p199 = scmp.ne.s32.totalorder %s187, %s188
      %p200 = scmp.eq.s32.totalorder %s36, 3
      %p201 = por %p199, %p200
      %p203 = scmp.ne.s32.totalorder %s188, %s202
      %p204 = scmp.eq.s32.totalorder %s36, 0
      %p205 = por %p203, %p204
      %s206 = smul.u32 %s37, 2
      %s207 = sadd.s32 %s206, %s38
      %s208 = smul.u32 %s49, 2
      %s209 = sadd.s32 %s208, %s45
      %s210 = ssub.s32 %s207, %s209
      %p211 = scmp.eq.s32.totalorder %s210, 0
      %s213 = sadd.s32 %s212, 1
      %s214 = scalar_select %p211, %s212, %s213
      %p217 = pneg %p211
      %p218 = scmp.eq.s32.totalorder %s30, 3
      %p219 = por %p217, %p218
      %p220 = scmp.ne.s32.totalorder %s212, %s215
      %p221 = scmp.eq.s32.totalorder %s30, 0
      %p222 = por %p220, %p221
      %p223 = scmp.ne.s32.totalorder %s212, %s215
      %p224 = scmp.eq.s32.totalorder %s35, 3
      %p225 = por %p223, %p224
      %p226 = scmp.ne.s32.totalorder %s215, %s216
      %p227 = scmp.eq.s32.totalorder %s35, 0
      %p228 = por %p226, %p227
      %p229 = scmp.ne.s32.totalorder %s215, %s216
      %p230 = scmp.eq.s32.totalorder %s36, 3
      %p231 = por %p229, %p230
      %p233 = scmp.ne.s32.totalorder %s216, %s232
      %p234 = scmp.eq.s32.totalorder %s36, 0
      %p235 = por %p233, %p234
      %s236 = ssub.s32 %s37, %s49
      %p237 = scmp.eq.s32.totalorder %s236, 0
      %s239 = sadd.s32 %s238, 1
      %s240 = scalar_select %p237, %s238, %s239
      %p243 = pneg %p237
      %p244 = scmp.eq.s32.totalorder %s30, 3
      %p245 = por %p243, %p244
      %p246 = scmp.ne.s32.totalorder %s238, %s241
      %p247 = scmp.eq.s32.totalorder %s30, 0
      %p248 = por %p246, %p247
      %p249 = scmp.ne.s32.totalorder %s238, %s241
      %p250 = scmp.eq.s32.totalorder %s35, 3
      %p251 = por %p249, %p250
      %p252 = scmp.ne.s32.totalorder %s241, %s242
      %p253 = scmp.eq.s32.totalorder %s35, 0
      %p254 = por %p252, %p253
      %p255 = scmp.ne.s32.totalorder %s241, %s242
      %p256 = scmp.eq.s32.totalorder %s36, 3
      %p257 = por %p255, %p256
      %p259 = scmp.ne.s32.totalorder %s242, %s258
      %p260 = scmp.eq.s32.totalorder %s36, 0
      %p261 = por %p259, %p260
      %s262 = ssub.s32 %s37, %s49
      %p263 = scmp.eq.s32.totalorder %s262, 0
      %s265 = sadd.s32 %s264, 1
      %s266 = scalar_select %p263, %s264, %s265
      %p269 = pneg %p263
      %p270 = scmp.eq.s32.totalorder %s30, 3
      %p271 = por %p269, %p270
      %p272 = scmp.ne.s32.totalorder %s264, %s267
      %p273 = scmp.eq.s32.totalorder %s30, 0
      %p274 = por %p272, %p273
      %p275 = scmp.ne.s32.totalorder %s264, %s267
      %p276 = scmp.eq.s32.totalorder %s35, 3
      %p277 = por %p275, %p276
      %p278 = scmp.ne.s32.totalorder %s267, %s268
      %p279 = scmp.eq.s32.totalorder %s35, 0
      %p280 = por %p278, %p279
      %p281 = scmp.ne.s32.totalorder %s267, %s268
      %p282 = scmp.eq.s32.totalorder %s36, 3
      %p283 = por %p281, %p282
      %p285 = scmp.ne.s32.totalorder %s268, %s284
      %p286 = scmp.eq.s32.totalorder %s36, 0
      %p287 = por %p285, %p286
      %s288 = ssub.s32 %s37, %s49
      %p289 = scmp.eq.s32.totalorder %s288, 0
      %s291 = sadd.s32 %s290, 1
      %s292 = scalar_select %p289, %s290, %s291
      %p295 = pneg %p289
      %p296 = scmp.eq.s32.totalorder %s30, 3
      %p297 = por %p295, %p296
      %p298 = scmp.ne.s32.totalorder %s290, %s293
      %p299 = scmp.eq.s32.totalorder %s30, 0
      %p300 = por %p298, %p299
      %p301 = scmp.ne.s32.totalorder %s290, %s293
      %p302 = scmp.eq.s32.totalorder %s35, 3
      %p303 = por %p301, %p302
      %p304 = scmp.ne.s32.totalorder %s293, %s294
      %p305 = scmp.eq.s32.totalorder %s35, 0
      %p306 = por %p304, %p305
      %p307 = scmp.ne.s32.totalorder %s293, %s294
      %p308 = scmp.eq.s32.totalorder %s36, 3
      %p309 = por %p307, %p308
      %p311 = scmp.ne.s32.totalorder %s294, %s310
      %p312 = scmp.eq.s32.totalorder %s36, 0
      %p313 = por %p311, %p312
      %p314 = scmp.le.s32.totalorder 1, %s30
      %p315 = scmp.lt.s32.totalorder %s30, 5
      %p316 = pnand %p314, %p315
      %p317 = pneg %p316
      // Predicated region
      $region9: #{tpu_custom_call.1} parent=5 // pred_check
        _
      $region10: #{tpu_custom_call.1} parent=5 // pred_check_branch
        %319 = sbr.rel (%p316) target = $region12
      $region11: #{tpu_custom_call.1} parent=5 // pred_region
        %s320 = ssub.s32 %s30, 1
        // Predicated region
        $region13: #{tpu_custom_call.1} parent=11 // pred_check
          %p321 = pneg %p93
        $region14: #{tpu_custom_call.1} parent=11 // pred_check_branch
          %323 = sbr.rel (%p321) target = $region16
        $region15: #{tpu_custom_call.1} parent=11 // pred_region
          %s325 = ssub.s32 32768, 32768
          %326 = vsyncadd [#allocation9], %s325
          %s327 = sshll.u32 [#allocation8], 4
          %s328 = int_to_ptr.vmem [resolvable:$true] %s327
          %333 = dma.hbm_to_vmem [thread:$0]  %s2, 32768, %s328, [#allocation9], 256, 256, 16
        $region16: #{tpu_custom_call.1} parent=11 // pred_fallthru
          _
        // Predicated region
        $region17: #{tpu_custom_call.1} parent=11 // pred_check
          %p334 = pneg %p114
        $region18: #{tpu_custom_call.1} parent=11 // pred_check_branch
          %336 = sbr.rel (%p334) target = $region20
        $region19: #{tpu_custom_call.1} parent=11 // pred_region
          %s338 = ssub.s32 64, 64
          %339 = vsyncadd [#allocation9], %s338
          %s341 = sshll.u32 [#allocation10], 4
          %s342 = int_to_ptr.vmem [resolvable:$true] %s341
          %344 = dma.hbm_to_vmem [thread:$0]  %s3, 64, %s342, [#allocation9]
        $region20: #{tpu_custom_call.1} parent=11 // pred_fallthru
          _
        // Predicated region
        $region21: #{tpu_custom_call.1} parent=11 // pred_check
          %p345 = pneg %p135
        $region22: #{tpu_custom_call.1} parent=11 // pred_check_branch
          %347 = sbr.rel (%p345) target = $region24
        $region23: #{tpu_custom_call.1} parent=11 // pred_region
          %s349 = ssub.s32 16384, 16384
          %350 = vsyncadd [#allocation12], %s349
          %s351 = sshll.u32 [#allocation11], 4
          %s352 = int_to_ptr.vmem [resolvable:$true] %s351
          %357 = dma.hbm_to_vmem [thread:$0]  %s4, 16384, %s352, [#allocation12], 256, 256, 16
        $region24: #{tpu_custom_call.1} parent=11 // pred_fallthru
          _
        // Predicated region
        $region25: #{tpu_custom_call.1} parent=11 // pred_check
          %p358 = pneg %p156
        $region26: #{tpu_custom_call.1} parent=11 // pred_check_branch
          %360 = sbr.rel (%p358) target = $region28
        $region27: #{tpu_custom_call.1} parent=11 // pred_region
          %s362 = ssub.s32 64, 64
          %363 = vsyncadd [#allocation12], %s362
          %s365 = sshll.u32 [#allocation13], 4
          %s366 = int_to_ptr.vmem [resolvable:$true] %s365
          %368 = dma.hbm_to_vmem [thread:$0]  %s5, 64, %s366, [#allocation12]
        $region28: #{tpu_custom_call.1} parent=11 // pred_fallthru
          _
        // Predicated region
        $region29: #{tpu_custom_call.1} parent=11 // pred_check
          %p369 = pneg %p177
        $region30: #{tpu_custom_call.1} parent=11 // pred_check_branch
          %371 = sbr.rel (%p369) target = $region32
        $region31: #{tpu_custom_call.1} parent=11 // pred_region
          %s373 = ssub.s32 32, 32
          %374 = vsyncadd [#allocation15], %s373
          %s376 = sshll.u32 [#allocation14], 4
          %s377 = int_to_ptr.vmem [resolvable:$true] %s376
          %379 = dma.hbm_to_vmem [thread:$0]  %s6, 32, %s377, [#allocation15]
        $region32: #{tpu_custom_call.1} parent=11 // pred_fallthru
          _
        // Predicated region
        $region33: #{tpu_custom_call.1} parent=11 // pred_check
          %p380 = pneg %p198
        $region34: #{tpu_custom_call.1} parent=11 // pred_check_branch
          %382 = sbr.rel (%p380) target = $region36
        $region35: #{tpu_custom_call.1} parent=11 // pred_region
          _
        $region36: #{tpu_custom_call.1} parent=11 // pred_fallthru
          _
      $region12: #{tpu_custom_call.1} parent=5 // pred_fallthru
        _
      %p383 = scmp.lt.s32.totalorder %s30, 4
      // Predicated region
      $region37: #{tpu_custom_call.1} parent=5 // pred_check
        %p384 = pneg %p383
      $region38: #{tpu_custom_call.1} parent=5 // pred_check_branch
        %386 = sbr.rel (%p384) target = $region40
      $region39: #{tpu_custom_call.1} parent=5 // pred_region
        // Predicated region
        $region41: #{tpu_custom_call.1} parent=39 // pred_check
          %p387 = pneg %p66
        $region42: #{tpu_custom_call.1} parent=39 // pred_check_branch
          %389 = sbr.rel (%p387) target = $region44
        $region43: #{tpu_custom_call.1} parent=39 // pred_region
          %s390 = sand.u32 %s56, 1
          %s391 = scalar_lea.sflag [#allocation6], %s390
          %s392 = sand.u32 %s56, 1
          %s393 = smul.addr %s392, 2048
          %s394 = scalar_lea.vmem [#allocation5], %s393
          %s395 = smul.u32 %s37, 2
          %s396 = sadd.s32 %s395, %s38
          %s397 = smul.u32 32, %s396
          %s399 = ssub.s32 32768, 32768
          %400 = vsyncadd %s391, %s399
          %s401 = smul.addr %s397, 8
          %s402 = smul.addr %s401, 128
          %s403 = scalar_lea.hbm %s1, %s402
          %s404 = sshll.u32 %s394, 4
          %s405 = int_to_ptr.vmem [resolvable:$true] %s404
          %410 = dma.hbm_to_vmem [thread:$0]  %s403, 32768, %s405, %s391, 1024, 1024, 64
        $region44: #{tpu_custom_call.1} parent=39 // pred_fallthru
          _
      $region40: #{tpu_custom_call.1} parent=5 // pred_fallthru
        _
      %p411 = scmp.le.s32.totalorder 1, %s30
      %p412 = scmp.lt.s32.totalorder %s30, 5
      %p413 = pnand %p411, %p412
      %p414 = pneg %p413
      // Predicated region
      $region45: #{tpu_custom_call.1} parent=5 // pred_check
        _
      $region46: #{tpu_custom_call.1} parent=5 // pred_check_branch
        %416 = sbr.rel (%p413) target = $region48
      $region47: #{tpu_custom_call.1} parent=5 // pred_region
        %s417 = ssub.s32 %s30, 1
        %s418 = sand.u32 %s59, 1
        %s419 = scalar_lea.sflag [#allocation6], %s418
        %s420 = sand.u32 %s59, 1
        %s421 = smul.addr %s420, 2048
        %s422 = scalar_lea.vmem [#allocation5], %s421
        // Predicated region
        $region49: #{tpu_custom_call.1} parent=47 // pred_check
          %p423 = pneg %p72
        $region50: #{tpu_custom_call.1} parent=47 // pred_check_branch
          %425 = sbr.rel (%p423) target = $region52
        $region51: #{tpu_custom_call.1} parent=47 // pred_region
          %426 = dma.done %s419, 32768
        $region52: #{tpu_custom_call.1} parent=47 // pred_fallthru
          _
        // Predicated region
        $region53: #{tpu_custom_call.1} parent=47 // pred_check
          %p427 = pneg %p93
        $region54: #{tpu_custom_call.1} parent=47 // pred_check_branch
          %429 = sbr.rel (%p427) target = $region56
        $region55: #{tpu_custom_call.1} parent=47 // pred_region
          %430 = dma.done [#allocation9], 32768
        $region56: #{tpu_custom_call.1} parent=47 // pred_fallthru
          _
        // Predicated region
        $region57: #{tpu_custom_call.1} parent=47 // pred_check
          %p431 = pneg %p114
        $region58: #{tpu_custom_call.1} parent=47 // pred_check_branch
          %433 = sbr.rel (%p431) target = $region60
        $region59: #{tpu_custom_call.1} parent=47 // pred_region
          %434 = dma.done [#allocation9], 64
        $region60: #{tpu_custom_call.1} parent=47 // pred_fallthru
          _
        // Predicated region
        $region61: #{tpu_custom_call.1} parent=47 // pred_check
          %p435 = pneg %p135
        $region62: #{tpu_custom_call.1} parent=47 // pred_check_branch
          %437 = sbr.rel (%p435) target = $region64
        $region63: #{tpu_custom_call.1} parent=47 // pred_region
          %438 = dma.done [#allocation12], 16384
        $region64: #{tpu_custom_call.1} parent=47 // pred_fallthru
          _
        // Predicated region
        $region65: #{tpu_custom_call.1} parent=47 // pred_check
          %p439 = pneg %p156
        $region66: #{tpu_custom_call.1} parent=47 // pred_check_branch
          %441 = sbr.rel (%p439) target = $region68
        $region67: #{tpu_custom_call.1} parent=47 // pred_region
          %442 = dma.done [#allocation12], 64
        $region68: #{tpu_custom_call.1} parent=47 // pred_fallthru
          _
        // Predicated region
        $region69: #{tpu_custom_call.1} parent=47 // pred_check
          %p443 = pneg %p177
        $region70: #{tpu_custom_call.1} parent=47 // pred_check_branch
          %445 = sbr.rel (%p443) target = $region72
        $region71: #{tpu_custom_call.1} parent=47 // pred_region
          %446 = dma.done [#allocation15], 32
        $region72: #{tpu_custom_call.1} parent=47 // pred_fallthru
          _
        %s447 = sand.u32 %s59, 1
        %s448 = scalar_lea.sflag [#allocation6], %s447
        %s449 = sand.u32 %s59, 1
        %s450 = smul.addr %s449, 2048
        %s451 = scalar_lea.vmem [#allocation5], %s450
        %p452 = pneg %p72
        %p453 = pneg %p69
        %p454 = pneg %p93
        %p455 = pneg %p90
        %p456 = pneg %p114
        %p457 = pneg %p111
        %p458 = pneg %p135
        %p459 = pneg %p132
        %p460 = pneg %p156
        %p461 = pneg %p153
        %p462 = pneg %p177
        %p463 = pneg %p174
        %p464 = pneg %p198
        %p465 = pneg %p195
        %p466 = pneg %p228
        %p467 = pneg %p225
        %s468 = smul.u32 %s39, 2
        %s469 = sadd.s32 %s468, %s40
        %s470 = smul.u32 32, %s469
        %p471 = scmp.lt.s32.totalorder %s470, 127
        %s472 = scalar_select %p471, %s470, 127
        %s473 = smul.addr %s472, 8
        %s474 = scalar_lea.vmem %s8, %s473
        %p475 = pneg %p254
        %p476 = pneg %p251
        %p477 = scmp.lt.s32.totalorder %s39, 1
        %s478 = scalar_select %p477, %s39, 1
        %s479 = scalar_lea.vmem %s9, %s478
        %p480 = pneg %p280
        %p481 = pneg %p277
        %p482 = scmp.lt.s32.totalorder %s39, 1
        %s483 = scalar_select %p482, %s39, 1
        %s484 = scalar_lea.vmem %s10, %s483
        %p485 = pneg %p306
        %p486 = pneg %p303
        %s487 = sand.u32 %s293, 1
        %s488 = scalar_lea.sflag [#allocation7], %s487
        %s489 = sand.u32 %s293, 1
        %s490 = smul.addr %s489, 4
        %s491 = scalar_lea.vmem [#allocation16], %s490
        %s492 = smul.u32 %s39, 2
        %s493 = sadd.s32 %s492, %s40
        %s494 = smul.u32 32, %s493
        %s495 = smul.u32 %s39, 2
        %s496 = sadd.s32 %s495, %s40
        %s497 = smul.u32 32, %s496
        %p498 = scmp.lt.s32.totalorder %s497, 127
        %s499 = scalar_select %p498, %s497, 127
        %s500 = smul.addr %s499, 8
        %s501 = scalar_lea.vmem %s8, %s500
        %s502 = smul.u32 %s39, 2
        %s503 = sadd.s32 %s502, %s40
        %s504 = smul.u32 32, %s503
        %p505 = scmp.lt.s32.totalorder %s39, 1
        %s506 = scalar_select %p505, %s39, 1
        %s507 = scalar_lea.vmem %s9, %s506
        %p508 = scmp.lt.s32.totalorder %s39, 1
        %s509 = scalar_select %p508, %s39, 1
        %s510 = scalar_lea.vmem %s10, %s509
        %p511 = scmp.eq.s32.totalorder %s40, 0
        // Predicated region
        $region73: #{tpu_custom_call.1} parent=47 // pred_check
          %p512 = pneg %p511
        $region74: #{tpu_custom_call.1} parent=47 // pred_check_branch
          %514 = sbr.rel (%p512) target = $region76
        $region75: #{tpu_custom_call.1} parent=47 // pred_region
          %vm515 = vcmask 0
          %516 = vst.msk [vmem:[%s507] sm:$0x1] %vm515, -1e+30
          %517 = vst.msk [vmem:[%s510] sm:$0x1] %vm515, 0.0
          %v518 = vlaneseq
          %vm519 = vcmp.ge.s32.totalorder %v518, 0
          %vm520 = vcmp.lt.s32.totalorder %v518, 512
          %vm521 = vmand %vm519, %vm520
          %522 = vst.msk [vmem:[%s491] sm:$0xf] %vm521, 0.0
        $region76: #{tpu_custom_call.1} parent=47 // pred_fallthru
          _
        %v523 = vld [vmem:[%s422] sm:$0xff]
        %v524 = vld [vmem:[%s422 + $0x8] sm:$0xff]
        %v525 = vld [vmem:[%s422 + $0x10] sm:$0xff]
        %v526 = vld [vmem:[%s422 + $0x18] sm:$0xff]
        %v527 = vld [vmem:[%s422 + $0x20] sm:$0xff]
        %v528 = vld [vmem:[%s422 + $0x28] sm:$0xff]
        %v529 = vld [vmem:[%s422 + $0x30] sm:$0xff]
        %v530 = vld [vmem:[%s422 + $0x38] sm:$0xff]
        %v531 = vld [vmem:[%s422 + $0x40] sm:$0xff]
        %v532 = vld [vmem:[%s422 + $0x48] sm:$0xff]
        %v533 = vld [vmem:[%s422 + $0x50] sm:$0xff]
        %v534 = vld [vmem:[%s422 + $0x58] sm:$0xff]
        %v535 = vld [vmem:[%s422 + $0x60] sm:$0xff]
        %v536 = vld [vmem:[%s422 + $0x68] sm:$0xff]
        %v537 = vld [vmem:[%s422 + $0x70] sm:$0xff]
        %v538 = vld [vmem:[%s422 + $0x78] sm:$0xff]
        %v539 = vld [vmem:[%s422 + $0x80] sm:$0xff]
        %v540 = vld [vmem:[%s422 + $0x88] sm:$0xff]
        %v541 = vld [vmem:[%s422 + $0x90] sm:$0xff]
        %v542 = vld [vmem:[%s422 + $0x98] sm:$0xff]
        %v543 = vld [vmem:[%s422 + $0xa0] sm:$0xff]
        %v544 = vld [vmem:[%s422 + $0xa8] sm:$0xff]
        %v545 = vld [vmem:[%s422 + $0xb0] sm:$0xff]
        %v546 = vld [vmem:[%s422 + $0xb8] sm:$0xff]
        %v547 = vld [vmem:[%s422 + $0xc0] sm:$0xff]
        %v548 = vld [vmem:[%s422 + $0xc8] sm:$0xff]
        %v549 = vld [vmem:[%s422 + $0xd0] sm:$0xff]
        %v550 = vld [vmem:[%s422 + $0xd8] sm:$0xff]
        %v551 = vld [vmem:[%s422 + $0xe0] sm:$0xff]
        %v552 = vld [vmem:[%s422 + $0xe8] sm:$0xff]
        %v553 = vld [vmem:[%s422 + $0xf0] sm:$0xff]
        %v554 = vld [vmem:[%s422 + $0xf8] sm:$0xff]
        %v555 = vld [vmem:[%s422 + $0x100] sm:$0xff]
        %v556 = vld [vmem:[%s422 + $0x108] sm:$0xff]
        %v557 = vld [vmem:[%s422 + $0x110] sm:$0xff]
        %v558 = vld [vmem:[%s422 + $0x118] sm:$0xff]
        %v559 = vld [vmem:[%s422 + $0x120] sm:$0xff]
        %v560 = vld [vmem:[%s422 + $0x128] sm:$0xff]
        %v561 = vld [vmem:[%s422 + $0x130] sm:$0xff]
        %v562 = vld [vmem:[%s422 + $0x138] sm:$0xff]
        %v563 = vld [vmem:[%s422 + $0x140] sm:$0xff]
        %v564 = vld [vmem:[%s422 + $0x148] sm:$0xff]
        %v565 = vld [vmem:[%s422 + $0x150] sm:$0xff]
        %v566 = vld [vmem:[%s422 + $0x158] sm:$0xff]
        %v567 = vld [vmem:[%s422 + $0x160] sm:$0xff]
        %v568 = vld [vmem:[%s422 + $0x168] sm:$0xff]
        %v569 = vld [vmem:[%s422 + $0x170] sm:$0xff]
        %v570 = vld [vmem:[%s422 + $0x178] sm:$0xff]
        %v571 = vld [vmem:[%s422 + $0x180] sm:$0xff]
        %v572 = vld [vmem:[%s422 + $0x188] sm:$0xff]
        %v573 = vld [vmem:[%s422 + $0x190] sm:$0xff]
        %v574 = vld [vmem:[%s422 + $0x198] sm:$0xff]
        %v575 = vld [vmem:[%s422 + $0x1a0] sm:$0xff]
        %v576 = vld [vmem:[%s422 + $0x1a8] sm:$0xff]
        %v577 = vld [vmem:[%s422 + $0x1b0] sm:$0xff]
        %v578 = vld [vmem:[%s422 + $0x1b8] sm:$0xff]
        %v579 = vld [vmem:[%s422 + $0x1c0] sm:$0xff]
        %v580 = vld [vmem:[%s422 + $0x1c8] sm:$0xff]
        %v581 = vld [vmem:[%s422 + $0x1d0] sm:$0xff]
        %v582 = vld [vmem:[%s422 + $0x1d8] sm:$0xff]
        %v583 = vld [vmem:[%s422 + $0x1e0] sm:$0xff]
        %v584 = vld [vmem:[%s422 + $0x1e8] sm:$0xff]
        %v585 = vld [vmem:[%s422 + $0x1f0] sm:$0xff]
        %v586 = vld [vmem:[%s422 + $0x1f8] sm:$0xff]
        %v587 = vld [vmem:[%s422 + $0x200] sm:$0xff]
        %v588 = vld [vmem:[%s422 + $0x208] sm:$0xff]
        %v589 = vld [vmem:[%s422 + $0x210] sm:$0xff]
        %v590 = vld [vmem:[%s422 + $0x218] sm:$0xff]
        %v591 = vld [vmem:[%s422 + $0x220] sm:$0xff]
        %v592 = vld [vmem:[%s422 + $0x228] sm:$0xff]
        %v593 = vld [vmem:[%s422 + $0x230] sm:$0xff]
        %v594 = vld [vmem:[%s422 + $0x238] sm:$0xff]
        %v595 = vld [vmem:[%s422 + $0x240] sm:$0xff]
        %v596 = vld [vmem:[%s422 + $0x248] sm:$0xff]
        %v597 = vld [vmem:[%s422 + $0x250] sm:$0xff]
        %v598 = vld [vmem:[%s422 + $0x258] sm:$0xff]
        %v599 = vld [vmem:[%s422 + $0x260] sm:$0xff]
        %v600 = vld [vmem:[%s422 + $0x268] sm:$0xff]
        %v601 = vld [vmem:[%s422 + $0x270] sm:$0xff]
        %v602 = vld [vmem:[%s422 + $0x278] sm:$0xff]
        %v603 = vld [vmem:[%s422 + $0x280] sm:$0xff]
        %v604 = vld [vmem:[%s422 + $0x288] sm:$0xff]
        %v605 = vld [vmem:[%s422 + $0x290] sm:$0xff]
        %v606 = vld [vmem:[%s422 + $0x298] sm:$0xff]
        %v607 = vld [vmem:[%s422 + $0x2a0] sm:$0xff]
        %v608 = vld [vmem:[%s422 + $0x2a8] sm:$0xff]
        %v609 = vld [vmem:[%s422 + $0x2b0] sm:$0xff]
        %v610 = vld [vmem:[%s422 + $0x2b8] sm:$0xff]
        %v611 = vld [vmem:[%s422 + $0x2c0] sm:$0xff]
        %v612 = vld [vmem:[%s422 + $0x2c8] sm:$0xff]
        %v613 = vld [vmem:[%s422 + $0x2d0] sm:$0xff]
        %v614 = vld [vmem:[%s422 + $0x2d8] sm:$0xff]
        %v615 = vld [vmem:[%s422 + $0x2e0] sm:$0xff]
        %v616 = vld [vmem:[%s422 + $0x2e8] sm:$0xff]
        %v617 = vld [vmem:[%s422 + $0x2f0] sm:$0xff]
        %v618 = vld [vmem:[%s422 + $0x2f8] sm:$0xff]
        %v619 = vld [vmem:[%s422 + $0x300] sm:$0xff]
        %v620 = vld [vmem:[%s422 + $0x308] sm:$0xff]
        %v621 = vld [vmem:[%s422 + $0x310] sm:$0xff]
        %v622 = vld [vmem:[%s422 + $0x318] sm:$0xff]
        %v623 = vld [vmem:[%s422 + $0x320] sm:$0xff]
        %v624 = vld [vmem:[%s422 + $0x328] sm:$0xff]
        %v625 = vld [vmem:[%s422 + $0x330] sm:$0xff]
        %v626 = vld [vmem:[%s422 + $0x338] sm:$0xff]
        %v627 = vld [vmem:[%s422 + $0x340] sm:$0xff]
        %v628 = vld [vmem:[%s422 + $0x348] sm:$0xff]
        %v629 = vld [vmem:[%s422 + $0x350] sm:$0xff]
        %v630 = vld [vmem:[%s422 + $0x358] sm:$0xff]
        %v631 = vld [vmem:[%s422 + $0x360] sm:$0xff]
        %v632 = vld [vmem:[%s422 + $0x368] sm:$0xff]
        %v633 = vld [vmem:[%s422 + $0x370] sm:$0xff]
        %v634 = vld [vmem:[%s422 + $0x378] sm:$0xff]
        %v635 = vld [vmem:[%s422 + $0x380] sm:$0xff]
        %v636 = vld [vmem:[%s422 + $0x388] sm:$0xff]
        %v637 = vld [vmem:[%s422 + $0x390] sm:$0xff]
        %v638 = vld [vmem:[%s422 + $0x398] sm:$0xff]
        %v639 = vld [vmem:[%s422 + $0x3a0] sm:$0xff]
        %v640 = vld [vmem:[%s422 + $0x3a8] sm:$0xff]
        %v641 = vld [vmem:[%s422 + $0x3b0] sm:$0xff]
        %v642 = vld [vmem:[%s422 + $0x3b8] sm:$0xff]
        %v643 = vld [vmem:[%s422 + $0x3c0] sm:$0xff]
        %v644 = vld [vmem:[%s422 + $0x3c8] sm:$0xff]
        %v645 = vld [vmem:[%s422 + $0x3d0] sm:$0xff]
        %v646 = vld [vmem:[%s422 + $0x3d8] sm:$0xff]
        %v647 = vld [vmem:[%s422 + $0x3e0] sm:$0xff]
        %v648 = vld [vmem:[%s422 + $0x3e8] sm:$0xff]
        %v649 = vld [vmem:[%s422 + $0x3f0] sm:$0xff]
        %v650 = vld [vmem:[%s422 + $0x3f8] sm:$0xff]
        %v651 = vld [vmem:[%s422 + $0x400] sm:$0xff]
        %v652 = vld [vmem:[%s422 + $0x408] sm:$0xff]
        %v653 = vld [vmem:[%s422 + $0x410] sm:$0xff]
        %v654 = vld [vmem:[%s422 + $0x418] sm:$0xff]
        %v655 = vld [vmem:[%s422 + $0x420] sm:$0xff]
        %v656 = vld [vmem:[%s422 + $0x428] sm:$0xff]
        %v657 = vld [vmem:[%s422 + $0x430] sm:$0xff]
        %v658 = vld [vmem:[%s422 + $0x438] sm:$0xff]
        %v659 = vld [vmem:[%s422 + $0x440] sm:$0xff]
        %v660 = vld [vmem:[%s422 + $0x448] sm:$0xff]
        %v661 = vld [vmem:[%s422 + $0x450] sm:$0xff]
        %v662 = vld [vmem:[%s422 + $0x458] sm:$0xff]
        %v663 = vld [vmem:[%s422 + $0x460] sm:$0xff]
        %v664 = vld [vmem:[%s422 + $0x468] sm:$0xff]
        %v665 = vld [vmem:[%s422 + $0x470] sm:$0xff]
        %v666 = vld [vmem:[%s422 + $0x478] sm:$0xff]
        %v667 = vld [vmem:[%s422 + $0x480] sm:$0xff]
        %v668 = vld [vmem:[%s422 + $0x488] sm:$0xff]
        %v669 = vld [vmem:[%s422 + $0x490] sm:$0xff]
        %v670 = vld [vmem:[%s422 + $0x498] sm:$0xff]
        %v671 = vld [vmem:[%s422 + $0x4a0] sm:$0xff]
        %v672 = vld [vmem:[%s422 + $0x4a8] sm:$0xff]
        %v673 = vld [vmem:[%s422 + $0x4b0] sm:$0xff]
        %v674 = vld [vmem:[%s422 + $0x4b8] sm:$0xff]
        %v675 = vld [vmem:[%s422 + $0x4c0] sm:$0xff]
        %v676 = vld [vmem:[%s422 + $0x4c8] sm:$0xff]
        %v677 = vld [vmem:[%s422 + $0x4d0] sm:$0xff]
        %v678 = vld [vmem:[%s422 + $0x4d8] sm:$0xff]
        %v679 = vld [vmem:[%s422 + $0x4e0] sm:$0xff]
        %v680 = vld [vmem:[%s422 + $0x4e8] sm:$0xff]
        %v681 = vld [vmem:[%s422 + $0x4f0] sm:$0xff]
        %v682 = vld [vmem:[%s422 + $0x4f8] sm:$0xff]
        %v683 = vld [vmem:[%s422 + $0x500] sm:$0xff]
        %v684 = vld [vmem:[%s422 + $0x508] sm:$0xff]
        %v685 = vld [vmem:[%s422 + $0x510] sm:$0xff]
        %v686 = vld [vmem:[%s422 + $0x518] sm:$0xff]
        %v687 = vld [vmem:[%s422 + $0x520] sm:$0xff]
        %v688 = vld [vmem:[%s422 + $0x528] sm:$0xff]
        %v689 = vld [vmem:[%s422 + $0x530] sm:$0xff]
        %v690 = vld [vmem:[%s422 + $0x538] sm:$0xff]
        %v691 = vld [vmem:[%s422 + $0x540] sm:$0xff]
        %v692 = vld [vmem:[%s422 + $0x548] sm:$0xff]
        %v693 = vld [vmem:[%s422 + $0x550] sm:$0xff]
        %v694 = vld [vmem:[%s422 + $0x558] sm:$0xff]
        %v695 = vld [vmem:[%s422 + $0x560] sm:$0xff]
        %v696 = vld [vmem:[%s422 + $0x568] sm:$0xff]
        %v697 = vld [vmem:[%s422 + $0x570] sm:$0xff]
        %v698 = vld [vmem:[%s422 + $0x578] sm:$0xff]
        %v699 = vld [vmem:[%s422 + $0x580] sm:$0xff]
        %v700 = vld [vmem:[%s422 + $0x588] sm:$0xff]
        %v701 = vld [vmem:[%s422 + $0x590] sm:$0xff]
        %v702 = vld [vmem:[%s422 + $0x598] sm:$0xff]
        %v703 = vld [vmem:[%s422 + $0x5a0] sm:$0xff]
        %v704 = vld [vmem:[%s422 + $0x5a8] sm:$0xff]
        %v705 = vld [vmem:[%s422 + $0x5b0] sm:$0xff]
        %v706 = vld [vmem:[%s422 + $0x5b8] sm:$0xff]
        %v707 = vld [vmem:[%s422 + $0x5c0] sm:$0xff]
        %v708 = vld [vmem:[%s422 + $0x5c8] sm:$0xff]
        %v709 = vld [vmem:[%s422 + $0x5d0] sm:$0xff]
        %v710 = vld [vmem:[%s422 + $0x5d8] sm:$0xff]
        %v711 = vld [vmem:[%s422 + $0x5e0] sm:$0xff]
        %v712 = vld [vmem:[%s422 + $0x5e8] sm:$0xff]
        %v713 = vld [vmem:[%s422 + $0x5f0] sm:$0xff]
        %v714 = vld [vmem:[%s422 + $0x5f8] sm:$0xff]
        %v715 = vld [vmem:[%s422 + $0x600] sm:$0xff]
        %v716 = vld [vmem:[%s422 + $0x608] sm:$0xff]
        %v717 = vld [vmem:[%s422 + $0x610] sm:$0xff]
        %v718 = vld [vmem:[%s422 + $0x618] sm:$0xff]
        %v719 = vld [vmem:[%s422 + $0x620] sm:$0xff]
        %v720 = vld [vmem:[%s422 + $0x628] sm:$0xff]
        %v721 = vld [vmem:[%s422 + $0x630] sm:$0xff]
        %v722 = vld [vmem:[%s422 + $0x638] sm:$0xff]
        %v723 = vld [vmem:[%s422 + $0x640] sm:$0xff]
        %v724 = vld [vmem:[%s422 + $0x648] sm:$0xff]
        %v725 = vld [vmem:[%s422 + $0x650] sm:$0xff]
        %v726 = vld [vmem:[%s422 + $0x658] sm:$0xff]
        %v727 = vld [vmem:[%s422 + $0x660] sm:$0xff]
        %v728 = vld [vmem:[%s422 + $0x668] sm:$0xff]
        %v729 = vld [vmem:[%s422 + $0x670] sm:$0xff]
        %v730 = vld [vmem:[%s422 + $0x678] sm:$0xff]
        %v731 = vld [vmem:[%s422 + $0x680] sm:$0xff]
        %v732 = vld [vmem:[%s422 + $0x688] sm:$0xff]
        %v733 = vld [vmem:[%s422 + $0x690] sm:$0xff]
        %v734 = vld [vmem:[%s422 + $0x698] sm:$0xff]
        %v735 = vld [vmem:[%s422 + $0x6a0] sm:$0xff]
        %v736 = vld [vmem:[%s422 + $0x6a8] sm:$0xff]
        %v737 = vld [vmem:[%s422 + $0x6b0] sm:$0xff]
        %v738 = vld [vmem:[%s422 + $0x6b8] sm:$0xff]
        %v739 = vld [vmem:[%s422 + $0x6c0] sm:$0xff]
        %v740 = vld [vmem:[%s422 + $0x6c8] sm:$0xff]
        %v741 = vld [vmem:[%s422 + $0x6d0] sm:$0xff]
        %v742 = vld [vmem:[%s422 + $0x6d8] sm:$0xff]
        %v743 = vld [vmem:[%s422 + $0x6e0] sm:$0xff]
        %v744 = vld [vmem:[%s422 + $0x6e8] sm:$0xff]
        %v745 = vld [vmem:[%s422 + $0x6f0] sm:$0xff]
        %v746 = vld [vmem:[%s422 + $0x6f8] sm:$0xff]
        %v747 = vld [vmem:[%s422 + $0x700] sm:$0xff]
        %v748 = vld [vmem:[%s422 + $0x708] sm:$0xff]
        %v749 = vld [vmem:[%s422 + $0x710] sm:$0xff]
        %v750 = vld [vmem:[%s422 + $0x718] sm:$0xff]
        %v751 = vld [vmem:[%s422 + $0x720] sm:$0xff]
        %v752 = vld [vmem:[%s422 + $0x728] sm:$0xff]
        %v753 = vld [vmem:[%s422 + $0x730] sm:$0xff]
        %v754 = vld [vmem:[%s422 + $0x738] sm:$0xff]
        %v755 = vld [vmem:[%s422 + $0x740] sm:$0xff]
        %v756 = vld [vmem:[%s422 + $0x748] sm:$0xff]
        %v757 = vld [vmem:[%s422 + $0x750] sm:$0xff]
        %v758 = vld [vmem:[%s422 + $0x758] sm:$0xff]
        %v759 = vld [vmem:[%s422 + $0x760] sm:$0xff]
        %v760 = vld [vmem:[%s422 + $0x768] sm:$0xff]
        %v761 = vld [vmem:[%s422 + $0x770] sm:$0xff]
        %v762 = vld [vmem:[%s422 + $0x778] sm:$0xff]
        %v763 = vld [vmem:[%s422 + $0x780] sm:$0xff]
        %v764 = vld [vmem:[%s422 + $0x788] sm:$0xff]
        %v765 = vld [vmem:[%s422 + $0x790] sm:$0xff]
        %v766 = vld [vmem:[%s422 + $0x798] sm:$0xff]
        %v767 = vld [vmem:[%s422 + $0x7a0] sm:$0xff]
        %v768 = vld [vmem:[%s422 + $0x7a8] sm:$0xff]
        %v769 = vld [vmem:[%s422 + $0x7b0] sm:$0xff]
        %v770 = vld [vmem:[%s422 + $0x7b8] sm:$0xff]
        %v771 = vld [vmem:[%s422 + $0x7c0] sm:$0xff]
        %v772 = vld [vmem:[%s422 + $0x7c8] sm:$0xff]
        %v773 = vld [vmem:[%s422 + $0x7d0] sm:$0xff]
        %v774 = vld [vmem:[%s422 + $0x7d8] sm:$0xff]
        %v775 = vld [vmem:[%s422 + $0x7e0] sm:$0xff]
        %v776 = vld [vmem:[%s422 + $0x7e8] sm:$0xff]
        %v777 = vld [vmem:[%s422 + $0x7f0] sm:$0xff]
        %v778 = vld [vmem:[%s422 + $0x7f8] sm:$0xff]
        %v779 = vpack.c.bf16 %v531, %v523
        %v780 = vpack.c.bf16 %v532, %v524
        %v781 = vpack.c.bf16 %v533, %v525
        %v782 = vpack.c.bf16 %v534, %v526
        %v783 = vpack.c.bf16 %v535, %v527
        %v784 = vpack.c.bf16 %v536, %v528
        %v785 = vpack.c.bf16 %v537, %v529
        %v786 = vpack.c.bf16 %v538, %v530
        %v787 = vpack.c.bf16 %v547, %v539
        %v788 = vpack.c.bf16 %v548, %v540
        %v789 = vpack.c.bf16 %v549, %v541
        %v790 = vpack.c.bf16 %v550, %v542
        %v791 = vpack.c.bf16 %v551, %v543
        %v792 = vpack.c.bf16 %v552, %v544
        %v793 = vpack.c.bf16 %v553, %v545
        %v794 = vpack.c.bf16 %v554, %v546
        %v795 = vpack.c.bf16 %v563, %v555
        %v796 = vpack.c.bf16 %v564, %v556
        %v797 = vpack.c.bf16 %v565, %v557
        %v798 = vpack.c.bf16 %v566, %v558
        %v799 = vpack.c.bf16 %v567, %v559
        %v800 = vpack.c.bf16 %v568, %v560
        %v801 = vpack.c.bf16 %v569, %v561
        %v802 = vpack.c.bf16 %v570, %v562
        %v803 = vpack.c.bf16 %v579, %v571
        %v804 = vpack.c.bf16 %v580, %v572
        %v805 = vpack.c.bf16 %v581, %v573
        %v806 = vpack.c.bf16 %v582, %v574
        %v807 = vpack.c.bf16 %v583, %v575
        %v808 = vpack.c.bf16 %v584, %v576
        %v809 = vpack.c.bf16 %v585, %v577
        %v810 = vpack.c.bf16 %v586, %v578
        %v811 = vpack.c.bf16 %v595, %v587
        %v812 = vpack.c.bf16 %v596, %v588
        %v813 = vpack.c.bf16 %v597, %v589
        %v814 = vpack.c.bf16 %v598, %v590
        %v815 = vpack.c.bf16 %v599, %v591
        %v816 = vpack.c.bf16 %v600, %v592
        %v817 = vpack.c.bf16 %v601, %v593
        %v818 = vpack.c.bf16 %v602, %v594
        %v819 = vpack.c.bf16 %v611, %v603
        %v820 = vpack.c.bf16 %v612, %v604
        %v821 = vpack.c.bf16 %v613, %v605
        %v822 = vpack.c.bf16 %v614, %v606
        %v823 = vpack.c.bf16 %v615, %v607
        %v824 = vpack.c.bf16 %v616, %v608
        %v825 = vpack.c.bf16 %v617, %v609
        %v826 = vpack.c.bf16 %v618, %v610
        %v827 = vpack.c.bf16 %v627, %v619
        %v828 = vpack.c.bf16 %v628, %v620
        %v829 = vpack.c.bf16 %v629, %v621
        %v830 = vpack.c.bf16 %v630, %v622
        %v831 = vpack.c.bf16 %v631, %v623
        %v832 = vpack.c.bf16 %v632, %v624
        %v833 = vpack.c.bf16 %v633, %v625
        %v834 = vpack.c.bf16 %v634, %v626
        %v835 = vpack.c.bf16 %v643, %v635
        %v836 = vpack.c.bf16 %v644, %v636
        %v837 = vpack.c.bf16 %v645, %v637
        %v838 = vpack.c.bf16 %v646, %v638
        %v839 = vpack.c.bf16 %v647, %v639
        %v840 = vpack.c.bf16 %v648, %v640
        %v841 = vpack.c.bf16 %v649, %v641
        %v842 = vpack.c.bf16 %v650, %v642
        %v843 = vpack.c.bf16 %v659, %v651
        %v844 = vpack.c.bf16 %v660, %v652
        %v845 = vpack.c.bf16 %v661, %v653
        %v846 = vpack.c.bf16 %v662, %v654
        %v847 = vpack.c.bf16 %v663, %v655
        %v848 = vpack.c.bf16 %v664, %v656
        %v849 = vpack.c.bf16 %v665, %v657
        %v850 = vpack.c.bf16 %v666, %v658
        %v851 = vpack.c.bf16 %v675, %v667
        %v852 = vpack.c.bf16 %v676, %v668
        %v853 = vpack.c.bf16 %v677, %v669
        %v854 = vpack.c.bf16 %v678, %v670
        %v855 = vpack.c.bf16 %v679, %v671
        %v856 = vpack.c.bf16 %v680, %v672
        %v857 = vpack.c.bf16 %v681, %v673
        %v858 = vpack.c.bf16 %v682, %v674
        %v859 = vpack.c.bf16 %v691, %v683
        %v860 = vpack.c.bf16 %v692, %v684
        %v861 = vpack.c.bf16 %v693, %v685
        %v862 = vpack.c.bf16 %v694, %v686
        %v863 = vpack.c.bf16 %v695, %v687
        %v864 = vpack.c.bf16 %v696, %v688
        %v865 = vpack.c.bf16 %v697, %v689
        %v866 = vpack.c.bf16 %v698, %v690
        %v867 = vpack.c.bf16 %v707, %v699
        %v868 = vpack.c.bf16 %v708, %v700
        %v869 = vpack.c.bf16 %v709, %v701
        %v870 = vpack.c.bf16 %v710, %v702
        %v871 = vpack.c.bf16 %v711, %v703
        %v872 = vpack.c.bf16 %v712, %v704
        %v873 = vpack.c.bf16 %v713, %v705
        %v874 = vpack.c.bf16 %v714, %v706
        %v875 = vpack.c.bf16 %v723, %v715
        %v876 = vpack.c.bf16 %v724, %v716
        %v877 = vpack.c.bf16 %v725, %v717
        %v878 = vpack.c.bf16 %v726, %v718
        %v879 = vpack.c.bf16 %v727, %v719
        %v880 = vpack.c.bf16 %v728, %v720
        %v881 = vpack.c.bf16 %v729, %v721
        %v882 = vpack.c.bf16 %v730, %v722
        %v883 = vpack.c.bf16 %v739, %v731
        %v884 = vpack.c.bf16 %v740, %v732
        %v885 = vpack.c.bf16 %v741, %v733
        %v886 = vpack.c.bf16 %v742, %v734
        %v887 = vpack.c.bf16 %v743, %v735
        %v888 = vpack.c.bf16 %v744, %v736
        %v889 = vpack.c.bf16 %v745, %v737
        %v890 = vpack.c.bf16 %v746, %v738
        %v891 = vpack.c.bf16 %v755, %v747
        %v892 = vpack.c.bf16 %v756, %v748
        %v893 = vpack.c.bf16 %v757, %v749
        %v894 = vpack.c.bf16 %v758, %v750
        %v895 = vpack.c.bf16 %v759, %v751
        %v896 = vpack.c.bf16 %v760, %v752
        %v897 = vpack.c.bf16 %v761, %v753
        %v898 = vpack.c.bf16 %v762, %v754
        %v899 = vpack.c.bf16 %v771, %v763
        %v900 = vpack.c.bf16 %v772, %v764
        %v901 = vpack.c.bf16 %v773, %v765
        %v902 = vpack.c.bf16 %v774, %v766
        %v903 = vpack.c.bf16 %v775, %v767
        %v904 = vpack.c.bf16 %v776, %v768
        %v905 = vpack.c.bf16 %v777, %v769
        %v906 = vpack.c.bf16 %v778, %v770
        %v907 = vld [vmem:[#allocation8] sm:$0xff]
        %v908 = vld [vmem:[#allocation8 + $0x8] sm:$0xff]
        %v909 = vld [vmem:[#allocation8 + $0x10] sm:$0xff]
        %v910 = vld [vmem:[#allocation8 + $0x18] sm:$0xff]
        %v911 = vld [vmem:[#allocation8 + $0x20] sm:$0xff]
        %v912 = vld [vmem:[#allocation8 + $0x28] sm:$0xff]
        %v913 = vld [vmem:[#allocation8 + $0x30] sm:$0xff]
        %v914 = vld [vmem:[#allocation8 + $0x38] sm:$0xff]
        %v915 = vld [vmem:[#allocation8 + $0x40] sm:$0xff]
        %v916 = vld [vmem:[#allocation8 + $0x48] sm:$0xff]
        %v917 = vld [vmem:[#allocation8 + $0x50] sm:$0xff]
        %v918 = vld [vmem:[#allocation8 + $0x58] sm:$0xff]
        %v919 = vld [vmem:[#allocation8 + $0x60] sm:$0xff]
        %v920 = vld [vmem:[#allocation8 + $0x68] sm:$0xff]
        %v921 = vld [vmem:[#allocation8 + $0x70] sm:$0xff]
        %v922 = vld [vmem:[#allocation8 + $0x78] sm:$0xff]
        %v923 = vld [vmem:[#allocation8 + $0x80] sm:$0xff]
        %v924 = vld [vmem:[#allocation8 + $0x88] sm:$0xff]
        %v925 = vld [vmem:[#allocation8 + $0x90] sm:$0xff]
        %v926 = vld [vmem:[#allocation8 + $0x98] sm:$0xff]
        %v927 = vld [vmem:[#allocation8 + $0xa0] sm:$0xff]
        %v928 = vld [vmem:[#allocation8 + $0xa8] sm:$0xff]
        %v929 = vld [vmem:[#allocation8 + $0xb0] sm:$0xff]
        %v930 = vld [vmem:[#allocation8 + $0xb8] sm:$0xff]
        %v931 = vld [vmem:[#allocation8 + $0xc0] sm:$0xff]
        %v932 = vld [vmem:[#allocation8 + $0xc8] sm:$0xff]
        %v933 = vld [vmem:[#allocation8 + $0xd0] sm:$0xff]
        %v934 = vld [vmem:[#allocation8 + $0xd8] sm:$0xff]
        %v935 = vld [vmem:[#allocation8 + $0xe0] sm:$0xff]
        %v936 = vld [vmem:[#allocation8 + $0xe8] sm:$0xff]
        %v937 = vld [vmem:[#allocation8 + $0xf0] sm:$0xff]
        %v938 = vld [vmem:[#allocation8 + $0xf8] sm:$0xff]
        %v939 = vld [vmem:[#allocation8 + $0x100] sm:$0xff]
        %v940 = vld [vmem:[#allocation8 + $0x108] sm:$0xff]
        %v941 = vld [vmem:[#allocation8 + $0x110] sm:$0xff]
        %v942 = vld [vmem:[#allocation8 + $0x118] sm:$0xff]
        %v943 = vld [vmem:[#allocation8 + $0x120] sm:$0xff]
        %v944 = vld [vmem:[#allocation8 + $0x128] sm:$0xff]
        %v945 = vld [vmem:[#allocation8 + $0x130] sm:$0xff]
        %v946 = vld [vmem:[#allocation8 + $0x138] sm:$0xff]
        %v947 = vld [vmem:[#allocation8 + $0x140] sm:$0xff]
        %v948 = vld [vmem:[#allocation8 + $0x148] sm:$0xff]
        %v949 = vld [vmem:[#allocation8 + $0x150] sm:$0xff]
        %v950 = vld [vmem:[#allocation8 + $0x158] sm:$0xff]
        %v951 = vld [vmem:[#allocation8 + $0x160] sm:$0xff]
        %v952 = vld [vmem:[#allocation8 + $0x168] sm:$0xff]
        %v953 = vld [vmem:[#allocation8 + $0x170] sm:$0xff]
        %v954 = vld [vmem:[#allocation8 + $0x178] sm:$0xff]
        %v955 = vld [vmem:[#allocation8 + $0x180] sm:$0xff]
        %v956 = vld [vmem:[#allocation8 + $0x188] sm:$0xff]
        %v957 = vld [vmem:[#allocation8 + $0x190] sm:$0xff]
        %v958 = vld [vmem:[#allocation8 + $0x198] sm:$0xff]
        %v959 = vld [vmem:[#allocation8 + $0x1a0] sm:$0xff]
        %v960 = vld [vmem:[#allocation8 + $0x1a8] sm:$0xff]
        %v961 = vld [vmem:[#allocation8 + $0x1b0] sm:$0xff]
        %v962 = vld [vmem:[#allocation8 + $0x1b8] sm:$0xff]
        %v963 = vld [vmem:[#allocation8 + $0x1c0] sm:$0xff]
        %v964 = vld [vmem:[#allocation8 + $0x1c8] sm:$0xff]
        %v965 = vld [vmem:[#allocation8 + $0x1d0] sm:$0xff]
        %v966 = vld [vmem:[#allocation8 + $0x1d8] sm:$0xff]
        %v967 = vld [vmem:[#allocation8 + $0x1e0] sm:$0xff]
        %v968 = vld [vmem:[#allocation8 + $0x1e8] sm:$0xff]
        %v969 = vld [vmem:[#allocation8 + $0x1f0] sm:$0xff]
        %v970 = vld [vmem:[#allocation8 + $0x1f8] sm:$0xff]
        %v971 = vld [vmem:[#allocation8 + $0x200] sm:$0xff]
        %v972 = vld [vmem:[#allocation8 + $0x208] sm:$0xff]
        %v973 = vld [vmem:[#allocation8 + $0x210] sm:$0xff]
        %v974 = vld [vmem:[#allocation8 + $0x218] sm:$0xff]
        %v975 = vld [vmem:[#allocation8 + $0x220] sm:$0xff]
        %v976 = vld [vmem:[#allocation8 + $0x228] sm:$0xff]
        %v977 = vld [vmem:[#allocation8 + $0x230] sm:$0xff]
        %v978 = vld [vmem:[#allocation8 + $0x238] sm:$0xff]
        %v979 = vld [vmem:[#allocation8 + $0x240] sm:$0xff]
        %v980 = vld [vmem:[#allocation8 + $0x248] sm:$0xff]
        %v981 = vld [vmem:[#allocation8 + $0x250] sm:$0xff]
        %v982 = vld [vmem:[#allocation8 + $0x258] sm:$0xff]
        %v983 = vld [vmem:[#allocation8 + $0x260] sm:$0xff]
        %v984 = vld [vmem:[#allocation8 + $0x268] sm:$0xff]
        %v985 = vld [vmem:[#allocation8 + $0x270] sm:$0xff]
        %v986 = vld [vmem:[#allocation8 + $0x278] sm:$0xff]
        %v987 = vld [vmem:[#allocation8 + $0x280] sm:$0xff]
        %v988 = vld [vmem:[#allocation8 + $0x288] sm:$0xff]
        %v989 = vld [vmem:[#allocation8 + $0x290] sm:$0xff]
        %v990 = vld [vmem:[#allocation8 + $0x298] sm:$0xff]
        %v991 = vld [vmem:[#allocation8 + $0x2a0] sm:$0xff]
        %v992 = vld [vmem:[#allocation8 + $0x2a8] sm:$0xff]
        %v993 = vld [vmem:[#allocation8 + $0x2b0] sm:$0xff]
        %v994 = vld [vmem:[#allocation8 + $0x2b8] sm:$0xff]
        %v995 = vld [vmem:[#allocation8 + $0x2c0] sm:$0xff]
        %v996 = vld [vmem:[#allocation8 + $0x2c8] sm:$0xff]
        %v997 = vld [vmem:[#allocation8 + $0x2d0] sm:$0xff]
        %v998 = vld [vmem:[#allocation8 + $0x2d8] sm:$0xff]
        %v999 = vld [vmem:[#allocation8 + $0x2e0] sm:$0xff]
        %v1000 = vld [vmem:[#allocation8 + $0x2e8] sm:$0xff]
        %v1001 = vld [vmem:[#allocation8 + $0x2f0] sm:$0xff]
        %v1002 = vld [vmem:[#allocation8 + $0x2f8] sm:$0xff]
        %v1003 = vld [vmem:[#allocation8 + $0x300] sm:$0xff]
        %v1004 = vld [vmem:[#allocation8 + $0x308] sm:$0xff]
        %v1005 = vld [vmem:[#allocation8 + $0x310] sm:$0xff]
        %v1006 = vld [vmem:[#allocation8 + $0x318] sm:$0xff]
        %v1007 = vld [vmem:[#allocation8 + $0x320] sm:$0xff]
        %v1008 = vld [vmem:[#allocation8 + $0x328] sm:$0xff]
        %v1009 = vld [vmem:[#allocation8 + $0x330] sm:$0xff]
        %v1010 = vld [vmem:[#allocation8 + $0x338] sm:$0xff]
        %v1011 = vld [vmem:[#allocation8 + $0x340] sm:$0xff]
        %v1012 = vld [vmem:[#allocation8 + $0x348] sm:$0xff]
        %v1013 = vld [vmem:[#allocation8 + $0x350] sm:$0xff]
        %v1014 = vld [vmem:[#allocation8 + $0x358] sm:$0xff]
        %v1015 = vld [vmem:[#allocation8 + $0x360] sm:$0xff]
        %v1016 = vld [vmem:[#allocation8 + $0x368] sm:$0xff]
        %v1017 = vld [vmem:[#allocation8 + $0x370] sm:$0xff]
        %v1018 = vld [vmem:[#allocation8 + $0x378] sm:$0xff]
        %v1019 = vld [vmem:[#allocation8 + $0x380] sm:$0xff]
        %v1020 = vld [vmem:[#allocation8 + $0x388] sm:$0xff]
        %v1021 = vld [vmem:[#allocation8 + $0x390] sm:$0xff]
        %v1022 = vld [vmem:[#allocation8 + $0x398] sm:$0xff]
        %v1023 = vld [vmem:[#allocation8 + $0x3a0] sm:$0xff]
        %v1024 = vld [vmem:[#allocation8 + $0x3a8] sm:$0xff]
        %v1025 = vld [vmem:[#allocation8 + $0x3b0] sm:$0xff]
        %v1026 = vld [vmem:[#allocation8 + $0x3b8] sm:$0xff]
        %v1027 = vld [vmem:[#allocation8 + $0x3c0] sm:$0xff]
        %v1028 = vld [vmem:[#allocation8 + $0x3c8] sm:$0xff]
        %v1029 = vld [vmem:[#allocation8 + $0x3d0] sm:$0xff]
        %v1030 = vld [vmem:[#allocation8 + $0x3d8] sm:$0xff]
        %v1031 = vld [vmem:[#allocation8 + $0x3e0] sm:$0xff]
        %v1032 = vld [vmem:[#allocation8 + $0x3e8] sm:$0xff]
        %v1033 = vld [vmem:[#allocation8 + $0x3f0] sm:$0xff]
        %v1034 = vld [vmem:[#allocation8 + $0x3f8] sm:$0xff]
        %v1035 = vld [vmem:[#allocation8 + $0x400] sm:$0xff]
        %v1036 = vld [vmem:[#allocation8 + $0x408] sm:$0xff]
        %v1037 = vld [vmem:[#allocation8 + $0x410] sm:$0xff]
        %v1038 = vld [vmem:[#allocation8 + $0x418] sm:$0xff]
        %v1039 = vld [vmem:[#allocation8 + $0x420] sm:$0xff]
        %v1040 = vld [vmem:[#allocation8 + $0x428] sm:$0xff]
        %v1041 = vld [vmem:[#allocation8 + $0x430] sm:$0xff]
        %v1042 = vld [vmem:[#allocation8 + $0x438] sm:$0xff]
        %v1043 = vld [vmem:[#allocation8 + $0x440] sm:$0xff]
        %v1044 = vld [vmem:[#allocation8 + $0x448] sm:$0xff]
        %v1045 = vld [vmem:[#allocation8 + $0x450] sm:$0xff]
        %v1046 = vld [vmem:[#allocation8 + $0x458] sm:$0xff]
        %v1047 = vld [vmem:[#allocation8 + $0x460] sm:$0xff]
        %v1048 = vld [vmem:[#allocation8 + $0x468] sm:$0xff]
        %v1049 = vld [vmem:[#allocation8 + $0x470] sm:$0xff]
        %v1050 = vld [vmem:[#allocation8 + $0x478] sm:$0xff]
        %v1051 = vld [vmem:[#allocation8 + $0x480] sm:$0xff]
        %v1052 = vld [vmem:[#allocation8 + $0x488] sm:$0xff]
        %v1053 = vld [vmem:[#allocation8 + $0x490] sm:$0xff]
        %v1054 = vld [vmem:[#allocation8 + $0x498] sm:$0xff]
        %v1055 = vld [vmem:[#allocation8 + $0x4a0] sm:$0xff]
        %v1056 = vld [vmem:[#allocation8 + $0x4a8] sm:$0xff]
        %v1057 = vld [vmem:[#allocation8 + $0x4b0] sm:$0xff]
        %v1058 = vld [vmem:[#allocation8 + $0x4b8] sm:$0xff]
        %v1059 = vld [vmem:[#allocation8 + $0x4c0] sm:$0xff]
        %v1060 = vld [vmem:[#allocation8 + $0x4c8] sm:$0xff]
        %v1061 = vld [vmem:[#allocation8 + $0x4d0] sm:$0xff]
        %v1062 = vld [vmem:[#allocation8 + $0x4d8] sm:$0xff]
        %v1063 = vld [vmem:[#allocation8 + $0x4e0] sm:$0xff]
        %v1064 = vld [vmem:[#allocation8 + $0x4e8] sm:$0xff]
        %v1065 = vld [vmem:[#allocation8 + $0x4f0] sm:$0xff]
        %v1066 = vld [vmem:[#allocation8 + $0x4f8] sm:$0xff]
        %v1067 = vld [vmem:[#allocation8 + $0x500] sm:$0xff]
        %v1068 = vld [vmem:[#allocation8 + $0x508] sm:$0xff]
        %v1069 = vld [vmem:[#allocation8 + $0x510] sm:$0xff]
        %v1070 = vld [vmem:[#allocation8 + $0x518] sm:$0xff]
        %v1071 = vld [vmem:[#allocation8 + $0x520] sm:$0xff]
        %v1072 = vld [vmem:[#allocation8 + $0x528] sm:$0xff]
        %v1073 = vld [vmem:[#allocation8 + $0x530] sm:$0xff]
        %v1074 = vld [vmem:[#allocation8 + $0x538] sm:$0xff]
        %v1075 = vld [vmem:[#allocation8 + $0x540] sm:$0xff]
        %v1076 = vld [vmem:[#allocation8 + $0x548] sm:$0xff]
        %v1077 = vld [vmem:[#allocation8 + $0x550] sm:$0xff]
        %v1078 = vld [vmem:[#allocation8 + $0x558] sm:$0xff]
        %v1079 = vld [vmem:[#allocation8 + $0x560] sm:$0xff]
        %v1080 = vld [vmem:[#allocation8 + $0x568] sm:$0xff]
        %v1081 = vld [vmem:[#allocation8 + $0x570] sm:$0xff]
        %v1082 = vld [vmem:[#allocation8 + $0x578] sm:$0xff]
        %v1083 = vld [vmem:[#allocation8 + $0x580] sm:$0xff]
        %v1084 = vld [vmem:[#allocation8 + $0x588] sm:$0xff]
        %v1085 = vld [vmem:[#allocation8 + $0x590] sm:$0xff]
        %v1086 = vld [vmem:[#allocation8 + $0x598] sm:$0xff]
        %v1087 = vld [vmem:[#allocation8 + $0x5a0] sm:$0xff]
        %v1088 = vld [vmem:[#allocation8 + $0x5a8] sm:$0xff]
        %v1089 = vld [vmem:[#allocation8 + $0x5b0] sm:$0xff]
        %v1090 = vld [vmem:[#allocation8 + $0x5b8] sm:$0xff]
        %v1091 = vld [vmem:[#allocation8 + $0x5c0] sm:$0xff]
        %v1092 = vld [vmem:[#allocation8 + $0x5c8] sm:$0xff]
        %v1093 = vld [vmem:[#allocation8 + $0x5d0] sm:$0xff]
        %v1094 = vld [vmem:[#allocation8 + $0x5d8] sm:$0xff]
        %v1095 = vld [vmem:[#allocation8 + $0x5e0] sm:$0xff]
        %v1096 = vld [vmem:[#allocation8 + $0x5e8] sm:$0xff]
        %v1097 = vld [vmem:[#allocation8 + $0x5f0] sm:$0xff]
        %v1098 = vld [vmem:[#allocation8 + $0x5f8] sm:$0xff]
        %v1099 = vld [vmem:[#allocation8 + $0x600] sm:$0xff]
        %v1100 = vld [vmem:[#allocation8 + $0x608] sm:$0xff]
        %v1101 = vld [vmem:[#allocation8 + $0x610] sm:$0xff]
        %v1102 = vld [vmem:[#allocation8 + $0x618] sm:$0xff]
        %v1103 = vld [vmem:[#allocation8 + $0x620] sm:$0xff]
        %v1104 = vld [vmem:[#allocation8 + $0x628] sm:$0xff]
        %v1105 = vld [vmem:[#allocation8 + $0x630] sm:$0xff]
        %v1106 = vld [vmem:[#allocation8 + $0x638] sm:$0xff]
        %v1107 = vld [vmem:[#allocation8 + $0x640] sm:$0xff]
        %v1108 = vld [vmem:[#allocation8 + $0x648] sm:$0xff]
        %v1109 = vld [vmem:[#allocation8 + $0x650] sm:$0xff]
        %v1110 = vld [vmem:[#allocation8 + $0x658] sm:$0xff]
        %v1111 = vld [vmem:[#allocation8 + $0x660] sm:$0xff]
        %v1112 = vld [vmem:[#allocation8 + $0x668] sm:$0xff]
        %v1113 = vld [vmem:[#allocation8 + $0x670] sm:$0xff]
        %v1114 = vld [vmem:[#allocation8 + $0x678] sm:$0xff]
        %v1115 = vld [vmem:[#allocation8 + $0x680] sm:$0xff]
        %v1116 = vld [vmem:[#allocation8 + $0x688] sm:$0xff]
        %v1117 = vld [vmem:[#allocation8 + $0x690] sm:$0xff]
        %v1118 = vld [vmem:[#allocation8 + $0x698] sm:$0xff]
        %v1119 = vld [vmem:[#allocation8 + $0x6a0] sm:$0xff]
        %v1120 = vld [vmem:[#allocation8 + $0x6a8] sm:$0xff]
        %v1121 = vld [vmem:[#allocation8 + $0x6b0] sm:$0xff]
        %v1122 = vld [vmem:[#allocation8 + $0x6b8] sm:$0xff]
        %v1123 = vld [vmem:[#allocation8 + $0x6c0] sm:$0xff]
        %v1124 = vld [vmem:[#allocation8 + $0x6c8] sm:$0xff]
        %v1125 = vld [vmem:[#allocation8 + $0x6d0] sm:$0xff]
        %v1126 = vld [vmem:[#allocation8 + $0x6d8] sm:$0xff]
        %v1127 = vld [vmem:[#allocation8 + $0x6e0] sm:$0xff]
        %v1128 = vld [vmem:[#allocation8 + $0x6e8] sm:$0xff]
        %v1129 = vld [vmem:[#allocation8 + $0x6f0] sm:$0xff]
        %v1130 = vld [vmem:[#allocation8 + $0x6f8] sm:$0xff]
        %v1131 = vld [vmem:[#allocation8 + $0x700] sm:$0xff]
        %v1132 = vld [vmem:[#allocation8 + $0x708] sm:$0xff]
        %v1133 = vld [vmem:[#allocation8 + $0x710] sm:$0xff]
        %v1134 = vld [vmem:[#allocation8 + $0x718] sm:$0xff]
        %v1135 = vld [vmem:[#allocation8 + $0x720] sm:$0xff]
        %v1136 = vld [vmem:[#allocation8 + $0x728] sm:$0xff]
        %v1137 = vld [vmem:[#allocation8 + $0x730] sm:$0xff]
        %v1138 = vld [vmem:[#allocation8 + $0x738] sm:$0xff]
        %v1139 = vld [vmem:[#allocation8 + $0x740] sm:$0xff]
        %v1140 = vld [vmem:[#allocation8 + $0x748] sm:$0xff]
        %v1141 = vld [vmem:[#allocation8 + $0x750] sm:$0xff]
        %v1142 = vld [vmem:[#allocation8 + $0x758] sm:$0xff]
        %v1143 = vld [vmem:[#allocation8 + $0x760] sm:$0xff]
        %v1144 = vld [vmem:[#allocation8 + $0x768] sm:$0xff]
        %v1145 = vld [vmem:[#allocation8 + $0x770] sm:$0xff]
        %v1146 = vld [vmem:[#allocation8 + $0x778] sm:$0xff]
        %v1147 = vld [vmem:[#allocation8 + $0x780] sm:$0xff]
        %v1148 = vld [vmem:[#allocation8 + $0x788] sm:$0xff]
        %v1149 = vld [vmem:[#allocation8 + $0x790] sm:$0xff]
        %v1150 = vld [vmem:[#allocation8 + $0x798] sm:$0xff]
        %v1151 = vld [vmem:[#allocation8 + $0x7a0] sm:$0xff]
        %v1152 = vld [vmem:[#allocation8 + $0x7a8] sm:$0xff]
        %v1153 = vld [vmem:[#allocation8 + $0x7b0] sm:$0xff]
        %v1154 = vld [vmem:[#allocation8 + $0x7b8] sm:$0xff]
        %v1155 = vld [vmem:[#allocation8 + $0x7c0] sm:$0xff]
        %v1156 = vld [vmem:[#allocation8 + $0x7c8] sm:$0xff]
        %v1157 = vld [vmem:[#allocation8 + $0x7d0] sm:$0xff]
        %v1158 = vld [vmem:[#allocation8 + $0x7d8] sm:$0xff]
        %v1159 = vld [vmem:[#allocation8 + $0x7e0] sm:$0xff]
        %v1160 = vld [vmem:[#allocation8 + $0x7e8] sm:$0xff]
        %v1161 = vld [vmem:[#allocation8 + $0x7f0] sm:$0xff]
        %v1162 = vld [vmem:[#allocation8 + $0x7f8] sm:$0xff]
        %v1163 = vld [vmem:[#allocation10] sm:$0xf]
        %v1165 = vlaneseq
        %v1166 = vshrl.u32 %v1165, 7
        %v1167 = vsub.s32 0, %v1166
        %v1168 = vrot.slane %v1163, %v1167
        %v1169 = vlaneseq
        %v1170 = vshrl.u32 %v1169, 7
        %v1171 = vsub.s32 1, %v1170
        %v1172 = vrot.slane %v1163, %v1171
        %v1173 = vlaneseq
        %v1174 = vshrl.u32 %v1173, 7
        %v1175 = vsub.s32 2, %v1174
        %v1176 = vrot.slane %v1163, %v1175
        %v1177 = vlaneseq
        %v1178 = vshrl.u32 %v1177, 7
        %v1179 = vsub.s32 3, %v1178
        %v1180 = vrot.slane %v1163, %v1179
        %v1441 = vunpack.c.l.b16 %v907
        %v1442 = vunpack.c.h.b16 %v907
        %v1443 = vunpack.c.l.b16 %v908
        %v1444 = vunpack.c.h.b16 %v908
        %v1445 = vunpack.c.l.b16 %v909
        %v1446 = vunpack.c.h.b16 %v909
        %v1447 = vunpack.c.l.b16 %v910
        %v1448 = vunpack.c.h.b16 %v910
        %v1449 = vunpack.c.l.b16 %v911
        %v1450 = vunpack.c.h.b16 %v911
        %v1451 = vunpack.c.l.b16 %v912
        %v1452 = vunpack.c.h.b16 %v912
        %v1453 = vunpack.c.l.b16 %v913
        %v1454 = vunpack.c.h.b16 %v913
        %v1455 = vunpack.c.l.b16 %v914
        %v1456 = vunpack.c.h.b16 %v914
        %v1457 = vunpack.c.l.b16 %v915
        %v1458 = vunpack.c.h.b16 %v915
        %v1459 = vunpack.c.l.b16 %v916
        %v1460 = vunpack.c.h.b16 %v916
        %v1461 = vunpack.c.l.b16 %v917
        %v1462 = vunpack.c.h.b16 %v917
        %v1463 = vunpack.c.l.b16 %v918
        %v1464 = vunpack.c.h.b16 %v918
        %v1465 = vunpack.c.l.b16 %v919
        %v1466 = vunpack.c.h.b16 %v919
        %v1467 = vunpack.c.l.b16 %v920
        %v1468 = vunpack.c.h.b16 %v920
        %v1469 = vunpack.c.l.b16 %v921
        %v1470 = vunpack.c.h.b16 %v921
        %v1471 = vunpack.c.l.b16 %v922
        %v1472 = vunpack.c.h.b16 %v922
        %v1473 = vunpack.c.l.b16 %v923
        %v1474 = vunpack.c.h.b16 %v923
        %v1475 = vunpack.c.l.b16 %v924
        %v1476 = vunpack.c.h.b16 %v924
        %v1477 = vunpack.c.l.b16 %v925
        %v1478 = vunpack.c.h.b16 %v925
        %v1479 = vunpack.c.l.b16 %v926
        %v1480 = vunpack.c.h.b16 %v926
        %v1481 = vunpack.c.l.b16 %v927
        %v1482 = vunpack.c.h.b16 %v927
        %v1483 = vunpack.c.l.b16 %v928
        %v1484 = vunpack.c.h.b16 %v928
        %v1485 = vunpack.c.l.b16 %v929
        %v1486 = vunpack.c.h.b16 %v929
        %v1487 = vunpack.c.l.b16 %v930
        %v1488 = vunpack.c.h.b16 %v930
        %v1489 = vunpack.c.l.b16 %v931
        %v1490 = vunpack.c.h.b16 %v931
        %v1491 = vunpack.c.l.b16 %v932
        %v1492 = vunpack.c.h.b16 %v932
        %v1493 = vunpack.c.l.b16 %v933
        %v1494 = vunpack.c.h.b16 %v933
        %v1495 = vunpack.c.l.b16 %v934
        %v1496 = vunpack.c.h.b16 %v934
        %v1497 = vunpack.c.l.b16 %v935
        %v1498 = vunpack.c.h.b16 %v935
        %v1499 = vunpack.c.l.b16 %v936
        %v1500 = vunpack.c.h.b16 %v936
        %v1501 = vunpack.c.l.b16 %v937
        %v1502 = vunpack.c.h.b16 %v937
        %v1503 = vunpack.c.l.b16 %v938
        %v1504 = vunpack.c.h.b16 %v938
        %v1505 = vunpack.c.l.b16 %v939
        %v1506 = vunpack.c.h.b16 %v939
        %v1507 = vunpack.c.l.b16 %v940
        %v1508 = vunpack.c.h.b16 %v940
        %v1509 = vunpack.c.l.b16 %v941
        %v1510 = vunpack.c.h.b16 %v941
        %v1511 = vunpack.c.l.b16 %v942
        %v1512 = vunpack.c.h.b16 %v942
        %v1513 = vunpack.c.l.b16 %v943
        %v1514 = vunpack.c.h.b16 %v943
        %v1515 = vunpack.c.l.b16 %v944
        %v1516 = vunpack.c.h.b16 %v944
        %v1517 = vunpack.c.l.b16 %v945
        %v1518 = vunpack.c.h.b16 %v945
        %v1519 = vunpack.c.l.b16 %v946
        %v1520 = vunpack.c.h.b16 %v946
        %v1521 = vunpack.c.l.b16 %v947
        %v1522 = vunpack.c.h.b16 %v947
        %v1523 = vunpack.c.l.b16 %v948
        %v1524 = vunpack.c.h.b16 %v948
        %v1525 = vunpack.c.l.b16 %v949
        %v1526 = vunpack.c.h.b16 %v949
        %v1527 = vunpack.c.l.b16 %v950
        %v1528 = vunpack.c.h.b16 %v950
        %v1529 = vunpack.c.l.b16 %v951
        %v1530 = vunpack.c.h.b16 %v951
        %v1531 = vunpack.c.l.b16 %v952
        %v1532 = vunpack.c.h.b16 %v952
        %v1533 = vunpack.c.l.b16 %v953
        %v1534 = vunpack.c.h.b16 %v953
        %v1535 = vunpack.c.l.b16 %v954
        %v1536 = vunpack.c.h.b16 %v954
        %v1537 = vunpack.c.l.b16 %v955
        %v1538 = vunpack.c.h.b16 %v955
        %v1539 = vunpack.c.l.b16 %v956
        %v1540 = vunpack.c.h.b16 %v956
        %v1541 = vunpack.c.l.b16 %v957
        %v1542 = vunpack.c.h.b16 %v957
        %v1543 = vunpack.c.l.b16 %v958
        %v1544 = vunpack.c.h.b16 %v958
        %v1545 = vunpack.c.l.b16 %v959
        %v1546 = vunpack.c.h.b16 %v959
        %v1547 = vunpack.c.l.b16 %v960
        %v1548 = vunpack.c.h.b16 %v960
        %v1549 = vunpack.c.l.b16 %v961
        %v1550 = vunpack.c.h.b16 %v961
        %v1551 = vunpack.c.l.b16 %v962
        %v1552 = vunpack.c.h.b16 %v962
        %v1553 = vunpack.c.l.b16 %v963
        %v1554 = vunpack.c.h.b16 %v963
        %v1555 = vunpack.c.l.b16 %v964
        %v1556 = vunpack.c.h.b16 %v964
        %v1557 = vunpack.c.l.b16 %v965
        %v1558 = vunpack.c.h.b16 %v965
        %v1559 = vunpack.c.l.b16 %v966
        %v1560 = vunpack.c.h.b16 %v966
        %v1561 = vunpack.c.l.b16 %v967
        %v1562 = vunpack.c.h.b16 %v967
        %v1563 = vunpack.c.l.b16 %v968
        %v1564 = vunpack.c.h.b16 %v968
        %v1565 = vunpack.c.l.b16 %v969
        %v1566 = vunpack.c.h.b16 %v969
        %v1567 = vunpack.c.l.b16 %v970
        %v1568 = vunpack.c.h.b16 %v970
        %v1569 = vunpack.c.l.b16 %v971
        %v1570 = vunpack.c.h.b16 %v971
        %v1571 = vunpack.c.l.b16 %v972
        %v1572 = vunpack.c.h.b16 %v972
        %v1573 = vunpack.c.l.b16 %v973
        %v1574 = vunpack.c.h.b16 %v973
        %v1575 = vunpack.c.l.b16 %v974
        %v1576 = vunpack.c.h.b16 %v974
        %v1577 = vunpack.c.l.b16 %v975
        %v1578 = vunpack.c.h.b16 %v975
        %v1579 = vunpack.c.l.b16 %v976
        %v1580 = vunpack.c.h.b16 %v976
        %v1581 = vunpack.c.l.b16 %v977
        %v1582 = vunpack.c.h.b16 %v977
        %v1583 = vunpack.c.l.b16 %v978
        %v1584 = vunpack.c.h.b16 %v978
        %v1585 = vunpack.c.l.b16 %v979
        %v1586 = vunpack.c.h.b16 %v979
        %v1587 = vunpack.c.l.b16 %v980
        %v1588 = vunpack.c.h.b16 %v980
        %v1589 = vunpack.c.l.b16 %v981
        %v1590 = vunpack.c.h.b16 %v981
        %v1591 = vunpack.c.l.b16 %v982
        %v1592 = vunpack.c.h.b16 %v982
        %v1593 = vunpack.c.l.b16 %v983
        %v1594 = vunpack.c.h.b16 %v983
        %v1595 = vunpack.c.l.b16 %v984
        %v1596 = vunpack.c.h.b16 %v984
        %v1597 = vunpack.c.l.b16 %v985
        %v1598 = vunpack.c.h.b16 %v985
        %v1599 = vunpack.c.l.b16 %v986
        %v1600 = vunpack.c.h.b16 %v986
        %v1601 = vunpack.c.l.b16 %v987
        %v1602 = vunpack.c.h.b16 %v987
        %v1603 = vunpack.c.l.b16 %v988
        %v1604 = vunpack.c.h.b16 %v988
        %v1605 = vunpack.c.l.b16 %v989
        %v1606 = vunpack.c.h.b16 %v989
        %v1607 = vunpack.c.l.b16 %v990
        %v1608 = vunpack.c.h.b16 %v990
        %v1609 = vunpack.c.l.b16 %v991
        %v1610 = vunpack.c.h.b16 %v991
        %v1611 = vunpack.c.l.b16 %v992
        %v1612 = vunpack.c.h.b16 %v992
        %v1613 = vunpack.c.l.b16 %v993
        %v1614 = vunpack.c.h.b16 %v993
        %v1615 = vunpack.c.l.b16 %v994
        %v1616 = vunpack.c.h.b16 %v994
        %v1617 = vunpack.c.l.b16 %v995
        %v1618 = vunpack.c.h.b16 %v995
        %v1619 = vunpack.c.l.b16 %v996
        %v1620 = vunpack.c.h.b16 %v996
        %v1621 = vunpack.c.l.b16 %v997
        %v1622 = vunpack.c.h.b16 %v997
        %v1623 = vunpack.c.l.b16 %v998
        %v1624 = vunpack.c.h.b16 %v998
        %v1625 = vunpack.c.l.b16 %v999
        %v1626 = vunpack.c.h.b16 %v999
        %v1627 = vunpack.c.l.b16 %v1000
        %v1628 = vunpack.c.h.b16 %v1000
        %v1629 = vunpack.c.l.b16 %v1001
        %v1630 = vunpack.c.h.b16 %v1001
        %v1631 = vunpack.c.l.b16 %v1002
        %v1632 = vunpack.c.h.b16 %v1002
        %v1633 = vunpack.c.l.b16 %v1003
        %v1634 = vunpack.c.h.b16 %v1003
        %v1635 = vunpack.c.l.b16 %v1004
        %v1636 = vunpack.c.h.b16 %v1004
        %v1637 = vunpack.c.l.b16 %v1005
        %v1638 = vunpack.c.h.b16 %v1005
        %v1639 = vunpack.c.l.b16 %v1006
        %v1640 = vunpack.c.h.b16 %v1006
        %v1641 = vunpack.c.l.b16 %v1007
        %v1642 = vunpack.c.h.b16 %v1007
        %v1643 = vunpack.c.l.b16 %v1008
        %v1644 = vunpack.c.h.b16 %v1008
        %v1645 = vunpack.c.l.b16 %v1009
        %v1646 = vunpack.c.h.b16 %v1009
        %v1647 = vunpack.c.l.b16 %v1010
        %v1648 = vunpack.c.h.b16 %v1010
        %v1649 = vunpack.c.l.b16 %v1011
        %v1650 = vunpack.c.h.b16 %v1011
        %v1651 = vunpack.c.l.b16 %v1012
        %v1652 = vunpack.c.h.b16 %v1012
        %v1653 = vunpack.c.l.b16 %v1013
        %v1654 = vunpack.c.h.b16 %v1013
        %v1655 = vunpack.c.l.b16 %v1014
        %v1656 = vunpack.c.h.b16 %v1014
        %v1657 = vunpack.c.l.b16 %v1015
        %v1658 = vunpack.c.h.b16 %v1015
        %v1659 = vunpack.c.l.b16 %v1016
        %v1660 = vunpack.c.h.b16 %v1016
        %v1661 = vunpack.c.l.b16 %v1017
        %v1662 = vunpack.c.h.b16 %v1017
        %v1663 = vunpack.c.l.b16 %v1018
        %v1664 = vunpack.c.h.b16 %v1018
        %v1665 = vunpack.c.l.b16 %v1019
        %v1666 = vunpack.c.h.b16 %v1019
        %v1667 = vunpack.c.l.b16 %v1020
        %v1668 = vunpack.c.h.b16 %v1020
        %v1669 = vunpack.c.l.b16 %v1021
        %v1670 = vunpack.c.h.b16 %v1021
        %v1671 = vunpack.c.l.b16 %v1022
        %v1672 = vunpack.c.h.b16 %v1022
        %v1673 = vunpack.c.l.b16 %v1023
        %v1674 = vunpack.c.h.b16 %v1023
        %v1675 = vunpack.c.l.b16 %v1024
        %v1676 = vunpack.c.h.b16 %v1024
        %v1677 = vunpack.c.l.b16 %v1025
        %v1678 = vunpack.c.h.b16 %v1025
        %v1679 = vunpack.c.l.b16 %v1026
        %v1680 = vunpack.c.h.b16 %v1026
        %v1681 = vunpack.c.l.b16 %v1027
        %v1682 = vunpack.c.h.b16 %v1027
        %v1683 = vunpack.c.l.b16 %v1028
        %v1684 = vunpack.c.h.b16 %v1028
        %v1685 = vunpack.c.l.b16 %v1029
        %v1686 = vunpack.c.h.b16 %v1029
        %v1687 = vunpack.c.l.b16 %v1030
        %v1688 = vunpack.c.h.b16 %v1030
        %v1689 = vunpack.c.l.b16 %v1031
        %v1690 = vunpack.c.h.b16 %v1031
        %v1691 = vunpack.c.l.b16 %v1032
        %v1692 = vunpack.c.h.b16 %v1032
        %v1693 = vunpack.c.l.b16 %v1033
        %v1694 = vunpack.c.h.b16 %v1033
        %v1695 = vunpack.c.l.b16 %v1034
        %v1696 = vunpack.c.h.b16 %v1034
        %v1697 = vunpack.c.l.b16 %v1035
        %v1698 = vunpack.c.h.b16 %v1035
        %v1699 = vunpack.c.l.b16 %v1036
        %v1700 = vunpack.c.h.b16 %v1036
        %v1701 = vunpack.c.l.b16 %v1037
        %v1702 = vunpack.c.h.b16 %v1037
        %v1703 = vunpack.c.l.b16 %v1038
        %v1704 = vunpack.c.h.b16 %v1038
        %v1705 = vunpack.c.l.b16 %v1039
        %v1706 = vunpack.c.h.b16 %v1039
        %v1707 = vunpack.c.l.b16 %v1040
        %v1708 = vunpack.c.h.b16 %v1040
        %v1709 = vunpack.c.l.b16 %v1041
        %v1710 = vunpack.c.h.b16 %v1041
        %v1711 = vunpack.c.l.b16 %v1042
        %v1712 = vunpack.c.h.b16 %v1042
        %v1713 = vunpack.c.l.b16 %v1043
        %v1714 = vunpack.c.h.b16 %v1043
        %v1715 = vunpack.c.l.b16 %v1044
        %v1716 = vunpack.c.h.b16 %v1044
        %v1717 = vunpack.c.l.b16 %v1045
        %v1718 = vunpack.c.h.b16 %v1045
        %v1719 = vunpack.c.l.b16 %v1046
        %v1720 = vunpack.c.h.b16 %v1046
        %v1721 = vunpack.c.l.b16 %v1047
        %v1722 = vunpack.c.h.b16 %v1047
        %v1723 = vunpack.c.l.b16 %v1048
        %v1724 = vunpack.c.h.b16 %v1048
        %v1725 = vunpack.c.l.b16 %v1049
        %v1726 = vunpack.c.h.b16 %v1049
        %v1727 = vunpack.c.l.b16 %v1050
        %v1728 = vunpack.c.h.b16 %v1050
        %v1729 = vunpack.c.l.b16 %v1051
        %v1730 = vunpack.c.h.b16 %v1051
        %v1731 = vunpack.c.l.b16 %v1052
        %v1732 = vunpack.c.h.b16 %v1052
        %v1733 = vunpack.c.l.b16 %v1053
        %v1734 = vunpack.c.h.b16 %v1053
        %v1735 = vunpack.c.l.b16 %v1054
        %v1736 = vunpack.c.h.b16 %v1054
        %v1737 = vunpack.c.l.b16 %v1055
        %v1738 = vunpack.c.h.b16 %v1055
        %v1739 = vunpack.c.l.b16 %v1056
        %v1740 = vunpack.c.h.b16 %v1056
        %v1741 = vunpack.c.l.b16 %v1057
        %v1742 = vunpack.c.h.b16 %v1057
        %v1743 = vunpack.c.l.b16 %v1058
        %v1744 = vunpack.c.h.b16 %v1058
        %v1745 = vunpack.c.l.b16 %v1059
        %v1746 = vunpack.c.h.b16 %v1059
        %v1747 = vunpack.c.l.b16 %v1060
        %v1748 = vunpack.c.h.b16 %v1060
        %v1749 = vunpack.c.l.b16 %v1061
        %v1750 = vunpack.c.h.b16 %v1061
        %v1751 = vunpack.c.l.b16 %v1062
        %v1752 = vunpack.c.h.b16 %v1062
        %v1753 = vunpack.c.l.b16 %v1063
        %v1754 = vunpack.c.h.b16 %v1063
        %v1755 = vunpack.c.l.b16 %v1064
        %v1756 = vunpack.c.h.b16 %v1064
        %v1757 = vunpack.c.l.b16 %v1065
        %v1758 = vunpack.c.h.b16 %v1065
        %v1759 = vunpack.c.l.b16 %v1066
        %v1760 = vunpack.c.h.b16 %v1066
        %v1761 = vunpack.c.l.b16 %v1067
        %v1762 = vunpack.c.h.b16 %v1067
        %v1763 = vunpack.c.l.b16 %v1068
        %v1764 = vunpack.c.h.b16 %v1068
        %v1765 = vunpack.c.l.b16 %v1069
        %v1766 = vunpack.c.h.b16 %v1069
        %v1767 = vunpack.c.l.b16 %v1070
        %v1768 = vunpack.c.h.b16 %v1070
        %v1769 = vunpack.c.l.b16 %v1071
        %v1770 = vunpack.c.h.b16 %v1071
        %v1771 = vunpack.c.l.b16 %v1072
        %v1772 = vunpack.c.h.b16 %v1072
        %v1773 = vunpack.c.l.b16 %v1073
        %v1774 = vunpack.c.h.b16 %v1073
        %v1775 = vunpack.c.l.b16 %v1074
        %v1776 = vunpack.c.h.b16 %v1074
        %v1777 = vunpack.c.l.b16 %v1075
        %v1778 = vunpack.c.h.b16 %v1075
        %v1779 = vunpack.c.l.b16 %v1076
        %v1780 = vunpack.c.h.b16 %v1076
        %v1781 = vunpack.c.l.b16 %v1077
        %v1782 = vunpack.c.h.b16 %v1077
        %v1783 = vunpack.c.l.b16 %v1078
        %v1784 = vunpack.c.h.b16 %v1078
        %v1785 = vunpack.c.l.b16 %v1079
        %v1786 = vunpack.c.h.b16 %v1079
        %v1787 = vunpack.c.l.b16 %v1080
        %v1788 = vunpack.c.h.b16 %v1080
        %v1789 = vunpack.c.l.b16 %v1081
        %v1790 = vunpack.c.h.b16 %v1081
        %v1791 = vunpack.c.l.b16 %v1082
        %v1792 = vunpack.c.h.b16 %v1082
        %v1793 = vunpack.c.l.b16 %v1083
        %v1794 = vunpack.c.h.b16 %v1083
        %v1795 = vunpack.c.l.b16 %v1084
        %v1796 = vunpack.c.h.b16 %v1084
        %v1797 = vunpack.c.l.b16 %v1085
        %v1798 = vunpack.c.h.b16 %v1085
        %v1799 = vunpack.c.l.b16 %v1086
        %v1800 = vunpack.c.h.b16 %v1086
        %v1801 = vunpack.c.l.b16 %v1087
        %v1802 = vunpack.c.h.b16 %v1087
        %v1803 = vunpack.c.l.b16 %v1088
        %v1804 = vunpack.c.h.b16 %v1088
        %v1805 = vunpack.c.l.b16 %v1089
        %v1806 = vunpack.c.h.b16 %v1089
        %v1807 = vunpack.c.l.b16 %v1090
        %v1808 = vunpack.c.h.b16 %v1090
        %v1809 = vunpack.c.l.b16 %v1091
        %v1810 = vunpack.c.h.b16 %v1091
        %v1811 = vunpack.c.l.b16 %v1092
        %v1812 = vunpack.c.h.b16 %v1092
        %v1813 = vunpack.c.l.b16 %v1093
        %v1814 = vunpack.c.h.b16 %v1093
        %v1815 = vunpack.c.l.b16 %v1094
        %v1816 = vunpack.c.h.b16 %v1094
        %v1817 = vunpack.c.l.b16 %v1095
        %v1818 = vunpack.c.h.b16 %v1095
        %v1819 = vunpack.c.l.b16 %v1096
        %v1820 = vunpack.c.h.b16 %v1096
        %v1821 = vunpack.c.l.b16 %v1097
        %v1822 = vunpack.c.h.b16 %v1097
        %v1823 = vunpack.c.l.b16 %v1098
        %v1824 = vunpack.c.h.b16 %v1098
        %v1825 = vunpack.c.l.b16 %v1099
        %v1826 = vunpack.c.h.b16 %v1099
        %v1827 = vunpack.c.l.b16 %v1100
        %v1828 = vunpack.c.h.b16 %v1100
        %v1829 = vunpack.c.l.b16 %v1101
        %v1830 = vunpack.c.h.b16 %v1101
        %v1831 = vunpack.c.l.b16 %v1102
        %v1832 = vunpack.c.h.b16 %v1102
        %v1833 = vunpack.c.l.b16 %v1103
        %v1834 = vunpack.c.h.b16 %v1103
        %v1835 = vunpack.c.l.b16 %v1104
        %v1836 = vunpack.c.h.b16 %v1104
        %v1837 = vunpack.c.l.b16 %v1105
        %v1838 = vunpack.c.h.b16 %v1105
        %v1839 = vunpack.c.l.b16 %v1106
        %v1840 = vunpack.c.h.b16 %v1106
        %v1841 = vunpack.c.l.b16 %v1107
        %v1842 = vunpack.c.h.b16 %v1107
        %v1843 = vunpack.c.l.b16 %v1108
        %v1844 = vunpack.c.h.b16 %v1108
        %v1845 = vunpack.c.l.b16 %v1109
        %v1846 = vunpack.c.h.b16 %v1109
        %v1847 = vunpack.c.l.b16 %v1110
        %v1848 = vunpack.c.h.b16 %v1110
        %v1849 = vunpack.c.l.b16 %v1111
        %v1850 = vunpack.c.h.b16 %v1111
        %v1851 = vunpack.c.l.b16 %v1112
        %v1852 = vunpack.c.h.b16 %v1112
        %v1853 = vunpack.c.l.b16 %v1113
        %v1854 = vunpack.c.h.b16 %v1113
        %v1855 = vunpack.c.l.b16 %v1114
        %v1856 = vunpack.c.h.b16 %v1114
        %v1857 = vunpack.c.l.b16 %v1115
        %v1858 = vunpack.c.h.b16 %v1115
        %v1859 = vunpack.c.l.b16 %v1116
        %v1860 = vunpack.c.h.b16 %v1116
        %v1861 = vunpack.c.l.b16 %v1117
        %v1862 = vunpack.c.h.b16 %v1117
        %v1863 = vunpack.c.l.b16 %v1118
        %v1864 = vunpack.c.h.b16 %v1118
        %v1865 = vunpack.c.l.b16 %v1119
        %v1866 = vunpack.c.h.b16 %v1119
        %v1867 = vunpack.c.l.b16 %v1120
        %v1868 = vunpack.c.h.b16 %v1120
        %v1869 = vunpack.c.l.b16 %v1121
        %v1870 = vunpack.c.h.b16 %v1121
        %v1871 = vunpack.c.l.b16 %v1122
        %v1872 = vunpack.c.h.b16 %v1122
        %v1873 = vunpack.c.l.b16 %v1123
        %v1874 = vunpack.c.h.b16 %v1123
        %v1875 = vunpack.c.l.b16 %v1124
        %v1876 = vunpack.c.h.b16 %v1124
        %v1877 = vunpack.c.l.b16 %v1125
        %v1878 = vunpack.c.h.b16 %v1125
        %v1879 = vunpack.c.l.b16 %v1126
        %v1880 = vunpack.c.h.b16 %v1126
        %v1881 = vunpack.c.l.b16 %v1127
        %v1882 = vunpack.c.h.b16 %v1127
        %v1883 = vunpack.c.l.b16 %v1128
        %v1884 = vunpack.c.h.b16 %v1128
        %v1885 = vunpack.c.l.b16 %v1129
        %v1886 = vunpack.c.h.b16 %v1129
        %v1887 = vunpack.c.l.b16 %v1130
        %v1888 = vunpack.c.h.b16 %v1130
        %v1889 = vunpack.c.l.b16 %v1131
        %v1890 = vunpack.c.h.b16 %v1131
        %v1891 = vunpack.c.l.b16 %v1132
        %v1892 = vunpack.c.h.b16 %v1132
        %v1893 = vunpack.c.l.b16 %v1133
        %v1894 = vunpack.c.h.b16 %v1133
        %v1895 = vunpack.c.l.b16 %v1134
        %v1896 = vunpack.c.h.b16 %v1134
        %v1897 = vunpack.c.l.b16 %v1135
        %v1898 = vunpack.c.h.b16 %v1135
        %v1899 = vunpack.c.l.b16 %v1136
        %v1900 = vunpack.c.h.b16 %v1136
        %v1901 = vunpack.c.l.b16 %v1137
        %v1902 = vunpack.c.h.b16 %v1137
        %v1903 = vunpack.c.l.b16 %v1138
        %v1904 = vunpack.c.h.b16 %v1138
        %v1905 = vunpack.c.l.b16 %v1139
        %v1906 = vunpack.c.h.b16 %v1139
        %v1907 = vunpack.c.l.b16 %v1140
        %v1908 = vunpack.c.h.b16 %v1140
        %v1909 = vunpack.c.l.b16 %v1141
        %v1910 = vunpack.c.h.b16 %v1141
        %v1911 = vunpack.c.l.b16 %v1142
        %v1912 = vunpack.c.h.b16 %v1142
        %v1913 = vunpack.c.l.b16 %v1143
        %v1914 = vunpack.c.h.b16 %v1143
        %v1915 = vunpack.c.l.b16 %v1144
        %v1916 = vunpack.c.h.b16 %v1144
        %v1917 = vunpack.c.l.b16 %v1145
        %v1918 = vunpack.c.h.b16 %v1145
        %v1919 = vunpack.c.l.b16 %v1146
        %v1920 = vunpack.c.h.b16 %v1146
        %v1921 = vunpack.c.l.b16 %v1147
        %v1922 = vunpack.c.h.b16 %v1147
        %v1923 = vunpack.c.l.b16 %v1148
        %v1924 = vunpack.c.h.b16 %v1148
        %v1925 = vunpack.c.l.b16 %v1149
        %v1926 = vunpack.c.h.b16 %v1149
        %v1927 = vunpack.c.l.b16 %v1150
        %v1928 = vunpack.c.h.b16 %v1150
        %v1929 = vunpack.c.l.b16 %v1151
        %v1930 = vunpack.c.h.b16 %v1151
        %v1931 = vunpack.c.l.b16 %v1152
        %v1932 = vunpack.c.h.b16 %v1152
        %v1933 = vunpack.c.l.b16 %v1153
        %v1934 = vunpack.c.h.b16 %v1153
        %v1935 = vunpack.c.l.b16 %v1154
        %v1936 = vunpack.c.h.b16 %v1154
        %v1937 = vunpack.c.l.b16 %v1155
        %v1938 = vunpack.c.h.b16 %v1155
        %v1939 = vunpack.c.l.b16 %v1156
        %v1940 = vunpack.c.h.b16 %v1156
        %v1941 = vunpack.c.l.b16 %v1157
        %v1942 = vunpack.c.h.b16 %v1157
        %v1943 = vunpack.c.l.b16 %v1158
        %v1944 = vunpack.c.h.b16 %v1158
        %v1945 = vunpack.c.l.b16 %v1159
        %v1946 = vunpack.c.h.b16 %v1159
        %v1947 = vunpack.c.l.b16 %v1160
        %v1948 = vunpack.c.h.b16 %v1160
        %v1949 = vunpack.c.l.b16 %v1161
        %v1950 = vunpack.c.h.b16 %v1161
        %v1951 = vunpack.c.l.b16 %v1162
        %v1952 = vunpack.c.h.b16 %v1162
        %v1953 = vpack.c.b16 %v1445, %v1441
        %v1954 = vpack.c.b16 %v1446, %v1442
        %v1955 = vpack.c.b16 %v1447, %v1443
        %v1956 = vpack.c.b16 %v1448, %v1444
        %v1957 = vpack.c.b16 %v1453, %v1449
        %v1958 = vpack.c.b16 %v1454, %v1450
        %v1959 = vpack.c.b16 %v1455, %v1451
        %v1960 = vpack.c.b16 %v1456, %v1452
        %v1961 = vpack.c.b16 %v1461, %v1457
        %v1962 = vpack.c.b16 %v1462, %v1458
        %v1963 = vpack.c.b16 %v1463, %v1459
        %v1964 = vpack.c.b16 %v1464, %v1460
        %v1965 = vpack.c.b16 %v1469, %v1465
        %v1966 = vpack.c.b16 %v1470, %v1466
        %v1967 = vpack.c.b16 %v1471, %v1467
        %v1968 = vpack.c.b16 %v1472, %v1468
        %v1969 = vpack.c.b16 %v1477, %v1473
        %v1970 = vpack.c.b16 %v1478, %v1474
        %v1971 = vpack.c.b16 %v1479, %v1475
        %v1972 = vpack.c.b16 %v1480, %v1476
        %v1973 = vpack.c.b16 %v1485, %v1481
        %v1974 = vpack.c.b16 %v1486, %v1482
        %v1975 = vpack.c.b16 %v1487, %v1483
        %v1976 = vpack.c.b16 %v1488, %v1484
        %v1977 = vpack.c.b16 %v1493, %v1489
        %v1978 = vpack.c.b16 %v1494, %v1490
        %v1979 = vpack.c.b16 %v1495, %v1491
        %v1980 = vpack.c.b16 %v1496, %v1492
        %v1981 = vpack.c.b16 %v1501, %v1497
        %v1982 = vpack.c.b16 %v1502, %v1498
        %v1983 = vpack.c.b16 %v1503, %v1499
        %v1984 = vpack.c.b16 %v1504, %v1500
        %v1985 = vpack.c.b16 %v1509, %v1505
        %v1986 = vpack.c.b16 %v1510, %v1506
        %v1987 = vpack.c.b16 %v1511, %v1507
        %v1988 = vpack.c.b16 %v1512, %v1508
        %v1989 = vpack.c.b16 %v1517, %v1513
        %v1990 = vpack.c.b16 %v1518, %v1514
        %v1991 = vpack.c.b16 %v1519, %v1515
        %v1992 = vpack.c.b16 %v1520, %v1516
        %v1993 = vpack.c.b16 %v1525, %v1521
        %v1994 = vpack.c.b16 %v1526, %v1522
        %v1995 = vpack.c.b16 %v1527, %v1523
        %v1996 = vpack.c.b16 %v1528, %v1524
        %v1997 = vpack.c.b16 %v1533, %v1529
        %v1998 = vpack.c.b16 %v1534, %v1530
        %v1999 = vpack.c.b16 %v1535, %v1531
        %v2000 = vpack.c.b16 %v1536, %v1532
        %v2001 = vpack.c.b16 %v1541, %v1537
        %v2002 = vpack.c.b16 %v1542, %v1538
        %v2003 = vpack.c.b16 %v1543, %v1539
        %v2004 = vpack.c.b16 %v1544, %v1540
        %v2005 = vpack.c.b16 %v1549, %v1545
        %v2006 = vpack.c.b16 %v1550, %v1546
        %v2007 = vpack.c.b16 %v1551, %v1547
        %v2008 = vpack.c.b16 %v1552, %v1548
        %v2009 = vpack.c.b16 %v1557, %v1553
        %v2010 = vpack.c.b16 %v1558, %v1554
        %v2011 = vpack.c.b16 %v1559, %v1555
        %v2012 = vpack.c.b16 %v1560, %v1556
        %v2013 = vpack.c.b16 %v1565, %v1561
        %v2014 = vpack.c.b16 %v1566, %v1562
        %v2015 = vpack.c.b16 %v1567, %v1563
        %v2016 = vpack.c.b16 %v1568, %v1564
        %v2017 = vpack.c.b16 %v1573, %v1569
        %v2018 = vpack.c.b16 %v1574, %v1570
        %v2019 = vpack.c.b16 %v1575, %v1571
        %v2020 = vpack.c.b16 %v1576, %v1572
        %v2021 = vpack.c.b16 %v1581, %v1577
        %v2022 = vpack.c.b16 %v1582, %v1578
        %v2023 = vpack.c.b16 %v1583, %v1579
        %v2024 = vpack.c.b16 %v1584, %v1580
        %v2025 = vpack.c.b16 %v1589, %v1585
        %v2026 = vpack.c.b16 %v1590, %v1586
        %v2027 = vpack.c.b16 %v1591, %v1587
        %v2028 = vpack.c.b16 %v1592, %v1588
        %v2029 = vpack.c.b16 %v1597, %v1593
        %v2030 = vpack.c.b16 %v1598, %v1594
        %v2031 = vpack.c.b16 %v1599, %v1595
        %v2032 = vpack.c.b16 %v1600, %v1596
        %v2033 = vpack.c.b16 %v1605, %v1601
        %v2034 = vpack.c.b16 %v1606, %v1602
        %v2035 = vpack.c.b16 %v1607, %v1603
        %v2036 = vpack.c.b16 %v1608, %v1604
        %v2037 = vpack.c.b16 %v1613, %v1609
        %v2038 = vpack.c.b16 %v1614, %v1610
        %v2039 = vpack.c.b16 %v1615, %v1611
        %v2040 = vpack.c.b16 %v1616, %v1612
        %v2041 = vpack.c.b16 %v1621, %v1617
        %v2042 = vpack.c.b16 %v1622, %v1618
        %v2043 = vpack.c.b16 %v1623, %v1619
        %v2044 = vpack.c.b16 %v1624, %v1620
        %v2045 = vpack.c.b16 %v1629, %v1625
        %v2046 = vpack.c.b16 %v1630, %v1626
        %v2047 = vpack.c.b16 %v1631, %v1627
        %v2048 = vpack.c.b16 %v1632, %v1628
        %v2049 = vpack.c.b16 %v1637, %v1633
        %v2050 = vpack.c.b16 %v1638, %v1634
        %v2051 = vpack.c.b16 %v1639, %v1635
        %v2052 = vpack.c.b16 %v1640, %v1636
        %v2053 = vpack.c.b16 %v1645, %v1641
        %v2054 = vpack.c.b16 %v1646, %v1642
        %v2055 = vpack.c.b16 %v1647, %v1643
        %v2056 = vpack.c.b16 %v1648, %v1644
        %v2057 = vpack.c.b16 %v1653, %v1649
        %v2058 = vpack.c.b16 %v1654, %v1650
        %v2059 = vpack.c.b16 %v1655, %v1651
        %v2060 = vpack.c.b16 %v1656, %v1652
        %v2061 = vpack.c.b16 %v1661, %v1657
        %v2062 = vpack.c.b16 %v1662, %v1658
        %v2063 = vpack.c.b16 %v1663, %v1659
        %v2064 = vpack.c.b16 %v1664, %v1660
        %v2065 = vpack.c.b16 %v1669, %v1665
        %v2066 = vpack.c.b16 %v1670, %v1666
        %v2067 = vpack.c.b16 %v1671, %v1667
        %v2068 = vpack.c.b16 %v1672, %v1668
        %v2069 = vpack.c.b16 %v1677, %v1673
        %v2070 = vpack.c.b16 %v1678, %v1674
        %v2071 = vpack.c.b16 %v1679, %v1675
        %v2072 = vpack.c.b16 %v1680, %v1676
        %v2073 = vpack.c.b16 %v1685, %v1681
        %v2074 = vpack.c.b16 %v1686, %v1682
        %v2075 = vpack.c.b16 %v1687, %v1683
        %v2076 = vpack.c.b16 %v1688, %v1684
        %v2077 = vpack.c.b16 %v1693, %v1689
        %v2078 = vpack.c.b16 %v1694, %v1690
        %v2079 = vpack.c.b16 %v1695, %v1691
        %v2080 = vpack.c.b16 %v1696, %v1692
        %v2081 = vpack.c.b16 %v1701, %v1697
        %v2082 = vpack.c.b16 %v1702, %v1698
        %v2083 = vpack.c.b16 %v1703, %v1699
        %v2084 = vpack.c.b16 %v1704, %v1700
        %v2085 = vpack.c.b16 %v1709, %v1705
        %v2086 = vpack.c.b16 %v1710, %v1706
        %v2087 = vpack.c.b16 %v1711, %v1707
        %v2088 = vpack.c.b16 %v1712, %v1708
        %v2089 = vpack.c.b16 %v1717, %v1713
        %v2090 = vpack.c.b16 %v1718, %v1714
        %v2091 = vpack.c.b16 %v1719, %v1715
        %v2092 = vpack.c.b16 %v1720, %v1716
        %v2093 = vpack.c.b16 %v1725, %v1721
        %v2094 = vpack.c.b16 %v1726, %v1722
        %v2095 = vpack.c.b16 %v1727, %v1723
        %v2096 = vpack.c.b16 %v1728, %v1724
        %v2097 = vpack.c.b16 %v1733, %v1729
        %v2098 = vpack.c.b16 %v1734, %v1730
        %v2099 = vpack.c.b16 %v1735, %v1731
        %v2100 = vpack.c.b16 %v1736, %v1732
        %v2101 = vpack.c.b16 %v1741, %v1737
        %v2102 = vpack.c.b16 %v1742, %v1738
        %v2103 = vpack.c.b16 %v1743, %v1739
        %v2104 = vpack.c.b16 %v1744, %v1740
        %v2105 = vpack.c.b16 %v1749, %v1745
        %v2106 = vpack.c.b16 %v1750, %v1746
        %v2107 = vpack.c.b16 %v1751, %v1747
        %v2108 = vpack.c.b16 %v1752, %v1748
        %v2109 = vpack.c.b16 %v1757, %v1753
        %v2110 = vpack.c.b16 %v1758, %v1754
        %v2111 = vpack.c.b16 %v1759, %v1755
        %v2112 = vpack.c.b16 %v1760, %v1756
        %v2113 = vpack.c.b16 %v1765, %v1761
        %v2114 = vpack.c.b16 %v1766, %v1762
        %v2115 = vpack.c.b16 %v1767, %v1763
        %v2116 = vpack.c.b16 %v1768, %v1764
        %v2117 = vpack.c.b16 %v1773, %v1769
        %v2118 = vpack.c.b16 %v1774, %v1770
        %v2119 = vpack.c.b16 %v1775, %v1771
        %v2120 = vpack.c.b16 %v1776, %v1772
        %v2121 = vpack.c.b16 %v1781, %v1777
        %v2122 = vpack.c.b16 %v1782, %v1778
        %v2123 = vpack.c.b16 %v1783, %v1779
        %v2124 = vpack.c.b16 %v1784, %v1780
        %v2125 = vpack.c.b16 %v1789, %v1785
        %v2126 = vpack.c.b16 %v1790, %v1786
        %v2127 = vpack.c.b16 %v1791, %v1787
        %v2128 = vpack.c.b16 %v1792, %v1788
        %v2129 = vpack.c.b16 %v1797, %v1793
        %v2130 = vpack.c.b16 %v1798, %v1794
        %v2131 = vpack.c.b16 %v1799, %v1795
        %v2132 = vpack.c.b16 %v1800, %v1796
        %v2133 = vpack.c.b16 %v1805, %v1801
        %v2134 = vpack.c.b16 %v1806, %v1802
        %v2135 = vpack.c.b16 %v1807, %v1803
        %v2136 = vpack.c.b16 %v1808, %v1804
        %v2137 = vpack.c.b16 %v1813, %v1809
        %v2138 = vpack.c.b16 %v1814, %v1810
        %v2139 = vpack.c.b16 %v1815, %v1811
        %v2140 = vpack.c.b16 %v1816, %v1812
        %v2141 = vpack.c.b16 %v1821, %v1817
        %v2142 = vpack.c.b16 %v1822, %v1818
        %v2143 = vpack.c.b16 %v1823, %v1819
        %v2144 = vpack.c.b16 %v1824, %v1820
        %v2145 = vpack.c.b16 %v1829, %v1825
        %v2146 = vpack.c.b16 %v1830, %v1826
        %v2147 = vpack.c.b16 %v1831, %v1827
        %v2148 = vpack.c.b16 %v1832, %v1828
        %v2149 = vpack.c.b16 %v1837, %v1833
        %v2150 = vpack.c.b16 %v1838, %v1834
        %v2151 = vpack.c.b16 %v1839, %v1835
        %v2152 = vpack.c.b16 %v1840, %v1836
        %v2153 = vpack.c.b16 %v1845, %v1841
        %v2154 = vpack.c.b16 %v1846, %v1842
        %v2155 = vpack.c.b16 %v1847, %v1843
        %v2156 = vpack.c.b16 %v1848, %v1844
        %v2157 = vpack.c.b16 %v1853, %v1849
        %v2158 = vpack.c.b16 %v1854, %v1850
        %v2159 = vpack.c.b16 %v1855, %v1851
        %v2160 = vpack.c.b16 %v1856, %v1852
        %v2161 = vpack.c.b16 %v1861, %v1857
        %v2162 = vpack.c.b16 %v1862, %v1858
        %v2163 = vpack.c.b16 %v1863, %v1859
        %v2164 = vpack.c.b16 %v1864, %v1860
        %v2165 = vpack.c.b16 %v1869, %v1865
        %v2166 = vpack.c.b16 %v1870, %v1866
        %v2167 = vpack.c.b16 %v1871, %v1867
        %v2168 = vpack.c.b16 %v1872, %v1868
        %v2169 = vpack.c.b16 %v1877, %v1873
        %v2170 = vpack.c.b16 %v1878, %v1874
        %v2171 = vpack.c.b16 %v1879, %v1875
        %v2172 = vpack.c.b16 %v1880, %v1876
        %v2173 = vpack.c.b16 %v1885, %v1881
        %v2174 = vpack.c.b16 %v1886, %v1882
        %v2175 = vpack.c.b16 %v1887, %v1883
        %v2176 = vpack.c.b16 %v1888, %v1884
        %v2177 = vpack.c.b16 %v1893, %v1889
        %v2178 = vpack.c.b16 %v1894, %v1890
        %v2179 = vpack.c.b16 %v1895, %v1891
        %v2180 = vpack.c.b16 %v1896, %v1892
        %v2181 = vpack.c.b16 %v1901, %v1897
        %v2182 = vpack.c.b16 %v1902, %v1898
        %v2183 = vpack.c.b16 %v1903, %v1899
        %v2184 = vpack.c.b16 %v1904, %v1900
        %v2185 = vpack.c.b16 %v1909, %v1905
        %v2186 = vpack.c.b16 %v1910, %v1906
        %v2187 = vpack.c.b16 %v1911, %v1907
        %v2188 = vpack.c.b16 %v1912, %v1908
        %v2189 = vpack.c.b16 %v1917, %v1913
        %v2190 = vpack.c.b16 %v1918, %v1914
        %v2191 = vpack.c.b16 %v1919, %v1915
        %v2192 = vpack.c.b16 %v1920, %v1916
        %v2193 = vpack.c.b16 %v1925, %v1921
        %v2194 = vpack.c.b16 %v1926, %v1922
        %v2195 = vpack.c.b16 %v1927, %v1923
        %v2196 = vpack.c.b16 %v1928, %v1924
        %v2197 = vpack.c.b16 %v1933, %v1929
        %v2198 = vpack.c.b16 %v1934, %v1930
        %v2199 = vpack.c.b16 %v1935, %v1931
        %v2200 = vpack.c.b16 %v1936, %v1932
        %v2201 = vpack.c.b16 %v1941, %v1937
        %v2202 = vpack.c.b16 %v1942, %v1938
        %v2203 = vpack.c.b16 %v1943, %v1939
        %v2204 = vpack.c.b16 %v1944, %v1940
        %v2205 = vpack.c.b16 %v1949, %v1945
        %v2206 = vpack.c.b16 %v1950, %v1946
        %v2207 = vpack.c.b16 %v1951, %v1947
        %v2208 = vpack.c.b16 %v1952, %v1948
        %2465 = vmatprep.subr.bf16.mxu0 %v1954
        %2466 = vmatpush1.bf16.msra.mxu0 %v1953
        %2467 = vmatprep.subr.bf16.mxu0 %v1958
        %2468 = vmatpush1.bf16.msra.mxu0 %v1957
        %2469 = vmatprep.subr.bf16.mxu0 %v1962
        %2470 = vmatpush1.bf16.msra.mxu0 %v1961
        %2471 = vmatprep.subr.bf16.mxu0 %v1966
        %2472 = vmatpush1.bf16.msra.mxu0 %v1965
        %2473 = vmatprep.subr.bf16.mxu0 %v1970
        %2474 = vmatpush1.bf16.msra.mxu0 %v1969
        %2475 = vmatprep.subr.bf16.mxu0 %v1974
        %2476 = vmatpush1.bf16.msra.mxu0 %v1973
        %2477 = vmatprep.subr.bf16.mxu0 %v1978
        %2478 = vmatpush1.bf16.msra.mxu0 %v1977
        %2479 = vmatprep.subr.bf16.mxu0 %v1982
        %2480 = vmatpush1.bf16.msra.mxu0 %v1981
        %2481 = vmatprep.subr.bf16.mxu0 %v1986
        %2482 = vmatpush1.bf16.msra.mxu0 %v1985
        %2483 = vmatprep.subr.bf16.mxu0 %v1990
        %2484 = vmatpush1.bf16.msra.mxu0 %v1989
        %2485 = vmatprep.subr.bf16.mxu0 %v1994
        %2486 = vmatpush1.bf16.msra.mxu0 %v1993
        %2487 = vmatprep.subr.bf16.mxu0 %v1998
        %2488 = vmatpush1.bf16.msra.mxu0 %v1997
        %2489 = vmatprep.subr.bf16.mxu0 %v2002
        %2490 = vmatpush1.bf16.msra.mxu0 %v2001
        %2491 = vmatprep.subr.bf16.mxu0 %v2006
        %2492 = vmatpush1.bf16.msra.mxu0 %v2005
        %2493 = vmatprep.subr.bf16.mxu0 %v2010
        %2494 = vmatpush1.bf16.msra.mxu0 %v2009
        %2495 = vmatprep.subr.bf16.mxu0 %v2014
        %2496 = vmatpush1.bf16.msra.mxu0 %v2013
        %2497 = vmatprep.mubr.bf16.mxu0 %v780
        %2498 = vmatmul.mubr.bf16.gmra.mrb[0].mxu0 %v779
        %v2499 = vpop.f32.mrb[0].mxu0
        %v2500 = vadd.f32 %v1168, %v2499
        %v2501 = vpop.f32.mrb[0].mxu0
        %v2502 = vadd.f32 %v1172, %v2501
        %v2503 = vpop.f32.mrb[0].mxu0
        %v2504 = vadd.f32 %v1168, %v2503
        %v2505 = vpop.f32.mrb[0].mxu0
        %v2506 = vadd.f32 %v1172, %v2505
        %2507 = vmatprep.mubr.bf16.mxu0 %v788
        %2508 = vmatmul.mubr.bf16.gmra.mrb[0].mxu0 %v787
        %v2509 = vpop.f32.mrb[0].mxu0
        %v2510 = vadd.f32 %v1168, %v2509
        %v2511 = vpop.f32.mrb[0].mxu0
        %v2512 = vadd.f32 %v1172, %v2511
        %v2513 = vpop.f32.mrb[0].mxu0
        %v2514 = vadd.f32 %v1168, %v2513
        %v2515 = vpop.f32.mrb[0].mxu0
        %v2516 = vadd.f32 %v1172, %v2515
        %2517 = vmatprep.mubr.bf16.mxu0 %v796
        %2518 = vmatmul.mubr.bf16.gmra.mrb[0].mxu0 %v795
        %v2519 = vpop.f32.mrb[0].mxu0
        %v2520 = vadd.f32 %v1168, %v2519
        %v2521 = vpop.f32.mrb[0].mxu0
        %v2522 = vadd.f32 %v1172, %v2521
        %v2523 = vpop.f32.mrb[0].mxu0
        %v2524 = vadd.f32 %v1168, %v2523
        %v2525 = vpop.f32.mrb[0].mxu0
        %v2526 = vadd.f32 %v1172, %v2525
        %2527 = vmatprep.mubr.bf16.mxu0 %v804
        %2528 = vmatmul.mubr.bf16.gmra.mrb[0].mxu0 %v803
        %v2529 = vpop.f32.mrb[0].mxu0
        %v2530 = vadd.f32 %v1168, %v2529
        %v2531 = vpop.f32.mrb[0].mxu0
        %v2532 = vadd.f32 %v1172, %v2531
        %v2533 = vpop.f32.mrb[0].mxu0
        %v2534 = vadd.f32 %v1168, %v2533
        %v2535 = vpop.f32.mrb[0].mxu0
        %v2536 = vadd.f32 %v1172, %v2535
        %2537 = vmatprep.mubr.bf16.mxu0 %v812
        %2538 = vmatmul.mubr.bf16.gmra.mrb[0].mxu0 %v811
        %v2539 = vpop.f32.mrb[0].mxu0
        %v2540 = vadd.f32 %v1168, %v2539
        %v2541 = vpop.f32.mrb[0].mxu0
        %v2542 = vadd.f32 %v1172, %v2541
        %v2543 = vpop.f32.mrb[0].mxu0
        %v2544 = vadd.f32 %v1168, %v2543
        %v2545 = vpop.f32.mrb[0].mxu0
        %v2546 = vadd.f32 %v1172, %v2545
        %2547 = vmatprep.mubr.bf16.mxu0 %v820
        %2548 = vmatmul.mubr.bf16.gmra.mrb[0].mxu0 %v819
        %v2549 = vpop.f32.mrb[0].mxu0
        %v2550 = vadd.f32 %v1168, %v2549
        %v2551 = vpop.f32.mrb[0].mxu0
        %v2552 = vadd.f32 %v1172, %v2551
        %v2553 = vpop.f32.mrb[0].mxu0
        %v2554 = vadd.f32 %v1168, %v2553
        %v2555 = vpop.f32.mrb[0].mxu0
        %v2556 = vadd.f32 %v1172, %v2555
        %2557 = vmatprep.mubr.bf16.mxu0 %v828
        %2558 = vmatmul.mubr.bf16.gmra.mrb[0].mxu0 %v827
        %v2559 = vpop.f32.mrb[0].mxu0
        %v2560 = vadd.f32 %v1168, %v2559
        %v2561 = vpop.f32.mrb[0].mxu0
        %v2562 = vadd.f32 %v1172, %v2561
        %v2563 = vpop.f32.mrb[0].mxu0
        %v2564 = vadd.f32 %v1168, %v2563
        %v2565 = vpop.f32.mrb[0].mxu0
        %v2566 = vadd.f32 %v1172, %v2565
        %2567 = vmatprep.mubr.bf16.mxu0 %v836
        %2568 = vmatmul.mubr.bf16.gmra.mrb[0].mxu0 %v835
        %v2569 = vpop.f32.mrb[0].mxu0
        %v2570 = vadd.f32 %v1168, %v2569
        %v2571 = vpop.f32.mrb[0].mxu0
        %v2572 = vadd.f32 %v1172, %v2571
        %v2573 = vpop.f32.mrb[0].mxu0
        %v2574 = vadd.f32 %v1168, %v2573
        %v2575 = vpop.f32.mrb[0].mxu0
        %v2576 = vadd.f32 %v1172, %v2575
        %2577 = vmatprep.mubr.bf16.mxu0 %v844
        %2578 = vmatmul.mubr.bf16.gmra.mrb[0].mxu0 %v843
        %v2579 = vpop.f32.mrb[0].mxu0
        %v2580 = vadd.f32 %v1168, %v2579
        %v2581 = vpop.f32.mrb[0].mxu0
        %v2582 = vadd.f32 %v1172, %v2581
        %v2583 = vpop.f32.mrb[0].mxu0
        %v2584 = vadd.f32 %v1168, %v2583
        %v2585 = vpop.f32.mrb[0].mxu0
        %v2586 = vadd.f32 %v1172, %v2585
        %2587 = vmatprep.mubr.bf16.mxu0 %v852
        %2588 = vmatmul.mubr.bf16.gmra.mrb[0].mxu0 %v851
        %v2589 = vpop.f32.mrb[0].mxu0
        %v2590 = vadd.f32 %v1168, %v2589
        %v2591 = vpop.f32.mrb[0].mxu0
        %v2592 = vadd.f32 %v1172, %v2591
        %v2593 = vpop.f32.mrb[0].mxu0
        %v2594 = vadd.f32 %v1168, %v2593
        %v2595 = vpop.f32.mrb[0].mxu0
        %v2596 = vadd.f32 %v1172, %v2595
        %2597 = vmatprep.mubr.bf16.mxu0 %v860
        %2598 = vmatmul.mubr.bf16.gmra.mrb[0].mxu0 %v859
        %v2599 = vpop.f32.mrb[0].mxu0
        %v2600 = vadd.f32 %v1168, %v2599
        %v2601 = vpop.f32.mrb[0].mxu0
        %v2602 = vadd.f32 %v1172, %v2601
        %v2603 = vpop.f32.mrb[0].mxu0
        %v2604 = vadd.f32 %v1168, %v2603
        %v2605 = vpop.f32.mrb[0].mxu0
        %v2606 = vadd.f32 %v1172, %v2605
        %2607 = vmatprep.mubr.bf16.mxu0 %v868
        %2608 = vmatmul.mubr.bf16.gmra.mrb[0].mxu0 %v867
        %v2609 = vpop.f32.mrb[0].mxu0
        %v2610 = vadd.f32 %v1168, %v2609
        %v2611 = vpop.f32.mrb[0].mxu0
        %v2612 = vadd.f32 %v1172, %v2611
        %v2613 = vpop.f32.mrb[0].mxu0
        %v2614 = vadd.f32 %v1168, %v2613
        %v2615 = vpop.f32.mrb[0].mxu0
        %v2616 = vadd.f32 %v1172, %v2615
        %2617 = vmatprep.mubr.bf16.mxu0 %v876
        %2618 = vmatmul.mubr.bf16.gmra.mrb[0].mxu0 %v875
        %v2619 = vpop.f32.mrb[0].mxu0
        %v2620 = vadd.f32 %v1168, %v2619
        %v2621 = vpop.f32.mrb[0].mxu0
        %v2622 = vadd.f32 %v1172, %v2621
        %v2623 = vpop.f32.mrb[0].mxu0
        %v2624 = vadd.f32 %v1168, %v2623
        %v2625 = vpop.f32.mrb[0].mxu0
        %v2626 = vadd.f32 %v1172, %v2625
        %2627 = vmatprep.mubr.bf16.mxu0 %v884
        %2628 = vmatmul.mubr.bf16.gmra.mrb[0].mxu0 %v883
        %v2629 = vpop.f32.mrb[0].mxu0
        %v2630 = vadd.f32 %v1168, %v2629
        %v2631 = vpop.f32.mrb[0].mxu0
        %v2632 = vadd.f32 %v1172, %v2631
        %v2633 = vpop.f32.mrb[0].mxu0
        %v2634 = vadd.f32 %v1168, %v2633
        %v2635 = vpop.f32.mrb[0].mxu0
        %v2636 = vadd.f32 %v1172, %v2635
        %2637 = vmatprep.mubr.bf16.mxu0 %v892
        %2638 = vmatmul.mubr.bf16.gmra.mrb[0].mxu0 %v891
        %v2639 = vpop.f32.mrb[0].mxu0
        %v2640 = vadd.f32 %v1168, %v2639
        %v2641 = vpop.f32.mrb[0].mxu0
        %v2642 = vadd.f32 %v1172, %v2641
        %v2643 = vpop.f32.mrb[0].mxu0
        %v2644 = vadd.f32 %v1168, %v2643
        %v2645 = vpop.f32.mrb[0].mxu0
        %v2646 = vadd.f32 %v1172, %v2645
        %2647 = vmatprep.mubr.bf16.mxu0 %v900
        %2648 = vmatmul.mubr.bf16.gmra.mrb[0].mxu0 %v899
        %v2649 = vpop.f32.mrb[0].mxu0
        %v2650 = vadd.f32 %v1168, %v2649
        %v2651 = vpop.f32.mrb[0].mxu0
        %v2652 = vadd.f32 %v1172, %v2651
        %v2653 = vpop.f32.mrb[0].mxu0
        %v2654 = vadd.f32 %v1168, %v2653
        %v2655 = vpop.f32.mrb[0].mxu0
        %v2656 = vadd.f32 %v1172, %v2655
        %2657 = vdwg.mxu0
        %2658 = vmatprep.subr.bf16.mxu0 %v2018
        %2659 = vmatpush1.bf16.msra.mxu0 %v2017
        %2660 = vmatprep.subr.bf16.mxu0 %v2022
        %2661 = vmatpush1.bf16.msra.mxu0 %v2021
        %2662 = vmatprep.subr.bf16.mxu0 %v2026
        %2663 = vmatpush1.bf16.msra.mxu0 %v2025
        %2664 = vmatprep.subr.bf16.mxu0 %v2030
        %2665 = vmatpush1.bf16.msra.mxu0 %v2029
        %2666 = vmatprep.subr.bf16.mxu0 %v2034
        %2667 = vmatpush1.bf16.msra.mxu0 %v2033
        %2668 = vmatprep.subr.bf16.mxu0 %v2038
        %2669 = vmatpush1.bf16.msra.mxu0 %v2037
        %2670 = vmatprep.subr.bf16.mxu0 %v2042
        %2671 = vmatpush1.bf16.msra.mxu0 %v2041
        %2672 = vmatprep.subr.bf16.mxu0 %v2046
        %2673 = vmatpush1.bf16.msra.mxu0 %v2045
        %2674 = vmatprep.subr.bf16.mxu0 %v2050
        %2675 = vmatpush1.bf16.msra.mxu0 %v2049
        %2676 = vmatprep.subr.bf16.mxu0 %v2054
        %2677 = vmatpush1.bf16.msra.mxu0 %v2053
        %2678 = vmatprep.subr.bf16.mxu0 %v2058
        %2679 = vmatpush1.bf16.msra.mxu0 %v2057
        %2680 = vmatprep.subr.bf16.mxu0 %v2062
        %2681 = vmatpush1.bf16.msra.mxu0 %v2061
        %2682 = vmatprep.subr.bf16.mxu0 %v2066
        %2683 = vmatpush1.bf16.msra.mxu0 %v2065
        %2684 = vmatprep.subr.bf16.mxu0 %v2070
        %2685 = vmatpush1.bf16.msra.mxu0 %v2069
        %2686 = vmatprep.subr.bf16.mxu0 %v2074
        %2687 = vmatpush1.bf16.msra.mxu0 %v2073
        %2688 = vmatprep.subr.bf16.mxu0 %v2078
        %2689 = vmatpush1.bf16.msra.mxu0 %v2077
        %2690 = vmatprep.mubr.bf16.mxu0 %v782
        %2691 = vmatmul.mubr.bf16.gmra.mrb[0].mxu0 %v781
        %v2692 = vpop.f32.mrb[0].mxu0
        %v2693 = vadd.f32 %v2500, %v2692
        %v2694 = vpop.f32.mrb[0].mxu0
        %v2695 = vadd.f32 %v2502, %v2694
        %v2696 = vpop.f32.mrb[0].mxu0
        %v2697 = vadd.f32 %v2504, %v2696
        %v2698 = vpop.f32.mrb[0].mxu0
        %v2699 = vadd.f32 %v2506, %v2698
        %2700 = vmatprep.mubr.bf16.mxu0 %v790
        %2701 = vmatmul.mubr.bf16.gmra.mrb[0].mxu0 %v789
        %v2702 = vpop.f32.mrb[0].mxu0
        %v2703 = vadd.f32 %v2510, %v2702
        %v2704 = vpop.f32.mrb[0].mxu0
        %v2705 = vadd.f32 %v2512, %v2704
        %v2706 = vpop.f32.mrb[0].mxu0
        %v2707 = vadd.f32 %v2514, %v2706
        %v2708 = vpop.f32.mrb[0].mxu0
        %v2709 = vadd.f32 %v2516, %v2708
        %2710 = vmatprep.mubr.bf16.mxu0 %v798
        %2711 = vmatmul.mubr.bf16.gmra.mrb[0].mxu0 %v797
        %v2712 = vpop.f32.mrb[0].mxu0
        %v2713 = vadd.f32 %v2520, %v2712
        %v2714 = vpop.f32.mrb[0].mxu0
        %v2715 = vadd.f32 %v2522, %v2714
        %v2716 = vpop.f32.mrb[0].mxu0
        %v2717 = vadd.f32 %v2524, %v2716
        %v2718 = vpop.f32.mrb[0].mxu0
        %v2719 = vadd.f32 %v2526, %v2718
        %2720 = vmatprep.mubr.bf16.mxu0 %v806
        %2721 = vmatmul.mubr.bf16.gmra.mrb[0].mxu0 %v805
        %v2722 = vpop.f32.mrb[0].mxu0
        %v2723 = vadd.f32 %v2530, %v2722
        %v2724 = vpop.f32.mrb[0].mxu0
        %v2725 = vadd.f32 %v2532, %v2724
        %v2726 = vpop.f32.mrb[0].mxu0
        %v2727 = vadd.f32 %v2534, %v2726
        %v2728 = vpop.f32.mrb[0].mxu0
        %v2729 = vadd.f32 %v2536, %v2728
        %2730 = vmatprep.mubr.bf16.mxu0 %v814
        %2731 = vmatmul.mubr.bf16.gmra.mrb[0].mxu0 %v813
        %v2732 = vpop.f32.mrb[0].mxu0
        %v2733 = vadd.f32 %v2540, %v2732
        %v2734 = vpop.f32.mrb[0].mxu0
        %v2735 = vadd.f32 %v2542, %v2734
        %v2736 = vpop.f32.mrb[0].mxu0
        %v2737 = vadd.f32 %v2544, %v2736
        %v2738 = vpop.f32.mrb[0].mxu0
        %v2739 = vadd.f32 %v2546, %v2738
        %2740 = vmatprep.mubr.bf16.mxu0 %v822
        %2741 = vmatmul.mubr.bf16.gmra.mrb[0].mxu0 %v821
        %v2742 = vpop.f32.mrb[0].mxu0
        %v2743 = vadd.f32 %v2550, %v2742
        %v2744 = vpop.f32.mrb[0].mxu0
        %v2745 = vadd.f32 %v2552, %v2744
        %v2746 = vpop.f32.mrb[0].mxu0
        %v2747 = vadd.f32 %v2554, %v2746
        %v2748 = vpop.f32.mrb[0].mxu0
        %v2749 = vadd.f32 %v2556, %v2748
        %2750 = vmatprep.mubr.bf16.mxu0 %v830
        %2751 = vmatmul.mubr.bf16.gmra.mrb[0].mxu0 %v829
        %v2752 = vpop.f32.mrb[0].mxu0
        %v2753 = vadd.f32 %v2560, %v2752
        %v2754 = vpop.f32.mrb[0].mxu0
        %v2755 = vadd.f32 %v2562, %v2754
        %v2756 = vpop.f32.mrb[0].mxu0
        %v2757 = vadd.f32 %v2564, %v2756
        %v2758 = vpop.f32.mrb[0].mxu0
        %v2759 = vadd.f32 %v2566, %v2758
        %2760 = vmatprep.mubr.bf16.mxu0 %v838
        %2761 = vmatmul.mubr.bf16.gmra.mrb[0].mxu0 %v837
        %v2762 = vpop.f32.mrb[0].mxu0
        %v2763 = vadd.f32 %v2570, %v2762
        %v2764 = vpop.f32.mrb[0].mxu0
        %v2765 = vadd.f32 %v2572, %v2764
        %v2766 = vpop.f32.mrb[0].mxu0
        %v2767 = vadd.f32 %v2574, %v2766
        %v2768 = vpop.f32.mrb[0].mxu0
        %v2769 = vadd.f32 %v2576, %v2768
        %2770 = vmatprep.mubr.bf16.mxu0 %v846
        %2771 = vmatmul.mubr.bf16.gmra.mrb[0].mxu0 %v845
        %v2772 = vpop.f32.mrb[0].mxu0
        %v2773 = vadd.f32 %v2580, %v2772
        %v2774 = vpop.f32.mrb[0].mxu0
        %v2775 = vadd.f32 %v2582, %v2774
        %v2776 = vpop.f32.mrb[0].mxu0
        %v2777 = vadd.f32 %v2584, %v2776
        %v2778 = vpop.f32.mrb[0].mxu0
        %v2779 = vadd.f32 %v2586, %v2778
        %2780 = vmatprep.mubr.bf16.mxu0 %v854
        %2781 = vmatmul.mubr.bf16.gmra.mrb[0].mxu0 %v853
        %v2782 = vpop.f32.mrb[0].mxu0
        %v2783 = vadd.f32 %v2590, %v2782
        %v2784 = vpop.f32.mrb[0].mxu0
        %v2785 = vadd.f32 %v2592, %v2784
        %v2786 = vpop.f32.mrb[0].mxu0
        %v2787 = vadd.f32 %v2594, %v2786
        %v2788 = vpop.f32.mrb[0].mxu0
        %v2789 = vadd.f32 %v2596, %v2788
        %2790 = vmatprep.mubr.bf16.mxu0 %v862
        %2791 = vmatmul.mubr.bf16.gmra.mrb[0].mxu0 %v861
        %v2792 = vpop.f32.mrb[0].mxu0
        %v2793 = vadd.f32 %v2600, %v2792
        %v2794 = vpop.f32.mrb[0].mxu0
        %v2795 = vadd.f32 %v2602, %v2794
        %v2796 = vpop.f32.mrb[0].mxu0
        %v2797 = vadd.f32 %v2604, %v2796
        %v2798 = vpop.f32.mrb[0].mxu0
        %v2799 = vadd.f32 %v2606, %v2798
        %2800 = vmatprep.mubr.bf16.mxu0 %v870
        %2801 = vmatmul.mubr.bf16.gmra.mrb[0].mxu0 %v869
        %v2802 = vpop.f32.mrb[0].mxu0
        %v2803 = vadd.f32 %v2610, %v2802
        %v2804 = vpop.f32.mrb[0].mxu0
        %v2805 = vadd.f32 %v2612, %v2804
        %v2806 = vpop.f32.mrb[0].mxu0
        %v2807 = vadd.f32 %v2614, %v2806
        %v2808 = vpop.f32.mrb[0].mxu0
        %v2809 = vadd.f32 %v2616, %v2808
        %2810 = vmatprep.mubr.bf16.mxu0 %v878
        %2811 = vmatmul.mubr.bf16.gmra.mrb[0].mxu0 %v877
        %v2812 = vpop.f32.mrb[0].mxu0
        %v2813 = vadd.f32 %v2620, %v2812
        %v2814 = vpop.f32.mrb[0].mxu0
        %v2815 = vadd.f32 %v2622, %v2814
        %v2816 = vpop.f32.mrb[0].mxu0
        %v2817 = vadd.f32 %v2624, %v2816
        %v2818 = vpop.f32.mrb[0].mxu0
        %v2819 = vadd.f32 %v2626, %v2818
        %2820 = vmatprep.mubr.bf16.mxu0 %v886
        %2821 = vmatmul.mubr.bf16.gmra.mrb[0].mxu0 %v885
        %v2822 = vpop.f32.mrb[0].mxu0
        %v2823 = vadd.f32 %v2630, %v2822
        %v2824 = vpop.f32.mrb[0].mxu0
        %v2825 = vadd.f32 %v2632, %v2824
        %v2826 = vpop.f32.mrb[0].mxu0
        %v2827 = vadd.f32 %v2634, %v2826
        %v2828 = vpop.f32.mrb[0].mxu0
        %v2829 = vadd.f32 %v2636, %v2828
        %2830 = vmatprep.mubr.bf16.mxu0 %v894
        %2831 = vmatmul.mubr.bf16.gmra.mrb[0].mxu0 %v893
        %v2832 = vpop.f32.mrb[0].mxu0
        %v2833 = vadd.f32 %v2640, %v2832
        %v2834 = vpop.f32.mrb[0].mxu0
        %v2835 = vadd.f32 %v2642, %v2834
        %v2836 = vpop.f32.mrb[0].mxu0
        %v2837 = vadd.f32 %v2644, %v2836
        %v2838 = vpop.f32.mrb[0].mxu0
        %v2839 = vadd.f32 %v2646, %v2838
        %2840 = vmatprep.mubr.bf16.mxu0 %v902
        %2841 = vmatmul.mubr.bf16.gmra.mrb[0].mxu0 %v901
        %v2842 = vpop.f32.mrb[0].mxu0
        %v2843 = vadd.f32 %v2650, %v2842
        %v2844 = vpop.f32.mrb[0].mxu0
        %v2845 = vadd.f32 %v2652, %v2844
        %v2846 = vpop.f32.mrb[0].mxu0
        %v2847 = vadd.f32 %v2654, %v2846
        %v2848 = vpop.f32.mrb[0].mxu0
        %v2849 = vadd.f32 %v2656, %v2848
        %2850 = vdwg.mxu0
        %2851 = vmatprep.subr.bf16.mxu0 %v2082
        %2852 = vmatpush1.bf16.msra.mxu0 %v2081
        %2853 = vmatprep.subr.bf16.mxu0 %v2086
        %2854 = vmatpush1.bf16.msra.mxu0 %v2085
        %2855 = vmatprep.subr.bf16.mxu0 %v2090
        %2856 = vmatpush1.bf16.msra.mxu0 %v2089
        %2857 = vmatprep.subr.bf16.mxu0 %v2094
        %2858 = vmatpush1.bf16.msra.mxu0 %v2093
        %2859 = vmatprep.subr.bf16.mxu0 %v2098
        %2860 = vmatpush1.bf16.msra.mxu0 %v2097
        %2861 = vmatprep.subr.bf16.mxu0 %v2102
        %2862 = vmatpush1.bf16.msra.mxu0 %v2101
        %2863 = vmatprep.subr.bf16.mxu0 %v2106
        %2864 = vmatpush1.bf16.msra.mxu0 %v2105
        %2865 = vmatprep.subr.bf16.mxu0 %v2110
        %2866 = vmatpush1.bf16.msra.mxu0 %v2109
        %2867 = vmatprep.subr.bf16.mxu0 %v2114
        %2868 = vmatpush1.bf16.msra.mxu0 %v2113
        %2869 = vmatprep.subr.bf16.mxu0 %v2118
        %2870 = vmatpush1.bf16.msra.mxu0 %v2117
        %2871 = vmatprep.subr.bf16.mxu0 %v2122
        %2872 = vmatpush1.bf16.msra.mxu0 %v2121
        %2873 = vmatprep.subr.bf16.mxu0 %v2126
        %2874 = vmatpush1.bf16.msra.mxu0 %v2125
        %2875 = vmatprep.subr.bf16.mxu0 %v2130
        %2876 = vmatpush1.bf16.msra.mxu0 %v2129
        %2877 = vmatprep.subr.bf16.mxu0 %v2134
        %2878 = vmatpush1.bf16.msra.mxu0 %v2133
        %2879 = vmatprep.subr.bf16.mxu0 %v2138
        %2880 = vmatpush1.bf16.msra.mxu0 %v2137
        %2881 = vmatprep.subr.bf16.mxu0 %v2142
        %2882 = vmatpush1.bf16.msra.mxu0 %v2141
        %2883 = vmatprep.mubr.bf16.mxu0 %v784
        %2884 = vmatmul.mubr.bf16.gmra.mrb[0].mxu0 %v783
        %v2885 = vpop.f32.mrb[0].mxu0
        %v2886 = vadd.f32 %v2693, %v2885
        %v2887 = vpop.f32.mrb[0].mxu0
        %v2888 = vadd.f32 %v2695, %v2887
        %v2889 = vpop.f32.mrb[0].mxu0
        %v2890 = vadd.f32 %v2697, %v2889
        %v2891 = vpop.f32.mrb[0].mxu0
        %v2892 = vadd.f32 %v2699, %v2891
        %2893 = vmatprep.mubr.bf16.mxu0 %v792
        %2894 = vmatmul.mubr.bf16.gmra.mrb[0].mxu0 %v791
        %v2895 = vpop.f32.mrb[0].mxu0
        %v2896 = vadd.f32 %v2703, %v2895
        %v2897 = vpop.f32.mrb[0].mxu0
        %v2898 = vadd.f32 %v2705, %v2897
        %v2899 = vpop.f32.mrb[0].mxu0
        %v2900 = vadd.f32 %v2707, %v2899
        %v2901 = vpop.f32.mrb[0].mxu0
        %v2902 = vadd.f32 %v2709, %v2901
        %2903 = vmatprep.mubr.bf16.mxu0 %v800
        %2904 = vmatmul.mubr.bf16.gmra.mrb[0].mxu0 %v799
        %v2905 = vpop.f32.mrb[0].mxu0
        %v2906 = vadd.f32 %v2713, %v2905
        %v2907 = vpop.f32.mrb[0].mxu0
        %v2908 = vadd.f32 %v2715, %v2907
        %v2909 = vpop.f32.mrb[0].mxu0
        %v2910 = vadd.f32 %v2717, %v2909
        %v2911 = vpop.f32.mrb[0].mxu0
        %v2912 = vadd.f32 %v2719, %v2911
        %2913 = vmatprep.mubr.bf16.mxu0 %v808
        %2914 = vmatmul.mubr.bf16.gmra.mrb[0].mxu0 %v807
        %v2915 = vpop.f32.mrb[0].mxu0
        %v2916 = vadd.f32 %v2723, %v2915
        %v2917 = vpop.f32.mrb[0].mxu0
        %v2918 = vadd.f32 %v2725, %v2917
        %v2919 = vpop.f32.mrb[0].mxu0
        %v2920 = vadd.f32 %v2727, %v2919
        %v2921 = vpop.f32.mrb[0].mxu0
        %v2922 = vadd.f32 %v2729, %v2921
        %2923 = vmatprep.mubr.bf16.mxu0 %v816
        %2924 = vmatmul.mubr.bf16.gmra.mrb[0].mxu0 %v815
        %v2925 = vpop.f32.mrb[0].mxu0
        %v2926 = vadd.f32 %v2733, %v2925
        %v2927 = vpop.f32.mrb[0].mxu0
        %v2928 = vadd.f32 %v2735, %v2927
        %v2929 = vpop.f32.mrb[0].mxu0
        %v2930 = vadd.f32 %v2737, %v2929
        %v2931 = vpop.f32.mrb[0].mxu0
        %v2932 = vadd.f32 %v2739, %v2931
        %2933 = vmatprep.mubr.bf16.mxu0 %v824
        %2934 = vmatmul.mubr.bf16.gmra.mrb[0].mxu0 %v823
        %v2935 = vpop.f32.mrb[0].mxu0
        %v2936 = vadd.f32 %v2743, %v2935
        %v2937 = vpop.f32.mrb[0].mxu0
        %v2938 = vadd.f32 %v2745, %v2937
        %v2939 = vpop.f32.mrb[0].mxu0
        %v2940 = vadd.f32 %v2747, %v2939
        %v2941 = vpop.f32.mrb[0].mxu0
        %v2942 = vadd.f32 %v2749, %v2941
        %2943 = vmatprep.mubr.bf16.mxu0 %v832
        %2944 = vmatmul.mubr.bf16.gmra.mrb[0].mxu0 %v831
        %v2945 = vpop.f32.mrb[0].mxu0
        %v2946 = vadd.f32 %v2753, %v2945
        %v2947 = vpop.f32.mrb[0].mxu0
        %v2948 = vadd.f32 %v2755, %v2947
        %v2949 = vpop.f32.mrb[0].mxu0
        %v2950 = vadd.f32 %v2757, %v2949
        %v2951 = vpop.f32.mrb[0].mxu0
        %v2952 = vadd.f32 %v2759, %v2951
        %2953 = vmatprep.mubr.bf16.mxu0 %v840
        %2954 = vmatmul.mubr.bf16.gmra.mrb[0].mxu0 %v839
        %v2955 = vpop.f32.mrb[0].mxu0
        %v2956 = vadd.f32 %v2763, %v2955
        %v2957 = vpop.f32.mrb[0].mxu0
        %v2958 = vadd.f32 %v2765, %v2957
        %v2959 = vpop.f32.mrb[0].mxu0
        %v2960 = vadd.f32 %v2767, %v2959
        %v2961 = vpop.f32.mrb[0].mxu0
        %v2962 = vadd.f32 %v2769, %v2961
        %2963 = vmatprep.mubr.bf16.mxu0 %v848
        %2964 = vmatmul.mubr.bf16.gmra.mrb[0].mxu0 %v847
        %v2965 = vpop.f32.mrb[0].mxu0
        %v2966 = vadd.f32 %v2773, %v2965
        %v2967 = vpop.f32.mrb[0].mxu0
        %v2968 = vadd.f32 %v2775, %v2967
        %v2969 = vpop.f32.mrb[0].mxu0
        %v2970 = vadd.f32 %v2777, %v2969
        %v2971 = vpop.f32.mrb[0].mxu0
        %v2972 = vadd.f32 %v2779, %v2971
        %2973 = vmatprep.mubr.bf16.mxu0 %v856
        %2974 = vmatmul.mubr.bf16.gmra.mrb[0].mxu0 %v855
        %v2975 = vpop.f32.mrb[0].mxu0
        %v2976 = vadd.f32 %v2783, %v2975
        %v2977 = vpop.f32.mrb[0].mxu0
        %v2978 = vadd.f32 %v2785, %v2977
        %v2979 = vpop.f32.mrb[0].mxu0
        %v2980 = vadd.f32 %v2787, %v2979
        %v2981 = vpop.f32.mrb[0].mxu0
        %v2982 = vadd.f32 %v2789, %v2981
        %2983 = vmatprep.mubr.bf16.mxu0 %v864
        %2984 = vmatmul.mubr.bf16.gmra.mrb[0].mxu0 %v863
        %v2985 = vpop.f32.mrb[0].mxu0
        %v2986 = vadd.f32 %v2793, %v2985
        %v2987 = vpop.f32.mrb[0].mxu0
        %v2988 = vadd.f32 %v2795, %v2987
        %v2989 = vpop.f32.mrb[0].mxu0
        %v2990 = vadd.f32 %v2797, %v2989
        %v2991 = vpop.f32.mrb[0].mxu0
        %v2992 = vadd.f32 %v2799, %v2991
        %2993 = vmatprep.mubr.bf16.mxu0 %v872
        %2994 = vmatmul.mubr.bf16.gmra.mrb[0].mxu0 %v871
        %v2995 = vpop.f32.mrb[0].mxu0
        %v2996 = vadd.f32 %v2803, %v2995
        %v2997 = vpop.f32.mrb[0].mxu0
        %v2998 = vadd.f32 %v2805, %v2997
        %v2999 = vpop.f32.mrb[0].mxu0
        %v3000 = vadd.f32 %v2807, %v2999
        %v3001 = vpop.f32.mrb[0].mxu0
        %v3002 = vadd.f32 %v2809, %v3001
        %3003 = vmatprep.mubr.bf16.mxu0 %v880
        %3004 = vmatmul.mubr.bf16.gmra.mrb[0].mxu0 %v879
        %v3005 = vpop.f32.mrb[0].mxu0
        %v3006 = vadd.f32 %v2813, %v3005
        %v3007 = vpop.f32.mrb[0].mxu0
        %v3008 = vadd.f32 %v2815, %v3007
        %v3009 = vpop.f32.mrb[0].mxu0
        %v3010 = vadd.f32 %v2817, %v3009
        %v3011 = vpop.f32.mrb[0].mxu0
        %v3012 = vadd.f32 %v2819, %v3011
        %3013 = vmatprep.mubr.bf16.mxu0 %v888
        %3014 = vmatmul.mubr.bf16.gmra.mrb[0].mxu0 %v887
        %v3015 = vpop.f32.mrb[0].mxu0
        %v3016 = vadd.f32 %v2823, %v3015
        %v3017 = vpop.f32.mrb[0].mxu0
        %v3018 = vadd.f32 %v2825, %v3017
        %v3019 = vpop.f32.mrb[0].mxu0
        %v3020 = vadd.f32 %v2827, %v3019
        %v3021 = vpop.f32.mrb[0].mxu0
        %v3022 = vadd.f32 %v2829, %v3021
        %3023 = vmatprep.mubr.bf16.mxu0 %v896
        %3024 = vmatmul.mubr.bf16.gmra.mrb[0].mxu0 %v895
        %v3025 = vpop.f32.mrb[0].mxu0
        %v3026 = vadd.f32 %v2833, %v3025
        %v3027 = vpop.f32.mrb[0].mxu0
        %v3028 = vadd.f32 %v2835, %v3027
        %v3029 = vpop.f32.mrb[0].mxu0
        %v3030 = vadd.f32 %v2837, %v3029
        %v3031 = vpop.f32.mrb[0].mxu0
        %v3032 = vadd.f32 %v2839, %v3031
        %3033 = vmatprep.mubr.bf16.mxu0 %v904
        %3034 = vmatmul.mubr.bf16.gmra.mrb[0].mxu0 %v903
        %v3035 = vpop.f32.mrb[0].mxu0
        %v3036 = vadd.f32 %v2843, %v3035
        %v3037 = vpop.f32.mrb[0].mxu0
        %v3038 = vadd.f32 %v2845, %v3037
        %v3039 = vpop.f32.mrb[0].mxu0
        %v3040 = vadd.f32 %v2847, %v3039
        %v3041 = vpop.f32.mrb[0].mxu0
        %v3042 = vadd.f32 %v2849, %v3041
        %3043 = vdwg.mxu0
        %3044 = vmatprep.subr.bf16.mxu0 %v2146
        %3045 = vmatpush1.bf16.msra.mxu0 %v2145
        %3046 = vmatprep.subr.bf16.mxu0 %v2150
        %3047 = vmatpush1.bf16.msra.mxu0 %v2149
        %3048 = vmatprep.subr.bf16.mxu0 %v2154
        %3049 = vmatpush1.bf16.msra.mxu0 %v2153
        %3050 = vmatprep.subr.bf16.mxu0 %v2158
        %3051 = vmatpush1.bf16.msra.mxu0 %v2157
        %3052 = vmatprep.subr.bf16.mxu0 %v2162
        %3053 = vmatpush1.bf16.msra.mxu0 %v2161
        %3054 = vmatprep.subr.bf16.mxu0 %v2166
        %3055 = vmatpush1.bf16.msra.mxu0 %v2165
        %3056 = vmatprep.subr.bf16.mxu0 %v2170
        %3057 = vmatpush1.bf16.msra.mxu0 %v2169
        %3058 = vmatprep.subr.bf16.mxu0 %v2174
        %3059 = vmatpush1.bf16.msra.mxu0 %v2173
        %3060 = vmatprep.subr.bf16.mxu0 %v2178
        %3061 = vmatpush1.bf16.msra.mxu0 %v2177
        %3062 = vmatprep.subr.bf16.mxu0 %v2182
        %3063 = vmatpush1.bf16.msra.mxu0 %v2181
        %3064 = vmatprep.subr.bf16.mxu0 %v2186
        %3065 = vmatpush1.bf16.msra.mxu0 %v2185
        %3066 = vmatprep.subr.bf16.mxu0 %v2190
        %3067 = vmatpush1.bf16.msra.mxu0 %v2189
        %3068 = vmatprep.subr.bf16.mxu0 %v2194
        %3069 = vmatpush1.bf16.msra.mxu0 %v2193
        %3070 = vmatprep.subr.bf16.mxu0 %v2198
        %3071 = vmatpush1.bf16.msra.mxu0 %v2197
        %3072 = vmatprep.subr.bf16.mxu0 %v2202
        %3073 = vmatpush1.bf16.msra.mxu0 %v2201
        %3074 = vmatprep.subr.bf16.mxu0 %v2206
        %3075 = vmatpush1.bf16.msra.mxu0 %v2205
        %3076 = vmatprep.mubr.bf16.mxu0 %v786
        %3077 = vmatmul.mubr.bf16.gmra.mrb[0].mxu0 %v785
        %v3078 = vpop.f32.mrb[0].mxu0
        %v3079 = vadd.f32 %v2886, %v3078
        %v3080 = vpop.f32.mrb[0].mxu0
        %v3081 = vadd.f32 %v2888, %v3080
        %v3082 = vpop.f32.mrb[0].mxu0
        %v3083 = vadd.f32 %v2890, %v3082
        %v3084 = vpop.f32.mrb[0].mxu0
        %v3085 = vadd.f32 %v2892, %v3084
        %3086 = vmatprep.mubr.bf16.mxu0 %v794
        %3087 = vmatmul.mubr.bf16.gmra.mrb[0].mxu0 %v793
        %v3088 = vpop.f32.mrb[0].mxu0
        %v3089 = vadd.f32 %v2896, %v3088
        %v3090 = vpop.f32.mrb[0].mxu0
        %v3091 = vadd.f32 %v2898, %v3090
        %v3092 = vpop.f32.mrb[0].mxu0
        %v3093 = vadd.f32 %v2900, %v3092
        %v3094 = vpop.f32.mrb[0].mxu0
        %v3095 = vadd.f32 %v2902, %v3094
        %3096 = vmatprep.mubr.bf16.mxu0 %v802
        %3097 = vmatmul.mubr.bf16.gmra.mrb[0].mxu0 %v801
        %v3098 = vpop.f32.mrb[0].mxu0
        %v3099 = vadd.f32 %v2906, %v3098
        %v3100 = vpop.f32.mrb[0].mxu0
        %v3101 = vadd.f32 %v2908, %v3100
        %v3102 = vpop.f32.mrb[0].mxu0
        %v3103 = vadd.f32 %v2910, %v3102
        %v3104 = vpop.f32.mrb[0].mxu0
        %v3105 = vadd.f32 %v2912, %v3104
        %3106 = vmatprep.mubr.bf16.mxu0 %v810
        %3107 = vmatmul.mubr.bf16.gmra.mrb[0].mxu0 %v809
        %v3108 = vpop.f32.mrb[0].mxu0
        %v3109 = vadd.f32 %v2916, %v3108
        %v3110 = vpop.f32.mrb[0].mxu0
        %v3111 = vadd.f32 %v2918, %v3110
        %v3112 = vpop.f32.mrb[0].mxu0
        %v3113 = vadd.f32 %v2920, %v3112
        %v3114 = vpop.f32.mrb[0].mxu0
        %v3115 = vadd.f32 %v2922, %v3114
        %3116 = vmatprep.mubr.bf16.mxu0 %v818
        %3117 = vmatmul.mubr.bf16.gmra.mrb[0].mxu0 %v817
        %v3118 = vpop.f32.mrb[0].mxu0
        %v3119 = vadd.f32 %v2926, %v3118
        %v3120 = vpop.f32.mrb[0].mxu0
        %v3121 = vadd.f32 %v2928, %v3120
        %v3122 = vpop.f32.mrb[0].mxu0
        %v3123 = vadd.f32 %v2930, %v3122
        %v3124 = vpop.f32.mrb[0].mxu0
        %v3125 = vadd.f32 %v2932, %v3124
        %3126 = vmatprep.mubr.bf16.mxu0 %v826
        %3127 = vmatmul.mubr.bf16.gmra.mrb[0].mxu0 %v825
        %v3128 = vpop.f32.mrb[0].mxu0
        %v3129 = vadd.f32 %v2936, %v3128
        %v3130 = vpop.f32.mrb[0].mxu0
        %v3131 = vadd.f32 %v2938, %v3130
        %v3132 = vpop.f32.mrb[0].mxu0
        %v3133 = vadd.f32 %v2940, %v3132
        %v3134 = vpop.f32.mrb[0].mxu0
        %v3135 = vadd.f32 %v2942, %v3134
        %3136 = vmatprep.mubr.bf16.mxu0 %v834
        %3137 = vmatmul.mubr.bf16.gmra.mrb[0].mxu0 %v833
        %v3138 = vpop.f32.mrb[0].mxu0
        %v3139 = vadd.f32 %v2946, %v3138
        %v3140 = vpop.f32.mrb[0].mxu0
        %v3141 = vadd.f32 %v2948, %v3140
        %v3142 = vpop.f32.mrb[0].mxu0
        %v3143 = vadd.f32 %v2950, %v3142
        %v3144 = vpop.f32.mrb[0].mxu0
        %v3145 = vadd.f32 %v2952, %v3144
        %3146 = vmatprep.mubr.bf16.mxu0 %v842
        %3147 = vmatmul.mubr.bf16.gmra.mrb[0].mxu0 %v841
        %v3148 = vpop.f32.mrb[0].mxu0
        %v3149 = vadd.f32 %v2956, %v3148
        %v3150 = vpop.f32.mrb[0].mxu0
        %v3151 = vadd.f32 %v2958, %v3150
        %v3152 = vpop.f32.mrb[0].mxu0
        %v3153 = vadd.f32 %v2960, %v3152
        %v3154 = vpop.f32.mrb[0].mxu0
        %v3155 = vadd.f32 %v2962, %v3154
        %3156 = vmatprep.mubr.bf16.mxu0 %v850
        %3157 = vmatmul.mubr.bf16.gmra.mrb[0].mxu0 %v849
        %v3158 = vpop.f32.mrb[0].mxu0
        %v3159 = vadd.f32 %v2966, %v3158
        %v3160 = vpop.f32.mrb[0].mxu0
        %v3161 = vadd.f32 %v2968, %v3160
        %v3162 = vpop.f32.mrb[0].mxu0
        %v3163 = vadd.f32 %v2970, %v3162
        %v3164 = vpop.f32.mrb[0].mxu0
        %v3165 = vadd.f32 %v2972, %v3164
        %3166 = vmatprep.mubr.bf16.mxu0 %v858
        %3167 = vmatmul.mubr.bf16.gmra.mrb[0].mxu0 %v857
        %v3168 = vpop.f32.mrb[0].mxu0
        %v3169 = vadd.f32 %v2976, %v3168
        %v3170 = vpop.f32.mrb[0].mxu0
        %v3171 = vadd.f32 %v2978, %v3170
        %v3172 = vpop.f32.mrb[0].mxu0
        %v3173 = vadd.f32 %v2980, %v3172
        %v3174 = vpop.f32.mrb[0].mxu0
        %v3175 = vadd.f32 %v2982, %v3174
        %3176 = vmatprep.mubr.bf16.mxu0 %v866
        %3177 = vmatmul.mubr.bf16.gmra.mrb[0].mxu0 %v865
        %v3178 = vpop.f32.mrb[0].mxu0
        %v3179 = vadd.f32 %v2986, %v3178
        %v3180 = vpop.f32.mrb[0].mxu0
        %v3181 = vadd.f32 %v2988, %v3180
        %v3182 = vpop.f32.mrb[0].mxu0
        %v3183 = vadd.f32 %v2990, %v3182
        %v3184 = vpop.f32.mrb[0].mxu0
        %v3185 = vadd.f32 %v2992, %v3184
        %3186 = vmatprep.mubr.bf16.mxu0 %v874
        %3187 = vmatmul.mubr.bf16.gmra.mrb[0].mxu0 %v873
        %v3188 = vpop.f32.mrb[0].mxu0
        %v3189 = vadd.f32 %v2996, %v3188
        %v3190 = vpop.f32.mrb[0].mxu0
        %v3191 = vadd.f32 %v2998, %v3190
        %v3192 = vpop.f32.mrb[0].mxu0
        %v3193 = vadd.f32 %v3000, %v3192
        %v3194 = vpop.f32.mrb[0].mxu0
        %v3195 = vadd.f32 %v3002, %v3194
        %3196 = vmatprep.mubr.bf16.mxu0 %v882
        %3197 = vmatmul.mubr.bf16.gmra.mrb[0].mxu0 %v881
        %v3198 = vpop.f32.mrb[0].mxu0
        %v3199 = vadd.f32 %v3006, %v3198
        %v3200 = vpop.f32.mrb[0].mxu0
        %v3201 = vadd.f32 %v3008, %v3200
        %v3202 = vpop.f32.mrb[0].mxu0
        %v3203 = vadd.f32 %v3010, %v3202
        %v3204 = vpop.f32.mrb[0].mxu0
        %v3205 = vadd.f32 %v3012, %v3204
        %3206 = vmatprep.mubr.bf16.mxu0 %v890
        %3207 = vmatmul.mubr.bf16.gmra.mrb[0].mxu0 %v889
        %v3208 = vpop.f32.mrb[0].mxu0
        %v3209 = vadd.f32 %v3016, %v3208
        %v3210 = vpop.f32.mrb[0].mxu0
        %v3211 = vadd.f32 %v3018, %v3210
        %v3212 = vpop.f32.mrb[0].mxu0
        %v3213 = vadd.f32 %v3020, %v3212
        %v3214 = vpop.f32.mrb[0].mxu0
        %v3215 = vadd.f32 %v3022, %v3214
        %3216 = vmatprep.mubr.bf16.mxu0 %v898
        %3217 = vmatmul.mubr.bf16.gmra.mrb[0].mxu0 %v897
        %v3218 = vpop.f32.mrb[0].mxu0
        %v3219 = vadd.f32 %v3026, %v3218
        %v3220 = vpop.f32.mrb[0].mxu0
        %v3221 = vadd.f32 %v3028, %v3220
        %v3222 = vpop.f32.mrb[0].mxu0
        %v3223 = vadd.f32 %v3030, %v3222
        %v3224 = vpop.f32.mrb[0].mxu0
        %v3225 = vadd.f32 %v3032, %v3224
        %3226 = vmatprep.mubr.bf16.mxu0 %v906
        %3227 = vmatmul.mubr.bf16.gmra.mrb[0].mxu0 %v905
        %v3228 = vpop.f32.mrb[0].mxu0
        %v3229 = vadd.f32 %v3036, %v3228
        %v3230 = vpop.f32.mrb[0].mxu0
        %v3231 = vadd.f32 %v3038, %v3230
        %v3232 = vpop.f32.mrb[0].mxu0
        %v3233 = vadd.f32 %v3040, %v3232
        %v3234 = vpop.f32.mrb[0].mxu0
        %v3235 = vadd.f32 %v3042, %v3234
        %3236 = vdwg.mxu0
        %3237 = vmatprep.subr.bf16.mxu0 %v1956
        %3238 = vmatpush1.bf16.msra.mxu0 %v1955
        %3239 = vmatprep.subr.bf16.mxu0 %v1960
        %3240 = vmatpush1.bf16.msra.mxu0 %v1959
        %3241 = vmatprep.subr.bf16.mxu0 %v1964
        %3242 = vmatpush1.bf16.msra.mxu0 %v1963
        %3243 = vmatprep.subr.bf16.mxu0 %v1968
        %3244 = vmatpush1.bf16.msra.mxu0 %v1967
        %3245 = vmatprep.subr.bf16.mxu0 %v1972
        %3246 = vmatpush1.bf16.msra.mxu0 %v1971
        %3247 = vmatprep.subr.bf16.mxu0 %v1976
        %3248 = vmatpush1.bf16.msra.mxu0 %v1975
        %3249 = vmatprep.subr.bf16.mxu0 %v1980
        %3250 = vmatpush1.bf16.msra.mxu0 %v1979
        %3251 = vmatprep.subr.bf16.mxu0 %v1984
        %3252 = vmatpush1.bf16.msra.mxu0 %v1983
        %3253 = vmatprep.subr.bf16.mxu0 %v1988
        %3254 = vmatpush1.bf16.msra.mxu0 %v1987
        %3255 = vmatprep.subr.bf16.mxu0 %v1992
        %3256 = vmatpush1.bf16.msra.mxu0 %v1991
        %3257 = vmatprep.subr.bf16.mxu0 %v1996
        %3258 = vmatpush1.bf16.msra.mxu0 %v1995
        %3259 = vmatprep.subr.bf16.mxu0 %v2000
        %3260 = vmatpush1.bf16.msra.mxu0 %v1999
        %3261 = vmatprep.subr.bf16.mxu0 %v2004
        %3262 = vmatpush1.bf16.msra.mxu0 %v2003
        %3263 = vmatprep.subr.bf16.mxu0 %v2008
        %3264 = vmatpush1.bf16.msra.mxu0 %v2007
        %3265 = vmatprep.subr.bf16.mxu0 %v2012
        %3266 = vmatpush1.bf16.msra.mxu0 %v2011
        %3267 = vmatprep.subr.bf16.mxu0 %v2016
        %3268 = vmatpush1.bf16.msra.mxu0 %v2015
        %3269 = vmatprep.mubr.bf16.mxu0 %v780
        %3270 = vmatmul.mubr.bf16.gmra.mrb[0].mxu0 %v779
        %v3271 = vpop.f32.mrb[0].mxu0
        %v3272 = vadd.f32 %v1176, %v3271
        %v3273 = vpop.f32.mrb[0].mxu0
        %v3274 = vadd.f32 %v1180, %v3273
        %v3275 = vpop.f32.mrb[0].mxu0
        %v3276 = vadd.f32 %v1176, %v3275
        %v3277 = vpop.f32.mrb[0].mxu0
        %v3278 = vadd.f32 %v1180, %v3277
        %3279 = vmatprep.mubr.bf16.mxu0 %v788
        %3280 = vmatmul.mubr.bf16.gmra.mrb[0].mxu0 %v787
        %v3281 = vpop.f32.mrb[0].mxu0
        %v3282 = vadd.f32 %v1176, %v3281
        %v3283 = vpop.f32.mrb[0].mxu0
        %v3284 = vadd.f32 %v1180, %v3283
        %v3285 = vpop.f32.mrb[0].mxu0
        %v3286 = vadd.f32 %v1176, %v3285
        %v3287 = vpop.f32.mrb[0].mxu0
        %v3288 = vadd.f32 %v1180, %v3287
        %3289 = vmatprep.mubr.bf16.mxu0 %v796
        %3290 = vmatmul.mubr.bf16.gmra.mrb[0].mxu0 %v795
        %v3291 = vpop.f32.mrb[0].mxu0
        %v3292 = vadd.f32 %v1176, %v3291
        %v3293 = vpop.f32.mrb[0].mxu0
        %v3294 = vadd.f32 %v1180, %v3293
        %v3295 = vpop.f32.mrb[0].mxu0
        %v3296 = vadd.f32 %v1176, %v3295
        %v3297 = vpop.f32.mrb[0].mxu0
        %v3298 = vadd.f32 %v1180, %v3297
        %3299 = vmatprep.mubr.bf16.mxu0 %v804
        %3300 = vmatmul.mubr.bf16.gmra.mrb[0].mxu0 %v803
        %v3301 = vpop.f32.mrb[0].mxu0
        %v3302 = vadd.f32 %v1176, %v3301
        %v3303 = vpop.f32.mrb[0].mxu0
        %v3304 = vadd.f32 %v1180, %v3303
        %v3305 = vpop.f32.mrb[0].mxu0
        %v3306 = vadd.f32 %v1176, %v3305
        %v3307 = vpop.f32.mrb[0].mxu0
        %v3308 = vadd.f32 %v1180, %v3307
        %3309 = vmatprep.mubr.bf16.mxu0 %v812
        %3310 = vmatmul.mubr.bf16.gmra.mrb[0].mxu0 %v811
        %v3311 = vpop.f32.mrb[0].mxu0
        %v3312 = vadd.f32 %v1176, %v3311
        %v3313 = vpop.f32.mrb[0].mxu0
        %v3314 = vadd.f32 %v1180, %v3313
        %v3315 = vpop.f32.mrb[0].mxu0
        %v3316 = vadd.f32 %v1176, %v3315
        %v3317 = vpop.f32.mrb[0].mxu0
        %v3318 = vadd.f32 %v1180, %v3317
        %3319 = vmatprep.mubr.bf16.mxu0 %v820
        %3320 = vmatmul.mubr.bf16.gmra.mrb[0].mxu0 %v819
        %v3321 = vpop.f32.mrb[0].mxu0
        %v3322 = vadd.f32 %v1176, %v3321
        %v3323 = vpop.f32.mrb[0].mxu0
        %v3324 = vadd.f32 %v1180, %v3323
        %v3325 = vpop.f32.mrb[0].mxu0
        %v3326 = vadd.f32 %v1176, %v3325
        %v3327 = vpop.f32.mrb[0].mxu0
        %v3328 = vadd.f32 %v1180, %v3327
        %3329 = vmatprep.mubr.bf16.mxu0 %v828
        %3330 = vmatmul.mubr.bf16.gmra.mrb[0].mxu0 %v827
        %v3331 = vpop.f32.mrb[0].mxu0
        %v3332 = vadd.f32 %v1176, %v3331
        %v3333 = vpop.f32.mrb[0].mxu0
        %v3334 = vadd.f32 %v1180, %v3333
        %v3335 = vpop.f32.mrb[0].mxu0
        %v3336 = vadd.f32 %v1176, %v3335
        %v3337 = vpop.f32.mrb[0].mxu0
        %v3338 = vadd.f32 %v1180, %v3337
        %3339 = vmatprep.mubr.bf16.mxu0 %v836
        %3340 = vmatmul.mubr.bf16.gmra.mrb[0].mxu0 %v835
        %v3341 = vpop.f32.mrb[0].mxu0
        %v3342 = vadd.f32 %v1176, %v3341
        %v3343 = vpop.f32.mrb[0].mxu0
        %v3344 = vadd.f32 %v1180, %v3343
        %v3345 = vpop.f32.mrb[0].mxu0
        %v3346 = vadd.f32 %v1176, %v3345
        %v3347 = vpop.f32.mrb[0].mxu0
        %v3348 = vadd.f32 %v1180, %v3347
        %3349 = vmatprep.mubr.bf16.mxu0 %v844
        %3350 = vmatmul.mubr.bf16.gmra.mrb[0].mxu0 %v843
        %v3351 = vpop.f32.mrb[0].mxu0
        %v3352 = vadd.f32 %v1176, %v3351
        %v3353 = vpop.f32.mrb[0].mxu0
        %v3354 = vadd.f32 %v1180, %v3353
        %v3355 = vpop.f32.mrb[0].mxu0
        %v3356 = vadd.f32 %v1176, %v3355
        %v3357 = vpop.f32.mrb[0].mxu0
        %v3358 = vadd.f32 %v1180, %v3357
        %3359 = vmatprep.mubr.bf16.mxu0 %v852
        %3360 = vmatmul.mubr.bf16.gmra.mrb[0].mxu0 %v851
        %v3361 = vpop.f32.mrb[0].mxu0
        %v3362 = vadd.f32 %v1176, %v3361
        %v3363 = vpop.f32.mrb[0].mxu0
        %v3364 = vadd.f32 %v1180, %v3363
        %v3365 = vpop.f32.mrb[0].mxu0
        %v3366 = vadd.f32 %v1176, %v3365
        %v3367 = vpop.f32.mrb[0].mxu0
        %v3368 = vadd.f32 %v1180, %v3367
        %3369 = vmatprep.mubr.bf16.mxu0 %v860
        %3370 = vmatmul.mubr.bf16.gmra.mrb[0].mxu0 %v859
        %v3371 = vpop.f32.mrb[0].mxu0
        %v3372 = vadd.f32 %v1176, %v3371
        %v3373 = vpop.f32.mrb[0].mxu0
        %v3374 = vadd.f32 %v1180, %v3373
        %v3375 = vpop.f32.mrb[0].mxu0
        %v3376 = vadd.f32 %v1176, %v3375
        %v3377 = vpop.f32.mrb[0].mxu0
        %v3378 = vadd.f32 %v1180, %v3377
        %3379 = vmatprep.mubr.bf16.mxu0 %v868
        %3380 = vmatmul.mubr.bf16.gmra.mrb[0].mxu0 %v867
        %v3381 = vpop.f32.mrb[0].mxu0
        %v3382 = vadd.f32 %v1176, %v3381
        %v3383 = vpop.f32.mrb[0].mxu0
        %v3384 = vadd.f32 %v1180, %v3383
        %v3385 = vpop.f32.mrb[0].mxu0
        %v3386 = vadd.f32 %v1176, %v3385
        %v3387 = vpop.f32.mrb[0].mxu0
        %v3388 = vadd.f32 %v1180, %v3387
        %3389 = vmatprep.mubr.bf16.mxu0 %v876
        %3390 = vmatmul.mubr.bf16.gmra.mrb[0].mxu0 %v875
        %v3391 = vpop.f32.mrb[0].mxu0
        %v3392 = vadd.f32 %v1176, %v3391
        %v3393 = vpop.f32.mrb[0].mxu0
        %v3394 = vadd.f32 %v1180, %v3393
        %v3395 = vpop.f32.mrb[0].mxu0
        %v3396 = vadd.f32 %v1176, %v3395
        %v3397 = vpop.f32.mrb[0].mxu0
        %v3398 = vadd.f32 %v1180, %v3397
        %3399 = vmatprep.mubr.bf16.mxu0 %v884
        %3400 = vmatmul.mubr.bf16.gmra.mrb[0].mxu0 %v883
        %v3401 = vpop.f32.mrb[0].mxu0
        %v3402 = vadd.f32 %v1176, %v3401
        %v3403 = vpop.f32.mrb[0].mxu0
        %v3404 = vadd.f32 %v1180, %v3403
        %v3405 = vpop.f32.mrb[0].mxu0
        %v3406 = vadd.f32 %v1176, %v3405
        %v3407 = vpop.f32.mrb[0].mxu0
        %v3408 = vadd.f32 %v1180, %v3407
        %3409 = vmatprep.mubr.bf16.mxu0 %v892
        %3410 = vmatmul.mubr.bf16.gmra.mrb[0].mxu0 %v891
        %v3411 = vpop.f32.mrb[0].mxu0
        %v3412 = vadd.f32 %v1176, %v3411
        %v3413 = vpop.f32.mrb[0].mxu0
        %v3414 = vadd.f32 %v1180, %v3413
        %v3415 = vpop.f32.mrb[0].mxu0
        %v3416 = vadd.f32 %v1176, %v3415
        %v3417 = vpop.f32.mrb[0].mxu0
        %v3418 = vadd.f32 %v1180, %v3417
        %3419 = vmatprep.mubr.bf16.mxu0 %v900
        %3420 = vmatmul.mubr.bf16.gmra.mrb[0].mxu0 %v899
        %v3421 = vpop.f32.mrb[0].mxu0
        %v3422 = vadd.f32 %v1176, %v3421
        %v3423 = vpop.f32.mrb[0].mxu0
        %v3424 = vadd.f32 %v1180, %v3423
        %v3425 = vpop.f32.mrb[0].mxu0
        %v3426 = vadd.f32 %v1176, %v3425
        %v3427 = vpop.f32.mrb[0].mxu0
        %v3428 = vadd.f32 %v1180, %v3427
        %3429 = vdwg.mxu0
        %3430 = vmatprep.subr.bf16.mxu0 %v2020
        %3431 = vmatpush1.bf16.msra.mxu0 %v2019
        %3432 = vmatprep.subr.bf16.mxu0 %v2024
        %3433 = vmatpush1.bf16.msra.mxu0 %v2023
        %3434 = vmatprep.subr.bf16.mxu0 %v2028
        %3435 = vmatpush1.bf16.msra.mxu0 %v2027
        %3436 = vmatprep.subr.bf16.mxu0 %v2032
        %3437 = vmatpush1.bf16.msra.mxu0 %v2031
        %3438 = vmatprep.subr.bf16.mxu0 %v2036
        %3439 = vmatpush1.bf16.msra.mxu0 %v2035
        %3440 = vmatprep.subr.bf16.mxu0 %v2040
        %3441 = vmatpush1.bf16.msra.mxu0 %v2039
        %3442 = vmatprep.subr.bf16.mxu0 %v2044
        %3443 = vmatpush1.bf16.msra.mxu0 %v2043
        %3444 = vmatprep.subr.bf16.mxu0 %v2048
        %3445 = vmatpush1.bf16.msra.mxu0 %v2047
        %3446 = vmatprep.subr.bf16.mxu0 %v2052
        %3447 = vmatpush1.bf16.msra.mxu0 %v2051
        %3448 = vmatprep.subr.bf16.mxu0 %v2056
        %3449 = vmatpush1.bf16.msra.mxu0 %v2055
        %3450 = vmatprep.subr.bf16.mxu0 %v2060
        %3451 = vmatpush1.bf16.msra.mxu0 %v2059
        %3452 = vmatprep.subr.bf16.mxu0 %v2064
        %3453 = vmatpush1.bf16.msra.mxu0 %v2063
        %3454 = vmatprep.subr.bf16.mxu0 %v2068
        %3455 = vmatpush1.bf16.msra.mxu0 %v2067
        %3456 = vmatprep.subr.bf16.mxu0 %v2072
        %3457 = vmatpush1.bf16.msra.mxu0 %v2071
        %3458 = vmatprep.subr.bf16.mxu0 %v2076
        %3459 = vmatpush1.bf16.msra.mxu0 %v2075
        %3460 = vmatprep.subr.bf16.mxu0 %v2080
        %3461 = vmatpush1.bf16.msra.mxu0 %v2079
        %3462 = vmatprep.mubr.bf16.mxu0 %v782
        %3463 = vmatmul.mubr.bf16.gmra.mrb[0].mxu0 %v781
        %v3464 = vpop.f32.mrb[0].mxu0
        %v3465 = vadd.f32 %v3272, %v3464
        %v3466 = vpop.f32.mrb[0].mxu0
        %v3467 = vadd.f32 %v3274, %v3466
        %v3468 = vpop.f32.mrb[0].mxu0
        %v3469 = vadd.f32 %v3276, %v3468
        %v3470 = vpop.f32.mrb[0].mxu0
        %v3471 = vadd.f32 %v3278, %v3470
        %3472 = vmatprep.mubr.bf16.mxu0 %v790
        %3473 = vmatmul.mubr.bf16.gmra.mrb[0].mxu0 %v789
        %v3474 = vpop.f32.mrb[0].mxu0
        %v3475 = vadd.f32 %v3282, %v3474
        %v3476 = vpop.f32.mrb[0].mxu0
        %v3477 = vadd.f32 %v3284, %v3476
        %v3478 = vpop.f32.mrb[0].mxu0
        %v3479 = vadd.f32 %v3286, %v3478
        %v3480 = vpop.f32.mrb[0].mxu0
        %v3481 = vadd.f32 %v3288, %v3480
        %3482 = vmatprep.mubr.bf16.mxu0 %v798
        %3483 = vmatmul.mubr.bf16.gmra.mrb[0].mxu0 %v797
        %v3484 = vpop.f32.mrb[0].mxu0
        %v3485 = vadd.f32 %v3292, %v3484
        %v3486 = vpop.f32.mrb[0].mxu0
        %v3487 = vadd.f32 %v3294, %v3486
        %v3488 = vpop.f32.mrb[0].mxu0
        %v3489 = vadd.f32 %v3296, %v3488
        %v3490 = vpop.f32.mrb[0].mxu0
        %v3491 = vadd.f32 %v3298, %v3490
        %3492 = vmatprep.mubr.bf16.mxu0 %v806
        %3493 = vmatmul.mubr.bf16.gmra.mrb[0].mxu0 %v805
        %v3494 = vpop.f32.mrb[0].mxu0
        %v3495 = vadd.f32 %v3302, %v3494
        %v3496 = vpop.f32.mrb[0].mxu0
        %v3497 = vadd.f32 %v3304, %v3496
        %v3498 = vpop.f32.mrb[0].mxu0
        %v3499 = vadd.f32 %v3306, %v3498
        %v3500 = vpop.f32.mrb[0].mxu0
        %v3501 = vadd.f32 %v3308, %v3500
        %3502 = vmatprep.mubr.bf16.mxu0 %v814
        %3503 = vmatmul.mubr.bf16.gmra.mrb[0].mxu0 %v813
        %v3504 = vpop.f32.mrb[0].mxu0
        %v3505 = vadd.f32 %v3312, %v3504
        %v3506 = vpop.f32.mrb[0].mxu0
        %v3507 = vadd.f32 %v3314, %v3506
        %v3508 = vpop.f32.mrb[0].mxu0
        %v3509 = vadd.f32 %v3316, %v3508
        %v3510 = vpop.f32.mrb[0].mxu0
        %v3511 = vadd.f32 %v3318, %v3510
        %3512 = vmatprep.mubr.bf16.mxu0 %v822
        %3513 = vmatmul.mubr.bf16.gmra.mrb[0].mxu0 %v821
        %v3514 = vpop.f32.mrb[0].mxu0
        %v3515 = vadd.f32 %v3322, %v3514
        %v3516 = vpop.f32.mrb[0].mxu0
        %v3517 = vadd.f32 %v3324, %v3516
        %v3518 = vpop.f32.mrb[0].mxu0
        %v3519 = vadd.f32 %v3326, %v3518
        %v3520 = vpop.f32.mrb[0].mxu0
        %v3521 = vadd.f32 %v3328, %v3520
        %3522 = vmatprep.mubr.bf16.mxu0 %v830
        %3523 = vmatmul.mubr.bf16.gmra.mrb[0].mxu0 %v829
        %v3524 = vpop.f32.mrb[0].mxu0
        %v3525 = vadd.f32 %v3332, %v3524
        %v3526 = vpop.f32.mrb[0].mxu0
        %v3527 = vadd.f32 %v3334, %v3526
        %v3528 = vpop.f32.mrb[0].mxu0
        %v3529 = vadd.f32 %v3336, %v3528
        %v3530 = vpop.f32.mrb[0].mxu0
        %v3531 = vadd.f32 %v3338, %v3530
        %3532 = vmatprep.mubr.bf16.mxu0 %v838
        %3533 = vmatmul.mubr.bf16.gmra.mrb[0].mxu0 %v837
        %v3534 = vpop.f32.mrb[0].mxu0
        %v3535 = vadd.f32 %v3342, %v3534
        %v3536 = vpop.f32.mrb[0].mxu0
        %v3537 = vadd.f32 %v3344, %v3536
        %v3538 = vpop.f32.mrb[0].mxu0
        %v3539 = vadd.f32 %v3346, %v3538
        %v3540 = vpop.f32.mrb[0].mxu0
        %v3541 = vadd.f32 %v3348, %v3540
        %3542 = vmatprep.mubr.bf16.mxu0 %v846
        %3543 = vmatmul.mubr.bf16.gmra.mrb[0].mxu0 %v845
        %v3544 = vpop.f32.mrb[0].mxu0
        %v3545 = vadd.f32 %v3352, %v3544
        %v3546 = vpop.f32.mrb[0].mxu0
        %v3547 = vadd.f32 %v3354, %v3546
        %v3548 = vpop.f32.mrb[0].mxu0
        %v3549 = vadd.f32 %v3356, %v3548
        %v3550 = vpop.f32.mrb[0].mxu0
        %v3551 = vadd.f32 %v3358, %v3550
        %3552 = vmatprep.mubr.bf16.mxu0 %v854
        %3553 = vmatmul.mubr.bf16.gmra.mrb[0].mxu0 %v853
        %v3554 = vpop.f32.mrb[0].mxu0
        %v3555 = vadd.f32 %v3362, %v3554
        %v3556 = vpop.f32.mrb[0].mxu0
        %v3557 = vadd.f32 %v3364, %v3556
        %v3558 = vpop.f32.mrb[0].mxu0
        %v3559 = vadd.f32 %v3366, %v3558
        %v3560 = vpop.f32.mrb[0].mxu0
        %v3561 = vadd.f32 %v3368, %v3560
        %3562 = vmatprep.mubr.bf16.mxu0 %v862
        %3563 = vmatmul.mubr.bf16.gmra.mrb[0].mxu0 %v861
        %v3564 = vpop.f32.mrb[0].mxu0
        %v3565 = vadd.f32 %v3372, %v3564
        %v3566 = vpop.f32.mrb[0].mxu0
        %v3567 = vadd.f32 %v3374, %v3566
        %v3568 = vpop.f32.mrb[0].mxu0
        %v3569 = vadd.f32 %v3376, %v3568
        %v3570 = vpop.f32.mrb[0].mxu0
        %v3571 = vadd.f32 %v3378, %v3570
        %3572 = vmatprep.mubr.bf16.mxu0 %v870
        %3573 = vmatmul.mubr.bf16.gmra.mrb[0].mxu0 %v869
        %v3574 = vpop.f32.mrb[0].mxu0
        %v3575 = vadd.f32 %v3382, %v3574
        %v3576 = vpop.f32.mrb[0].mxu0
        %v3577 = vadd.f32 %v3384, %v3576
        %v3578 = vpop.f32.mrb[0].mxu0
        %v3579 = vadd.f32 %v3386, %v3578
        %v3580 = vpop.f32.mrb[0].mxu0
        %v3581 = vadd.f32 %v3388, %v3580
        %3582 = vmatprep.mubr.bf16.mxu0 %v878
        %3583 = vmatmul.mubr.bf16.gmra.mrb[0].mxu0 %v877
        %v3584 = vpop.f32.mrb[0].mxu0
        %v3585 = vadd.f32 %v3392, %v3584
        %v3586 = vpop.f32.mrb[0].mxu0
        %v3587 = vadd.f32 %v3394, %v3586
        %v3588 = vpop.f32.mrb[0].mxu0
        %v3589 = vadd.f32 %v3396, %v3588
        %v3590 = vpop.f32.mrb[0].mxu0
        %v3591 = vadd.f32 %v3398, %v3590
        %3592 = vmatprep.mubr.bf16.mxu0 %v886
        %3593 = vmatmul.mubr.bf16.gmra.mrb[0].mxu0 %v885
        %v3594 = vpop.f32.mrb[0].mxu0
        %v3595 = vadd.f32 %v3402, %v3594
        %v3596 = vpop.f32.mrb[0].mxu0
        %v3597 = vadd.f32 %v3404, %v3596
        %v3598 = vpop.f32.mrb[0].mxu0
        %v3599 = vadd.f32 %v3406, %v3598
        %v3600 = vpop.f32.mrb[0].mxu0
        %v3601 = vadd.f32 %v3408, %v3600
        %3602 = vmatprep.mubr.bf16.mxu0 %v894
        %3603 = vmatmul.mubr.bf16.gmra.mrb[0].mxu0 %v893
        %v3604 = vpop.f32.mrb[0].mxu0
        %v3605 = vadd.f32 %v3412, %v3604
        %v3606 = vpop.f32.mrb[0].mxu0
        %v3607 = vadd.f32 %v3414, %v3606
        %v3608 = vpop.f32.mrb[0].mxu0
        %v3609 = vadd.f32 %v3416, %v3608
        %v3610 = vpop.f32.mrb[0].mxu0
        %v3611 = vadd.f32 %v3418, %v3610
        %3612 = vmatprep.mubr.bf16.mxu0 %v902
        %3613 = vmatmul.mubr.bf16.gmra.mrb[0].mxu0 %v901
        %v3614 = vpop.f32.mrb[0].mxu0
        %v3615 = vadd.f32 %v3422, %v3614
        %v3616 = vpop.f32.mrb[0].mxu0
        %v3617 = vadd.f32 %v3424, %v3616
        %v3618 = vpop.f32.mrb[0].mxu0
        %v3619 = vadd.f32 %v3426, %v3618
        %v3620 = vpop.f32.mrb[0].mxu0
        %v3621 = vadd.f32 %v3428, %v3620
        %3622 = vdwg.mxu0
        %3623 = vmatprep.subr.bf16.mxu0 %v2084
        %3624 = vmatpush1.bf16.msra.mxu0 %v2083
        %3625 = vmatprep.subr.bf16.mxu0 %v2088
        %3626 = vmatpush1.bf16.msra.mxu0 %v2087
        %3627 = vmatprep.subr.bf16.mxu0 %v2092
        %3628 = vmatpush1.bf16.msra.mxu0 %v2091
        %3629 = vmatprep.subr.bf16.mxu0 %v2096
        %3630 = vmatpush1.bf16.msra.mxu0 %v2095
        %3631 = vmatprep.subr.bf16.mxu0 %v2100
        %3632 = vmatpush1.bf16.msra.mxu0 %v2099
        %3633 = vmatprep.subr.bf16.mxu0 %v2104
        %3634 = vmatpush1.bf16.msra.mxu0 %v2103
        %3635 = vmatprep.subr.bf16.mxu0 %v2108
        %3636 = vmatpush1.bf16.msra.mxu0 %v2107
        %3637 = vmatprep.subr.bf16.mxu0 %v2112
        %3638 = vmatpush1.bf16.msra.mxu0 %v2111
        %3639 = vmatprep.subr.bf16.mxu0 %v2116
        %3640 = vmatpush1.bf16.msra.mxu0 %v2115
        %3641 = vmatprep.subr.bf16.mxu0 %v2120
        %3642 = vmatpush1.bf16.msra.mxu0 %v2119
        %3643 = vmatprep.subr.bf16.mxu0 %v2124
        %3644 = vmatpush1.bf16.msra.mxu0 %v2123
        %3645 = vmatprep.subr.bf16.mxu0 %v2128
        %3646 = vmatpush1.bf16.msra.mxu0 %v2127
        %3647 = vmatprep.subr.bf16.mxu0 %v2132
        %3648 = vmatpush1.bf16.msra.mxu0 %v2131
        %3649 = vmatprep.subr.bf16.mxu0 %v2136
        %3650 = vmatpush1.bf16.msra.mxu0 %v2135
        %3651 = vmatprep.subr.bf16.mxu0 %v2140
        %3652 = vmatpush1.bf16.msra.mxu0 %v2139
        %3653 = vmatprep.subr.bf16.mxu0 %v2144
        %3654 = vmatpush1.bf16.msra.mxu0 %v2143
        %3655 = vmatprep.mubr.bf16.mxu0 %v784
        %3656 = vmatmul.mubr.bf16.gmra.mrb[0].mxu0 %v783
        %v3657 = vpop.f32.mrb[0].mxu0
        %v3658 = vadd.f32 %v3465, %v3657
        %v3659 = vpop.f32.mrb[0].mxu0
        %v3660 = vadd.f32 %v3467, %v3659
        %v3661 = vpop.f32.mrb[0].mxu0
        %v3662 = vadd.f32 %v3469, %v3661
        %v3663 = vpop.f32.mrb[0].mxu0
        %v3664 = vadd.f32 %v3471, %v3663
        %3665 = vmatprep.mubr.bf16.mxu0 %v792
        %3666 = vmatmul.mubr.bf16.gmra.mrb[0].mxu0 %v791
        %v3667 = vpop.f32.mrb[0].mxu0
        %v3668 = vadd.f32 %v3475, %v3667
        %v3669 = vpop.f32.mrb[0].mxu0
        %v3670 = vadd.f32 %v3477, %v3669
        %v3671 = vpop.f32.mrb[0].mxu0
        %v3672 = vadd.f32 %v3479, %v3671
        %v3673 = vpop.f32.mrb[0].mxu0
        %v3674 = vadd.f32 %v3481, %v3673
        %3675 = vmatprep.mubr.bf16.mxu0 %v800
        %3676 = vmatmul.mubr.bf16.gmra.mrb[0].mxu0 %v799
        %v3677 = vpop.f32.mrb[0].mxu0
        %v3678 = vadd.f32 %v3485, %v3677
        %v3679 = vpop.f32.mrb[0].mxu0
        %v3680 = vadd.f32 %v3487, %v3679
        %v3681 = vpop.f32.mrb[0].mxu0
        %v3682 = vadd.f32 %v3489, %v3681
        %v3683 = vpop.f32.mrb[0].mxu0
        %v3684 = vadd.f32 %v3491, %v3683
        %3685 = vmatprep.mubr.bf16.mxu0 %v808
        %3686 = vmatmul.mubr.bf16.gmra.mrb[0].mxu0 %v807
        %v3687 = vpop.f32.mrb[0].mxu0
        %v3688 = vadd.f32 %v3495, %v3687
        %v3689 = vpop.f32.mrb[0].mxu0
        %v3690 = vadd.f32 %v3497, %v3689
        %v3691 = vpop.f32.mrb[0].mxu0
        %v3692 = vadd.f32 %v3499, %v3691
        %v3693 = vpop.f32.mrb[0].mxu0
        %v3694 = vadd.f32 %v3501, %v3693
        %3695 = vmatprep.mubr.bf16.mxu0 %v816
        %3696 = vmatmul.mubr.bf16.gmra.mrb[0].mxu0 %v815
        %v3697 = vpop.f32.mrb[0].mxu0
        %v3698 = vadd.f32 %v3505, %v3697
        %v3699 = vpop.f32.mrb[0].mxu0
        %v3700 = vadd.f32 %v3507, %v3699
        %v3701 = vpop.f32.mrb[0].mxu0
        %v3702 = vadd.f32 %v3509, %v3701
        %v3703 = vpop.f32.mrb[0].mxu0
        %v3704 = vadd.f32 %v3511, %v3703
        %3705 = vmatprep.mubr.bf16.mxu0 %v824
        %3706 = vmatmul.mubr.bf16.gmra.mrb[0].mxu0 %v823
        %v3707 = vpop.f32.mrb[0].mxu0
        %v3708 = vadd.f32 %v3515, %v3707
        %v3709 = vpop.f32.mrb[0].mxu0
        %v3710 = vadd.f32 %v3517, %v3709
        %v3711 = vpop.f32.mrb[0].mxu0
        %v3712 = vadd.f32 %v3519, %v3711
        %v3713 = vpop.f32.mrb[0].mxu0
        %v3714 = vadd.f32 %v3521, %v3713
        %3715 = vmatprep.mubr.bf16.mxu0 %v832
        %3716 = vmatmul.mubr.bf16.gmra.mrb[0].mxu0 %v831
        %v3717 = vpop.f32.mrb[0].mxu0
        %v3718 = vadd.f32 %v3525, %v3717
        %v3719 = vpop.f32.mrb[0].mxu0
        %v3720 = vadd.f32 %v3527, %v3719
        %v3721 = vpop.f32.mrb[0].mxu0
        %v3722 = vadd.f32 %v3529, %v3721
        %v3723 = vpop.f32.mrb[0].mxu0
        %v3724 = vadd.f32 %v3531, %v3723
        %3725 = vmatprep.mubr.bf16.mxu0 %v840
        %3726 = vmatmul.mubr.bf16.gmra.mrb[0].mxu0 %v839
        %v3727 = vpop.f32.mrb[0].mxu0
        %v3728 = vadd.f32 %v3535, %v3727
        %v3729 = vpop.f32.mrb[0].mxu0
        %v3730 = vadd.f32 %v3537, %v3729
        %v3731 = vpop.f32.mrb[0].mxu0
        %v3732 = vadd.f32 %v3539, %v3731
        %v3733 = vpop.f32.mrb[0].mxu0
        %v3734 = vadd.f32 %v3541, %v3733
        %3735 = vmatprep.mubr.bf16.mxu0 %v848
        %3736 = vmatmul.mubr.bf16.gmra.mrb[0].mxu0 %v847
        %v3737 = vpop.f32.mrb[0].mxu0
        %v3738 = vadd.f32 %v3545, %v3737
        %v3739 = vpop.f32.mrb[0].mxu0
        %v3740 = vadd.f32 %v3547, %v3739
        %v3741 = vpop.f32.mrb[0].mxu0
        %v3742 = vadd.f32 %v3549, %v3741
        %v3743 = vpop.f32.mrb[0].mxu0
        %v3744 = vadd.f32 %v3551, %v3743
        %3745 = vmatprep.mubr.bf16.mxu0 %v856
        %3746 = vmatmul.mubr.bf16.gmra.mrb[0].mxu0 %v855
        %v3747 = vpop.f32.mrb[0].mxu0
        %v3748 = vadd.f32 %v3555, %v3747
        %v3749 = vpop.f32.mrb[0].mxu0
        %v3750 = vadd.f32 %v3557, %v3749
        %v3751 = vpop.f32.mrb[0].mxu0
        %v3752 = vadd.f32 %v3559, %v3751
        %v3753 = vpop.f32.mrb[0].mxu0
        %v3754 = vadd.f32 %v3561, %v3753
        %3755 = vmatprep.mubr.bf16.mxu0 %v864
        %3756 = vmatmul.mubr.bf16.gmra.mrb[0].mxu0 %v863
        %v3757 = vpop.f32.mrb[0].mxu0
        %v3758 = vadd.f32 %v3565, %v3757
        %v3759 = vpop.f32.mrb[0].mxu0
        %v3760 = vadd.f32 %v3567, %v3759
        %v3761 = vpop.f32.mrb[0].mxu0
        %v3762 = vadd.f32 %v3569, %v3761
        %v3763 = vpop.f32.mrb[0].mxu0
        %v3764 = vadd.f32 %v3571, %v3763
        %3765 = vmatprep.mubr.bf16.mxu0 %v872
        %3766 = vmatmul.mubr.bf16.gmra.mrb[0].mxu0 %v871
        %v3767 = vpop.f32.mrb[0].mxu0
        %v3768 = vadd.f32 %v3575, %v3767
        %v3769 = vpop.f32.mrb[0].mxu0
        %v3770 = vadd.f32 %v3577, %v3769
        %v3771 = vpop.f32.mrb[0].mxu0
        %v3772 = vadd.f32 %v3579, %v3771
        %v3773 = vpop.f32.mrb[0].mxu0
        %v3774 = vadd.f32 %v3581, %v3773
        %3775 = vmatprep.mubr.bf16.mxu0 %v880
        %3776 = vmatmul.mubr.bf16.gmra.mrb[0].mxu0 %v879
        %v3777 = vpop.f32.mrb[0].mxu0
        %v3778 = vadd.f32 %v3585, %v3777
        %v3779 = vpop.f32.mrb[0].mxu0
        %v3780 = vadd.f32 %v3587, %v3779
        %v3781 = vpop.f32.mrb[0].mxu0
        %v3782 = vadd.f32 %v3589, %v3781
        %v3783 = vpop.f32.mrb[0].mxu0
        %v3784 = vadd.f32 %v3591, %v3783
        %3785 = vmatprep.mubr.bf16.mxu0 %v888
        %3786 = vmatmul.mubr.bf16.gmra.mrb[0].mxu0 %v887
        %v3787 = vpop.f32.mrb[0].mxu0
        %v3788 = vadd.f32 %v3595, %v3787
        %v3789 = vpop.f32.mrb[0].mxu0
        %v3790 = vadd.f32 %v3597, %v3789
        %v3791 = vpop.f32.mrb[0].mxu0
        %v3792 = vadd.f32 %v3599, %v3791
        %v3793 = vpop.f32.mrb[0].mxu0
        %v3794 = vadd.f32 %v3601, %v3793
        %3795 = vmatprep.mubr.bf16.mxu0 %v896
        %3796 = vmatmul.mubr.bf16.gmra.mrb[0].mxu0 %v895
        %v3797 = vpop.f32.mrb[0].mxu0
        %v3798 = vadd.f32 %v3605, %v3797
        %v3799 = vpop.f32.mrb[0].mxu0
        %v3800 = vadd.f32 %v3607, %v3799
        %v3801 = vpop.f32.mrb[0].mxu0
        %v3802 = vadd.f32 %v3609, %v3801
        %v3803 = vpop.f32.mrb[0].mxu0
        %v3804 = vadd.f32 %v3611, %v3803
        %3805 = vmatprep.mubr.bf16.mxu0 %v904
        %3806 = vmatmul.mubr.bf16.gmra.mrb[0].mxu0 %v903
        %v3807 = vpop.f32.mrb[0].mxu0
        %v3808 = vadd.f32 %v3615, %v3807
        %v3809 = vpop.f32.mrb[0].mxu0
        %v3810 = vadd.f32 %v3617, %v3809
        %v3811 = vpop.f32.mrb[0].mxu0
        %v3812 = vadd.f32 %v3619, %v3811
        %v3813 = vpop.f32.mrb[0].mxu0
        %v3814 = vadd.f32 %v3621, %v3813
        %3815 = vdwg.mxu0
        %3816 = vmatprep.subr.bf16.mxu0 %v2148
        %3817 = vmatpush1.bf16.msra.mxu0 %v2147
        %3818 = vmatprep.subr.bf16.mxu0 %v2152
        %3819 = vmatpush1.bf16.msra.mxu0 %v2151
        %3820 = vmatprep.subr.bf16.mxu0 %v2156
        %3821 = vmatpush1.bf16.msra.mxu0 %v2155
        %3822 = vmatprep.subr.bf16.mxu0 %v2160
        %3823 = vmatpush1.bf16.msra.mxu0 %v2159
        %3824 = vmatprep.subr.bf16.mxu0 %v2164
        %3825 = vmatpush1.bf16.msra.mxu0 %v2163
        %3826 = vmatprep.subr.bf16.mxu0 %v2168
        %3827 = vmatpush1.bf16.msra.mxu0 %v2167
        %3828 = vmatprep.subr.bf16.mxu0 %v2172
        %3829 = vmatpush1.bf16.msra.mxu0 %v2171
        %3830 = vmatprep.subr.bf16.mxu0 %v2176
        %3831 = vmatpush1.bf16.msra.mxu0 %v2175
        %3832 = vmatprep.subr.bf16.mxu0 %v2180
        %3833 = vmatpush1.bf16.msra.mxu0 %v2179
        %3834 = vmatprep.subr.bf16.mxu0 %v2184
        %3835 = vmatpush1.bf16.msra.mxu0 %v2183
        %3836 = vmatprep.subr.bf16.mxu0 %v2188
        %3837 = vmatpush1.bf16.msra.mxu0 %v2187
        %3838 = vmatprep.subr.bf16.mxu0 %v2192
        %3839 = vmatpush1.bf16.msra.mxu0 %v2191
        %3840 = vmatprep.subr.bf16.mxu0 %v2196
        %3841 = vmatpush1.bf16.msra.mxu0 %v2195
        %3842 = vmatprep.subr.bf16.mxu0 %v2200
        %3843 = vmatpush1.bf16.msra.mxu0 %v2199
        %3844 = vmatprep.subr.bf16.mxu0 %v2204
        %3845 = vmatpush1.bf16.msra.mxu0 %v2203
        %3846 = vmatprep.subr.bf16.mxu0 %v2208
        %3847 = vmatpush1.bf16.msra.mxu0 %v2207
        %3848 = vmatprep.mubr.bf16.mxu0 %v786
        %3849 = vmatmul.mubr.bf16.gmra.mrb[0].mxu0 %v785
        %v3850 = vpop.f32.mrb[0].mxu0
        %v3851 = vadd.f32 %v3658, %v3850
        %v3852 = vpop.f32.mrb[0].mxu0
        %v3853 = vadd.f32 %v3660, %v3852
        %v3854 = vpop.f32.mrb[0].mxu0
        %v3855 = vadd.f32 %v3662, %v3854
        %v3856 = vpop.f32.mrb[0].mxu0
        %v3857 = vadd.f32 %v3664, %v3856
        %3858 = vmatprep.mubr.bf16.mxu0 %v794
        %3859 = vmatmul.mubr.bf16.gmra.mrb[0].mxu0 %v793
        %v3860 = vpop.f32.mrb[0].mxu0
        %v3861 = vadd.f32 %v3668, %v3860
        %v3862 = vpop.f32.mrb[0].mxu0
        %v3863 = vadd.f32 %v3670, %v3862
        %v3864 = vpop.f32.mrb[0].mxu0
        %v3865 = vadd.f32 %v3672, %v3864
        %v3866 = vpop.f32.mrb[0].mxu0
        %v3867 = vadd.f32 %v3674, %v3866
        %3868 = vmatprep.mubr.bf16.mxu0 %v802
        %3869 = vmatmul.mubr.bf16.gmra.mrb[0].mxu0 %v801
        %v3870 = vpop.f32.mrb[0].mxu0
        %v3871 = vadd.f32 %v3678, %v3870
        %v3872 = vpop.f32.mrb[0].mxu0
        %v3873 = vadd.f32 %v3680, %v3872
        %v3874 = vpop.f32.mrb[0].mxu0
        %v3875 = vadd.f32 %v3682, %v3874
        %v3876 = vpop.f32.mrb[0].mxu0
        %v3877 = vadd.f32 %v3684, %v3876
        %3878 = vmatprep.mubr.bf16.mxu0 %v810
        %3879 = vmatmul.mubr.bf16.gmra.mrb[0].mxu0 %v809
        %v3880 = vpop.f32.mrb[0].mxu0
        %v3881 = vadd.f32 %v3688, %v3880
        %v3882 = vpop.f32.mrb[0].mxu0
        %v3883 = vadd.f32 %v3690, %v3882
        %v3884 = vpop.f32.mrb[0].mxu0
        %v3885 = vadd.f32 %v3692, %v3884
        %v3886 = vpop.f32.mrb[0].mxu0
        %v3887 = vadd.f32 %v3694, %v3886
        %3888 = vmatprep.mubr.bf16.mxu0 %v818
        %3889 = vmatmul.mubr.bf16.gmra.mrb[0].mxu0 %v817
        %v3890 = vpop.f32.mrb[0].mxu0
        %v3891 = vadd.f32 %v3698, %v3890
        %v3892 = vpop.f32.mrb[0].mxu0
        %v3893 = vadd.f32 %v3700, %v3892
        %v3894 = vpop.f32.mrb[0].mxu0
        %v3895 = vadd.f32 %v3702, %v3894
        %v3896 = vpop.f32.mrb[0].mxu0
        %v3897 = vadd.f32 %v3704, %v3896
        %3898 = vmatprep.mubr.bf16.mxu0 %v826
        %3899 = vmatmul.mubr.bf16.gmra.mrb[0].mxu0 %v825
        %v3900 = vpop.f32.mrb[0].mxu0
        %v3901 = vadd.f32 %v3708, %v3900
        %v3902 = vpop.f32.mrb[0].mxu0
        %v3903 = vadd.f32 %v3710, %v3902
        %v3904 = vpop.f32.mrb[0].mxu0
        %v3905 = vadd.f32 %v3712, %v3904
        %v3906 = vpop.f32.mrb[0].mxu0
        %v3907 = vadd.f32 %v3714, %v3906
        %3908 = vmatprep.mubr.bf16.mxu0 %v834
        %3909 = vmatmul.mubr.bf16.gmra.mrb[0].mxu0 %v833
        %v3910 = vpop.f32.mrb[0].mxu0
        %v3911 = vadd.f32 %v3718, %v3910
        %v3912 = vpop.f32.mrb[0].mxu0
        %v3913 = vadd.f32 %v3720, %v3912
        %v3914 = vpop.f32.mrb[0].mxu0
        %v3915 = vadd.f32 %v3722, %v3914
        %v3916 = vpop.f32.mrb[0].mxu0
        %v3917 = vadd.f32 %v3724, %v3916
        %3918 = vmatprep.mubr.bf16.mxu0 %v842
        %3919 = vmatmul.mubr.bf16.gmra.mrb[0].mxu0 %v841
        %v3920 = vpop.f32.mrb[0].mxu0
        %v3921 = vadd.f32 %v3728, %v3920
        %v3922 = vpop.f32.mrb[0].mxu0
        %v3923 = vadd.f32 %v3730, %v3922
        %v3924 = vpop.f32.mrb[0].mxu0
        %v3925 = vadd.f32 %v3732, %v3924
        %v3926 = vpop.f32.mrb[0].mxu0
        %v3927 = vadd.f32 %v3734, %v3926
        %3928 = vmatprep.mubr.bf16.mxu0 %v850
        %3929 = vmatmul.mubr.bf16.gmra.mrb[0].mxu0 %v849
        %v3930 = vpop.f32.mrb[0].mxu0
        %v3931 = vadd.f32 %v3738, %v3930
        %v3932 = vpop.f32.mrb[0].mxu0
        %v3933 = vadd.f32 %v3740, %v3932
        %v3934 = vpop.f32.mrb[0].mxu0
        %v3935 = vadd.f32 %v3742, %v3934
        %v3936 = vpop.f32.mrb[0].mxu0
        %v3937 = vadd.f32 %v3744, %v3936
        %3938 = vmatprep.mubr.bf16.mxu0 %v858
        %3939 = vmatmul.mubr.bf16.gmra.mrb[0].mxu0 %v857
        %v3940 = vpop.f32.mrb[0].mxu0
        %v3941 = vadd.f32 %v3748, %v3940
        %v3942 = vpop.f32.mrb[0].mxu0
        %v3943 = vadd.f32 %v3750, %v3942
        %v3944 = vpop.f32.mrb[0].mxu0
        %v3945 = vadd.f32 %v3752, %v3944
        %v3946 = vpop.f32.mrb[0].mxu0
        %v3947 = vadd.f32 %v3754, %v3946
        %3948 = vmatprep.mubr.bf16.mxu0 %v866
        %3949 = vmatmul.mubr.bf16.gmra.mrb[0].mxu0 %v865
        %v3950 = vpop.f32.mrb[0].mxu0
        %v3951 = vadd.f32 %v3758, %v3950
        %v3952 = vpop.f32.mrb[0].mxu0
        %v3953 = vadd.f32 %v3760, %v3952
        %v3954 = vpop.f32.mrb[0].mxu0
        %v3955 = vadd.f32 %v3762, %v3954
        %v3956 = vpop.f32.mrb[0].mxu0
        %v3957 = vadd.f32 %v3764, %v3956
        %3958 = vmatprep.mubr.bf16.mxu0 %v874
        %3959 = vmatmul.mubr.bf16.gmra.mrb[0].mxu0 %v873
        %v3960 = vpop.f32.mrb[0].mxu0
        %v3961 = vadd.f32 %v3768, %v3960
        %v3962 = vpop.f32.mrb[0].mxu0
        %v3963 = vadd.f32 %v3770, %v3962
        %v3964 = vpop.f32.mrb[0].mxu0
        %v3965 = vadd.f32 %v3772, %v3964
        %v3966 = vpop.f32.mrb[0].mxu0
        %v3967 = vadd.f32 %v3774, %v3966
        %3968 = vmatprep.mubr.bf16.mxu0 %v882
        %3969 = vmatmul.mubr.bf16.gmra.mrb[0].mxu0 %v881
        %v3970 = vpop.f32.mrb[0].mxu0
        %v3971 = vadd.f32 %v3778, %v3970
        %v3972 = vpop.f32.mrb[0].mxu0
        %v3973 = vadd.f32 %v3780, %v3972
        %v3974 = vpop.f32.mrb[0].mxu0
        %v3975 = vadd.f32 %v3782, %v3974
        %v3976 = vpop.f32.mrb[0].mxu0
        %v3977 = vadd.f32 %v3784, %v3976
        %3978 = vmatprep.mubr.bf16.mxu0 %v890
        %3979 = vmatmul.mubr.bf16.gmra.mrb[0].mxu0 %v889
        %v3980 = vpop.f32.mrb[0].mxu0
        %v3981 = vadd.f32 %v3788, %v3980
        %v3982 = vpop.f32.mrb[0].mxu0
        %v3983 = vadd.f32 %v3790, %v3982
        %v3984 = vpop.f32.mrb[0].mxu0
        %v3985 = vadd.f32 %v3792, %v3984
        %v3986 = vpop.f32.mrb[0].mxu0
        %v3987 = vadd.f32 %v3794, %v3986
        %3988 = vmatprep.mubr.bf16.mxu0 %v898
        %3989 = vmatmul.mubr.bf16.gmra.mrb[0].mxu0 %v897
        %v3990 = vpop.f32.mrb[0].mxu0
        %v3991 = vadd.f32 %v3798, %v3990
        %v3992 = vpop.f32.mrb[0].mxu0
        %v3993 = vadd.f32 %v3800, %v3992
        %v3994 = vpop.f32.mrb[0].mxu0
        %v3995 = vadd.f32 %v3802, %v3994
        %v3996 = vpop.f32.mrb[0].mxu0
        %v3997 = vadd.f32 %v3804, %v3996
        %3998 = vmatprep.mubr.bf16.mxu0 %v906
        %3999 = vmatmul.mubr.bf16.gmra.mrb[0].mxu0 %v905
        %v4000 = vpop.f32.mrb[0].mxu0
        %v4001 = vadd.f32 %v3808, %v4000
        %v4002 = vpop.f32.mrb[0].mxu0
        %v4003 = vadd.f32 %v3810, %v4002
        %v4004 = vpop.f32.mrb[0].mxu0
        %v4005 = vadd.f32 %v3812, %v4004
        %v4006 = vpop.f32.mrb[0].mxu0
        %v4007 = vadd.f32 %v3814, %v4006
        %4008 = vdwg.mxu0
        %v4009 = vmax.f32 %v3079, 0.0
        %v4010 = vmax.f32 %v3081, 0.0
        %v4011 = vmax.f32 %v3851, 0.0
        %v4012 = vmax.f32 %v3853, 0.0
        %v4013 = vmax.f32 %v3083, 0.0
        %v4014 = vmax.f32 %v3085, 0.0
        %v4015 = vmax.f32 %v3855, 0.0
        %v4016 = vmax.f32 %v3857, 0.0
        %v4017 = vmax.f32 %v3089, 0.0
        %v4018 = vmax.f32 %v3091, 0.0
        %v4019 = vmax.f32 %v3861, 0.0
        %v4020 = vmax.f32 %v3863, 0.0
        %v4021 = vmax.f32 %v3093, 0.0
        %v4022 = vmax.f32 %v3095, 0.0
        %v4023 = vmax.f32 %v3865, 0.0
        %v4024 = vmax.f32 %v3867, 0.0
        %v4025 = vmax.f32 %v3099, 0.0
        %v4026 = vmax.f32 %v3101, 0.0
        %v4027 = vmax.f32 %v3871, 0.0
        %v4028 = vmax.f32 %v3873, 0.0
        %v4029 = vmax.f32 %v3103, 0.0
        %v4030 = vmax.f32 %v3105, 0.0
        %v4031 = vmax.f32 %v3875, 0.0
        %v4032 = vmax.f32 %v3877, 0.0
        %v4033 = vmax.f32 %v3109, 0.0
        %v4034 = vmax.f32 %v3111, 0.0
        %v4035 = vmax.f32 %v3881, 0.0
        %v4036 = vmax.f32 %v3883, 0.0
        %v4037 = vmax.f32 %v3113, 0.0
        %v4038 = vmax.f32 %v3115, 0.0
        %v4039 = vmax.f32 %v3885, 0.0
        %v4040 = vmax.f32 %v3887, 0.0
        %v4041 = vmax.f32 %v3119, 0.0
        %v4042 = vmax.f32 %v3121, 0.0
        %v4043 = vmax.f32 %v3891, 0.0
        %v4044 = vmax.f32 %v3893, 0.0
        %v4045 = vmax.f32 %v3123, 0.0
        %v4046 = vmax.f32 %v3125, 0.0
        %v4047 = vmax.f32 %v3895, 0.0
        %v4048 = vmax.f32 %v3897, 0.0
        %v4049 = vmax.f32 %v3129, 0.0
        %v4050 = vmax.f32 %v3131, 0.0
        %v4051 = vmax.f32 %v3901, 0.0
        %v4052 = vmax.f32 %v3903, 0.0
        %v4053 = vmax.f32 %v3133, 0.0
        %v4054 = vmax.f32 %v3135, 0.0
        %v4055 = vmax.f32 %v3905, 0.0
        %v4056 = vmax.f32 %v3907, 0.0
        %v4057 = vmax.f32 %v3139, 0.0
        %v4058 = vmax.f32 %v3141, 0.0
        %v4059 = vmax.f32 %v3911, 0.0
        %v4060 = vmax.f32 %v3913, 0.0
        %v4061 = vmax.f32 %v3143, 0.0
        %v4062 = vmax.f32 %v3145, 0.0
        %v4063 = vmax.f32 %v3915, 0.0
        %v4064 = vmax.f32 %v3917, 0.0
        %v4065 = vmax.f32 %v3149, 0.0
        %v4066 = vmax.f32 %v3151, 0.0
        %v4067 = vmax.f32 %v3921, 0.0
        %v4068 = vmax.f32 %v3923, 0.0
        %v4069 = vmax.f32 %v3153, 0.0
        %v4070 = vmax.f32 %v3155, 0.0
        %v4071 = vmax.f32 %v3925, 0.0
        %v4072 = vmax.f32 %v3927, 0.0
        %v4073 = vmax.f32 %v3159, 0.0
        %v4074 = vmax.f32 %v3161, 0.0
        %v4075 = vmax.f32 %v3931, 0.0
        %v4076 = vmax.f32 %v3933, 0.0
        %v4077 = vmax.f32 %v3163, 0.0
        %v4078 = vmax.f32 %v3165, 0.0
        %v4079 = vmax.f32 %v3935, 0.0
        %v4080 = vmax.f32 %v3937, 0.0
        %v4081 = vmax.f32 %v3169, 0.0
        %v4082 = vmax.f32 %v3171, 0.0
        %v4083 = vmax.f32 %v3941, 0.0
        %v4084 = vmax.f32 %v3943, 0.0
        %v4085 = vmax.f32 %v3173, 0.0
        %v4086 = vmax.f32 %v3175, 0.0
        %v4087 = vmax.f32 %v3945, 0.0
        %v4088 = vmax.f32 %v3947, 0.0
        %v4089 = vmax.f32 %v3179, 0.0
        %v4090 = vmax.f32 %v3181, 0.0
        %v4091 = vmax.f32 %v3951, 0.0
        %v4092 = vmax.f32 %v3953, 0.0
        %v4093 = vmax.f32 %v3183, 0.0
        %v4094 = vmax.f32 %v3185, 0.0
        %v4095 = vmax.f32 %v3955, 0.0
        %v4096 = vmax.f32 %v3957, 0.0
        %v4097 = vmax.f32 %v3189, 0.0
        %v4098 = vmax.f32 %v3191, 0.0
        %v4099 = vmax.f32 %v3961, 0.0
        %v4100 = vmax.f32 %v3963, 0.0
        %v4101 = vmax.f32 %v3193, 0.0
        %v4102 = vmax.f32 %v3195, 0.0
        %v4103 = vmax.f32 %v3965, 0.0
        %v4104 = vmax.f32 %v3967, 0.0
        %v4105 = vmax.f32 %v3199, 0.0
        %v4106 = vmax.f32 %v3201, 0.0
        %v4107 = vmax.f32 %v3971, 0.0
        %v4108 = vmax.f32 %v3973, 0.0
        %v4109 = vmax.f32 %v3203, 0.0
        %v4110 = vmax.f32 %v3205, 0.0
        %v4111 = vmax.f32 %v3975, 0.0
        %v4112 = vmax.f32 %v3977, 0.0
        %v4113 = vmax.f32 %v3209, 0.0
        %v4114 = vmax.f32 %v3211, 0.0
        %v4115 = vmax.f32 %v3981, 0.0
        %v4116 = vmax.f32 %v3983, 0.0
        %v4117 = vmax.f32 %v3213, 0.0
        %v4118 = vmax.f32 %v3215, 0.0
        %v4119 = vmax.f32 %v3985, 0.0
        %v4120 = vmax.f32 %v3987, 0.0
        %v4121 = vmax.f32 %v3219, 0.0
        %v4122 = vmax.f32 %v3221, 0.0
        %v4123 = vmax.f32 %v3991, 0.0
        %v4124 = vmax.f32 %v3993, 0.0
        %v4125 = vmax.f32 %v3223, 0.0
        %v4126 = vmax.f32 %v3225, 0.0
        %v4127 = vmax.f32 %v3995, 0.0
        %v4128 = vmax.f32 %v3997, 0.0
        %v4129 = vmax.f32 %v3229, 0.0
        %v4130 = vmax.f32 %v3231, 0.0
        %v4131 = vmax.f32 %v4001, 0.0
        %v4132 = vmax.f32 %v4003, 0.0
        %v4133 = vmax.f32 %v3233, 0.0
        %v4134 = vmax.f32 %v3235, 0.0
        %v4135 = vmax.f32 %v4005, 0.0
        %v4136 = vmax.f32 %v4007, 0.0
        %v4137 = vpack.c.bf16 %v4013, %v4009
        %v4138 = vpack.c.bf16 %v4014, %v4010
        %v4139 = vpack.c.bf16 %v4015, %v4011
        %v4140 = vpack.c.bf16 %v4016, %v4012
        %v4141 = vpack.c.bf16 %v4021, %v4017
        %v4142 = vpack.c.bf16 %v4022, %v4018
        %v4143 = vpack.c.bf16 %v4023, %v4019
        %v4144 = vpack.c.bf16 %v4024, %v4020
        %v4145 = vpack.c.bf16 %v4029, %v4025
        %v4146 = vpack.c.bf16 %v4030, %v4026
        %v4147 = vpack.c.bf16 %v4031, %v4027
        %v4148 = vpack.c.bf16 %v4032, %v4028
        %v4149 = vpack.c.bf16 %v4037, %v4033
        %v4150 = vpack.c.bf16 %v4038, %v4034
        %v4151 = vpack.c.bf16 %v4039, %v4035
        %v4152 = vpack.c.bf16 %v4040, %v4036
        %v4153 = vpack.c.bf16 %v4045, %v4041
        %v4154 = vpack.c.bf16 %v4046, %v4042
        %v4155 = vpack.c.bf16 %v4047, %v4043
        %v4156 = vpack.c.bf16 %v4048, %v4044
        %v4157 = vpack.c.bf16 %v4053, %v4049
        %v4158 = vpack.c.bf16 %v4054, %v4050
        %v4159 = vpack.c.bf16 %v4055, %v4051
        %v4160 = vpack.c.bf16 %v4056, %v4052
        %v4161 = vpack.c.bf16 %v4061, %v4057
        %v4162 = vpack.c.bf16 %v4062, %v4058
        %v4163 = vpack.c.bf16 %v4063, %v4059
        %v4164 = vpack.c.bf16 %v4064, %v4060
        %v4165 = vpack.c.bf16 %v4069, %v4065
        %v4166 = vpack.c.bf16 %v4070, %v4066
        %v4167 = vpack.c.bf16 %v4071, %v4067
        %v4168 = vpack.c.bf16 %v4072, %v4068
        %v4169 = vpack.c.bf16 %v4077, %v4073
        %v4170 = vpack.c.bf16 %v4078, %v4074
        %v4171 = vpack.c.bf16 %v4079, %v4075
        %v4172 = vpack.c.bf16 %v4080, %v4076
        %v4173 = vpack.c.bf16 %v4085, %v4081
        %v4174 = vpack.c.bf16 %v4086, %v4082
        %v4175 = vpack.c.bf16 %v4087, %v4083
        %v4176 = vpack.c.bf16 %v4088, %v4084
        %v4177 = vpack.c.bf16 %v4093, %v4089
        %v4178 = vpack.c.bf16 %v4094, %v4090
        %v4179 = vpack.c.bf16 %v4095, %v4091
        %v4180 = vpack.c.bf16 %v4096, %v4092
        %v4181 = vpack.c.bf16 %v4101, %v4097
        %v4182 = vpack.c.bf16 %v4102, %v4098
        %v4183 = vpack.c.bf16 %v4103, %v4099
        %v4184 = vpack.c.bf16 %v4104, %v4100
        %v4185 = vpack.c.bf16 %v4109, %v4105
        %v4186 = vpack.c.bf16 %v4110, %v4106
        %v4187 = vpack.c.bf16 %v4111, %v4107
        %v4188 = vpack.c.bf16 %v4112, %v4108
        %v4189 = vpack.c.bf16 %v4117, %v4113
        %v4190 = vpack.c.bf16 %v4118, %v4114
        %v4191 = vpack.c.bf16 %v4119, %v4115
        %v4192 = vpack.c.bf16 %v4120, %v4116
        %v4193 = vpack.c.bf16 %v4125, %v4121
        %v4194 = vpack.c.bf16 %v4126, %v4122
        %v4195 = vpack.c.bf16 %v4127, %v4123
        %v4196 = vpack.c.bf16 %v4128, %v4124
        %v4197 = vpack.c.bf16 %v4133, %v4129
        %v4198 = vpack.c.bf16 %v4134, %v4130
        %v4199 = vpack.c.bf16 %v4135, %v4131
        %v4200 = vpack.c.bf16 %v4136, %v4132
        %v4201 = vld [vmem:[#allocation11] sm:$0xff]
        %v4202 = vld [vmem:[#allocation11 + $0x8] sm:$0xff]
        %v4203 = vld [vmem:[#allocation11 + $0x10] sm:$0xff]
        %v4204 = vld [vmem:[#allocation11 + $0x18] sm:$0xff]
        %v4205 = vld [vmem:[#allocation11 + $0x20] sm:$0xff]
        %v4206 = vld [vmem:[#allocation11 + $0x28] sm:$0xff]
        %v4207 = vld [vmem:[#allocation11 + $0x30] sm:$0xff]
        %v4208 = vld [vmem:[#allocation11 + $0x38] sm:$0xff]
        %v4209 = vld [vmem:[#allocation11 + $0x40] sm:$0xff]
        %v4210 = vld [vmem:[#allocation11 + $0x48] sm:$0xff]
        %v4211 = vld [vmem:[#allocation11 + $0x50] sm:$0xff]
        %v4212 = vld [vmem:[#allocation11 + $0x58] sm:$0xff]
        %v4213 = vld [vmem:[#allocation11 + $0x60] sm:$0xff]
        %v4214 = vld [vmem:[#allocation11 + $0x68] sm:$0xff]
        %v4215 = vld [vmem:[#allocation11 + $0x70] sm:$0xff]
        %v4216 = vld [vmem:[#allocation11 + $0x78] sm:$0xff]
        %v4217 = vld [vmem:[#allocation11 + $0x80] sm:$0xff]
        %v4218 = vld [vmem:[#allocation11 + $0x88] sm:$0xff]
        %v4219 = vld [vmem:[#allocation11 + $0x90] sm:$0xff]
        %v4220 = vld [vmem:[#allocation11 + $0x98] sm:$0xff]
        %v4221 = vld [vmem:[#allocation11 + $0xa0] sm:$0xff]
        %v4222 = vld [vmem:[#allocation11 + $0xa8] sm:$0xff]
        %v4223 = vld [vmem:[#allocation11 + $0xb0] sm:$0xff]
        %v4224 = vld [vmem:[#allocation11 + $0xb8] sm:$0xff]
        %v4225 = vld [vmem:[#allocation11 + $0xc0] sm:$0xff]
        %v4226 = vld [vmem:[#allocation11 + $0xc8] sm:$0xff]
        %v4227 = vld [vmem:[#allocation11 + $0xd0] sm:$0xff]
        %v4228 = vld [vmem:[#allocation11 + $0xd8] sm:$0xff]
        %v4229 = vld [vmem:[#allocation11 + $0xe0] sm:$0xff]
        %v4230 = vld [vmem:[#allocation11 + $0xe8] sm:$0xff]
        %v4231 = vld [vmem:[#allocation11 + $0xf0] sm:$0xff]
        %v4232 = vld [vmem:[#allocation11 + $0xf8] sm:$0xff]
        %v4233 = vld [vmem:[#allocation11 + $0x100] sm:$0xff]
        %v4234 = vld [vmem:[#allocation11 + $0x108] sm:$0xff]
        %v4235 = vld [vmem:[#allocation11 + $0x110] sm:$0xff]
        %v4236 = vld [vmem:[#allocation11 + $0x118] sm:$0xff]
        %v4237 = vld [vmem:[#allocation11 + $0x120] sm:$0xff]
        %v4238 = vld [vmem:[#allocation11 + $0x128] sm:$0xff]
        %v4239 = vld [vmem:[#allocation11 + $0x130] sm:$0xff]
        %v4240 = vld [vmem:[#allocation11 + $0x138] sm:$0xff]
        %v4241 = vld [vmem:[#allocation11 + $0x140] sm:$0xff]
        %v4242 = vld [vmem:[#allocation11 + $0x148] sm:$0xff]
        %v4243 = vld [vmem:[#allocation11 + $0x150] sm:$0xff]
        %v4244 = vld [vmem:[#allocation11 + $0x158] sm:$0xff]
        %v4245 = vld [vmem:[#allocation11 + $0x160] sm:$0xff]
        %v4246 = vld [vmem:[#allocation11 + $0x168] sm:$0xff]
        %v4247 = vld [vmem:[#allocation11 + $0x170] sm:$0xff]
        %v4248 = vld [vmem:[#allocation11 + $0x178] sm:$0xff]
        %v4249 = vld [vmem:[#allocation11 + $0x180] sm:$0xff]
        %v4250 = vld [vmem:[#allocation11 + $0x188] sm:$0xff]
        %v4251 = vld [vmem:[#allocation11 + $0x190] sm:$0xff]
        %v4252 = vld [vmem:[#allocation11 + $0x198] sm:$0xff]
        %v4253 = vld [vmem:[#allocation11 + $0x1a0] sm:$0xff]
        %v4254 = vld [vmem:[#allocation11 + $0x1a8] sm:$0xff]
        %v4255 = vld [vmem:[#allocation11 + $0x1b0] sm:$0xff]
        %v4256 = vld [vmem:[#allocation11 + $0x1b8] sm:$0xff]
        %v4257 = vld [vmem:[#allocation11 + $0x1c0] sm:$0xff]
        %v4258 = vld [vmem:[#allocation11 + $0x1c8] sm:$0xff]
        %v4259 = vld [vmem:[#allocation11 + $0x1d0] sm:$0xff]
        %v4260 = vld [vmem:[#allocation11 + $0x1d8] sm:$0xff]
        %v4261 = vld [vmem:[#allocation11 + $0x1e0] sm:$0xff]
        %v4262 = vld [vmem:[#allocation11 + $0x1e8] sm:$0xff]
        %v4263 = vld [vmem:[#allocation11 + $0x1f0] sm:$0xff]
        %v4264 = vld [vmem:[#allocation11 + $0x1f8] sm:$0xff]
        %v4265 = vld [vmem:[#allocation11 + $0x200] sm:$0xff]
        %v4266 = vld [vmem:[#allocation11 + $0x208] sm:$0xff]
        %v4267 = vld [vmem:[#allocation11 + $0x210] sm:$0xff]
        %v4268 = vld [vmem:[#allocation11 + $0x218] sm:$0xff]
        %v4269 = vld [vmem:[#allocation11 + $0x220] sm:$0xff]
        %v4270 = vld [vmem:[#allocation11 + $0x228] sm:$0xff]
        %v4271 = vld [vmem:[#allocation11 + $0x230] sm:$0xff]
        %v4272 = vld [vmem:[#allocation11 + $0x238] sm:$0xff]
        %v4273 = vld [vmem:[#allocation11 + $0x240] sm:$0xff]
        %v4274 = vld [vmem:[#allocation11 + $0x248] sm:$0xff]
        %v4275 = vld [vmem:[#allocation11 + $0x250] sm:$0xff]
        %v4276 = vld [vmem:[#allocation11 + $0x258] sm:$0xff]
        %v4277 = vld [vmem:[#allocation11 + $0x260] sm:$0xff]
        %v4278 = vld [vmem:[#allocation11 + $0x268] sm:$0xff]
        %v4279 = vld [vmem:[#allocation11 + $0x270] sm:$0xff]
        %v4280 = vld [vmem:[#allocation11 + $0x278] sm:$0xff]
        %v4281 = vld [vmem:[#allocation11 + $0x280] sm:$0xff]
        %v4282 = vld [vmem:[#allocation11 + $0x288] sm:$0xff]
        %v4283 = vld [vmem:[#allocation11 + $0x290] sm:$0xff]
        %v4284 = vld [vmem:[#allocation11 + $0x298] sm:$0xff]
        %v4285 = vld [vmem:[#allocation11 + $0x2a0] sm:$0xff]
        %v4286 = vld [vmem:[#allocation11 + $0x2a8] sm:$0xff]
        %v4287 = vld [vmem:[#allocation11 + $0x2b0] sm:$0xff]
        %v4288 = vld [vmem:[#allocation11 + $0x2b8] sm:$0xff]
        %v4289 = vld [vmem:[#allocation11 + $0x2c0] sm:$0xff]
        %v4290 = vld [vmem:[#allocation11 + $0x2c8] sm:$0xff]
        %v4291 = vld [vmem:[#allocation11 + $0x2d0] sm:$0xff]
        %v4292 = vld [vmem:[#allocation11 + $0x2d8] sm:$0xff]
        %v4293 = vld [vmem:[#allocation11 + $0x2e0] sm:$0xff]
        %v4294 = vld [vmem:[#allocation11 + $0x2e8] sm:$0xff]
        %v4295 = vld [vmem:[#allocation11 + $0x2f0] sm:$0xff]
        %v4296 = vld [vmem:[#allocation11 + $0x2f8] sm:$0xff]
        %v4297 = vld [vmem:[#allocation11 + $0x300] sm:$0xff]
        %v4298 = vld [vmem:[#allocation11 + $0x308] sm:$0xff]
        %v4299 = vld [vmem:[#allocation11 + $0x310] sm:$0xff]
        %v4300 = vld [vmem:[#allocation11 + $0x318] sm:$0xff]
        %v4301 = vld [vmem:[#allocation11 + $0x320] sm:$0xff]
        %v4302 = vld [vmem:[#allocation11 + $0x328] sm:$0xff]
        %v4303 = vld [vmem:[#allocation11 + $0x330] sm:$0xff]
        %v4304 = vld [vmem:[#allocation11 + $0x338] sm:$0xff]
        %v4305 = vld [vmem:[#allocation11 + $0x340] sm:$0xff]
        %v4306 = vld [vmem:[#allocation11 + $0x348] sm:$0xff]
        %v4307 = vld [vmem:[#allocation11 + $0x350] sm:$0xff]
        %v4308 = vld [vmem:[#allocation11 + $0x358] sm:$0xff]
        %v4309 = vld [vmem:[#allocation11 + $0x360] sm:$0xff]
        %v4310 = vld [vmem:[#allocation11 + $0x368] sm:$0xff]
        %v4311 = vld [vmem:[#allocation11 + $0x370] sm:$0xff]
        %v4312 = vld [vmem:[#allocation11 + $0x378] sm:$0xff]
        %v4313 = vld [vmem:[#allocation11 + $0x380] sm:$0xff]
        %v4314 = vld [vmem:[#allocation11 + $0x388] sm:$0xff]
        %v4315 = vld [vmem:[#allocation11 + $0x390] sm:$0xff]
        %v4316 = vld [vmem:[#allocation11 + $0x398] sm:$0xff]
        %v4317 = vld [vmem:[#allocation11 + $0x3a0] sm:$0xff]
        %v4318 = vld [vmem:[#allocation11 + $0x3a8] sm:$0xff]
        %v4319 = vld [vmem:[#allocation11 + $0x3b0] sm:$0xff]
        %v4320 = vld [vmem:[#allocation11 + $0x3b8] sm:$0xff]
        %v4321 = vld [vmem:[#allocation11 + $0x3c0] sm:$0xff]
        %v4322 = vld [vmem:[#allocation11 + $0x3c8] sm:$0xff]
        %v4323 = vld [vmem:[#allocation11 + $0x3d0] sm:$0xff]
        %v4324 = vld [vmem:[#allocation11 + $0x3d8] sm:$0xff]
        %v4325 = vld [vmem:[#allocation11 + $0x3e0] sm:$0xff]
        %v4326 = vld [vmem:[#allocation11 + $0x3e8] sm:$0xff]
        %v4327 = vld [vmem:[#allocation11 + $0x3f0] sm:$0xff]
        %v4328 = vld [vmem:[#allocation11 + $0x3f8] sm:$0xff]
        %v4329 = vld [vmem:[#allocation13] sm:$0xf]
        %v4331 = vlaneseq
        %v4332 = vshrl.u32 %v4331, 7
        %v4333 = vsub.s32 0, %v4332
        %v4334 = vrot.slane %v4329, %v4333
        %v4335 = vlaneseq
        %v4336 = vshrl.u32 %v4335, 7
        %v4337 = vsub.s32 1, %v4336
        %v4338 = vrot.slane %v4329, %v4337
        %v4339 = vlaneseq
        %v4340 = vshrl.u32 %v4339, 7
        %v4341 = vsub.s32 2, %v4340
        %v4342 = vrot.slane %v4329, %v4341
        %v4343 = vlaneseq
        %v4344 = vshrl.u32 %v4343, 7
        %v4345 = vsub.s32 3, %v4344
        %v4346 = vrot.slane %v4329, %v4345
        %v4479 = vunpack.c.l.b16 %v4201
        %v4480 = vunpack.c.h.b16 %v4201
        %v4481 = vunpack.c.l.b16 %v4202
        %v4482 = vunpack.c.h.b16 %v4202
        %v4483 = vunpack.c.l.b16 %v4203
        %v4484 = vunpack.c.h.b16 %v4203
        %v4485 = vunpack.c.l.b16 %v4204
        %v4486 = vunpack.c.h.b16 %v4204
        %v4487 = vunpack.c.l.b16 %v4205
        %v4488 = vunpack.c.h.b16 %v4205
        %v4489 = vunpack.c.l.b16 %v4206
        %v4490 = vunpack.c.h.b16 %v4206
        %v4491 = vunpack.c.l.b16 %v4207
        %v4492 = vunpack.c.h.b16 %v4207
        %v4493 = vunpack.c.l.b16 %v4208
        %v4494 = vunpack.c.h.b16 %v4208
        %v4495 = vunpack.c.l.b16 %v4209
        %v4496 = vunpack.c.h.b16 %v4209
        %v4497 = vunpack.c.l.b16 %v4210
        %v4498 = vunpack.c.h.b16 %v4210
        %v4499 = vunpack.c.l.b16 %v4211
        %v4500 = vunpack.c.h.b16 %v4211
        %v4501 = vunpack.c.l.b16 %v4212
        %v4502 = vunpack.c.h.b16 %v4212
        %v4503 = vunpack.c.l.b16 %v4213
        %v4504 = vunpack.c.h.b16 %v4213
        %v4505 = vunpack.c.l.b16 %v4214
        %v4506 = vunpack.c.h.b16 %v4214
        %v4507 = vunpack.c.l.b16 %v4215
        %v4508 = vunpack.c.h.b16 %v4215
        %v4509 = vunpack.c.l.b16 %v4216
        %v4510 = vunpack.c.h.b16 %v4216
        %v4511 = vunpack.c.l.b16 %v4217
        %v4512 = vunpack.c.h.b16 %v4217
        %v4513 = vunpack.c.l.b16 %v4218
        %v4514 = vunpack.c.h.b16 %v4218
        %v4515 = vunpack.c.l.b16 %v4219
        %v4516 = vunpack.c.h.b16 %v4219
        %v4517 = vunpack.c.l.b16 %v4220
        %v4518 = vunpack.c.h.b16 %v4220
        %v4519 = vunpack.c.l.b16 %v4221
        %v4520 = vunpack.c.h.b16 %v4221
        %v4521 = vunpack.c.l.b16 %v4222
        %v4522 = vunpack.c.h.b16 %v4222
        %v4523 = vunpack.c.l.b16 %v4223
        %v4524 = vunpack.c.h.b16 %v4223
        %v4525 = vunpack.c.l.b16 %v4224
        %v4526 = vunpack.c.h.b16 %v4224
        %v4527 = vunpack.c.l.b16 %v4225
        %v4528 = vunpack.c.h.b16 %v4225
        %v4529 = vunpack.c.l.b16 %v4226
        %v4530 = vunpack.c.h.b16 %v4226
        %v4531 = vunpack.c.l.b16 %v4227
        %v4532 = vunpack.c.h.b16 %v4227
        %v4533 = vunpack.c.l.b16 %v4228
        %v4534 = vunpack.c.h.b16 %v4228
        %v4535 = vunpack.c.l.b16 %v4229
        %v4536 = vunpack.c.h.b16 %v4229
        %v4537 = vunpack.c.l.b16 %v4230
        %v4538 = vunpack.c.h.b16 %v4230
        %v4539 = vunpack.c.l.b16 %v4231
        %v4540 = vunpack.c.h.b16 %v4231
        %v4541 = vunpack.c.l.b16 %v4232
        %v4542 = vunpack.c.h.b16 %v4232
        %v4543 = vunpack.c.l.b16 %v4233
        %v4544 = vunpack.c.h.b16 %v4233
        %v4545 = vunpack.c.l.b16 %v4234
        %v4546 = vunpack.c.h.b16 %v4234
        %v4547 = vunpack.c.l.b16 %v4235
        %v4548 = vunpack.c.h.b16 %v4235
        %v4549 = vunpack.c.l.b16 %v4236
        %v4550 = vunpack.c.h.b16 %v4236
        %v4551 = vunpack.c.l.b16 %v4237
        %v4552 = vunpack.c.h.b16 %v4237
        %v4553 = vunpack.c.l.b16 %v4238
        %v4554 = vunpack.c.h.b16 %v4238
        %v4555 = vunpack.c.l.b16 %v4239
        %v4556 = vunpack.c.h.b16 %v4239
        %v4557 = vunpack.c.l.b16 %v4240
        %v4558 = vunpack.c.h.b16 %v4240
        %v4559 = vunpack.c.l.b16 %v4241
        %v4560 = vunpack.c.h.b16 %v4241
        %v4561 = vunpack.c.l.b16 %v4242
        %v4562 = vunpack.c.h.b16 %v4242
        %v4563 = vunpack.c.l.b16 %v4243
        %v4564 = vunpack.c.h.b16 %v4243
        %v4565 = vunpack.c.l.b16 %v4244
        %v4566 = vunpack.c.h.b16 %v4244
        %v4567 = vunpack.c.l.b16 %v4245
        %v4568 = vunpack.c.h.b16 %v4245
        %v4569 = vunpack.c.l.b16 %v4246
        %v4570 = vunpack.c.h.b16 %v4246
        %v4571 = vunpack.c.l.b16 %v4247
        %v4572 = vunpack.c.h.b16 %v4247
        %v4573 = vunpack.c.l.b16 %v4248
        %v4574 = vunpack.c.h.b16 %v4248
        %v4575 = vunpack.c.l.b16 %v4249
        %v4576 = vunpack.c.h.b16 %v4249
        %v4577 = vunpack.c.l.b16 %v4250
        %v4578 = vunpack.c.h.b16 %v4250
        %v4579 = vunpack.c.l.b16 %v4251
        %v4580 = vunpack.c.h.b16 %v4251
        %v4581 = vunpack.c.l.b16 %v4252
        %v4582 = vunpack.c.h.b16 %v4252
        %v4583 = vunpack.c.l.b16 %v4253
        %v4584 = vunpack.c.h.b16 %v4253
        %v4585 = vunpack.c.l.b16 %v4254
        %v4586 = vunpack.c.h.b16 %v4254
        %v4587 = vunpack.c.l.b16 %v4255
        %v4588 = vunpack.c.h.b16 %v4255
        %v4589 = vunpack.c.l.b16 %v4256
        %v4590 = vunpack.c.h.b16 %v4256
        %v4591 = vunpack.c.l.b16 %v4257
        %v4592 = vunpack.c.h.b16 %v4257
        %v4593 = vunpack.c.l.b16 %v4258
        %v4594 = vunpack.c.h.b16 %v4258
        %v4595 = vunpack.c.l.b16 %v4259
        %v4596 = vunpack.c.h.b16 %v4259
        %v4597 = vunpack.c.l.b16 %v4260
        %v4598 = vunpack.c.h.b16 %v4260
        %v4599 = vunpack.c.l.b16 %v4261
        %v4600 = vunpack.c.h.b16 %v4261
        %v4601 = vunpack.c.l.b16 %v4262
        %v4602 = vunpack.c.h.b16 %v4262
        %v4603 = vunpack.c.l.b16 %v4263
        %v4604 = vunpack.c.h.b16 %v4263
        %v4605 = vunpack.c.l.b16 %v4264
        %v4606 = vunpack.c.h.b16 %v4264
        %v4607 = vunpack.c.l.b16 %v4265
        %v4608 = vunpack.c.h.b16 %v4265
        %v4609 = vunpack.c.l.b16 %v4266
        %v4610 = vunpack.c.h.b16 %v4266
        %v4611 = vunpack.c.l.b16 %v4267
        %v4612 = vunpack.c.h.b16 %v4267
        %v4613 = vunpack.c.l.b16 %v4268
        %v4614 = vunpack.c.h.b16 %v4268
        %v4615 = vunpack.c.l.b16 %v4269
        %v4616 = vunpack.c.h.b16 %v4269
        %v4617 = vunpack.c.l.b16 %v4270
        %v4618 = vunpack.c.h.b16 %v4270
        %v4619 = vunpack.c.l.b16 %v4271
        %v4620 = vunpack.c.h.b16 %v4271
        %v4621 = vunpack.c.l.b16 %v4272
        %v4622 = vunpack.c.h.b16 %v4272
        %v4623 = vunpack.c.l.b16 %v4273
        %v4624 = vunpack.c.h.b16 %v4273
        %v4625 = vunpack.c.l.b16 %v4274
        %v4626 = vunpack.c.h.b16 %v4274
        %v4627 = vunpack.c.l.b16 %v4275
        %v4628 = vunpack.c.h.b16 %v4275
        %v4629 = vunpack.c.l.b16 %v4276
        %v4630 = vunpack.c.h.b16 %v4276
        %v4631 = vunpack.c.l.b16 %v4277
        %v4632 = vunpack.c.h.b16 %v4277
        %v4633 = vunpack.c.l.b16 %v4278
        %v4634 = vunpack.c.h.b16 %v4278
        %v4635 = vunpack.c.l.b16 %v4279
        %v4636 = vunpack.c.h.b16 %v4279
        %v4637 = vunpack.c.l.b16 %v4280
        %v4638 = vunpack.c.h.b16 %v4280
        %v4639 = vunpack.c.l.b16 %v4281
        %v4640 = vunpack.c.h.b16 %v4281
        %v4641 = vunpack.c.l.b16 %v4282
        %v4642 = vunpack.c.h.b16 %v4282
        %v4643 = vunpack.c.l.b16 %v4283
        %v4644 = vunpack.c.h.b16 %v4283
        %v4645 = vunpack.c.l.b16 %v4284
        %v4646 = vunpack.c.h.b16 %v4284
        %v4647 = vunpack.c.l.b16 %v4285
        %v4648 = vunpack.c.h.b16 %v4285
        %v4649 = vunpack.c.l.b16 %v4286
        %v4650 = vunpack.c.h.b16 %v4286
        %v4651 = vunpack.c.l.b16 %v4287
        %v4652 = vunpack.c.h.b16 %v4287
        %v4653 = vunpack.c.l.b16 %v4288
        %v4654 = vunpack.c.h.b16 %v4288
        %v4655 = vunpack.c.l.b16 %v4289
        %v4656 = vunpack.c.h.b16 %v4289
        %v4657 = vunpack.c.l.b16 %v4290
        %v4658 = vunpack.c.h.b16 %v4290
        %v4659 = vunpack.c.l.b16 %v4291
        %v4660 = vunpack.c.h.b16 %v4291
        %v4661 = vunpack.c.l.b16 %v4292
        %v4662 = vunpack.c.h.b16 %v4292
        %v4663 = vunpack.c.l.b16 %v4293
        %v4664 = vunpack.c.h.b16 %v4293
        %v4665 = vunpack.c.l.b16 %v4294
        %v4666 = vunpack.c.h.b16 %v4294
        %v4667 = vunpack.c.l.b16 %v4295
        %v4668 = vunpack.c.h.b16 %v4295
        %v4669 = vunpack.c.l.b16 %v4296
        %v4670 = vunpack.c.h.b16 %v4296
        %v4671 = vunpack.c.l.b16 %v4297
        %v4672 = vunpack.c.h.b16 %v4297
        %v4673 = vunpack.c.l.b16 %v4298
        %v4674 = vunpack.c.h.b16 %v4298
        %v4675 = vunpack.c.l.b16 %v4299
        %v4676 = vunpack.c.h.b16 %v4299
        %v4677 = vunpack.c.l.b16 %v4300
        %v4678 = vunpack.c.h.b16 %v4300
        %v4679 = vunpack.c.l.b16 %v4301
        %v4680 = vunpack.c.h.b16 %v4301
        %v4681 = vunpack.c.l.b16 %v4302
        %v4682 = vunpack.c.h.b16 %v4302
        %v4683 = vunpack.c.l.b16 %v4303
        %v4684 = vunpack.c.h.b16 %v4303
        %v4685 = vunpack.c.l.b16 %v4304
        %v4686 = vunpack.c.h.b16 %v4304
        %v4687 = vunpack.c.l.b16 %v4305
        %v4688 = vunpack.c.h.b16 %v4305
        %v4689 = vunpack.c.l.b16 %v4306
        %v4690 = vunpack.c.h.b16 %v4306
        %v4691 = vunpack.c.l.b16 %v4307
        %v4692 = vunpack.c.h.b16 %v4307
        %v4693 = vunpack.c.l.b16 %v4308
        %v4694 = vunpack.c.h.b16 %v4308
        %v4695 = vunpack.c.l.b16 %v4309
        %v4696 = vunpack.c.h.b16 %v4309
        %v4697 = vunpack.c.l.b16 %v4310
        %v4698 = vunpack.c.h.b16 %v4310
        %v4699 = vunpack.c.l.b16 %v4311
        %v4700 = vunpack.c.h.b16 %v4311
        %v4701 = vunpack.c.l.b16 %v4312
        %v4702 = vunpack.c.h.b16 %v4312
        %v4703 = vunpack.c.l.b16 %v4313
        %v4704 = vunpack.c.h.b16 %v4313
        %v4705 = vunpack.c.l.b16 %v4314
        %v4706 = vunpack.c.h.b16 %v4314
        %v4707 = vunpack.c.l.b16 %v4315
        %v4708 = vunpack.c.h.b16 %v4315
        %v4709 = vunpack.c.l.b16 %v4316
        %v4710 = vunpack.c.h.b16 %v4316
        %v4711 = vunpack.c.l.b16 %v4317
        %v4712 = vunpack.c.h.b16 %v4317
        %v4713 = vunpack.c.l.b16 %v4318
        %v4714 = vunpack.c.h.b16 %v4318
        %v4715 = vunpack.c.l.b16 %v4319
        %v4716 = vunpack.c.h.b16 %v4319
        %v4717 = vunpack.c.l.b16 %v4320
        %v4718 = vunpack.c.h.b16 %v4320
        %v4719 = vunpack.c.l.b16 %v4321
        %v4720 = vunpack.c.h.b16 %v4321
        %v4721 = vunpack.c.l.b16 %v4322
        %v4722 = vunpack.c.h.b16 %v4322
        %v4723 = vunpack.c.l.b16 %v4323
        %v4724 = vunpack.c.h.b16 %v4323
        %v4725 = vunpack.c.l.b16 %v4324
        %v4726 = vunpack.c.h.b16 %v4324
        %v4727 = vunpack.c.l.b16 %v4325
        %v4728 = vunpack.c.h.b16 %v4325
        %v4729 = vunpack.c.l.b16 %v4326
        %v4730 = vunpack.c.h.b16 %v4326
        %v4731 = vunpack.c.l.b16 %v4327
        %v4732 = vunpack.c.h.b16 %v4327
        %v4733 = vunpack.c.l.b16 %v4328
        %v4734 = vunpack.c.h.b16 %v4328
        %v4735 = vpack.c.b16 %v4483, %v4479
        %v4736 = vpack.c.b16 %v4484, %v4480
        %v4737 = vpack.c.b16 %v4485, %v4481
        %v4738 = vpack.c.b16 %v4486, %v4482
        %v4739 = vpack.c.b16 %v4491, %v4487
        %v4740 = vpack.c.b16 %v4492, %v4488
        %v4741 = vpack.c.b16 %v4493, %v4489
        %v4742 = vpack.c.b16 %v4494, %v4490
        %v4743 = vpack.c.b16 %v4499, %v4495
        %v4744 = vpack.c.b16 %v4500, %v4496
        %v4745 = vpack.c.b16 %v4501, %v4497
        %v4746 = vpack.c.b16 %v4502, %v4498
        %v4747 = vpack.c.b16 %v4507, %v4503
        %v4748 = vpack.c.b16 %v4508, %v4504
        %v4749 = vpack.c.b16 %v4509, %v4505
        %v4750 = vpack.c.b16 %v4510, %v4506
        %v4751 = vpack.c.b16 %v4515, %v4511
        %v4752 = vpack.c.b16 %v4516, %v4512
        %v4753 = vpack.c.b16 %v4517, %v4513
        %v4754 = vpack.c.b16 %v4518, %v4514
        %v4755 = vpack.c.b16 %v4523, %v4519
        %v4756 = vpack.c.b16 %v4524, %v4520
        %v4757 = vpack.c.b16 %v4525, %v4521
        %v4758 = vpack.c.b16 %v4526, %v4522
        %v4759 = vpack.c.b16 %v4531, %v4527
        %v4760 = vpack.c.b16 %v4532, %v4528
        %v4761 = vpack.c.b16 %v4533, %v4529
        %v4762 = vpack.c.b16 %v4534, %v4530
        %v4763 = vpack.c.b16 %v4539, %v4535
        %v4764 = vpack.c.b16 %v4540, %v4536
        %v4765 = vpack.c.b16 %v4541, %v4537
        %v4766 = vpack.c.b16 %v4542, %v4538
        %v4767 = vpack.c.b16 %v4547, %v4543
        %v4768 = vpack.c.b16 %v4548, %v4544
        %v4769 = vpack.c.b16 %v4549, %v4545
        %v4770 = vpack.c.b16 %v4550, %v4546
        %v4771 = vpack.c.b16 %v4555, %v4551
        %v4772 = vpack.c.b16 %v4556, %v4552
        %v4773 = vpack.c.b16 %v4557, %v4553
        %v4774 = vpack.c.b16 %v4558, %v4554
        %v4775 = vpack.c.b16 %v4563, %v4559
        %v4776 = vpack.c.b16 %v4564, %v4560
        %v4777 = vpack.c.b16 %v4565, %v4561
        %v4778 = vpack.c.b16 %v4566, %v4562
        %v4779 = vpack.c.b16 %v4571, %v4567
        %v4780 = vpack.c.b16 %v4572, %v4568
        %v4781 = vpack.c.b16 %v4573, %v4569
        %v4782 = vpack.c.b16 %v4574, %v4570
        %v4783 = vpack.c.b16 %v4579, %v4575
        %v4784 = vpack.c.b16 %v4580, %v4576
        %v4785 = vpack.c.b16 %v4581, %v4577
        %v4786 = vpack.c.b16 %v4582, %v4578
        %v4787 = vpack.c.b16 %v4587, %v4583
        %v4788 = vpack.c.b16 %v4588, %v4584
        %v4789 = vpack.c.b16 %v4589, %v4585
        %v4790 = vpack.c.b16 %v4590, %v4586
        %v4791 = vpack.c.b16 %v4595, %v4591
        %v4792 = vpack.c.b16 %v4596, %v4592
        %v4793 = vpack.c.b16 %v4597, %v4593
        %v4794 = vpack.c.b16 %v4598, %v4594
        %v4795 = vpack.c.b16 %v4603, %v4599
        %v4796 = vpack.c.b16 %v4604, %v4600
        %v4797 = vpack.c.b16 %v4605, %v4601
        %v4798 = vpack.c.b16 %v4606, %v4602
        %v4799 = vpack.c.b16 %v4611, %v4607
        %v4800 = vpack.c.b16 %v4612, %v4608
        %v4801 = vpack.c.b16 %v4613, %v4609
        %v4802 = vpack.c.b16 %v4614, %v4610
        %v4803 = vpack.c.b16 %v4619, %v4615
        %v4804 = vpack.c.b16 %v4620, %v4616
        %v4805 = vpack.c.b16 %v4621, %v4617
        %v4806 = vpack.c.b16 %v4622, %v4618
        %v4807 = vpack.c.b16 %v4627, %v4623
        %v4808 = vpack.c.b16 %v4628, %v4624
        %v4809 = vpack.c.b16 %v4629, %v4625
        %v4810 = vpack.c.b16 %v4630, %v4626
        %v4811 = vpack.c.b16 %v4635, %v4631
        %v4812 = vpack.c.b16 %v4636, %v4632
        %v4813 = vpack.c.b16 %v4637, %v4633
        %v4814 = vpack.c.b16 %v4638, %v4634
        %v4815 = vpack.c.b16 %v4643, %v4639
        %v4816 = vpack.c.b16 %v4644, %v4640
        %v4817 = vpack.c.b16 %v4645, %v4641
        %v4818 = vpack.c.b16 %v4646, %v4642
        %v4819 = vpack.c.b16 %v4651, %v4647
        %v4820 = vpack.c.b16 %v4652, %v4648
        %v4821 = vpack.c.b16 %v4653, %v4649
        %v4822 = vpack.c.b16 %v4654, %v4650
        %v4823 = vpack.c.b16 %v4659, %v4655
        %v4824 = vpack.c.b16 %v4660, %v4656
        %v4825 = vpack.c.b16 %v4661, %v4657
        %v4826 = vpack.c.b16 %v4662, %v4658
        %v4827 = vpack.c.b16 %v4667, %v4663
        %v4828 = vpack.c.b16 %v4668, %v4664
        %v4829 = vpack.c.b16 %v4669, %v4665
        %v4830 = vpack.c.b16 %v4670, %v4666
        %v4831 = vpack.c.b16 %v4675, %v4671
        %v4832 = vpack.c.b16 %v4676, %v4672
        %v4833 = vpack.c.b16 %v4677, %v4673
        %v4834 = vpack.c.b16 %v4678, %v4674
        %v4835 = vpack.c.b16 %v4683, %v4679
        %v4836 = vpack.c.b16 %v4684, %v4680
        %v4837 = vpack.c.b16 %v4685, %v4681
        %v4838 = vpack.c.b16 %v4686, %v4682
        %v4839 = vpack.c.b16 %v4691, %v4687
        %v4840 = vpack.c.b16 %v4692, %v4688
        %v4841 = vpack.c.b16 %v4693, %v4689
        %v4842 = vpack.c.b16 %v4694, %v4690
        %v4843 = vpack.c.b16 %v4699, %v4695
        %v4844 = vpack.c.b16 %v4700, %v4696
        %v4845 = vpack.c.b16 %v4701, %v4697
        %v4846 = vpack.c.b16 %v4702, %v4698
        %v4847 = vpack.c.b16 %v4707, %v4703
        %v4848 = vpack.c.b16 %v4708, %v4704
        %v4849 = vpack.c.b16 %v4709, %v4705
        %v4850 = vpack.c.b16 %v4710, %v4706
        %v4851 = vpack.c.b16 %v4715, %v4711
        %v4852 = vpack.c.b16 %v4716, %v4712
        %v4853 = vpack.c.b16 %v4717, %v4713
        %v4854 = vpack.c.b16 %v4718, %v4714
        %v4855 = vpack.c.b16 %v4723, %v4719
        %v4856 = vpack.c.b16 %v4724, %v4720
        %v4857 = vpack.c.b16 %v4725, %v4721
        %v4858 = vpack.c.b16 %v4726, %v4722
        %v4859 = vpack.c.b16 %v4731, %v4727
        %v4860 = vpack.c.b16 %v4732, %v4728
        %v4861 = vpack.c.b16 %v4733, %v4729
        %v4862 = vpack.c.b16 %v4734, %v4730
        %4991 = vmatprep.subr.bf16.mxu0 %v4736
        %4992 = vmatpush1.bf16.msra.mxu0 %v4735
        %4993 = vmatprep.subr.bf16.mxu0 %v4740
        %4994 = vmatpush1.bf16.msra.mxu0 %v4739
        %4995 = vmatprep.subr.bf16.mxu0 %v4744
        %4996 = vmatpush1.bf16.msra.mxu0 %v4743
        %4997 = vmatprep.subr.bf16.mxu0 %v4748
        %4998 = vmatpush1.bf16.msra.mxu0 %v4747
        %4999 = vmatprep.subr.bf16.mxu0 %v4752
        %5000 = vmatpush1.bf16.msra.mxu0 %v4751
        %5001 = vmatprep.subr.bf16.mxu0 %v4756
        %5002 = vmatpush1.bf16.msra.mxu0 %v4755
        %5003 = vmatprep.subr.bf16.mxu0 %v4760
        %5004 = vmatpush1.bf16.msra.mxu0 %v4759
        %5005 = vmatprep.subr.bf16.mxu0 %v4764
        %5006 = vmatpush1.bf16.msra.mxu0 %v4763
        %5007 = vmatprep.subr.bf16.mxu0 %v4768
        %5008 = vmatpush1.bf16.msra.mxu0 %v4767
        %5009 = vmatprep.subr.bf16.mxu0 %v4772
        %5010 = vmatpush1.bf16.msra.mxu0 %v4771
        %5011 = vmatprep.subr.bf16.mxu0 %v4776
        %5012 = vmatpush1.bf16.msra.mxu0 %v4775
        %5013 = vmatprep.subr.bf16.mxu0 %v4780
        %5014 = vmatpush1.bf16.msra.mxu0 %v4779
        %5015 = vmatprep.subr.bf16.mxu0 %v4784
        %5016 = vmatpush1.bf16.msra.mxu0 %v4783
        %5017 = vmatprep.subr.bf16.mxu0 %v4788
        %5018 = vmatpush1.bf16.msra.mxu0 %v4787
        %5019 = vmatprep.subr.bf16.mxu0 %v4792
        %5020 = vmatpush1.bf16.msra.mxu0 %v4791
        %5021 = vmatprep.subr.bf16.mxu0 %v4796
        %5022 = vmatpush1.bf16.msra.mxu0 %v4795
        %5023 = vmatprep.mubr.bf16.mxu0 %v4138
        %5024 = vmatmul.mubr.bf16.gmra.mrb[0].mxu0 %v4137
        %v5025 = vpop.f32.mrb[0].mxu0
        %v5026 = vadd.f32 %v4334, %v5025
        %v5027 = vpop.f32.mrb[0].mxu0
        %v5028 = vadd.f32 %v4338, %v5027
        %v5029 = vpop.f32.mrb[0].mxu0
        %v5030 = vadd.f32 %v4334, %v5029
        %v5031 = vpop.f32.mrb[0].mxu0
        %v5032 = vadd.f32 %v4338, %v5031
        %5033 = vmatprep.mubr.bf16.mxu0 %v4142
        %5034 = vmatmul.mubr.bf16.gmra.mrb[0].mxu0 %v4141
        %v5035 = vpop.f32.mrb[0].mxu0
        %v5036 = vadd.f32 %v4334, %v5035
        %v5037 = vpop.f32.mrb[0].mxu0
        %v5038 = vadd.f32 %v4338, %v5037
        %v5039 = vpop.f32.mrb[0].mxu0
        %v5040 = vadd.f32 %v4334, %v5039
        %v5041 = vpop.f32.mrb[0].mxu0
        %v5042 = vadd.f32 %v4338, %v5041
        %5043 = vmatprep.mubr.bf16.mxu0 %v4146
        %5044 = vmatmul.mubr.bf16.gmra.mrb[0].mxu0 %v4145
        %v5045 = vpop.f32.mrb[0].mxu0
        %v5046 = vadd.f32 %v4334, %v5045
        %v5047 = vpop.f32.mrb[0].mxu0
        %v5048 = vadd.f32 %v4338, %v5047
        %v5049 = vpop.f32.mrb[0].mxu0
        %v5050 = vadd.f32 %v4334, %v5049
        %v5051 = vpop.f32.mrb[0].mxu0
        %v5052 = vadd.f32 %v4338, %v5051
        %5053 = vmatprep.mubr.bf16.mxu0 %v4150
        %5054 = vmatmul.mubr.bf16.gmra.mrb[0].mxu0 %v4149
        %v5055 = vpop.f32.mrb[0].mxu0
        %v5056 = vadd.f32 %v4334, %v5055
        %v5057 = vpop.f32.mrb[0].mxu0
        %v5058 = vadd.f32 %v4338, %v5057
        %v5059 = vpop.f32.mrb[0].mxu0
        %v5060 = vadd.f32 %v4334, %v5059
        %v5061 = vpop.f32.mrb[0].mxu0
        %v5062 = vadd.f32 %v4338, %v5061
        %5063 = vmatprep.mubr.bf16.mxu0 %v4154
        %5064 = vmatmul.mubr.bf16.gmra.mrb[0].mxu0 %v4153
        %v5065 = vpop.f32.mrb[0].mxu0
        %v5066 = vadd.f32 %v4334, %v5065
        %v5067 = vpop.f32.mrb[0].mxu0
        %v5068 = vadd.f32 %v4338, %v5067
        %v5069 = vpop.f32.mrb[0].mxu0
        %v5070 = vadd.f32 %v4334, %v5069
        %v5071 = vpop.f32.mrb[0].mxu0
        %v5072 = vadd.f32 %v4338, %v5071
        %5073 = vmatprep.mubr.bf16.mxu0 %v4158
        %5074 = vmatmul.mubr.bf16.gmra.mrb[0].mxu0 %v4157
        %v5075 = vpop.f32.mrb[0].mxu0
        %v5076 = vadd.f32 %v4334, %v5075
        %v5077 = vpop.f32.mrb[0].mxu0
        %v5078 = vadd.f32 %v4338, %v5077
        %v5079 = vpop.f32.mrb[0].mxu0
        %v5080 = vadd.f32 %v4334, %v5079
        %v5081 = vpop.f32.mrb[0].mxu0
        %v5082 = vadd.f32 %v4338, %v5081
        %5083 = vmatprep.mubr.bf16.mxu0 %v4162
        %5084 = vmatmul.mubr.bf16.gmra.mrb[0].mxu0 %v4161
        %v5085 = vpop.f32.mrb[0].mxu0
        %v5086 = vadd.f32 %v4334, %v5085
        %v5087 = vpop.f32.mrb[0].mxu0
        %v5088 = vadd.f32 %v4338, %v5087
        %v5089 = vpop.f32.mrb[0].mxu0
        %v5090 = vadd.f32 %v4334, %v5089
        %v5091 = vpop.f32.mrb[0].mxu0
        %v5092 = vadd.f32 %v4338, %v5091
        %5093 = vmatprep.mubr.bf16.mxu0 %v4166
        %5094 = vmatmul.mubr.bf16.gmra.mrb[0].mxu0 %v4165
        %v5095 = vpop.f32.mrb[0].mxu0
        %v5096 = vadd.f32 %v4334, %v5095
        %v5097 = vpop.f32.mrb[0].mxu0
        %v5098 = vadd.f32 %v4338, %v5097
        %v5099 = vpop.f32.mrb[0].mxu0
        %v5100 = vadd.f32 %v4334, %v5099
        %v5101 = vpop.f32.mrb[0].mxu0
        %v5102 = vadd.f32 %v4338, %v5101
        %5103 = vmatprep.mubr.bf16.mxu0 %v4170
        %5104 = vmatmul.mubr.bf16.gmra.mrb[0].mxu0 %v4169
        %v5105 = vpop.f32.mrb[0].mxu0
        %v5106 = vadd.f32 %v4334, %v5105
        %v5107 = vpop.f32.mrb[0].mxu0
        %v5108 = vadd.f32 %v4338, %v5107
        %v5109 = vpop.f32.mrb[0].mxu0
        %v5110 = vadd.f32 %v4334, %v5109
        %v5111 = vpop.f32.mrb[0].mxu0
        %v5112 = vadd.f32 %v4338, %v5111
        %5113 = vmatprep.mubr.bf16.mxu0 %v4174
        %5114 = vmatmul.mubr.bf16.gmra.mrb[0].mxu0 %v4173
        %v5115 = vpop.f32.mrb[0].mxu0
        %v5116 = vadd.f32 %v4334, %v5115
        %v5117 = vpop.f32.mrb[0].mxu0
        %v5118 = vadd.f32 %v4338, %v5117
        %v5119 = vpop.f32.mrb[0].mxu0
        %v5120 = vadd.f32 %v4334, %v5119
        %v5121 = vpop.f32.mrb[0].mxu0
        %v5122 = vadd.f32 %v4338, %v5121
        %5123 = vmatprep.mubr.bf16.mxu0 %v4178
        %5124 = vmatmul.mubr.bf16.gmra.mrb[0].mxu0 %v4177
        %v5125 = vpop.f32.mrb[0].mxu0
        %v5126 = vadd.f32 %v4334, %v5125
        %v5127 = vpop.f32.mrb[0].mxu0
        %v5128 = vadd.f32 %v4338, %v5127
        %v5129 = vpop.f32.mrb[0].mxu0
        %v5130 = vadd.f32 %v4334, %v5129
        %v5131 = vpop.f32.mrb[0].mxu0
        %v5132 = vadd.f32 %v4338, %v5131
        %5133 = vmatprep.mubr.bf16.mxu0 %v4182
        %5134 = vmatmul.mubr.bf16.gmra.mrb[0].mxu0 %v4181
        %v5135 = vpop.f32.mrb[0].mxu0
        %v5136 = vadd.f32 %v4334, %v5135
        %v5137 = vpop.f32.mrb[0].mxu0
        %v5138 = vadd.f32 %v4338, %v5137
        %v5139 = vpop.f32.mrb[0].mxu0
        %v5140 = vadd.f32 %v4334, %v5139
        %v5141 = vpop.f32.mrb[0].mxu0
        %v5142 = vadd.f32 %v4338, %v5141
        %5143 = vmatprep.mubr.bf16.mxu0 %v4186
        %5144 = vmatmul.mubr.bf16.gmra.mrb[0].mxu0 %v4185
        %v5145 = vpop.f32.mrb[0].mxu0
        %v5146 = vadd.f32 %v4334, %v5145
        %v5147 = vpop.f32.mrb[0].mxu0
        %v5148 = vadd.f32 %v4338, %v5147
        %v5149 = vpop.f32.mrb[0].mxu0
        %v5150 = vadd.f32 %v4334, %v5149
        %v5151 = vpop.f32.mrb[0].mxu0
        %v5152 = vadd.f32 %v4338, %v5151
        %5153 = vmatprep.mubr.bf16.mxu0 %v4190
        %5154 = vmatmul.mubr.bf16.gmra.mrb[0].mxu0 %v4189
        %v5155 = vpop.f32.mrb[0].mxu0
        %v5156 = vadd.f32 %v4334, %v5155
        %v5157 = vpop.f32.mrb[0].mxu0
        %v5158 = vadd.f32 %v4338, %v5157
        %v5159 = vpop.f32.mrb[0].mxu0
        %v5160 = vadd.f32 %v4334, %v5159
        %v5161 = vpop.f32.mrb[0].mxu0
        %v5162 = vadd.f32 %v4338, %v5161
        %5163 = vmatprep.mubr.bf16.mxu0 %v4194
        %5164 = vmatmul.mubr.bf16.gmra.mrb[0].mxu0 %v4193
        %v5165 = vpop.f32.mrb[0].mxu0
        %v5166 = vadd.f32 %v4334, %v5165
        %v5167 = vpop.f32.mrb[0].mxu0
        %v5168 = vadd.f32 %v4338, %v5167
        %v5169 = vpop.f32.mrb[0].mxu0
        %v5170 = vadd.f32 %v4334, %v5169
        %v5171 = vpop.f32.mrb[0].mxu0
        %v5172 = vadd.f32 %v4338, %v5171
        %5173 = vmatprep.mubr.bf16.mxu0 %v4198
        %5174 = vmatmul.mubr.bf16.gmra.mrb[0].mxu0 %v4197
        %v5175 = vpop.f32.mrb[0].mxu0
        %v5176 = vadd.f32 %v4334, %v5175
        %v5177 = vpop.f32.mrb[0].mxu0
        %v5178 = vadd.f32 %v4338, %v5177
        %v5179 = vpop.f32.mrb[0].mxu0
        %v5180 = vadd.f32 %v4334, %v5179
        %v5181 = vpop.f32.mrb[0].mxu0
        %v5182 = vadd.f32 %v4338, %v5181
        %5183 = vdwg.mxu0
        %5184 = vmatprep.subr.bf16.mxu0 %v4800
        %5185 = vmatpush1.bf16.msra.mxu0 %v4799
        %5186 = vmatprep.subr.bf16.mxu0 %v4804
        %5187 = vmatpush1.bf16.msra.mxu0 %v4803
        %5188 = vmatprep.subr.bf16.mxu0 %v4808
        %5189 = vmatpush1.bf16.msra.mxu0 %v4807
        %5190 = vmatprep.subr.bf16.mxu0 %v4812
        %5191 = vmatpush1.bf16.msra.mxu0 %v4811
        %5192 = vmatprep.subr.bf16.mxu0 %v4816
        %5193 = vmatpush1.bf16.msra.mxu0 %v4815
        %5194 = vmatprep.subr.bf16.mxu0 %v4820
        %5195 = vmatpush1.bf16.msra.mxu0 %v4819
        %5196 = vmatprep.subr.bf16.mxu0 %v4824
        %5197 = vmatpush1.bf16.msra.mxu0 %v4823
        %5198 = vmatprep.subr.bf16.mxu0 %v4828
        %5199 = vmatpush1.bf16.msra.mxu0 %v4827
        %5200 = vmatprep.subr.bf16.mxu0 %v4832
        %5201 = vmatpush1.bf16.msra.mxu0 %v4831
        %5202 = vmatprep.subr.bf16.mxu0 %v4836
        %5203 = vmatpush1.bf16.msra.mxu0 %v4835
        %5204 = vmatprep.subr.bf16.mxu0 %v4840
        %5205 = vmatpush1.bf16.msra.mxu0 %v4839
        %5206 = vmatprep.subr.bf16.mxu0 %v4844
        %5207 = vmatpush1.bf16.msra.mxu0 %v4843
        %5208 = vmatprep.subr.bf16.mxu0 %v4848
        %5209 = vmatpush1.bf16.msra.mxu0 %v4847
        %5210 = vmatprep.subr.bf16.mxu0 %v4852
        %5211 = vmatpush1.bf16.msra.mxu0 %v4851
        %5212 = vmatprep.subr.bf16.mxu0 %v4856
        %5213 = vmatpush1.bf16.msra.mxu0 %v4855
        %5214 = vmatprep.subr.bf16.mxu0 %v4860
        %5215 = vmatpush1.bf16.msra.mxu0 %v4859
        %5216 = vmatprep.mubr.bf16.mxu0 %v4140
        %5217 = vmatmul.mubr.bf16.gmra.mrb[0].mxu0 %v4139
        %v5218 = vpop.f32.mrb[0].mxu0
        %v5219 = vadd.f32 %v5026, %v5218
        %v5220 = vpop.f32.mrb[0].mxu0
        %v5221 = vadd.f32 %v5028, %v5220
        %v5222 = vpop.f32.mrb[0].mxu0
        %v5223 = vadd.f32 %v5030, %v5222
        %v5224 = vpop.f32.mrb[0].mxu0
        %v5225 = vadd.f32 %v5032, %v5224
        %5226 = vmatprep.mubr.bf16.mxu0 %v4144
        %5227 = vmatmul.mubr.bf16.gmra.mrb[0].mxu0 %v4143
        %v5228 = vpop.f32.mrb[0].mxu0
        %v5229 = vadd.f32 %v5036, %v5228
        %v5230 = vpop.f32.mrb[0].mxu0
        %v5231 = vadd.f32 %v5038, %v5230
        %v5232 = vpop.f32.mrb[0].mxu0
        %v5233 = vadd.f32 %v5040, %v5232
        %v5234 = vpop.f32.mrb[0].mxu0
        %v5235 = vadd.f32 %v5042, %v5234
        %5236 = vmatprep.mubr.bf16.mxu0 %v4148
        %5237 = vmatmul.mubr.bf16.gmra.mrb[0].mxu0 %v4147
        %v5238 = vpop.f32.mrb[0].mxu0
        %v5239 = vadd.f32 %v5046, %v5238
        %v5240 = vpop.f32.mrb[0].mxu0
        %v5241 = vadd.f32 %v5048, %v5240
        %v5242 = vpop.f32.mrb[0].mxu0
        %v5243 = vadd.f32 %v5050, %v5242
        %v5244 = vpop.f32.mrb[0].mxu0
        %v5245 = vadd.f32 %v5052, %v5244
        %5246 = vmatprep.mubr.bf16.mxu0 %v4152
        %5247 = vmatmul.mubr.bf16.gmra.mrb[0].mxu0 %v4151
        %v5248 = vpop.f32.mrb[0].mxu0
        %v5249 = vadd.f32 %v5056, %v5248
        %v5250 = vpop.f32.mrb[0].mxu0
        %v5251 = vadd.f32 %v5058, %v5250
        %v5252 = vpop.f32.mrb[0].mxu0
        %v5253 = vadd.f32 %v5060, %v5252
        %v5254 = vpop.f32.mrb[0].mxu0
        %v5255 = vadd.f32 %v5062, %v5254
        %5256 = vmatprep.mubr.bf16.mxu0 %v4156
        %5257 = vmatmul.mubr.bf16.gmra.mrb[0].mxu0 %v4155
        %v5258 = vpop.f32.mrb[0].mxu0
        %v5259 = vadd.f32 %v5066, %v5258
        %v5260 = vpop.f32.mrb[0].mxu0
        %v5261 = vadd.f32 %v5068, %v5260
        %v5262 = vpop.f32.mrb[0].mxu0
        %v5263 = vadd.f32 %v5070, %v5262
        %v5264 = vpop.f32.mrb[0].mxu0
        %v5265 = vadd.f32 %v5072, %v5264
        %5266 = vmatprep.mubr.bf16.mxu0 %v4160
        %5267 = vmatmul.mubr.bf16.gmra.mrb[0].mxu0 %v4159
        %v5268 = vpop.f32.mrb[0].mxu0
        %v5269 = vadd.f32 %v5076, %v5268
        %v5270 = vpop.f32.mrb[0].mxu0
        %v5271 = vadd.f32 %v5078, %v5270
        %v5272 = vpop.f32.mrb[0].mxu0
        %v5273 = vadd.f32 %v5080, %v5272
        %v5274 = vpop.f32.mrb[0].mxu0
        %v5275 = vadd.f32 %v5082, %v5274
        %5276 = vmatprep.mubr.bf16.mxu0 %v4164
        %5277 = vmatmul.mubr.bf16.gmra.mrb[0].mxu0 %v4163
        %v5278 = vpop.f32.mrb[0].mxu0
        %v5279 = vadd.f32 %v5086, %v5278
        %v5280 = vpop.f32.mrb[0].mxu0
        %v5281 = vadd.f32 %v5088, %v5280
        %v5282 = vpop.f32.mrb[0].mxu0
        %v5283 = vadd.f32 %v5090, %v5282
        %v5284 = vpop.f32.mrb[0].mxu0
        %v5285 = vadd.f32 %v5092, %v5284
        %5286 = vmatprep.mubr.bf16.mxu0 %v4168
        %5287 = vmatmul.mubr.bf16.gmra.mrb[0].mxu0 %v4167
        %v5288 = vpop.f32.mrb[0].mxu0
        %v5289 = vadd.f32 %v5096, %v5288
        %v5290 = vpop.f32.mrb[0].mxu0
        %v5291 = vadd.f32 %v5098, %v5290
        %v5292 = vpop.f32.mrb[0].mxu0
        %v5293 = vadd.f32 %v5100, %v5292
        %v5294 = vpop.f32.mrb[0].mxu0
        %v5295 = vadd.f32 %v5102, %v5294
        %5296 = vmatprep.mubr.bf16.mxu0 %v4172
        %5297 = vmatmul.mubr.bf16.gmra.mrb[0].mxu0 %v4171
        %v5298 = vpop.f32.mrb[0].mxu0
        %v5299 = vadd.f32 %v5106, %v5298
        %v5300 = vpop.f32.mrb[0].mxu0
        %v5301 = vadd.f32 %v5108, %v5300
        %v5302 = vpop.f32.mrb[0].mxu0
        %v5303 = vadd.f32 %v5110, %v5302
        %v5304 = vpop.f32.mrb[0].mxu0
        %v5305 = vadd.f32 %v5112, %v5304
        %5306 = vmatprep.mubr.bf16.mxu0 %v4176
        %5307 = vmatmul.mubr.bf16.gmra.mrb[0].mxu0 %v4175
        %v5308 = vpop.f32.mrb[0].mxu0
        %v5309 = vadd.f32 %v5116, %v5308
        %v5310 = vpop.f32.mrb[0].mxu0
        %v5311 = vadd.f32 %v5118, %v5310
        %v5312 = vpop.f32.mrb[0].mxu0
        %v5313 = vadd.f32 %v5120, %v5312
        %v5314 = vpop.f32.mrb[0].mxu0
        %v5315 = vadd.f32 %v5122, %v5314
        %5316 = vmatprep.mubr.bf16.mxu0 %v4180
        %5317 = vmatmul.mubr.bf16.gmra.mrb[0].mxu0 %v4179
        %v5318 = vpop.f32.mrb[0].mxu0
        %v5319 = vadd.f32 %v5126, %v5318
        %v5320 = vpop.f32.mrb[0].mxu0
        %v5321 = vadd.f32 %v5128, %v5320
        %v5322 = vpop.f32.mrb[0].mxu0
        %v5323 = vadd.f32 %v5130, %v5322
        %v5324 = vpop.f32.mrb[0].mxu0
        %v5325 = vadd.f32 %v5132, %v5324
        %5326 = vmatprep.mubr.bf16.mxu0 %v4184
        %5327 = vmatmul.mubr.bf16.gmra.mrb[0].mxu0 %v4183
        %v5328 = vpop.f32.mrb[0].mxu0
        %v5329 = vadd.f32 %v5136, %v5328
        %v5330 = vpop.f32.mrb[0].mxu0
        %v5331 = vadd.f32 %v5138, %v5330
        %v5332 = vpop.f32.mrb[0].mxu0
        %v5333 = vadd.f32 %v5140, %v5332
        %v5334 = vpop.f32.mrb[0].mxu0
        %v5335 = vadd.f32 %v5142, %v5334
        %5336 = vmatprep.mubr.bf16.mxu0 %v4188
        %5337 = vmatmul.mubr.bf16.gmra.mrb[0].mxu0 %v4187
        %v5338 = vpop.f32.mrb[0].mxu0
        %v5339 = vadd.f32 %v5146, %v5338
        %v5340 = vpop.f32.mrb[0].mxu0
        %v5341 = vadd.f32 %v5148, %v5340
        %v5342 = vpop.f32.mrb[0].mxu0
        %v5343 = vadd.f32 %v5150, %v5342
        %v5344 = vpop.f32.mrb[0].mxu0
        %v5345 = vadd.f32 %v5152, %v5344
        %5346 = vmatprep.mubr.bf16.mxu0 %v4192
        %5347 = vmatmul.mubr.bf16.gmra.mrb[0].mxu0 %v4191
        %v5348 = vpop.f32.mrb[0].mxu0
        %v5349 = vadd.f32 %v5156, %v5348
        %v5350 = vpop.f32.mrb[0].mxu0
        %v5351 = vadd.f32 %v5158, %v5350
        %v5352 = vpop.f32.mrb[0].mxu0
        %v5353 = vadd.f32 %v5160, %v5352
        %v5354 = vpop.f32.mrb[0].mxu0
        %v5355 = vadd.f32 %v5162, %v5354
        %5356 = vmatprep.mubr.bf16.mxu0 %v4196
        %5357 = vmatmul.mubr.bf16.gmra.mrb[0].mxu0 %v4195
        %v5358 = vpop.f32.mrb[0].mxu0
        %v5359 = vadd.f32 %v5166, %v5358
        %v5360 = vpop.f32.mrb[0].mxu0
        %v5361 = vadd.f32 %v5168, %v5360
        %v5362 = vpop.f32.mrb[0].mxu0
        %v5363 = vadd.f32 %v5170, %v5362
        %v5364 = vpop.f32.mrb[0].mxu0
        %v5365 = vadd.f32 %v5172, %v5364
        %5366 = vmatprep.mubr.bf16.mxu0 %v4200
        %5367 = vmatmul.mubr.bf16.gmra.mrb[0].mxu0 %v4199
        %v5368 = vpop.f32.mrb[0].mxu0
        %v5369 = vadd.f32 %v5176, %v5368
        %v5370 = vpop.f32.mrb[0].mxu0
        %v5371 = vadd.f32 %v5178, %v5370
        %v5372 = vpop.f32.mrb[0].mxu0
        %v5373 = vadd.f32 %v5180, %v5372
        %v5374 = vpop.f32.mrb[0].mxu0
        %v5375 = vadd.f32 %v5182, %v5374
        %5376 = vdwg.mxu0
        %5377 = vmatprep.subr.bf16.mxu0 %v4738
        %5378 = vmatpush1.bf16.msra.mxu0 %v4737
        %5379 = vmatprep.subr.bf16.mxu0 %v4742
        %5380 = vmatpush1.bf16.msra.mxu0 %v4741
        %5381 = vmatprep.subr.bf16.mxu0 %v4746
        %5382 = vmatpush1.bf16.msra.mxu0 %v4745
        %5383 = vmatprep.subr.bf16.mxu0 %v4750
        %5384 = vmatpush1.bf16.msra.mxu0 %v4749
        %5385 = vmatprep.subr.bf16.mxu0 %v4754
        %5386 = vmatpush1.bf16.msra.mxu0 %v4753
        %5387 = vmatprep.subr.bf16.mxu0 %v4758
        %5388 = vmatpush1.bf16.msra.mxu0 %v4757
        %5389 = vmatprep.subr.bf16.mxu0 %v4762
        %5390 = vmatpush1.bf16.msra.mxu0 %v4761
        %5391 = vmatprep.subr.bf16.mxu0 %v4766
        %5392 = vmatpush1.bf16.msra.mxu0 %v4765
        %5393 = vmatprep.subr.bf16.mxu0 %v4770
        %5394 = vmatpush1.bf16.msra.mxu0 %v4769
        %5395 = vmatprep.subr.bf16.mxu0 %v4774
        %5396 = vmatpush1.bf16.msra.mxu0 %v4773
        %5397 = vmatprep.subr.bf16.mxu0 %v4778
        %5398 = vmatpush1.bf16.msra.mxu0 %v4777
        %5399 = vmatprep.subr.bf16.mxu0 %v4782
        %5400 = vmatpush1.bf16.msra.mxu0 %v4781
        %5401 = vmatprep.subr.bf16.mxu0 %v4786
        %5402 = vmatpush1.bf16.msra.mxu0 %v4785
        %5403 = vmatprep.subr.bf16.mxu0 %v4790
        %5404 = vmatpush1.bf16.msra.mxu0 %v4789
        %5405 = vmatprep.subr.bf16.mxu0 %v4794
        %5406 = vmatpush1.bf16.msra.mxu0 %v4793
        %5407 = vmatprep.subr.bf16.mxu0 %v4798
        %5408 = vmatpush1.bf16.msra.mxu0 %v4797
        %5409 = vmatprep.mubr.bf16.mxu0 %v4138
        %5410 = vmatmul.mubr.bf16.gmra.mrb[0].mxu0 %v4137
        %v5411 = vpop.f32.mrb[0].mxu0
        %v5412 = vadd.f32 %v4342, %v5411
        %v5413 = vpop.f32.mrb[0].mxu0
        %v5414 = vadd.f32 %v4346, %v5413
        %v5415 = vpop.f32.mrb[0].mxu0
        %v5416 = vadd.f32 %v4342, %v5415
        %v5417 = vpop.f32.mrb[0].mxu0
        %v5418 = vadd.f32 %v4346, %v5417
        %5419 = vmatprep.mubr.bf16.mxu0 %v4142
        %5420 = vmatmul.mubr.bf16.gmra.mrb[0].mxu0 %v4141
        %v5421 = vpop.f32.mrb[0].mxu0
        %v5422 = vadd.f32 %v4342, %v5421
        %v5423 = vpop.f32.mrb[0].mxu0
        %v5424 = vadd.f32 %v4346, %v5423
        %v5425 = vpop.f32.mrb[0].mxu0
        %v5426 = vadd.f32 %v4342, %v5425
        %v5427 = vpop.f32.mrb[0].mxu0
        %v5428 = vadd.f32 %v4346, %v5427
        %5429 = vmatprep.mubr.bf16.mxu0 %v4146
        %5430 = vmatmul.mubr.bf16.gmra.mrb[0].mxu0 %v4145
        %v5431 = vpop.f32.mrb[0].mxu0
        %v5432 = vadd.f32 %v4342, %v5431
        %v5433 = vpop.f32.mrb[0].mxu0
        %v5434 = vadd.f32 %v4346, %v5433
        %v5435 = vpop.f32.mrb[0].mxu0
        %v5436 = vadd.f32 %v4342, %v5435
        %v5437 = vpop.f32.mrb[0].mxu0
        %v5438 = vadd.f32 %v4346, %v5437
        %5439 = vmatprep.mubr.bf16.mxu0 %v4150
        %5440 = vmatmul.mubr.bf16.gmra.mrb[0].mxu0 %v4149
        %v5441 = vpop.f32.mrb[0].mxu0
        %v5442 = vadd.f32 %v4342, %v5441
        %v5443 = vpop.f32.mrb[0].mxu0
        %v5444 = vadd.f32 %v4346, %v5443
        %v5445 = vpop.f32.mrb[0].mxu0
        %v5446 = vadd.f32 %v4342, %v5445
        %v5447 = vpop.f32.mrb[0].mxu0
        %v5448 = vadd.f32 %v4346, %v5447
        %5449 = vmatprep.mubr.bf16.mxu0 %v4154
        %5450 = vmatmul.mubr.bf16.gmra.mrb[0].mxu0 %v4153
        %v5451 = vpop.f32.mrb[0].mxu0
        %v5452 = vadd.f32 %v4342, %v5451
        %v5453 = vpop.f32.mrb[0].mxu0
        %v5454 = vadd.f32 %v4346, %v5453
        %v5455 = vpop.f32.mrb[0].mxu0
        %v5456 = vadd.f32 %v4342, %v5455
        %v5457 = vpop.f32.mrb[0].mxu0
        %v5458 = vadd.f32 %v4346, %v5457
        %5459 = vmatprep.mubr.bf16.mxu0 %v4158
        %5460 = vmatmul.mubr.bf16.gmra.mrb[0].mxu0 %v4157
        %v5461 = vpop.f32.mrb[0].mxu0
        %v5462 = vadd.f32 %v4342, %v5461
        %v5463 = vpop.f32.mrb[0].mxu0
        %v5464 = vadd.f32 %v4346, %v5463
        %v5465 = vpop.f32.mrb[0].mxu0
        %v5466 = vadd.f32 %v4342, %v5465
        %v5467 = vpop.f32.mrb[0].mxu0
        %v5468 = vadd.f32 %v4346, %v5467
        %5469 = vmatprep.mubr.bf16.mxu0 %v4162
        %5470 = vmatmul.mubr.bf16.gmra.mrb[0].mxu0 %v4161
        %v5471 = vpop.f32.mrb[0].mxu0
        %v5472 = vadd.f32 %v4342, %v5471
        %v5473 = vpop.f32.mrb[0].mxu0
        %v5474 = vadd.f32 %v4346, %v5473
        %v5475 = vpop.f32.mrb[0].mxu0
        %v5476 = vadd.f32 %v4342, %v5475
        %v5477 = vpop.f32.mrb[0].mxu0
        %v5478 = vadd.f32 %v4346, %v5477
        %5479 = vmatprep.mubr.bf16.mxu0 %v4166
        %5480 = vmatmul.mubr.bf16.gmra.mrb[0].mxu0 %v4165
        %v5481 = vpop.f32.mrb[0].mxu0
        %v5482 = vadd.f32 %v4342, %v5481
        %v5483 = vpop.f32.mrb[0].mxu0
        %v5484 = vadd.f32 %v4346, %v5483
        %v5485 = vpop.f32.mrb[0].mxu0
        %v5486 = vadd.f32 %v4342, %v5485
        %v5487 = vpop.f32.mrb[0].mxu0
        %v5488 = vadd.f32 %v4346, %v5487
        %5489 = vmatprep.mubr.bf16.mxu0 %v4170
        %5490 = vmatmul.mubr.bf16.gmra.mrb[0].mxu0 %v4169
        %v5491 = vpop.f32.mrb[0].mxu0
        %v5492 = vadd.f32 %v4342, %v5491
        %v5493 = vpop.f32.mrb[0].mxu0
        %v5494 = vadd.f32 %v4346, %v5493
        %v5495 = vpop.f32.mrb[0].mxu0
        %v5496 = vadd.f32 %v4342, %v5495
        %v5497 = vpop.f32.mrb[0].mxu0
        %v5498 = vadd.f32 %v4346, %v5497
        %5499 = vmatprep.mubr.bf16.mxu0 %v4174
        %5500 = vmatmul.mubr.bf16.gmra.mrb[0].mxu0 %v4173
        %v5501 = vpop.f32.mrb[0].mxu0
        %v5502 = vadd.f32 %v4342, %v5501
        %v5503 = vpop.f32.mrb[0].mxu0
        %v5504 = vadd.f32 %v4346, %v5503
        %v5505 = vpop.f32.mrb[0].mxu0
        %v5506 = vadd.f32 %v4342, %v5505
        %v5507 = vpop.f32.mrb[0].mxu0
        %v5508 = vadd.f32 %v4346, %v5507
        %5509 = vmatprep.mubr.bf16.mxu0 %v4178
        %5510 = vmatmul.mubr.bf16.gmra.mrb[0].mxu0 %v4177
        %v5511 = vpop.f32.mrb[0].mxu0
        %v5512 = vadd.f32 %v4342, %v5511
        %v5513 = vpop.f32.mrb[0].mxu0
        %v5514 = vadd.f32 %v4346, %v5513
        %v5515 = vpop.f32.mrb[0].mxu0
        %v5516 = vadd.f32 %v4342, %v5515
        %v5517 = vpop.f32.mrb[0].mxu0
        %v5518 = vadd.f32 %v4346, %v5517
        %5519 = vmatprep.mubr.bf16.mxu0 %v4182
        %5520 = vmatmul.mubr.bf16.gmra.mrb[0].mxu0 %v4181
        %v5521 = vpop.f32.mrb[0].mxu0
        %v5522 = vadd.f32 %v4342, %v5521
        %v5523 = vpop.f32.mrb[0].mxu0
        %v5524 = vadd.f32 %v4346, %v5523
        %v5525 = vpop.f32.mrb[0].mxu0
        %v5526 = vadd.f32 %v4342, %v5525
        %v5527 = vpop.f32.mrb[0].mxu0
        %v5528 = vadd.f32 %v4346, %v5527
        %5529 = vmatprep.mubr.bf16.mxu0 %v4186
        %5530 = vmatmul.mubr.bf16.gmra.mrb[0].mxu0 %v4185
        %v5531 = vpop.f32.mrb[0].mxu0
        %v5532 = vadd.f32 %v4342, %v5531
        %v5533 = vpop.f32.mrb[0].mxu0
        %v5534 = vadd.f32 %v4346, %v5533
        %v5535 = vpop.f32.mrb[0].mxu0
        %v5536 = vadd.f32 %v4342, %v5535
        %v5537 = vpop.f32.mrb[0].mxu0
        %v5538 = vadd.f32 %v4346, %v5537
        %5539 = vmatprep.mubr.bf16.mxu0 %v4190
        %5540 = vmatmul.mubr.bf16.gmra.mrb[0].mxu0 %v4189
        %v5541 = vpop.f32.mrb[0].mxu0
        %v5542 = vadd.f32 %v4342, %v5541
        %v5543 = vpop.f32.mrb[0].mxu0
        %v5544 = vadd.f32 %v4346, %v5543
        %v5545 = vpop.f32.mrb[0].mxu0
        %v5546 = vadd.f32 %v4342, %v5545
        %v5547 = vpop.f32.mrb[0].mxu0
        %v5548 = vadd.f32 %v4346, %v5547
        %5549 = vmatprep.mubr.bf16.mxu0 %v4194
        %5550 = vmatmul.mubr.bf16.gmra.mrb[0].mxu0 %v4193
        %v5551 = vpop.f32.mrb[0].mxu0
        %v5552 = vadd.f32 %v4342, %v5551
        %v5553 = vpop.f32.mrb[0].mxu0
        %v5554 = vadd.f32 %v4346, %v5553
        %v5555 = vpop.f32.mrb[0].mxu0
        %v5556 = vadd.f32 %v4342, %v5555
        %v5557 = vpop.f32.mrb[0].mxu0
        %v5558 = vadd.f32 %v4346, %v5557
        %5559 = vmatprep.mubr.bf16.mxu0 %v4198
        %5560 = vmatmul.mubr.bf16.gmra.mrb[0].mxu0 %v4197
        %v5561 = vpop.f32.mrb[0].mxu0
        %v5562 = vadd.f32 %v4342, %v5561
        %v5563 = vpop.f32.mrb[0].mxu0
        %v5564 = vadd.f32 %v4346, %v5563
        %v5565 = vpop.f32.mrb[0].mxu0
        %v5566 = vadd.f32 %v4342, %v5565
        %v5567 = vpop.f32.mrb[0].mxu0
        %v5568 = vadd.f32 %v4346, %v5567
        %5569 = vdwg.mxu0
        %5570 = vmatprep.subr.bf16.mxu0 %v4802
        %5571 = vmatpush1.bf16.msra.mxu0 %v4801
        %5572 = vmatprep.subr.bf16.mxu0 %v4806
        %5573 = vmatpush1.bf16.msra.mxu0 %v4805
        %5574 = vmatprep.subr.bf16.mxu0 %v4810
        %5575 = vmatpush1.bf16.msra.mxu0 %v4809
        %5576 = vmatprep.subr.bf16.mxu0 %v4814
        %5577 = vmatpush1.bf16.msra.mxu0 %v4813
        %5578 = vmatprep.subr.bf16.mxu0 %v4818
        %5579 = vmatpush1.bf16.msra.mxu0 %v4817
        %5580 = vmatprep.subr.bf16.mxu0 %v4822
        %5581 = vmatpush1.bf16.msra.mxu0 %v4821
        %5582 = vmatprep.subr.bf16.mxu0 %v4826
        %5583 = vmatpush1.bf16.msra.mxu0 %v4825
        %5584 = vmatprep.subr.bf16.mxu0 %v4830
        %5585 = vmatpush1.bf16.msra.mxu0 %v4829
        %5586 = vmatprep.subr.bf16.mxu0 %v4834
        %5587 = vmatpush1.bf16.msra.mxu0 %v4833
        %5588 = vmatprep.subr.bf16.mxu0 %v4838
        %5589 = vmatpush1.bf16.msra.mxu0 %v4837
        %5590 = vmatprep.subr.bf16.mxu0 %v4842
        %5591 = vmatpush1.bf16.msra.mxu0 %v4841
        %5592 = vmatprep.subr.bf16.mxu0 %v4846
        %5593 = vmatpush1.bf16.msra.mxu0 %v4845
        %5594 = vmatprep.subr.bf16.mxu0 %v4850
        %5595 = vmatpush1.bf16.msra.mxu0 %v4849
        %5596 = vmatprep.subr.bf16.mxu0 %v4854
        %5597 = vmatpush1.bf16.msra.mxu0 %v4853
        %5598 = vmatprep.subr.bf16.mxu0 %v4858
        %5599 = vmatpush1.bf16.msra.mxu0 %v4857
        %5600 = vmatprep.subr.bf16.mxu0 %v4862
        %5601 = vmatpush1.bf16.msra.mxu0 %v4861
        %5602 = vmatprep.mubr.bf16.mxu0 %v4140
        %5603 = vmatmul.mubr.bf16.gmra.mrb[0].mxu0 %v4139
        %v5604 = vpop.f32.mrb[0].mxu0
        %v5605 = vadd.f32 %v5412, %v5604
        %v5606 = vpop.f32.mrb[0].mxu0
        %v5607 = vadd.f32 %v5414, %v5606
        %v5608 = vpop.f32.mrb[0].mxu0
        %v5609 = vadd.f32 %v5416, %v5608
        %v5610 = vpop.f32.mrb[0].mxu0
        %v5611 = vadd.f32 %v5418, %v5610
        %5612 = vmatprep.mubr.bf16.mxu0 %v4144
        %5613 = vmatmul.mubr.bf16.gmra.mrb[0].mxu0 %v4143
        %v5614 = vpop.f32.mrb[0].mxu0
        %v5615 = vadd.f32 %v5422, %v5614
        %v5616 = vpop.f32.mrb[0].mxu0
        %v5617 = vadd.f32 %v5424, %v5616
        %v5618 = vpop.f32.mrb[0].mxu0
        %v5619 = vadd.f32 %v5426, %v5618
        %v5620 = vpop.f32.mrb[0].mxu0
        %v5621 = vadd.f32 %v5428, %v5620
        %5622 = vmatprep.mubr.bf16.mxu0 %v4148
        %5623 = vmatmul.mubr.bf16.gmra.mrb[0].mxu0 %v4147
        %v5624 = vpop.f32.mrb[0].mxu0
        %v5625 = vadd.f32 %v5432, %v5624
        %v5626 = vpop.f32.mrb[0].mxu0
        %v5627 = vadd.f32 %v5434, %v5626
        %v5628 = vpop.f32.mrb[0].mxu0
        %v5629 = vadd.f32 %v5436, %v5628
        %v5630 = vpop.f32.mrb[0].mxu0
        %v5631 = vadd.f32 %v5438, %v5630
        %5632 = vmatprep.mubr.bf16.mxu0 %v4152
        %5633 = vmatmul.mubr.bf16.gmra.mrb[0].mxu0 %v4151
        %v5634 = vpop.f32.mrb[0].mxu0
        %v5635 = vadd.f32 %v5442, %v5634
        %v5636 = vpop.f32.mrb[0].mxu0
        %v5637 = vadd.f32 %v5444, %v5636
        %v5638 = vpop.f32.mrb[0].mxu0
        %v5639 = vadd.f32 %v5446, %v5638
        %v5640 = vpop.f32.mrb[0].mxu0
        %v5641 = vadd.f32 %v5448, %v5640
        %5642 = vmatprep.mubr.bf16.mxu0 %v4156
        %5643 = vmatmul.mubr.bf16.gmra.mrb[0].mxu0 %v4155
        %v5644 = vpop.f32.mrb[0].mxu0
        %v5645 = vadd.f32 %v5452, %v5644
        %v5646 = vpop.f32.mrb[0].mxu0
        %v5647 = vadd.f32 %v5454, %v5646
        %v5648 = vpop.f32.mrb[0].mxu0
        %v5649 = vadd.f32 %v5456, %v5648
        %v5650 = vpop.f32.mrb[0].mxu0
        %v5651 = vadd.f32 %v5458, %v5650
        %5652 = vmatprep.mubr.bf16.mxu0 %v4160
        %5653 = vmatmul.mubr.bf16.gmra.mrb[0].mxu0 %v4159
        %v5654 = vpop.f32.mrb[0].mxu0
        %v5655 = vadd.f32 %v5462, %v5654
        %v5656 = vpop.f32.mrb[0].mxu0
        %v5657 = vadd.f32 %v5464, %v5656
        %v5658 = vpop.f32.mrb[0].mxu0
        %v5659 = vadd.f32 %v5466, %v5658
        %v5660 = vpop.f32.mrb[0].mxu0
        %v5661 = vadd.f32 %v5468, %v5660
        %5662 = vmatprep.mubr.bf16.mxu0 %v4164
        %5663 = vmatmul.mubr.bf16.gmra.mrb[0].mxu0 %v4163
        %v5664 = vpop.f32.mrb[0].mxu0
        %v5665 = vadd.f32 %v5472, %v5664
        %v5666 = vpop.f32.mrb[0].mxu0
        %v5667 = vadd.f32 %v5474, %v5666
        %v5668 = vpop.f32.mrb[0].mxu0
        %v5669 = vadd.f32 %v5476, %v5668
        %v5670 = vpop.f32.mrb[0].mxu0
        %v5671 = vadd.f32 %v5478, %v5670
        %5672 = vmatprep.mubr.bf16.mxu0 %v4168
        %5673 = vmatmul.mubr.bf16.gmra.mrb[0].mxu0 %v4167
        %v5674 = vpop.f32.mrb[0].mxu0
        %v5675 = vadd.f32 %v5482, %v5674
        %v5676 = vpop.f32.mrb[0].mxu0
        %v5677 = vadd.f32 %v5484, %v5676
        %v5678 = vpop.f32.mrb[0].mxu0
        %v5679 = vadd.f32 %v5486, %v5678
        %v5680 = vpop.f32.mrb[0].mxu0
        %v5681 = vadd.f32 %v5488, %v5680
        %5682 = vmatprep.mubr.bf16.mxu0 %v4172
        %5683 = vmatmul.mubr.bf16.gmra.mrb[0].mxu0 %v4171
        %v5684 = vpop.f32.mrb[0].mxu0
        %v5685 = vadd.f32 %v5492, %v5684
        %v5686 = vpop.f32.mrb[0].mxu0
        %v5687 = vadd.f32 %v5494, %v5686
        %v5688 = vpop.f32.mrb[0].mxu0
        %v5689 = vadd.f32 %v5496, %v5688
        %v5690 = vpop.f32.mrb[0].mxu0
        %v5691 = vadd.f32 %v5498, %v5690
        %5692 = vmatprep.mubr.bf16.mxu0 %v4176
        %5693 = vmatmul.mubr.bf16.gmra.mrb[0].mxu0 %v4175
        %v5694 = vpop.f32.mrb[0].mxu0
        %v5695 = vadd.f32 %v5502, %v5694
        %v5696 = vpop.f32.mrb[0].mxu0
        %v5697 = vadd.f32 %v5504, %v5696
        %v5698 = vpop.f32.mrb[0].mxu0
        %v5699 = vadd.f32 %v5506, %v5698
        %v5700 = vpop.f32.mrb[0].mxu0
        %v5701 = vadd.f32 %v5508, %v5700
        %5702 = vmatprep.mubr.bf16.mxu0 %v4180
        %5703 = vmatmul.mubr.bf16.gmra.mrb[0].mxu0 %v4179
        %v5704 = vpop.f32.mrb[0].mxu0
        %v5705 = vadd.f32 %v5512, %v5704
        %v5706 = vpop.f32.mrb[0].mxu0
        %v5707 = vadd.f32 %v5514, %v5706
        %v5708 = vpop.f32.mrb[0].mxu0
        %v5709 = vadd.f32 %v5516, %v5708
        %v5710 = vpop.f32.mrb[0].mxu0
        %v5711 = vadd.f32 %v5518, %v5710
        %5712 = vmatprep.mubr.bf16.mxu0 %v4184
        %5713 = vmatmul.mubr.bf16.gmra.mrb[0].mxu0 %v4183
        %v5714 = vpop.f32.mrb[0].mxu0
        %v5715 = vadd.f32 %v5522, %v5714
        %v5716 = vpop.f32.mrb[0].mxu0
        %v5717 = vadd.f32 %v5524, %v5716
        %v5718 = vpop.f32.mrb[0].mxu0
        %v5719 = vadd.f32 %v5526, %v5718
        %v5720 = vpop.f32.mrb[0].mxu0
        %v5721 = vadd.f32 %v5528, %v5720
        %5722 = vmatprep.mubr.bf16.mxu0 %v4188
        %5723 = vmatmul.mubr.bf16.gmra.mrb[0].mxu0 %v4187
        %v5724 = vpop.f32.mrb[0].mxu0
        %v5725 = vadd.f32 %v5532, %v5724
        %v5726 = vpop.f32.mrb[0].mxu0
        %v5727 = vadd.f32 %v5534, %v5726
        %v5728 = vpop.f32.mrb[0].mxu0
        %v5729 = vadd.f32 %v5536, %v5728
        %v5730 = vpop.f32.mrb[0].mxu0
        %v5731 = vadd.f32 %v5538, %v5730
        %5732 = vmatprep.mubr.bf16.mxu0 %v4192
        %5733 = vmatmul.mubr.bf16.gmra.mrb[0].mxu0 %v4191
        %v5734 = vpop.f32.mrb[0].mxu0
        %v5735 = vadd.f32 %v5542, %v5734
        %v5736 = vpop.f32.mrb[0].mxu0
        %v5737 = vadd.f32 %v5544, %v5736
        %v5738 = vpop.f32.mrb[0].mxu0
        %v5739 = vadd.f32 %v5546, %v5738
        %v5740 = vpop.f32.mrb[0].mxu0
        %v5741 = vadd.f32 %v5548, %v5740
        %5742 = vmatprep.mubr.bf16.mxu0 %v4196
        %5743 = vmatmul.mubr.bf16.gmra.mrb[0].mxu0 %v4195
        %v5744 = vpop.f32.mrb[0].mxu0
        %v5745 = vadd.f32 %v5552, %v5744
        %v5746 = vpop.f32.mrb[0].mxu0
        %v5747 = vadd.f32 %v5554, %v5746
        %v5748 = vpop.f32.mrb[0].mxu0
        %v5749 = vadd.f32 %v5556, %v5748
        %v5750 = vpop.f32.mrb[0].mxu0
        %v5751 = vadd.f32 %v5558, %v5750
        %5752 = vmatprep.mubr.bf16.mxu0 %v4200
        %5753 = vmatmul.mubr.bf16.gmra.mrb[0].mxu0 %v4199
        %v5754 = vpop.f32.mrb[0].mxu0
        %v5755 = vadd.f32 %v5562, %v5754
        %v5756 = vpop.f32.mrb[0].mxu0
        %v5757 = vadd.f32 %v5564, %v5756
        %v5758 = vpop.f32.mrb[0].mxu0
        %v5759 = vadd.f32 %v5566, %v5758
        %v5760 = vpop.f32.mrb[0].mxu0
        %v5761 = vadd.f32 %v5568, %v5760
        %5762 = vdwg.mxu0
        %v5763 = vtanh.pop %v5219
        %v5764 = vtanh.pop %v5221
        %v5765 = vtanh.pop %v5223
        %v5766 = vtanh.pop %v5225
        %v5767 = vtanh.pop %v5229
        %v5768 = vtanh.pop %v5231
        %v5769 = vtanh.pop %v5233
        %v5770 = vtanh.pop %v5235
        %v5771 = vtanh.pop %v5239
        %v5772 = vtanh.pop %v5241
        %v5773 = vtanh.pop %v5243
        %v5774 = vtanh.pop %v5245
        %v5775 = vtanh.pop %v5249
        %v5776 = vtanh.pop %v5251
        %v5777 = vtanh.pop %v5253
        %v5778 = vtanh.pop %v5255
        %v5779 = vtanh.pop %v5259
        %v5780 = vtanh.pop %v5261
        %v5781 = vtanh.pop %v5263
        %v5782 = vtanh.pop %v5265
        %v5783 = vtanh.pop %v5269
        %v5784 = vtanh.pop %v5271
        %v5785 = vtanh.pop %v5273
        %v5786 = vtanh.pop %v5275
        %v5787 = vtanh.pop %v5279
        %v5788 = vtanh.pop %v5281
        %v5789 = vtanh.pop %v5283
        %v5790 = vtanh.pop %v5285
        %v5791 = vtanh.pop %v5289
        %v5792 = vtanh.pop %v5291
        %v5793 = vtanh.pop %v5293
        %v5794 = vtanh.pop %v5295
        %v5795 = vtanh.pop %v5299
        %v5796 = vtanh.pop %v5301
        %v5797 = vtanh.pop %v5303
        %v5798 = vtanh.pop %v5305
        %v5799 = vtanh.pop %v5309
        %v5800 = vtanh.pop %v5311
        %v5801 = vtanh.pop %v5313
        %v5802 = vtanh.pop %v5315
        %v5803 = vtanh.pop %v5319
        %v5804 = vtanh.pop %v5321
        %v5805 = vtanh.pop %v5323
        %v5806 = vtanh.pop %v5325
        %v5807 = vtanh.pop %v5329
        %v5808 = vtanh.pop %v5331
        %v5809 = vtanh.pop %v5333
        %v5810 = vtanh.pop %v5335
        %v5811 = vtanh.pop %v5339
        %v5812 = vtanh.pop %v5341
        %v5813 = vtanh.pop %v5343
        %v5814 = vtanh.pop %v5345
        %v5815 = vtanh.pop %v5349
        %v5816 = vtanh.pop %v5351
        %v5817 = vtanh.pop %v5353
        %v5818 = vtanh.pop %v5355
        %v5819 = vtanh.pop %v5359
        %v5820 = vtanh.pop %v5361
        %v5821 = vtanh.pop %v5363
        %v5822 = vtanh.pop %v5365
        %v5823 = vtanh.pop %v5369
        %v5824 = vtanh.pop %v5371
        %v5825 = vtanh.pop %v5373
        %v5826 = vtanh.pop %v5375
        %v5827 = vxor.u32 %v5605, 2147483648
        %v5828 = vxor.u32 %v5607, 2147483648
        %v5829 = vxor.u32 %v5609, 2147483648
        %v5830 = vxor.u32 %v5611, 2147483648
        %v5831 = vxor.u32 %v5615, 2147483648
        %v5832 = vxor.u32 %v5617, 2147483648
        %v5833 = vxor.u32 %v5619, 2147483648
        %v5834 = vxor.u32 %v5621, 2147483648
        %v5835 = vxor.u32 %v5625, 2147483648
        %v5836 = vxor.u32 %v5627, 2147483648
        %v5837 = vxor.u32 %v5629, 2147483648
        %v5838 = vxor.u32 %v5631, 2147483648
        %v5839 = vxor.u32 %v5635, 2147483648
        %v5840 = vxor.u32 %v5637, 2147483648
        %v5841 = vxor.u32 %v5639, 2147483648
        %v5842 = vxor.u32 %v5641, 2147483648
        %v5843 = vxor.u32 %v5645, 2147483648
        %v5844 = vxor.u32 %v5647, 2147483648
        %v5845 = vxor.u32 %v5649, 2147483648
        %v5846 = vxor.u32 %v5651, 2147483648
        %v5847 = vxor.u32 %v5655, 2147483648
        %v5848 = vxor.u32 %v5657, 2147483648
        %v5849 = vxor.u32 %v5659, 2147483648
        %v5850 = vxor.u32 %v5661, 2147483648
        %v5851 = vxor.u32 %v5665, 2147483648
        %v5852 = vxor.u32 %v5667, 2147483648
        %v5853 = vxor.u32 %v5669, 2147483648
        %v5854 = vxor.u32 %v5671, 2147483648
        %v5855 = vxor.u32 %v5675, 2147483648
        %v5856 = vxor.u32 %v5677, 2147483648
        %v5857 = vxor.u32 %v5679, 2147483648
        %v5858 = vxor.u32 %v5681, 2147483648
        %v5859 = vxor.u32 %v5685, 2147483648
        %v5860 = vxor.u32 %v5687, 2147483648
        %v5861 = vxor.u32 %v5689, 2147483648
        %v5862 = vxor.u32 %v5691, 2147483648
        %v5863 = vxor.u32 %v5695, 2147483648
        %v5864 = vxor.u32 %v5697, 2147483648
        %v5865 = vxor.u32 %v5699, 2147483648
        %v5866 = vxor.u32 %v5701, 2147483648
        %v5867 = vxor.u32 %v5705, 2147483648
        %v5868 = vxor.u32 %v5707, 2147483648
        %v5869 = vxor.u32 %v5709, 2147483648
        %v5870 = vxor.u32 %v5711, 2147483648
        %v5871 = vxor.u32 %v5715, 2147483648
        %v5872 = vxor.u32 %v5717, 2147483648
        %v5873 = vxor.u32 %v5719, 2147483648
        %v5874 = vxor.u32 %v5721, 2147483648
        %v5875 = vxor.u32 %v5725, 2147483648
        %v5876 = vxor.u32 %v5727, 2147483648
        %v5877 = vxor.u32 %v5729, 2147483648
        %v5878 = vxor.u32 %v5731, 2147483648
        %v5879 = vxor.u32 %v5735, 2147483648
        %v5880 = vxor.u32 %v5737, 2147483648
        %v5881 = vxor.u32 %v5739, 2147483648
        %v5882 = vxor.u32 %v5741, 2147483648
        %v5883 = vxor.u32 %v5745, 2147483648
        %v5884 = vxor.u32 %v5747, 2147483648
        %v5885 = vxor.u32 %v5749, 2147483648
        %v5886 = vxor.u32 %v5751, 2147483648
        %v5887 = vxor.u32 %v5755, 2147483648
        %v5888 = vxor.u32 %v5757, 2147483648
        %v5889 = vxor.u32 %v5759, 2147483648
        %v5890 = vxor.u32 %v5761, 2147483648
        %v5891 = vmul.f32 %v5827, 1.442695
        %v5892 = vpow.pop %v5891
        %v5893 = vmul.f32 %v5828, 1.442695
        %v5894 = vpow.pop %v5893
        %v5895 = vmul.f32 %v5829, 1.442695
        %v5896 = vpow.pop %v5895
        %v5897 = vmul.f32 %v5830, 1.442695
        %v5898 = vpow.pop %v5897
        %v5899 = vmul.f32 %v5831, 1.442695
        %v5900 = vpow.pop %v5899
        %v5901 = vmul.f32 %v5832, 1.442695
        %v5902 = vpow.pop %v5901
        %v5903 = vmul.f32 %v5833, 1.442695
        %v5904 = vpow.pop %v5903
        %v5905 = vmul.f32 %v5834, 1.442695
        %v5906 = vpow.pop %v5905
        %v5907 = vmul.f32 %v5835, 1.442695
        %v5908 = vpow.pop %v5907
        %v5909 = vmul.f32 %v5836, 1.442695
        %v5910 = vpow.pop %v5909
        %v5911 = vmul.f32 %v5837, 1.442695
        %v5912 = vpow.pop %v5911
        %v5913 = vmul.f32 %v5838, 1.442695
        %v5914 = vpow.pop %v5913
        %v5915 = vmul.f32 %v5839, 1.442695
        %v5916 = vpow.pop %v5915
        %v5917 = vmul.f32 %v5840, 1.442695
        %v5918 = vpow.pop %v5917
        %v5919 = vmul.f32 %v5841, 1.442695
        %v5920 = vpow.pop %v5919
        %v5921 = vmul.f32 %v5842, 1.442695
        %v5922 = vpow.pop %v5921
        %v5923 = vmul.f32 %v5843, 1.442695
        %v5924 = vpow.pop %v5923
        %v5925 = vmul.f32 %v5844, 1.442695
        %v5926 = vpow.pop %v5925
        %v5927 = vmul.f32 %v5845, 1.442695
        %v5928 = vpow.pop %v5927
        %v5929 = vmul.f32 %v5846, 1.442695
        %v5930 = vpow.pop %v5929
        %v5931 = vmul.f32 %v5847, 1.442695
        %v5932 = vpow.pop %v5931
        %v5933 = vmul.f32 %v5848, 1.442695
        %v5934 = vpow.pop %v5933
        %v5935 = vmul.f32 %v5849, 1.442695
        %v5936 = vpow.pop %v5935
        %v5937 = vmul.f32 %v5850, 1.442695
        %v5938 = vpow.pop %v5937
        %v5939 = vmul.f32 %v5851, 1.442695
        %v5940 = vpow.pop %v5939
        %v5941 = vmul.f32 %v5852, 1.442695
        %v5942 = vpow.pop %v5941
        %v5943 = vmul.f32 %v5853, 1.442695
        %v5944 = vpow.pop %v5943
        %v5945 = vmul.f32 %v5854, 1.442695
        %v5946 = vpow.pop %v5945
        %v5947 = vmul.f32 %v5855, 1.442695
        %v5948 = vpow.pop %v5947
        %v5949 = vmul.f32 %v5856, 1.442695
        %v5950 = vpow.pop %v5949
        %v5951 = vmul.f32 %v5857, 1.442695
        %v5952 = vpow.pop %v5951
        %v5953 = vmul.f32 %v5858, 1.442695
        %v5954 = vpow.pop %v5953
        %v5955 = vmul.f32 %v5859, 1.442695
        %v5956 = vpow.pop %v5955
        %v5957 = vmul.f32 %v5860, 1.442695
        %v5958 = vpow.pop %v5957
        %v5959 = vmul.f32 %v5861, 1.442695
        %v5960 = vpow.pop %v5959
        %v5961 = vmul.f32 %v5862, 1.442695
        %v5962 = vpow.pop %v5961
        %v5963 = vmul.f32 %v5863, 1.442695
        %v5964 = vpow.pop %v5963
        %v5965 = vmul.f32 %v5864, 1.442695
        %v5966 = vpow.pop %v5965
        %v5967 = vmul.f32 %v5865, 1.442695
        %v5968 = vpow.pop %v5967
        %v5969 = vmul.f32 %v5866, 1.442695
        %v5970 = vpow.pop %v5969
        %v5971 = vmul.f32 %v5867, 1.442695
        %v5972 = vpow.pop %v5971
        %v5973 = vmul.f32 %v5868, 1.442695
        %v5974 = vpow.pop %v5973
        %v5975 = vmul.f32 %v5869, 1.442695
        %v5976 = vpow.pop %v5975
        %v5977 = vmul.f32 %v5870, 1.442695
        %v5978 = vpow.pop %v5977
        %v5979 = vmul.f32 %v5871, 1.442695
        %v5980 = vpow.pop %v5979
        %v5981 = vmul.f32 %v5872, 1.442695
        %v5982 = vpow.pop %v5981
        %v5983 = vmul.f32 %v5873, 1.442695
        %v5984 = vpow.pop %v5983
        %v5985 = vmul.f32 %v5874, 1.442695
        %v5986 = vpow.pop %v5985
        %v5987 = vmul.f32 %v5875, 1.442695
        %v5988 = vpow.pop %v5987
        %v5989 = vmul.f32 %v5876, 1.442695
        %v5990 = vpow.pop %v5989
        %v5991 = vmul.f32 %v5877, 1.442695
        %v5992 = vpow.pop %v5991
        %v5993 = vmul.f32 %v5878, 1.442695
        %v5994 = vpow.pop %v5993
        %v5995 = vmul.f32 %v5879, 1.442695
        %v5996 = vpow.pop %v5995
        %v5997 = vmul.f32 %v5880, 1.442695
        %v5998 = vpow.pop %v5997
        %v5999 = vmul.f32 %v5881, 1.442695
        %v6000 = vpow.pop %v5999
        %v6001 = vmul.f32 %v5882, 1.442695
        %v6002 = vpow.pop %v6001
        %v6003 = vmul.f32 %v5883, 1.442695
        %v6004 = vpow.pop %v6003
        %v6005 = vmul.f32 %v5884, 1.442695
        %v6006 = vpow.pop %v6005
        %v6007 = vmul.f32 %v5885, 1.442695
        %v6008 = vpow.pop %v6007
        %v6009 = vmul.f32 %v5886, 1.442695
        %v6010 = vpow.pop %v6009
        %v6011 = vmul.f32 %v5887, 1.442695
        %v6012 = vpow.pop %v6011
        %v6013 = vmul.f32 %v5888, 1.442695
        %v6014 = vpow.pop %v6013
        %v6015 = vmul.f32 %v5889, 1.442695
        %v6016 = vpow.pop %v6015
        %v6017 = vmul.f32 %v5890, 1.442695
        %v6018 = vpow.pop %v6017
        %v6019 = vadd.f32 %v5892, 1.0
        %v6020 = vadd.f32 %v5894, 1.0
        %v6021 = vadd.f32 %v5896, 1.0
        %v6022 = vadd.f32 %v5898, 1.0
        %v6023 = vadd.f32 %v5900, 1.0
        %v6024 = vadd.f32 %v5902, 1.0
        %v6025 = vadd.f32 %v5904, 1.0
        %v6026 = vadd.f32 %v5906, 1.0
        %v6027 = vadd.f32 %v5908, 1.0
        %v6028 = vadd.f32 %v5910, 1.0
        %v6029 = vadd.f32 %v5912, 1.0
        %v6030 = vadd.f32 %v5914, 1.0
        %v6031 = vadd.f32 %v5916, 1.0
        %v6032 = vadd.f32 %v5918, 1.0
        %v6033 = vadd.f32 %v5920, 1.0
        %v6034 = vadd.f32 %v5922, 1.0
        %v6035 = vadd.f32 %v5924, 1.0
        %v6036 = vadd.f32 %v5926, 1.0
        %v6037 = vadd.f32 %v5928, 1.0
        %v6038 = vadd.f32 %v5930, 1.0
        %v6039 = vadd.f32 %v5932, 1.0
        %v6040 = vadd.f32 %v5934, 1.0
        %v6041 = vadd.f32 %v5936, 1.0
        %v6042 = vadd.f32 %v5938, 1.0
        %v6043 = vadd.f32 %v5940, 1.0
        %v6044 = vadd.f32 %v5942, 1.0
        %v6045 = vadd.f32 %v5944, 1.0
        %v6046 = vadd.f32 %v5946, 1.0
        %v6047 = vadd.f32 %v5948, 1.0
        %v6048 = vadd.f32 %v5950, 1.0
        %v6049 = vadd.f32 %v5952, 1.0
        %v6050 = vadd.f32 %v5954, 1.0
        %v6051 = vadd.f32 %v5956, 1.0
        %v6052 = vadd.f32 %v5958, 1.0
        %v6053 = vadd.f32 %v5960, 1.0
        %v6054 = vadd.f32 %v5962, 1.0
        %v6055 = vadd.f32 %v5964, 1.0
        %v6056 = vadd.f32 %v5966, 1.0
        %v6057 = vadd.f32 %v5968, 1.0
        %v6058 = vadd.f32 %v5970, 1.0
        %v6059 = vadd.f32 %v5972, 1.0
        %v6060 = vadd.f32 %v5974, 1.0
        %v6061 = vadd.f32 %v5976, 1.0
        %v6062 = vadd.f32 %v5978, 1.0
        %v6063 = vadd.f32 %v5980, 1.0
        %v6064 = vadd.f32 %v5982, 1.0
        %v6065 = vadd.f32 %v5984, 1.0
        %v6066 = vadd.f32 %v5986, 1.0
        %v6067 = vadd.f32 %v5988, 1.0
        %v6068 = vadd.f32 %v5990, 1.0
        %v6069 = vadd.f32 %v5992, 1.0
        %v6070 = vadd.f32 %v5994, 1.0
        %v6071 = vadd.f32 %v5996, 1.0
        %v6072 = vadd.f32 %v5998, 1.0
        %v6073 = vadd.f32 %v6000, 1.0
        %v6074 = vadd.f32 %v6002, 1.0
        %v6075 = vadd.f32 %v6004, 1.0
        %v6076 = vadd.f32 %v6006, 1.0
        %v6077 = vadd.f32 %v6008, 1.0
        %v6078 = vadd.f32 %v6010, 1.0
        %v6079 = vadd.f32 %v6012, 1.0
        %v6080 = vadd.f32 %v6014, 1.0
        %v6081 = vadd.f32 %v6016, 1.0
        %v6082 = vadd.f32 %v6018, 1.0
        %v6083 = vrcp.pop %v6019
        %v6084 = vmul.f32 1.0, %v6083
        %v6085 = vrcp.pop %v6020
        %v6086 = vmul.f32 1.0, %v6085
        %v6087 = vrcp.pop %v6021
        %v6088 = vmul.f32 1.0, %v6087
        %v6089 = vrcp.pop %v6022
        %v6090 = vmul.f32 1.0, %v6089
        %v6091 = vrcp.pop %v6023
        %v6092 = vmul.f32 1.0, %v6091
        %v6093 = vrcp.pop %v6024
        %v6094 = vmul.f32 1.0, %v6093
        %v6095 = vrcp.pop %v6025
        %v6096 = vmul.f32 1.0, %v6095
        %v6097 = vrcp.pop %v6026
        %v6098 = vmul.f32 1.0, %v6097
        %v6099 = vrcp.pop %v6027
        %v6100 = vmul.f32 1.0, %v6099
        %v6101 = vrcp.pop %v6028
        %v6102 = vmul.f32 1.0, %v6101
        %v6103 = vrcp.pop %v6029
        %v6104 = vmul.f32 1.0, %v6103
        %v6105 = vrcp.pop %v6030
        %v6106 = vmul.f32 1.0, %v6105
        %v6107 = vrcp.pop %v6031
        %v6108 = vmul.f32 1.0, %v6107
        %v6109 = vrcp.pop %v6032
        %v6110 = vmul.f32 1.0, %v6109
        %v6111 = vrcp.pop %v6033
        %v6112 = vmul.f32 1.0, %v6111
        %v6113 = vrcp.pop %v6034
        %v6114 = vmul.f32 1.0, %v6113
        %v6115 = vrcp.pop %v6035
        %v6116 = vmul.f32 1.0, %v6115
        %v6117 = vrcp.pop %v6036
        %v6118 = vmul.f32 1.0, %v6117
        %v6119 = vrcp.pop %v6037
        %v6120 = vmul.f32 1.0, %v6119
        %v6121 = vrcp.pop %v6038
        %v6122 = vmul.f32 1.0, %v6121
        %v6123 = vrcp.pop %v6039
        %v6124 = vmul.f32 1.0, %v6123
        %v6125 = vrcp.pop %v6040
        %v6126 = vmul.f32 1.0, %v6125
        %v6127 = vrcp.pop %v6041
        %v6128 = vmul.f32 1.0, %v6127
        %v6129 = vrcp.pop %v6042
        %v6130 = vmul.f32 1.0, %v6129
        %v6131 = vrcp.pop %v6043
        %v6132 = vmul.f32 1.0, %v6131
        %v6133 = vrcp.pop %v6044
        %v6134 = vmul.f32 1.0, %v6133
        %v6135 = vrcp.pop %v6045
        %v6136 = vmul.f32 1.0, %v6135
        %v6137 = vrcp.pop %v6046
        %v6138 = vmul.f32 1.0, %v6137
        %v6139 = vrcp.pop %v6047
        %v6140 = vmul.f32 1.0, %v6139
        %v6141 = vrcp.pop %v6048
        %v6142 = vmul.f32 1.0, %v6141
        %v6143 = vrcp.pop %v6049
        %v6144 = vmul.f32 1.0, %v6143
        %v6145 = vrcp.pop %v6050
        %v6146 = vmul.f32 1.0, %v6145
        %v6147 = vrcp.pop %v6051
        %v6148 = vmul.f32 1.0, %v6147
        %v6149 = vrcp.pop %v6052
        %v6150 = vmul.f32 1.0, %v6149
        %v6151 = vrcp.pop %v6053
        %v6152 = vmul.f32 1.0, %v6151
        %v6153 = vrcp.pop %v6054
        %v6154 = vmul.f32 1.0, %v6153
        %v6155 = vrcp.pop %v6055
        %v6156 = vmul.f32 1.0, %v6155
        %v6157 = vrcp.pop %v6056
        %v6158 = vmul.f32 1.0, %v6157
        %v6159 = vrcp.pop %v6057
        %v6160 = vmul.f32 1.0, %v6159
        %v6161 = vrcp.pop %v6058
        %v6162 = vmul.f32 1.0, %v6161
        %v6163 = vrcp.pop %v6059
        %v6164 = vmul.f32 1.0, %v6163
        %v6165 = vrcp.pop %v6060
        %v6166 = vmul.f32 1.0, %v6165
        %v6167 = vrcp.pop %v6061
        %v6168 = vmul.f32 1.0, %v6167
        %v6169 = vrcp.pop %v6062
        %v6170 = vmul.f32 1.0, %v6169
        %v6171 = vrcp.pop %v6063
        %v6172 = vmul.f32 1.0, %v6171
        %v6173 = vrcp.pop %v6064
        %v6174 = vmul.f32 1.0, %v6173
        %v6175 = vrcp.pop %v6065
        %v6176 = vmul.f32 1.0, %v6175
        %v6177 = vrcp.pop %v6066
        %v6178 = vmul.f32 1.0, %v6177
        %v6179 = vrcp.pop %v6067
        %v6180 = vmul.f32 1.0, %v6179
        %v6181 = vrcp.pop %v6068
        %v6182 = vmul.f32 1.0, %v6181
        %v6183 = vrcp.pop %v6069
        %v6184 = vmul.f32 1.0, %v6183
        %v6185 = vrcp.pop %v6070
        %v6186 = vmul.f32 1.0, %v6185
        %v6187 = vrcp.pop %v6071
        %v6188 = vmul.f32 1.0, %v6187
        %v6189 = vrcp.pop %v6072
        %v6190 = vmul.f32 1.0, %v6189
        %v6191 = vrcp.pop %v6073
        %v6192 = vmul.f32 1.0, %v6191
        %v6193 = vrcp.pop %v6074
        %v6194 = vmul.f32 1.0, %v6193
        %v6195 = vrcp.pop %v6075
        %v6196 = vmul.f32 1.0, %v6195
        %v6197 = vrcp.pop %v6076
        %v6198 = vmul.f32 1.0, %v6197
        %v6199 = vrcp.pop %v6077
        %v6200 = vmul.f32 1.0, %v6199
        %v6201 = vrcp.pop %v6078
        %v6202 = vmul.f32 1.0, %v6201
        %v6203 = vrcp.pop %v6079
        %v6204 = vmul.f32 1.0, %v6203
        %v6205 = vrcp.pop %v6080
        %v6206 = vmul.f32 1.0, %v6205
        %v6207 = vrcp.pop %v6081
        %v6208 = vmul.f32 1.0, %v6207
        %v6209 = vrcp.pop %v6082
        %v6210 = vmul.f32 1.0, %v6209
        %v6211 = vmul.f32 %v5763, %v6084
        %v6212 = vmul.f32 %v5764, %v6086
        %v6213 = vmul.f32 %v5765, %v6088
        %v6214 = vmul.f32 %v5766, %v6090
        %v6215 = vmul.f32 %v5767, %v6092
        %v6216 = vmul.f32 %v5768, %v6094
        %v6217 = vmul.f32 %v5769, %v6096
        %v6218 = vmul.f32 %v5770, %v6098
        %v6219 = vmul.f32 %v5771, %v6100
        %v6220 = vmul.f32 %v5772, %v6102
        %v6221 = vmul.f32 %v5773, %v6104
        %v6222 = vmul.f32 %v5774, %v6106
        %v6223 = vmul.f32 %v5775, %v6108
        %v6224 = vmul.f32 %v5776, %v6110
        %v6225 = vmul.f32 %v5777, %v6112
        %v6226 = vmul.f32 %v5778, %v6114
        %v6227 = vmul.f32 %v5779, %v6116
        %v6228 = vmul.f32 %v5780, %v6118
        %v6229 = vmul.f32 %v5781, %v6120
        %v6230 = vmul.f32 %v5782, %v6122
        %v6231 = vmul.f32 %v5783, %v6124
        %v6232 = vmul.f32 %v5784, %v6126
        %v6233 = vmul.f32 %v5785, %v6128
        %v6234 = vmul.f32 %v5786, %v6130
        %v6235 = vmul.f32 %v5787, %v6132
        %v6236 = vmul.f32 %v5788, %v6134
        %v6237 = vmul.f32 %v5789, %v6136
        %v6238 = vmul.f32 %v5790, %v6138
        %v6239 = vmul.f32 %v5791, %v6140
        %v6240 = vmul.f32 %v5792, %v6142
        %v6241 = vmul.f32 %v5793, %v6144
        %v6242 = vmul.f32 %v5794, %v6146
        %v6243 = vmul.f32 %v5795, %v6148
        %v6244 = vmul.f32 %v5796, %v6150
        %v6245 = vmul.f32 %v5797, %v6152
        %v6246 = vmul.f32 %v5798, %v6154
        %v6247 = vmul.f32 %v5799, %v6156
        %v6248 = vmul.f32 %v5800, %v6158
        %v6249 = vmul.f32 %v5801, %v6160
        %v6250 = vmul.f32 %v5802, %v6162
        %v6251 = vmul.f32 %v5803, %v6164
        %v6252 = vmul.f32 %v5804, %v6166
        %v6253 = vmul.f32 %v5805, %v6168
        %v6254 = vmul.f32 %v5806, %v6170
        %v6255 = vmul.f32 %v5807, %v6172
        %v6256 = vmul.f32 %v5808, %v6174
        %v6257 = vmul.f32 %v5809, %v6176
        %v6258 = vmul.f32 %v5810, %v6178
        %v6259 = vmul.f32 %v5811, %v6180
        %v6260 = vmul.f32 %v5812, %v6182
        %v6261 = vmul.f32 %v5813, %v6184
        %v6262 = vmul.f32 %v5814, %v6186
        %v6263 = vmul.f32 %v5815, %v6188
        %v6264 = vmul.f32 %v5816, %v6190
        %v6265 = vmul.f32 %v5817, %v6192
        %v6266 = vmul.f32 %v5818, %v6194
        %v6267 = vmul.f32 %v5819, %v6196
        %v6268 = vmul.f32 %v5820, %v6198
        %v6269 = vmul.f32 %v5821, %v6200
        %v6270 = vmul.f32 %v5822, %v6202
        %v6271 = vmul.f32 %v5823, %v6204
        %v6272 = vmul.f32 %v5824, %v6206
        %v6273 = vmul.f32 %v5825, %v6208
        %v6274 = vmul.f32 %v5826, %v6210
        %v6275 = vld [vmem:[#allocation14] sm:$0x3]
        %v6277 = vlaneseq
        %v6278 = vshrl.u32 %v6277, 7
        %v6279 = vsub.s32 0, %v6278
        %v6280 = vrot.slane %v6275, %v6279
        %v6281 = vlaneseq
        %v6282 = vshrl.u32 %v6281, 7
        %v6283 = vsub.s32 1, %v6282
        %v6284 = vrot.slane %v6275, %v6283
        %v6287 = vmul.f32 %v6211, %v6280
        %v6288 = vmul.f32 %v6212, %v6284
        %v6289 = vmul.f32 %v6213, %v6280
        %v6290 = vmul.f32 %v6214, %v6284
        %v6291 = vmul.f32 %v6215, %v6280
        %v6292 = vmul.f32 %v6216, %v6284
        %v6293 = vmul.f32 %v6217, %v6280
        %v6294 = vmul.f32 %v6218, %v6284
        %v6295 = vmul.f32 %v6219, %v6280
        %v6296 = vmul.f32 %v6220, %v6284
        %v6297 = vmul.f32 %v6221, %v6280
        %v6298 = vmul.f32 %v6222, %v6284
        %v6299 = vmul.f32 %v6223, %v6280
        %v6300 = vmul.f32 %v6224, %v6284
        %v6301 = vmul.f32 %v6225, %v6280
        %v6302 = vmul.f32 %v6226, %v6284
        %v6303 = vmul.f32 %v6227, %v6280
        %v6304 = vmul.f32 %v6228, %v6284
        %v6305 = vmul.f32 %v6229, %v6280
        %v6306 = vmul.f32 %v6230, %v6284
        %v6307 = vmul.f32 %v6231, %v6280
        %v6308 = vmul.f32 %v6232, %v6284
        %v6309 = vmul.f32 %v6233, %v6280
        %v6310 = vmul.f32 %v6234, %v6284
        %v6311 = vmul.f32 %v6235, %v6280
        %v6312 = vmul.f32 %v6236, %v6284
        %v6313 = vmul.f32 %v6237, %v6280
        %v6314 = vmul.f32 %v6238, %v6284
        %v6315 = vmul.f32 %v6239, %v6280
        %v6316 = vmul.f32 %v6240, %v6284
        %v6317 = vmul.f32 %v6241, %v6280
        %v6318 = vmul.f32 %v6242, %v6284
        %v6319 = vmul.f32 %v6243, %v6280
        %v6320 = vmul.f32 %v6244, %v6284
        %v6321 = vmul.f32 %v6245, %v6280
        %v6322 = vmul.f32 %v6246, %v6284
        %v6323 = vmul.f32 %v6247, %v6280
        %v6324 = vmul.f32 %v6248, %v6284
        %v6325 = vmul.f32 %v6249, %v6280
        %v6326 = vmul.f32 %v6250, %v6284
        %v6327 = vmul.f32 %v6251, %v6280
        %v6328 = vmul.f32 %v6252, %v6284
        %v6329 = vmul.f32 %v6253, %v6280
        %v6330 = vmul.f32 %v6254, %v6284
        %v6331 = vmul.f32 %v6255, %v6280
        %v6332 = vmul.f32 %v6256, %v6284
        %v6333 = vmul.f32 %v6257, %v6280
        %v6334 = vmul.f32 %v6258, %v6284
        %v6335 = vmul.f32 %v6259, %v6280
        %v6336 = vmul.f32 %v6260, %v6284
        %v6337 = vmul.f32 %v6261, %v6280
        %v6338 = vmul.f32 %v6262, %v6284
        %v6339 = vmul.f32 %v6263, %v6280
        %v6340 = vmul.f32 %v6264, %v6284
        %v6341 = vmul.f32 %v6265, %v6280
        %v6342 = vmul.f32 %v6266, %v6284
        %v6343 = vmul.f32 %v6267, %v6280
        %v6344 = vmul.f32 %v6268, %v6284
        %v6345 = vmul.f32 %v6269, %v6280
        %v6346 = vmul.f32 %v6270, %v6284
        %v6347 = vmul.f32 %v6271, %v6280
        %v6348 = vmul.f32 %v6272, %v6284
        %v6349 = vmul.f32 %v6273, %v6280
        %v6350 = vmul.f32 %v6274, %v6284
        %v6351 = vadd.f32 %v6287, %v6288
        %6352 = vadd.xlane.f32.xlu0 %v6351
        %v6353 = vpop.xlane.xlu0 %6352
        %v6354 = vadd.f32 %v6289, %v6290
        %6355 = vadd.xlane.f32.xlu0 %v6354
        %v6356 = vpop.xlane.xlu0 %6355
        %v6357 = vadd.f32 %v6291, %v6292
        %6358 = vadd.xlane.f32.xlu0 %v6357
        %v6359 = vpop.xlane.xlu0 %6358
        %v6360 = vadd.f32 %v6293, %v6294
        %6361 = vadd.xlane.f32.xlu0 %v6360
        %v6362 = vpop.xlane.xlu0 %6361
        %v6363 = vadd.f32 %v6295, %v6296
        %6364 = vadd.xlane.f32.xlu0 %v6363
        %v6365 = vpop.xlane.xlu0 %6364
        %v6366 = vadd.f32 %v6297, %v6298
        %6367 = vadd.xlane.f32.xlu0 %v6366
        %v6368 = vpop.xlane.xlu0 %6367
        %v6369 = vadd.f32 %v6299, %v6300
        %6370 = vadd.xlane.f32.xlu0 %v6369
        %v6371 = vpop.xlane.xlu0 %6370
        %v6372 = vadd.f32 %v6301, %v6302
        %6373 = vadd.xlane.f32.xlu0 %v6372
        %v6374 = vpop.xlane.xlu0 %6373
        %v6375 = vadd.f32 %v6303, %v6304
        %6376 = vadd.xlane.f32.xlu0 %v6375
        %v6377 = vpop.xlane.xlu0 %6376
        %v6378 = vadd.f32 %v6305, %v6306
        %6379 = vadd.xlane.f32.xlu0 %v6378
        %v6380 = vpop.xlane.xlu0 %6379
        %v6381 = vadd.f32 %v6307, %v6308
        %6382 = vadd.xlane.f32.xlu0 %v6381
        %v6383 = vpop.xlane.xlu0 %6382
        %v6384 = vadd.f32 %v6309, %v6310
        %6385 = vadd.xlane.f32.xlu0 %v6384
        %v6386 = vpop.xlane.xlu0 %6385
        %v6387 = vadd.f32 %v6311, %v6312
        %6388 = vadd.xlane.f32.xlu0 %v6387
        %v6389 = vpop.xlane.xlu0 %6388
        %v6390 = vadd.f32 %v6313, %v6314
        %6391 = vadd.xlane.f32.xlu0 %v6390
        %v6392 = vpop.xlane.xlu0 %6391
        %v6393 = vadd.f32 %v6315, %v6316
        %6394 = vadd.xlane.f32.xlu0 %v6393
        %v6395 = vpop.xlane.xlu0 %6394
        %v6396 = vadd.f32 %v6317, %v6318
        %6397 = vadd.xlane.f32.xlu0 %v6396
        %v6398 = vpop.xlane.xlu0 %6397
        %v6399 = vadd.f32 %v6319, %v6320
        %6400 = vadd.xlane.f32.xlu0 %v6399
        %v6401 = vpop.xlane.xlu0 %6400
        %v6402 = vadd.f32 %v6321, %v6322
        %6403 = vadd.xlane.f32.xlu0 %v6402
        %v6404 = vpop.xlane.xlu0 %6403
        %v6405 = vadd.f32 %v6323, %v6324
        %6406 = vadd.xlane.f32.xlu0 %v6405
        %v6407 = vpop.xlane.xlu0 %6406
        %v6408 = vadd.f32 %v6325, %v6326
        %6409 = vadd.xlane.f32.xlu0 %v6408
        %v6410 = vpop.xlane.xlu0 %6409
        %v6411 = vadd.f32 %v6327, %v6328
        %6412 = vadd.xlane.f32.xlu0 %v6411
        %v6413 = vpop.xlane.xlu0 %6412
        %v6414 = vadd.f32 %v6329, %v6330
        %6415 = vadd.xlane.f32.xlu0 %v6414
        %v6416 = vpop.xlane.xlu0 %6415
        %v6417 = vadd.f32 %v6331, %v6332
        %6418 = vadd.xlane.f32.xlu0 %v6417
        %v6419 = vpop.xlane.xlu0 %6418
        %v6420 = vadd.f32 %v6333, %v6334
        %6421 = vadd.xlane.f32.xlu0 %v6420
        %v6422 = vpop.xlane.xlu0 %6421
        %v6423 = vadd.f32 %v6335, %v6336
        %6424 = vadd.xlane.f32.xlu0 %v6423
        %v6425 = vpop.xlane.xlu0 %6424
        %v6426 = vadd.f32 %v6337, %v6338
        %6427 = vadd.xlane.f32.xlu0 %v6426
        %v6428 = vpop.xlane.xlu0 %6427
        %v6429 = vadd.f32 %v6339, %v6340
        %6430 = vadd.xlane.f32.xlu0 %v6429
        %v6431 = vpop.xlane.xlu0 %6430
        %v6432 = vadd.f32 %v6341, %v6342
        %6433 = vadd.xlane.f32.xlu0 %v6432
        %v6434 = vpop.xlane.xlu0 %6433
        %v6435 = vadd.f32 %v6343, %v6344
        %6436 = vadd.xlane.f32.xlu0 %v6435
        %v6437 = vpop.xlane.xlu0 %6436
        %v6438 = vadd.f32 %v6345, %v6346
        %6439 = vadd.xlane.f32.xlu0 %v6438
        %v6440 = vpop.xlane.xlu0 %6439
        %v6441 = vadd.f32 %v6347, %v6348
        %6442 = vadd.xlane.f32.xlu0 %v6441
        %v6443 = vpop.xlane.xlu0 %6442
        %v6444 = vadd.f32 %v6349, %v6350
        %6445 = vadd.xlane.f32.xlu0 %v6444
        %v6446 = vpop.xlane.xlu0 %6445
        %v6447 = vld [vmem:[#allocation4] sm:$0x1]
        %v6449 = vlaneseq
        %v6450 = vshrl.u32 %v6449, 7
        %v6451 = vsub.s32 0, %v6450
        %v6452 = vrot.slane %v6447, %v6451
        %v6454 = vadd.f32 %v6353, %v6452
        %v6455 = vadd.f32 %v6356, %v6452
        %v6456 = vadd.f32 %v6359, %v6452
        %v6457 = vadd.f32 %v6362, %v6452
        %v6458 = vadd.f32 %v6365, %v6452
        %v6459 = vadd.f32 %v6368, %v6452
        %v6460 = vadd.f32 %v6371, %v6452
        %v6461 = vadd.f32 %v6374, %v6452
        %v6462 = vadd.f32 %v6377, %v6452
        %v6463 = vadd.f32 %v6380, %v6452
        %v6464 = vadd.f32 %v6383, %v6452
        %v6465 = vadd.f32 %v6386, %v6452
        %v6466 = vadd.f32 %v6389, %v6452
        %v6467 = vadd.f32 %v6392, %v6452
        %v6468 = vadd.f32 %v6395, %v6452
        %v6469 = vadd.f32 %v6398, %v6452
        %v6470 = vadd.f32 %v6401, %v6452
        %v6471 = vadd.f32 %v6404, %v6452
        %v6472 = vadd.f32 %v6407, %v6452
        %v6473 = vadd.f32 %v6410, %v6452
        %v6474 = vadd.f32 %v6413, %v6452
        %v6475 = vadd.f32 %v6416, %v6452
        %v6476 = vadd.f32 %v6419, %v6452
        %v6477 = vadd.f32 %v6422, %v6452
        %v6478 = vadd.f32 %v6425, %v6452
        %v6479 = vadd.f32 %v6428, %v6452
        %v6480 = vadd.f32 %v6431, %v6452
        %v6481 = vadd.f32 %v6434, %v6452
        %v6482 = vadd.f32 %v6437, %v6452
        %v6483 = vadd.f32 %v6440, %v6452
        %v6484 = vadd.f32 %v6443, %v6452
        %v6485 = vadd.f32 %v6446, %v6452
        %s6486 = smul.u32 %s39, 2
        %s6487 = sadd.s32 %s6486, %s40
        %s6488 = smul.u32 %s6487, 256
        %v6489 = vlaneseq
        %v6490 = vshrl.u32 %v6489, 7
        %v6491 = vadd.s32 %v6490, 8
        %v6492 = vadd.s32 %v6490, 16
        %v6493 = vadd.s32 %v6490, 24
        %v6494 = vadd.s32 %v6490, 32
        %v6495 = vadd.s32 %v6490, 40
        %v6496 = vadd.s32 %v6490, 48
        %v6497 = vadd.s32 %v6490, 56
        %v6498 = vadd.s32 %v6490, 64
        %v6499 = vadd.s32 %v6490, 72
        %v6500 = vadd.s32 %v6490, 80
        %v6501 = vadd.s32 %v6490, 88
        %v6502 = vadd.s32 %v6490, 96
        %v6503 = vadd.s32 %v6490, 104
        %v6504 = vadd.s32 %v6490, 112
        %v6505 = vadd.s32 %v6490, 120
        %v6506 = vadd.s32 %v6490, 128
        %v6507 = vadd.s32 %v6490, 136
        %v6508 = vadd.s32 %v6490, 144
        %v6509 = vadd.s32 %v6490, 152
        %v6510 = vadd.s32 %v6490, 160
        %v6511 = vadd.s32 %v6490, 168
        %v6512 = vadd.s32 %v6490, 176
        %v6513 = vadd.s32 %v6490, 184
        %v6514 = vadd.s32 %v6490, 192
        %v6515 = vadd.s32 %v6490, 200
        %v6516 = vadd.s32 %v6490, 208
        %v6517 = vadd.s32 %v6490, 216
        %v6518 = vadd.s32 %v6490, 224
        %v6519 = vadd.s32 %v6490, 232
        %v6520 = vadd.s32 %v6490, 240
        %v6521 = vadd.s32 %v6490, 248
        %v6522 = vstv %s6488
        %v6523 = vadd.s32 %v6522, %v6490
        %v6524 = vadd.s32 %v6522, %v6491
        %v6525 = vadd.s32 %v6522, %v6492
        %v6526 = vadd.s32 %v6522, %v6493
        %v6527 = vadd.s32 %v6522, %v6494
        %v6528 = vadd.s32 %v6522, %v6495
        %v6529 = vadd.s32 %v6522, %v6496
        %v6530 = vadd.s32 %v6522, %v6497
        %v6531 = vadd.s32 %v6522, %v6498
        %v6532 = vadd.s32 %v6522, %v6499
        %v6533 = vadd.s32 %v6522, %v6500
        %v6534 = vadd.s32 %v6522, %v6501
        %v6535 = vadd.s32 %v6522, %v6502
        %v6536 = vadd.s32 %v6522, %v6503
        %v6537 = vadd.s32 %v6522, %v6504
        %v6538 = vadd.s32 %v6522, %v6505
        %v6539 = vadd.s32 %v6522, %v6506
        %v6540 = vadd.s32 %v6522, %v6507
        %v6541 = vadd.s32 %v6522, %v6508
        %v6542 = vadd.s32 %v6522, %v6509
        %v6543 = vadd.s32 %v6522, %v6510
        %v6544 = vadd.s32 %v6522, %v6511
        %v6545 = vadd.s32 %v6522, %v6512
        %v6546 = vadd.s32 %v6522, %v6513
        %v6547 = vadd.s32 %v6522, %v6514
        %v6548 = vadd.s32 %v6522, %v6515
        %v6549 = vadd.s32 %v6522, %v6516
        %v6550 = vadd.s32 %v6522, %v6517
        %v6551 = vadd.s32 %v6522, %v6518
        %v6552 = vadd.s32 %v6522, %v6519
        %v6553 = vadd.s32 %v6522, %v6520
        %v6554 = vadd.s32 %v6522, %v6521
        %s6555 = sld [smem:[#allocation3]]
        %v6556 = vstv %s6555
        %vm6557 = vcmp.lt.s32.totalorder %v6523, %v6556
        %vm6558 = vcmp.lt.s32.totalorder %v6524, %v6556
        %vm6559 = vcmp.lt.s32.totalorder %v6525, %v6556
        %vm6560 = vcmp.lt.s32.totalorder %v6526, %v6556
        %vm6561 = vcmp.lt.s32.totalorder %v6527, %v6556
        %vm6562 = vcmp.lt.s32.totalorder %v6528, %v6556
        %vm6563 = vcmp.lt.s32.totalorder %v6529, %v6556
        %vm6564 = vcmp.lt.s32.totalorder %v6530, %v6556
        %vm6565 = vcmp.lt.s32.totalorder %v6531, %v6556
        %vm6566 = vcmp.lt.s32.totalorder %v6532, %v6556
        %vm6567 = vcmp.lt.s32.totalorder %v6533, %v6556
        %vm6568 = vcmp.lt.s32.totalorder %v6534, %v6556
        %vm6569 = vcmp.lt.s32.totalorder %v6535, %v6556
        %vm6570 = vcmp.lt.s32.totalorder %v6536, %v6556
        %vm6571 = vcmp.lt.s32.totalorder %v6537, %v6556
        %vm6572 = vcmp.lt.s32.totalorder %v6538, %v6556
        %vm6573 = vcmp.lt.s32.totalorder %v6539, %v6556
        %vm6574 = vcmp.lt.s32.totalorder %v6540, %v6556
        %vm6575 = vcmp.lt.s32.totalorder %v6541, %v6556
        %vm6576 = vcmp.lt.s32.totalorder %v6542, %v6556
        %vm6577 = vcmp.lt.s32.totalorder %v6543, %v6556
        %vm6578 = vcmp.lt.s32.totalorder %v6544, %v6556
        %vm6579 = vcmp.lt.s32.totalorder %v6545, %v6556
        %vm6580 = vcmp.lt.s32.totalorder %v6546, %v6556
        %vm6581 = vcmp.lt.s32.totalorder %v6547, %v6556
        %vm6582 = vcmp.lt.s32.totalorder %v6548, %v6556
        %vm6583 = vcmp.lt.s32.totalorder %v6549, %v6556
        %vm6584 = vcmp.lt.s32.totalorder %v6550, %v6556
        %vm6585 = vcmp.lt.s32.totalorder %v6551, %v6556
        %vm6586 = vcmp.lt.s32.totalorder %v6552, %v6556
        %vm6587 = vcmp.lt.s32.totalorder %v6553, %v6556
        %vm6588 = vcmp.lt.s32.totalorder %v6554, %v6556
        %v6589 = vsel %vm6557, %v6454, -1e+30
        %v6590 = vsel %vm6558, %v6455, -1e+30
        %v6591 = vsel %vm6559, %v6456, -1e+30
        %v6592 = vsel %vm6560, %v6457, -1e+30
        %v6593 = vsel %vm6561, %v6458, -1e+30
        %v6594 = vsel %vm6562, %v6459, -1e+30
        %v6595 = vsel %vm6563, %v6460, -1e+30
        %v6596 = vsel %vm6564, %v6461, -1e+30
        %v6597 = vsel %vm6565, %v6462, -1e+30
        %v6598 = vsel %vm6566, %v6463, -1e+30
        %v6599 = vsel %vm6567, %v6464, -1e+30
        %v6600 = vsel %vm6568, %v6465, -1e+30
        %v6601 = vsel %vm6569, %v6466, -1e+30
        %v6602 = vsel %vm6570, %v6467, -1e+30
        %v6603 = vsel %vm6571, %v6468, -1e+30
        %v6604 = vsel %vm6572, %v6469, -1e+30
        %v6605 = vsel %vm6573, %v6470, -1e+30
        %v6606 = vsel %vm6574, %v6471, -1e+30
        %v6607 = vsel %vm6575, %v6472, -1e+30
        %v6608 = vsel %vm6576, %v6473, -1e+30
        %v6609 = vsel %vm6577, %v6474, -1e+30
        %v6610 = vsel %vm6578, %v6475, -1e+30
        %v6611 = vsel %vm6579, %v6476, -1e+30
        %v6612 = vsel %vm6580, %v6477, -1e+30
        %v6613 = vsel %vm6581, %v6478, -1e+30
        %v6614 = vsel %vm6582, %v6479, -1e+30
        %v6615 = vsel %vm6583, %v6480, -1e+30
        %v6616 = vsel %vm6584, %v6481, -1e+30
        %v6617 = vsel %vm6585, %v6482, -1e+30
        %v6618 = vsel %vm6586, %v6483, -1e+30
        %v6619 = vsel %vm6587, %v6484, -1e+30
        %v6620 = vsel %vm6588, %v6485, -1e+30
        %vm6621 = vcmask 7168
        %6622 = vst.msk [vmem:[%s501] sm:$0xff] %vm6621, %v6589
        %6623 = vst.msk [vmem:[%s501 + $0x8] sm:$0xff] %vm6621, %v6590
        %6624 = vst.msk [vmem:[%s501 + $0x10] sm:$0xff] %vm6621, %v6591
        %6625 = vst.msk [vmem:[%s501 + $0x18] sm:$0xff] %vm6621, %v6592
        %6626 = vst.msk [vmem:[%s501 + $0x20] sm:$0xff] %vm6621, %v6593
        %6627 = vst.msk [vmem:[%s501 + $0x28] sm:$0xff] %vm6621, %v6594
        %6628 = vst.msk [vmem:[%s501 + $0x30] sm:$0xff] %vm6621, %v6595
        %6629 = vst.msk [vmem:[%s501 + $0x38] sm:$0xff] %vm6621, %v6596
        %6630 = vst.msk [vmem:[%s501 + $0x40] sm:$0xff] %vm6621, %v6597
        %6631 = vst.msk [vmem:[%s501 + $0x48] sm:$0xff] %vm6621, %v6598
        %6632 = vst.msk [vmem:[%s501 + $0x50] sm:$0xff] %vm6621, %v6599
        %6633 = vst.msk [vmem:[%s501 + $0x58] sm:$0xff] %vm6621, %v6600
        %6634 = vst.msk [vmem:[%s501 + $0x60] sm:$0xff] %vm6621, %v6601
        %6635 = vst.msk [vmem:[%s501 + $0x68] sm:$0xff] %vm6621, %v6602
        %6636 = vst.msk [vmem:[%s501 + $0x70] sm:$0xff] %vm6621, %v6603
        %6637 = vst.msk [vmem:[%s501 + $0x78] sm:$0xff] %vm6621, %v6604
        %6638 = vst.msk [vmem:[%s501 + $0x80] sm:$0xff] %vm6621, %v6605
        %6639 = vst.msk [vmem:[%s501 + $0x88] sm:$0xff] %vm6621, %v6606
        %6640 = vst.msk [vmem:[%s501 + $0x90] sm:$0xff] %vm6621, %v6607
        %6641 = vst.msk [vmem:[%s501 + $0x98] sm:$0xff] %vm6621, %v6608
        %6642 = vst.msk [vmem:[%s501 + $0xa0] sm:$0xff] %vm6621, %v6609
        %6643 = vst.msk [vmem:[%s501 + $0xa8] sm:$0xff] %vm6621, %v6610
        %6644 = vst.msk [vmem:[%s501 + $0xb0] sm:$0xff] %vm6621, %v6611
        %6645 = vst.msk [vmem:[%s501 + $0xb8] sm:$0xff] %vm6621, %v6612
        %6646 = vst.msk [vmem:[%s501 + $0xc0] sm:$0xff] %vm6621, %v6613
        %6647 = vst.msk [vmem:[%s501 + $0xc8] sm:$0xff] %vm6621, %v6614
        %6648 = vst.msk [vmem:[%s501 + $0xd0] sm:$0xff] %vm6621, %v6615
        %6649 = vst.msk [vmem:[%s501 + $0xd8] sm:$0xff] %vm6621, %v6616
        %6650 = vst.msk [vmem:[%s501 + $0xe0] sm:$0xff] %vm6621, %v6617
        %6651 = vst.msk [vmem:[%s501 + $0xe8] sm:$0xff] %vm6621, %v6618
        %6652 = vst.msk [vmem:[%s501 + $0xf0] sm:$0xff] %vm6621, %v6619
        %6653 = vst.msk [vmem:[%s501 + $0xf8] sm:$0xff] %vm6621, %v6620
        %v6654 = vld [vmem:[%s507] sm:$0x1]
        %v6655 = vsel %vm6621, %v6589, -inf
        %v6656 = vsel %vm6621, %v6590, -inf
        %v6657 = vsel %vm6621, %v6591, -inf
        %v6658 = vsel %vm6621, %v6592, -inf
        %v6659 = vsel %vm6621, %v6593, -inf
        %v6660 = vmax.f32 %v6655, %v6659
        %v6661 = vsel %vm6621, %v6594, -inf
        %v6662 = vmax.f32 %v6656, %v6661
        %v6663 = vsel %vm6621, %v6595, -inf
        %v6664 = vmax.f32 %v6657, %v6663
        %v6665 = vsel %vm6621, %v6596, -inf
        %v6666 = vmax.f32 %v6658, %v6665
        %v6667 = vsel %vm6621, %v6597, -inf
        %v6668 = vmax.f32 %v6660, %v6667
        %v6669 = vsel %vm6621, %v6598, -inf
        %v6670 = vmax.f32 %v6662, %v6669
        %v6671 = vsel %vm6621, %v6599, -inf
        %v6672 = vmax.f32 %v6664, %v6671
        %v6673 = vsel %vm6621, %v6600, -inf
        %v6674 = vmax.f32 %v6666, %v6673
        %v6675 = vsel %vm6621, %v6601, -inf
        %v6676 = vmax.f32 %v6668, %v6675
        %v6677 = vsel %vm6621, %v6602, -inf
        %v6678 = vmax.f32 %v6670, %v6677
        %v6679 = vsel %vm6621, %v6603, -inf
        %v6680 = vmax.f32 %v6672, %v6679
        %v6681 = vsel %vm6621, %v6604, -inf
        %v6682 = vmax.f32 %v6674, %v6681
        %v6683 = vsel %vm6621, %v6605, -inf
        %v6684 = vmax.f32 %v6676, %v6683
        %v6685 = vsel %vm6621, %v6606, -inf
        %v6686 = vmax.f32 %v6678, %v6685
        %v6687 = vsel %vm6621, %v6607, -inf
        %v6688 = vmax.f32 %v6680, %v6687
        %v6689 = vsel %vm6621, %v6608, -inf
        %v6690 = vmax.f32 %v6682, %v6689
        %v6691 = vsel %vm6621, %v6609, -inf
        %v6692 = vmax.f32 %v6684, %v6691
        %v6693 = vsel %vm6621, %v6610, -inf
        %v6694 = vmax.f32 %v6686, %v6693
        %v6695 = vsel %vm6621, %v6611, -inf
        %v6696 = vmax.f32 %v6688, %v6695
        %v6697 = vsel %vm6621, %v6612, -inf
        %v6698 = vmax.f32 %v6690, %v6697
        %v6699 = vsel %vm6621, %v6613, -inf
        %v6700 = vmax.f32 %v6692, %v6699
        %v6701 = vsel %vm6621, %v6614, -inf
        %v6702 = vmax.f32 %v6694, %v6701
        %v6703 = vsel %vm6621, %v6615, -inf
        %v6704 = vmax.f32 %v6696, %v6703
        %v6705 = vsel %vm6621, %v6616, -inf
        %v6706 = vmax.f32 %v6698, %v6705
        %v6707 = vsel %vm6621, %v6617, -inf
        %v6708 = vmax.f32 %v6700, %v6707
        %v6709 = vsel %vm6621, %v6618, -inf
        %v6710 = vmax.f32 %v6702, %v6709
        %v6711 = vsel %vm6621, %v6619, -inf
        %v6712 = vmax.f32 %v6704, %v6711
        %v6713 = vsel %vm6621, %v6620, -inf
        %v6714 = vmax.f32 %v6706, %v6713
        %v6715 = vmax.f32 %v6708, %v6710
        %v6716 = vmax.f32 %v6712, %v6714
        %v6717 = vmax.f32 %v6715, %v6716
        %v6718 = vrot.slane %v6717, 4
        %v6719 = vmax.f32 %v6717, %v6718
        %v6720 = vrot.slane %v6719, 2
        %v6721 = vmax.f32 %v6719, %v6720
        %v6722 = vrot.slane %v6721, 1
        %v6723 = vmax.f32 %v6721, %v6722
        %v6724 = vmax.f32 %v6654, %v6723
        %v6725 = vsub.f32 %v6654, %v6724
        %v6726 = vmul.f32 %v6725, 1.442695
        %v6727 = vpow.pop %v6726
        %v6729 = vlaneseq
        %v6730 = vshrl.u32 %v6729, 7
        %v6731 = vsub.s32 0, %v6730
        %v6732 = vrot.slane %v6724, %v6731
        %v6734 = vsub.f32 %v6589, %v6732
        %v6735 = vsub.f32 %v6590, %v6732
        %v6736 = vsub.f32 %v6591, %v6732
        %v6737 = vsub.f32 %v6592, %v6732
        %v6738 = vsub.f32 %v6593, %v6732
        %v6739 = vsub.f32 %v6594, %v6732
        %v6740 = vsub.f32 %v6595, %v6732
        %v6741 = vsub.f32 %v6596, %v6732
        %v6742 = vsub.f32 %v6597, %v6732
        %v6743 = vsub.f32 %v6598, %v6732
        %v6744 = vsub.f32 %v6599, %v6732
        %v6745 = vsub.f32 %v6600, %v6732
        %v6746 = vsub.f32 %v6601, %v6732
        %v6747 = vsub.f32 %v6602, %v6732
        %v6748 = vsub.f32 %v6603, %v6732
        %v6749 = vsub.f32 %v6604, %v6732
        %v6750 = vsub.f32 %v6605, %v6732
        %v6751 = vsub.f32 %v6606, %v6732
        %v6752 = vsub.f32 %v6607, %v6732
        %v6753 = vsub.f32 %v6608, %v6732
        %v6754 = vsub.f32 %v6609, %v6732
        %v6755 = vsub.f32 %v6610, %v6732
        %v6756 = vsub.f32 %v6611, %v6732
        %v6757 = vsub.f32 %v6612, %v6732
        %v6758 = vsub.f32 %v6613, %v6732
        %v6759 = vsub.f32 %v6614, %v6732
        %v6760 = vsub.f32 %v6615, %v6732
        %v6761 = vsub.f32 %v6616, %v6732
        %v6762 = vsub.f32 %v6617, %v6732
        %v6763 = vsub.f32 %v6618, %v6732
        %v6764 = vsub.f32 %v6619, %v6732
        %v6765 = vsub.f32 %v6620, %v6732
        %v6766 = vmul.f32 %v6734, 1.442695
        %v6767 = vpow.pop %v6766
        %v6768 = vmul.f32 %v6735, 1.442695
        %v6769 = vpow.pop %v6768
        %v6770 = vmul.f32 %v6736, 1.442695
        %v6771 = vpow.pop %v6770
        %v6772 = vmul.f32 %v6737, 1.442695
        %v6773 = vpow.pop %v6772
        %v6774 = vmul.f32 %v6738, 1.442695
        %v6775 = vpow.pop %v6774
        %v6776 = vmul.f32 %v6739, 1.442695
        %v6777 = vpow.pop %v6776
        %v6778 = vmul.f32 %v6740, 1.442695
        %v6779 = vpow.pop %v6778
        %v6780 = vmul.f32 %v6741, 1.442695
        %v6781 = vpow.pop %v6780
        %v6782 = vmul.f32 %v6742, 1.442695
        %v6783 = vpow.pop %v6782
        %v6784 = vmul.f32 %v6743, 1.442695
        %v6785 = vpow.pop %v6784
        %v6786 = vmul.f32 %v6744, 1.442695
        %v6787 = vpow.pop %v6786
        %v6788 = vmul.f32 %v6745, 1.442695
        %v6789 = vpow.pop %v6788
        %v6790 = vmul.f32 %v6746, 1.442695
        %v6791 = vpow.pop %v6790
        %v6792 = vmul.f32 %v6747, 1.442695
        %v6793 = vpow.pop %v6792
        %v6794 = vmul.f32 %v6748, 1.442695
        %v6795 = vpow.pop %v6794
        %v6796 = vmul.f32 %v6749, 1.442695
        %v6797 = vpow.pop %v6796
        %v6798 = vmul.f32 %v6750, 1.442695
        %v6799 = vpow.pop %v6798
        %v6800 = vmul.f32 %v6751, 1.442695
        %v6801 = vpow.pop %v6800
        %v6802 = vmul.f32 %v6752, 1.442695
        %v6803 = vpow.pop %v6802
        %v6804 = vmul.f32 %v6753, 1.442695
        %v6805 = vpow.pop %v6804
        %v6806 = vmul.f32 %v6754, 1.442695
        %v6807 = vpow.pop %v6806
        %v6808 = vmul.f32 %v6755, 1.442695
        %v6809 = vpow.pop %v6808
        %v6810 = vmul.f32 %v6756, 1.442695
        %v6811 = vpow.pop %v6810
        %v6812 = vmul.f32 %v6757, 1.442695
        %v6813 = vpow.pop %v6812
        %v6814 = vmul.f32 %v6758, 1.442695
        %v6815 = vpow.pop %v6814
        %v6816 = vmul.f32 %v6759, 1.442695
        %v6817 = vpow.pop %v6816
        %v6818 = vmul.f32 %v6760, 1.442695
        %v6819 = vpow.pop %v6818
        %v6820 = vmul.f32 %v6761, 1.442695
        %v6821 = vpow.pop %v6820
        %v6822 = vmul.f32 %v6762, 1.442695
        %v6823 = vpow.pop %v6822
        %v6824 = vmul.f32 %v6763, 1.442695
        %v6825 = vpow.pop %v6824
        %v6826 = vmul.f32 %v6764, 1.442695
        %v6827 = vpow.pop %v6826
        %v6828 = vmul.f32 %v6765, 1.442695
        %v6829 = vpow.pop %v6828
        %v6830 = vld [vmem:[%s510] sm:$0x1]
        %v6831 = vmul.f32 %v6727, %v6830
        %v6832 = vsel %vm6621, %v6767, 0.0
        %v6833 = vsel %vm6621, %v6769, 0.0
        %v6834 = vadd.f32 %v6832, %v6833
        %v6835 = vsel %vm6621, %v6771, 0.0
        %v6836 = vadd.f32 %v6834, %v6835
        %v6837 = vsel %vm6621, %v6773, 0.0
        %v6838 = vadd.f32 %v6836, %v6837
        %v6839 = vsel %vm6621, %v6775, 0.0
        %v6840 = vadd.f32 %v6838, %v6839
        %v6841 = vsel %vm6621, %v6777, 0.0
        %v6842 = vadd.f32 %v6840, %v6841
        %v6843 = vsel %vm6621, %v6779, 0.0
        %v6844 = vadd.f32 %v6842, %v6843
        %v6845 = vsel %vm6621, %v6781, 0.0
        %v6846 = vadd.f32 %v6844, %v6845
        %v6847 = vsel %vm6621, %v6783, 0.0
        %v6848 = vadd.f32 %v6846, %v6847
        %v6849 = vsel %vm6621, %v6785, 0.0
        %v6850 = vadd.f32 %v6848, %v6849
        %v6851 = vsel %vm6621, %v6787, 0.0
        %v6852 = vadd.f32 %v6850, %v6851
        %v6853 = vsel %vm6621, %v6789, 0.0
        %v6854 = vadd.f32 %v6852, %v6853
        %v6855 = vsel %vm6621, %v6791, 0.0
        %v6856 = vadd.f32 %v6854, %v6855
        %v6857 = vsel %vm6621, %v6793, 0.0
        %v6858 = vadd.f32 %v6856, %v6857
        %v6859 = vsel %vm6621, %v6795, 0.0
        %v6860 = vadd.f32 %v6858, %v6859
        %v6861 = vsel %vm6621, %v6797, 0.0
        %v6862 = vadd.f32 %v6860, %v6861
        %v6863 = vsel %vm6621, %v6799, 0.0
        %v6864 = vadd.f32 %v6862, %v6863
        %v6865 = vsel %vm6621, %v6801, 0.0
        %v6866 = vadd.f32 %v6864, %v6865
        %v6867 = vsel %vm6621, %v6803, 0.0
        %v6868 = vadd.f32 %v6866, %v6867
        %v6869 = vsel %vm6621, %v6805, 0.0
        %v6870 = vadd.f32 %v6868, %v6869
        %v6871 = vsel %vm6621, %v6807, 0.0
        %v6872 = vadd.f32 %v6870, %v6871
        %v6873 = vsel %vm6621, %v6809, 0.0
        %v6874 = vadd.f32 %v6872, %v6873
        %v6875 = vsel %vm6621, %v6811, 0.0
        %v6876 = vadd.f32 %v6874, %v6875
        %v6877 = vsel %vm6621, %v6813, 0.0
        %v6878 = vadd.f32 %v6876, %v6877
        %v6879 = vsel %vm6621, %v6815, 0.0
        %v6880 = vadd.f32 %v6878, %v6879
        %v6881 = vsel %vm6621, %v6817, 0.0
        %v6882 = vadd.f32 %v6880, %v6881
        %v6883 = vsel %vm6621, %v6819, 0.0
        %v6884 = vadd.f32 %v6882, %v6883
        %v6885 = vsel %vm6621, %v6821, 0.0
        %v6886 = vadd.f32 %v6884, %v6885
        %v6887 = vsel %vm6621, %v6823, 0.0
        %v6888 = vadd.f32 %v6886, %v6887
        %v6889 = vsel %vm6621, %v6825, 0.0
        %v6890 = vadd.f32 %v6888, %v6889
        %v6891 = vsel %vm6621, %v6827, 0.0
        %v6892 = vadd.f32 %v6890, %v6891
        %v6893 = vsel %vm6621, %v6829, 0.0
        %v6894 = vadd.f32 %v6892, %v6893
        %v6895 = vrot.slane %v6894, 4
        %v6896 = vadd.f32 %v6894, %v6895
        %v6897 = vrot.slane %v6896, 2
        %v6898 = vadd.f32 %v6896, %v6897
        %v6899 = vrot.slane %v6898, 1
        %v6900 = vadd.f32 %v6898, %v6899
        %v6901 = vadd.f32 %v6831, %v6900
        %vm6902 = vcmask 0
        %6903 = vst.msk [vmem:[%s510] sm:$0x1] %vm6902, %v6901
        %v6904 = vpack.c.bf16 %v6769, %v6767
        %v6905 = vpack.c.bf16 %v6773, %v6771
        %v6906 = vpack.c.bf16 %v6777, %v6775
        %v6907 = vpack.c.bf16 %v6781, %v6779
        %v6908 = vpack.c.bf16 %v6785, %v6783
        %v6909 = vpack.c.bf16 %v6789, %v6787
        %v6910 = vpack.c.bf16 %v6793, %v6791
        %v6911 = vpack.c.bf16 %v6797, %v6795
        %v6912 = vpack.c.bf16 %v6801, %v6799
        %v6913 = vpack.c.bf16 %v6805, %v6803
        %v6914 = vpack.c.bf16 %v6809, %v6807
        %v6915 = vpack.c.bf16 %v6813, %v6811
        %v6916 = vpack.c.bf16 %v6817, %v6815
        %v6917 = vpack.c.bf16 %v6821, %v6819
        %v6918 = vpack.c.bf16 %v6825, %v6823
        %v6919 = vpack.c.bf16 %v6829, %v6827
        %6920 = vxpose.xlu0.c.b16.start [1/8] %v6904, 128
        %6921 = vxpose.xlu0.c.b16.cont [2/8] %v6905, 128
        %6922 = vxpose.xlu0.c.b16.cont [3/8] %v6906, 128
        %6923 = vxpose.xlu0.c.b16.cont [4/8] %v6907, 128
        %6924 = vxpose.xlu0.c.b16.cont [5/8] %v6908, 128
        %6925 = vxpose.xlu0.c.b16.cont [6/8] %v6909, 128
        %6926 = vxpose.xlu0.c.b16.cont [7/8] %v6910, 128
        %6927 = vxpose.xlu0.c.b16.end [8/8] %v6911, 128
        %v6928 = vpop.trf.xlu0
        %v6929 = vpop.trf.xlu0
        %v6930 = vpop.trf.xlu0
        %v6931 = vpop.trf.xlu0
        %v6932 = vpop.trf.xlu0
        %v6933 = vpop.trf.xlu0
        %v6934 = vpop.trf.xlu0
        %v6935 = vpop.trf.xlu0
        %6936 = vxpose.xlu0.c.b16.start [1/8] %v6912, 128
        %6937 = vxpose.xlu0.c.b16.cont [2/8] %v6913, 128
        %6938 = vxpose.xlu0.c.b16.cont [3/8] %v6914, 128
        %6939 = vxpose.xlu0.c.b16.cont [4/8] %v6915, 128
        %6940 = vxpose.xlu0.c.b16.cont [5/8] %v6916, 128
        %6941 = vxpose.xlu0.c.b16.cont [6/8] %v6917, 128
        %6942 = vxpose.xlu0.c.b16.cont [7/8] %v6918, 128
        %6943 = vxpose.xlu0.c.b16.end [8/8] %v6919, 128
        %v6944 = vpop.trf.xlu0
        %v6945 = vpop.trf.xlu0
        %v6946 = vpop.trf.xlu0
        %v6947 = vpop.trf.xlu0
        %v6948 = vpop.trf.xlu0
        %v6949 = vpop.trf.xlu0
        %v6950 = vpop.trf.xlu0
        %v6951 = vpop.trf.xlu0
        %6952 = vmatprep.subr.bf16.mxu0 %v4138
        %6953 = vmatpush1.bf16.msra.mxu0 %v4137
        %6954 = vmatprep.subr.bf16.mxu0 %v4142
        %6955 = vmatpush1.bf16.msra.mxu0 %v4141
        %6956 = vmatprep.subr.bf16.mxu0 %v4146
        %6957 = vmatpush1.bf16.msra.mxu0 %v4145
        %6958 = vmatprep.subr.bf16.mxu0 %v4150
        %6959 = vmatpush1.bf16.msra.mxu0 %v4149
        %6960 = vmatprep.subr.bf16.mxu0 %v4154
        %6961 = vmatpush1.bf16.msra.mxu0 %v4153
        %6962 = vmatprep.subr.bf16.mxu0 %v4158
        %6963 = vmatpush1.bf16.msra.mxu0 %v4157
        %6964 = vmatprep.subr.bf16.mxu0 %v4162
        %6965 = vmatpush1.bf16.msra.mxu0 %v4161
        %6966 = vmatprep.subr.bf16.mxu0 %v4166
        %6967 = vmatpush1.bf16.msra.mxu0 %v4165
        %6968 = vmatprep.subr.bf16.mxu0 %v4170
        %6969 = vmatpush1.bf16.msra.mxu0 %v4169
        %6970 = vmatprep.subr.bf16.mxu0 %v4174
        %6971 = vmatpush1.bf16.msra.mxu0 %v4173
        %6972 = vmatprep.subr.bf16.mxu0 %v4178
        %6973 = vmatpush1.bf16.msra.mxu0 %v4177
        %6974 = vmatprep.subr.bf16.mxu0 %v4182
        %6975 = vmatpush1.bf16.msra.mxu0 %v4181
        %6976 = vmatprep.subr.bf16.mxu0 %v4186
        %6977 = vmatpush1.bf16.msra.mxu0 %v4185
        %6978 = vmatprep.subr.bf16.mxu0 %v4190
        %6979 = vmatpush1.bf16.msra.mxu0 %v4189
        %6980 = vmatprep.subr.bf16.mxu0 %v4194
        %6981 = vmatpush1.bf16.msra.mxu0 %v4193
        %6982 = vmatprep.subr.bf16.mxu0 %v4198
        %6983 = vmatpush1.bf16.msra.mxu0 %v4197
        %6984 = vmatprep.mubr.bf16.mxu0 %v6944
        %6985 = vmatmul.mubr.bf16.gmra.mrb[0].mxu0 %v6928
        %v6986 = vpop.f32.mrb[0].mxu0
        %v6987 = vadd.f32 0.0, %v6986
        %v6988 = vpop.f32.mrb[0].mxu0
        %v6989 = vadd.f32 0.0, %v6988
        %v6990 = vpop.f32.mrb[0].mxu0
        %v6991 = vpop.f32.mrb[0].mxu0
        %6992 = vdwg.mxu0
        %6993 = vmatprep.subr.bf16.mxu0 %v4140
        %6994 = vmatpush1.bf16.msra.mxu0 %v4139
        %6995 = vmatprep.subr.bf16.mxu0 %v4144
        %6996 = vmatpush1.bf16.msra.mxu0 %v4143
        %6997 = vmatprep.subr.bf16.mxu0 %v4148
        %6998 = vmatpush1.bf16.msra.mxu0 %v4147
        %6999 = vmatprep.subr.bf16.mxu0 %v4152
        %7000 = vmatpush1.bf16.msra.mxu0 %v4151
        %7001 = vmatprep.subr.bf16.mxu0 %v4156
        %7002 = vmatpush1.bf16.msra.mxu0 %v4155
        %7003 = vmatprep.subr.bf16.mxu0 %v4160
        %7004 = vmatpush1.bf16.msra.mxu0 %v4159
        %7005 = vmatprep.subr.bf16.mxu0 %v4164
        %7006 = vmatpush1.bf16.msra.mxu0 %v4163
        %7007 = vmatprep.subr.bf16.mxu0 %v4168
        %7008 = vmatpush1.bf16.msra.mxu0 %v4167
        %7009 = vmatprep.subr.bf16.mxu0 %v4172
        %7010 = vmatpush1.bf16.msra.mxu0 %v4171
        %7011 = vmatprep.subr.bf16.mxu0 %v4176
        %7012 = vmatpush1.bf16.msra.mxu0 %v4175
        %7013 = vmatprep.subr.bf16.mxu0 %v4180
        %7014 = vmatpush1.bf16.msra.mxu0 %v4179
        %7015 = vmatprep.subr.bf16.mxu0 %v4184
        %7016 = vmatpush1.bf16.msra.mxu0 %v4183
        %7017 = vmatprep.subr.bf16.mxu0 %v4188
        %7018 = vmatpush1.bf16.msra.mxu0 %v4187
        %7019 = vmatprep.subr.bf16.mxu0 %v4192
        %7020 = vmatpush1.bf16.msra.mxu0 %v4191
        %7021 = vmatprep.subr.bf16.mxu0 %v4196
        %7022 = vmatpush1.bf16.msra.mxu0 %v4195
        %7023 = vmatprep.subr.bf16.mxu0 %v4200
        %7024 = vmatpush1.bf16.msra.mxu0 %v4199
        %7025 = vmatprep.mubr.bf16.mxu0 %v6944
        %7026 = vmatmul.mubr.bf16.gmra.mrb[0].mxu0 %v6928
        %v7027 = vpop.f32.mrb[0].mxu0
        %v7028 = vadd.f32 0.0, %v7027
        %v7029 = vpop.f32.mrb[0].mxu0
        %v7030 = vadd.f32 0.0, %v7029
        %v7031 = vpop.f32.mrb[0].mxu0
        %v7032 = vpop.f32.mrb[0].mxu0
        %7033 = vdwg.mxu0
        %v7034 = vld [vmem:[%s491] sm:$0xf]
        %7036 = vset.pattern.permute.xlu0 0
        %7037 = vperm.xlu0 %7036, %v6727
        %v7038 = vpop.permute.xlu0 %7037
        %v7040 = vlaneseq
        %v7041 = vshrl.u32 %v7040, 7
        %v7042 = vsub.s32 0, %v7041
        %v7043 = vrot.slane %v7038, %v7042
        %v7044 = vmul.f32 %v7043, %v7034
        %v7049 = vcombine.low %v6987, %v6989
        %v7050 = vcombine.low %v7028, %v7030
        %v7052 = vunpack.c.l.s4 1966171168
        %v7053 = vunpack.c.0.s8 %v7052
        %v7054 = vlaneseq
        %v7055 = vshrl.u32 %v7054, 7
        %v7056 = vsub.s32 %v7053, %v7055
        %v7057 = vrot.slane %v7049, %v7056
        %v7059 = vunpack.c.l.s4 1966171168
        %v7060 = vunpack.c.0.s8 %v7059
        %v7061 = vlaneseq
        %v7062 = vshrl.u32 %v7061, 7
        %v7063 = vsub.s32 %v7060, %v7062
        %v7064 = vrot.slane %v7050, %v7063
        %v7065 = vcombine.low %v7057, %v7064
        %v7067 = vunpack.c.l.s4 1966171168
        %v7068 = vunpack.c.0.s8 %v7067
        %v7069 = vlaneseq
        %v7070 = vshrl.u32 %v7069, 7
        %v7071 = vsub.s32 %v7068, %v7070
        %v7072 = vrot.slane %v7065, %v7071
        %v7074 = vadd.f32 %v7044, %v7072
        %v7075 = vlaneseq
        %vm7076 = vcmp.ge.s32.totalorder %v7075, 0
        %vm7077 = vcmp.lt.s32.totalorder %v7075, 512
        %vm7078 = vmand %vm7076, %vm7077
        %7079 = vst.msk [vmem:[%s491] sm:$0xf] %vm7078, %v7074
        %7080 = vst.msk [vmem:[%s507] sm:$0x1] %vm6902, %v6724
        %s7081 = smul.u32 %s39, 2
        %s7082 = sadd.s32 %s7081, %s40
        %s7083 = smul.u32 32, %s7082
        %p7084 = scmp.lt.s32.totalorder %s7083, 127
        %s7085 = scalar_select %p7084, %s7083, 127
        %s7086 = smul.addr %s7085, 8
        %s7087 = scalar_lea.vmem %s8, %s7086
        %p7088 = scmp.lt.s32.totalorder %s39, 1
        %s7089 = scalar_select %p7088, %s39, 1
        %s7090 = scalar_lea.vmem %s9, %s7089
        %p7091 = scmp.lt.s32.totalorder %s39, 1
        %s7092 = scalar_select %p7091, %s39, 1
        %s7093 = scalar_lea.vmem %s10, %s7092
        %s7094 = sand.u32 %s293, 1
        %s7095 = scalar_lea.sflag [#allocation7], %s7094
        %s7096 = sand.u32 %s293, 1
        %s7097 = smul.addr %s7096, 4
        %s7098 = scalar_lea.vmem [#allocation16], %s7097
        // Predicated region
        $region77: #{tpu_custom_call.1} parent=47 // pred_check
          %p7099 = pneg %p225
        $region78: #{tpu_custom_call.1} parent=47 // pred_check_branch
          %7101 = sbr.rel (%p7099) target = $region80
        $region79: #{tpu_custom_call.1} parent=47 // pred_region
          %s7102 = smul.u32 %s39, 2
          %s7103 = sadd.s32 %s7102, %s40
          %s7104 = smul.u32 32, %s7103
        $region80: #{tpu_custom_call.1} parent=47 // pred_fallthru
          _
        // Predicated region
        $region81: #{tpu_custom_call.1} parent=47 // pred_check
          %p7105 = pneg %p251
        $region82: #{tpu_custom_call.1} parent=47 // pred_check_branch
          %7107 = sbr.rel (%p7105) target = $region84
        $region83: #{tpu_custom_call.1} parent=47 // pred_region
          _
        $region84: #{tpu_custom_call.1} parent=47 // pred_fallthru
          _
        // Predicated region
        $region85: #{tpu_custom_call.1} parent=47 // pred_check
          %p7108 = pneg %p277
        $region86: #{tpu_custom_call.1} parent=47 // pred_check_branch
          %7110 = sbr.rel (%p7108) target = $region88
        $region87: #{tpu_custom_call.1} parent=47 // pred_region
          _
        $region88: #{tpu_custom_call.1} parent=47 // pred_fallthru
          _
        // Predicated region
        $region89: #{tpu_custom_call.1} parent=47 // pred_check
          %p7111 = pneg %p303
        $region90: #{tpu_custom_call.1} parent=47 // pred_check_branch
          %7113 = sbr.rel (%p7111) target = $region92
        $region91: #{tpu_custom_call.1} parent=47 // pred_region
          %s7115 = ssub.s32 64, 64
          %7116 = vsyncadd %s7095, %s7115
          %s7117 = smul.addr %s39, 4
          %s7118 = smul.addr %s7117, 16
          %s7119 = scalar_lea.hbm %s11, %s7118
          %s7121 = sshll.u32 %s7098, 4
          %s7122 = int_to_ptr.vmem [resolvable:$true] %s7121
          %7124 = dma.vmem_to_hbm [thread:$0]  %s7122, 64, %s7119, %s7095
        $region92: #{tpu_custom_call.1} parent=47 // pred_fallthru
          _
      $region48: #{tpu_custom_call.1} parent=5 // pred_fallthru
        _
      %p7125 = scmp.le.s32.totalorder 2, %s30
      // Predicated region
      $region93: #{tpu_custom_call.1} parent=5 // pred_check
        %p7126 = pneg %p7125
      $region94: #{tpu_custom_call.1} parent=5 // pred_check_branch
        %7128 = sbr.rel (%p7126) target = $region96
      $region95: #{tpu_custom_call.1} parent=5 // pred_region
        %s7129 = ssub.s32 %s30, 2
        // Predicated region
        $region97: #{tpu_custom_call.1} parent=95 // pred_check
          %p7130 = pneg %p231
        $region98: #{tpu_custom_call.1} parent=95 // pred_check_branch
          %7132 = sbr.rel (%p7130) target = $region100
        $region99: #{tpu_custom_call.1} parent=95 // pred_region
          %s7133 = smul.u32 %s41, 2
          %s7134 = sadd.s32 %s7133, %s42
          %s7135 = smul.u32 32, %s7134
          %p7136 = scmp.lt.s32.totalorder %s7135, 127
          %s7137 = scalar_select %p7136, %s7135, 127
          %s7138 = smul.addr %s7137, 8
          %s7139 = scalar_lea.vmem %s8, %s7138
        $region100: #{tpu_custom_call.1} parent=95 // pred_fallthru
          _
        // Predicated region
        $region101: #{tpu_custom_call.1} parent=95 // pred_check
          %p7140 = pneg %p257
        $region102: #{tpu_custom_call.1} parent=95 // pred_check_branch
          %7142 = sbr.rel (%p7140) target = $region104
        $region103: #{tpu_custom_call.1} parent=95 // pred_region
          %p7143 = scmp.lt.s32.totalorder %s41, 1
          %s7144 = scalar_select %p7143, %s41, 1
          %s7145 = scalar_lea.vmem %s9, %s7144
        $region104: #{tpu_custom_call.1} parent=95 // pred_fallthru
          _
        // Predicated region
        $region105: #{tpu_custom_call.1} parent=95 // pred_check
          %p7146 = pneg %p283
        $region106: #{tpu_custom_call.1} parent=95 // pred_check_branch
          %7148 = sbr.rel (%p7146) target = $region108
        $region107: #{tpu_custom_call.1} parent=95 // pred_region
          %p7149 = scmp.lt.s32.totalorder %s41, 1
          %s7150 = scalar_select %p7149, %s41, 1
          %s7151 = scalar_lea.vmem %s10, %s7150
        $region108: #{tpu_custom_call.1} parent=95 // pred_fallthru
          _
        // Predicated region
        $region109: #{tpu_custom_call.1} parent=95 // pred_check
          %p7152 = pneg %p309
        $region110: #{tpu_custom_call.1} parent=95 // pred_check_branch
          %7154 = sbr.rel (%p7152) target = $region112
        $region111: #{tpu_custom_call.1} parent=95 // pred_region
          %s7155 = sand.u32 %s294, 1
          %s7156 = scalar_lea.sflag [#allocation7], %s7155
          %s7157 = sand.u32 %s294, 1
          %s7158 = smul.addr %s7157, 4
          %s7159 = scalar_lea.vmem [#allocation16], %s7158
          %7160 = dma.done %s7156, 64
        $region112: #{tpu_custom_call.1} parent=95 // pred_fallthru
          _
      $region96: #{tpu_custom_call.1} parent=5 // pred_fallthru
        _
    $region6: #{tpu_custom_call.1} parent=1 // loop_footer
      %s34 = sadd.s32 1, %s30
    $region7: #{tpu_custom_call.1} parent=1 // loop_footer_branch
      %29 = sbr.rel target = $region3
    $region8: #{tpu_custom_call.1} parent=1 // loop_exit
      _
    %7161 = vsyncpa [#allocation6], 1
    %s7162 = scalar_lea.sflag [#allocation6], 1
    %7163 = vsyncpa %s7162, 1
    %7164 = vsyncpa [#allocation9], 1
    %7165 = vsyncpa [#allocation12], 1
    %7166 = vsyncpa [#allocation15], 1
    %7167 = vsyncpa [#allocation7], 1
    %s7168 = scalar_lea.sflag [#allocation7], 1
    %7169 = vsyncpa %s7168, 1

</llo_original>
